<compile_context>
chip_gen: v6e
topology: v6e:2x2x1
jax: 0.10.0
libtpu: 0.0.40
codegen_flags: <defaults>
</compile_context>

<pallas_src>
import functools

import jax
import jax.numpy as jnp
from jax.experimental import pallas as pl
from jax.experimental.pallas import tpu as pltpu

F32 = jnp.float32
BF16 = jnp.bfloat16


def _gelu(x):
    c = jnp.float32(0.7978845608028654)  # sqrt(2/pi)
    return 0.5 * x * (1.0 + jnp.tanh(c * (x + 0.044715 * x * x * x)))


def _layernorm(x, gamma, beta):
    mu = jnp.mean(x, axis=-1, keepdims=True)
    xc = x - mu
    var = jnp.mean(xc * xc, axis=-1, keepdims=True)
    return xc * jax.lax.rsqrt(var + 1e-5) * gamma + beta


# ---------------------------------------------------------------------------
# Single fused kernel: convmixer stack -> down+ct -> transformer stack ->
# gs_block stack -> 2-layer LSTM jknet -> temporal mean.
# ---------------------------------------------------------------------------
def _fused_mixer_kernel(
        x_ref, ct_ref, adj_ref,
        a1_ref, t1_ref, a2_ref, t2_ref, wp_ref, bp_ref, sp_ref, tp_ref,
        dm_ref, db_ref,
        ln1g_ref, ln1b_ref, wqkv_ref, wo_ref, bo_ref,
        ln2g_ref, ln2b_ref, w1_ref, b1_ref, w2_ref, b2_ref,
        wts_ref, wih_ref, whh_ref, bl_ref,
        o_ref,
        pad_ref, rows_ref, ctx_ref,
        *, K, H, heads, dim_head, scale):
    N, _, WC = x_ref.shape
    M = N * H
    p = K // 2
    depth1 = a1_ref.shape[0]
    depth2 = wqkv_ref.shape[0]
    depth3 = wts_ref.shape[0]
    dim = o_ref.shape[1]
    inner = heads * dim_head

    # ---------------- layer1: convmixer blocks -----------------------------
    # Zero only the 2*p vertical 'same'-conv pad rows of the scratch, once.
    zpad = jnp.zeros((N, p, WC), F32)
    pad_ref[:, 0:p, :] = zpad
    pad_ref[:, p + H:p + H + p, :] = zpad

    def dw_stage(a_mat, t_row):
        # Depthwise KxK conv + folded BN + GELU as ONE MXU matmul: stack the
        # K shifted row-windows along lanes (K*WC contraction depth).
        for kh in range(K):
            rows_ref[:, kh * WC:(kh + 1) * WC] = (
                pad_ref[:, kh:kh + H, :].reshape(M, WC).astype(BF16))
        acc = jnp.dot(rows_ref[...], a_mat, preferred_element_type=F32)
        return _gelu(acc + t_row)

    x = x_ref[...]                                           # (N, H, WC) f32
    for d in range(depth1):
        pad_ref[:, p:p + H, :] = x
        y1 = dw_stage(a1_ref[d], t1_ref[d])                  # (M, WC)
        pad_ref[:, p:p + H, :] = y1.reshape(N, H, WC)
        y2 = dw_stage(a2_ref[d], t2_ref[d])
        resid = y2 + x.reshape(M, WC)                        # dw(x) + x
        z = jnp.dot(resid.astype(BF16), wp_ref[d],
                    preferred_element_type=F32) + bp_ref[d]  # 1x1 conv
        z = _gelu(z) * sp_ref[d] + tp_ref[d]                 # GELU + BN
        x = z.reshape(N, H, WC)

    # ---------------- down: 1x1 conv + NCHW flatten + ct add ---------------
    g = (jnp.dot(x.reshape(N, H * WC).astype(BF16), dm_ref[...],
                 preferred_element_type=F32)
         + db_ref[...] + ct_ref[...])                        # (N, dim)

    # ---------------- layer2: pre-norm transformer blocks ------------------
    for d in range(depth2):
        xn = _layernorm(g, ln1g_ref[d], ln1b_ref[d])
        qkv = jnp.dot(xn.astype(BF16), wqkv_ref[d],
                      preferred_element_type=F32)            # (N, 3*inner)
        for h in range(heads):
            lo = h * dim_head
            q = qkv[:, lo:lo + dim_head].astype(BF16)
            k = qkv[:, inner + lo:inner + lo + dim_head].astype(BF16)
            v = qkv[:, 2 * inner + lo:2 * inner + lo + dim_head].astype(BF16)
            s = jax.lax.dot_general(q, k, (((1,), (1,)), ((), ())),
                                    preferred_element_type=F32) * scale
            s = s - jnp.max(s, axis=-1, keepdims=True)
            e = jnp.exp(s)
            att = (e / jnp.sum(e, axis=-1, keepdims=True)).astype(BF16)
            ctx_ref[:, lo:lo + dim_head] = jnp.dot(
                att, v, preferred_element_type=F32)
        # single output projection over the concatenated head contexts
        g = (jnp.dot(ctx_ref[...].astype(BF16), wo_ref[d],
                     preferred_element_type=F32) + bo_ref[d] + g)
        xn2 = _layernorm(g, ln2g_ref[d], ln2b_ref[d])
        hmid = _gelu(jnp.dot(xn2.astype(BF16), w1_ref[d],
                             preferred_element_type=F32) + b1_ref[d])
        g = jnp.dot(hmid.astype(BF16), w2_ref[d],
                    preferred_element_type=F32) + b2_ref[d] + g

    # ---------------- layer3: gs_block stack (mean policy, gcn=True) -------
    adj = adj_ref[...]
    adj_n = (adj * pl.reciprocal(jnp.sum(adj, axis=1, keepdims=True),
                                 approx=True)).astype(BF16)
    seq = []
    for d in range(depth3):
        neigh = jnp.dot(adj_n, g.astype(BF16), preferred_element_type=F32)
        hh = jnp.maximum(jnp.dot(neigh.astype(BF16), wts_ref[d],
                                 preferred_element_type=F32), 0.0)
        ss = jnp.sum(hh * hh, axis=-1, keepdims=True)
        g = hh * jax.lax.rsqrt(jnp.maximum(ss, 1e-24))       # L2 normalize
        seq.append(g)

    # ---------------- jknet: 2-layer LSTM, SelectItem(0), mean over time ---
    def lstm_cell(xt, hp, cp, wih, whh, b):
        gates = (jnp.dot(xt.astype(BF16), wih, preferred_element_type=F32)
                 + jnp.dot(hp.astype(BF16), whh, preferred_element_type=F32)
                 + b)
        i = jax.nn.sigmoid(gates[:, 0:dim])
        f = jax.nn.sigmoid(gates[:, dim:2 * dim])
        gg = jnp.tanh(gates[:, 2 * dim:3 * dim])
        o = jax.nn.sigmoid(gates[:, 3 * dim:4 * dim])
        cn = f * cp + i * gg
        return o * jnp.tanh(cn), cn

    zeros = jnp.zeros((N, dim), F32)
    h1, c1, h2, c2 = zeros, zeros, zeros, zeros
    acc = zeros
    for t in range(depth3):
        h1, c1 = lstm_cell(seq[t], h1, c1, wih_ref[0], whh_ref[0], bl_ref[0])
        h2, c2 = lstm_cell(h1, h2, c2, wih_ref[1], whh_ref[1], bl_ref[1])
        acc = acc + h2
    o_ref[...] = acc * jnp.float32(1.0 / depth3)


# ---------------------------------------------------------------------------
# Parameter init (deterministic).  Produces kernel-ready (pre-folded, lane-
# dense, stacked, bf16) parameters.
# ---------------------------------------------------------------------------
def init_params(key, *, channel, K, H, W, dim, depth1, depth2, depth3,
                heads, dim_head, mlp_dim):
    C = channel
    WC = W * C
    cd = C // 8
    assert dim == cd * H * W, (dim, cd, H, W)
    inner = heads * dim_head
    p = K // 2
    keys = iter(jax.random.split(key, 512))

    def rnd(shape, s=0.1):
        return (s * jax.random.normal(next(keys), shape)).astype(F32)

    def bn_fold(Cn):
        gamma = 1.0 + 0.1 * jax.random.normal(next(keys), (Cn,))
        beta = 0.1 * jax.random.normal(next(keys), (Cn,))
        mean = 0.1 * jax.random.normal(next(keys), (Cn,))
        var = 1.0 + 0.1 * jnp.abs(jax.random.normal(next(keys), (Cn,)))
        sc = gamma / jnp.sqrt(var + 1e-5)
        sh = beta - mean * sc
        return sc.astype(F32), sh.astype(F32)

    def tile_c(v):                  # (C,) -> (1, W*C); lane index = w*C + c
        return jnp.tile(jnp.asarray(v, F32).reshape(1, C), (1, W))

    def dw_stage():
        # depthwise KxK conv (cross-correlation, 'same' zero pad) + eval BN,
        # folded into a stacked (K*WC, WC) matrix (one block per vertical tap).
        w = rnd((K, K, C))
        b = rnd((C,))
        sc, sh = bn_fold(C)
        wf = w * sc
        t = tile_c(b * sc + sh)
        mats = []
        for kh in range(K):
            a = jnp.zeros((WC, WC), F32)
            for kw in range(K):
                a = a + jnp.kron(jnp.eye(W, k=-(kw - p), dtype=F32),
                                 jnp.diag(wf[kh, kw]))
            mats.append(a)
        return jnp.concatenate(mats, axis=0), t     # (K*WC, WC), (1, WC)

    a1s, t1s, a2s, t2s, wps, bps, sps, tps = ([] for _ in range(8))
    for _ in range(depth1):
        a1, t1 = dw_stage()
        a2, t2 = dw_stage()
        w = rnd((C, C))
        b = rnd((C,))
        sc, sh = bn_fold(C)
        a1s.append(a1); t1s.append(t1); a2s.append(a2); t2s.append(t2)
        wps.append(jnp.kron(jnp.eye(W, dtype=F32), w))
        bps.append(tile_c(b)); sps.append(tile_c(sc)); tps.append(tile_c(sh))

    params = dict(
        a1=jnp.stack(a1s).astype(BF16), t1=jnp.stack(t1s),
        a2=jnp.stack(a2s).astype(BF16), t2=jnp.stack(t2s),
        wp=jnp.stack(wps).astype(BF16), bp=jnp.stack(bps),
        sp=jnp.stack(sps), tp=jnp.stack(tps))

    # down: 1x1 conv (C -> C//8) + NCHW flatten folded into (H*WC, dim).
    wd = rnd((C, cd))
    bd = rnd((cd,))
    m6 = jnp.einsum('cd,hk,wv->hwcdkv', wd,
                    jnp.eye(H, dtype=F32), jnp.eye(W, dtype=F32))
    params["down_m"] = m6.reshape(H * W * C, cd * H * W).astype(BF16)
    params["down_b"] = jnp.repeat(bd, H * W).reshape(1, cd * H * W).astype(F32)

    # layer2 transformer blocks, stacked along a leading depth axis.
    params["ln1_g"] = jnp.ones((depth2, 1, dim), F32)
    params["ln1_b"] = jnp.zeros((depth2, 1, dim), F32)
    params["wqkv"] = jnp.stack(
        [rnd((dim, 3 * inner)) for _ in range(depth2)]).astype(BF16)
    params["wo"] = jnp.stack(
        [rnd((inner, dim)) for _ in range(depth2)]).astype(BF16)
    params["bo"] = jnp.stack([rnd((1, dim)) for _ in range(depth2)])
    params["ln2_g"] = jnp.ones((depth2, 1, dim), F32)
    params["ln2_b"] = jnp.zeros((depth2, 1, dim), F32)
    params["w1"] = jnp.stack(
        [rnd((dim, mlp_dim)) for _ in range(depth2)]).astype(BF16)
    params["b1"] = jnp.stack([rnd((1, mlp_dim)) for _ in range(depth2)])
    params["w2"] = jnp.stack(
        [rnd((mlp_dim, dim)) for _ in range(depth2)]).astype(BF16)
    params["b2"] = jnp.stack([rnd((1, dim)) for _ in range(depth2)])

    # gs_block weights + 2-layer LSTM jknet (ih/hh biases folded).
    params["wts"] = jnp.stack(
        [rnd((dim, dim)) for _ in range(depth3)]).astype(BF16)
    params["wih"] = jnp.stack(
        [rnd((dim, 4 * dim)) for _ in range(2)]).astype(BF16)
    params["whh"] = jnp.stack(
        [rnd((dim, 4 * dim)) for _ in range(2)]).astype(BF16)
    params["blstm"] = jnp.stack([rnd((1, 4 * dim)) for _ in range(2)])
    return params


# ---------------------------------------------------------------------------
# Full forward pass: ONE fused pallas_call.
# ---------------------------------------------------------------------------
def mixer_transformer_forward(params, x_nchw, ct, adj, *, K, heads, dim_head):
    N, C, H, W = x_nchw.shape
    WC = W * C
    dim = params["down_b"].shape[-1]
    inner = heads * dim_head
    p = K // 2
    hpad = ((H + 2 * p + 7) // 8) * 8      # 8-sublane-aligned padded height

    # NCHW -> lane-dense (N, H, W*C); lane index = w*C + c.
    x = jnp.transpose(x_nchw, (0, 2, 3, 1)).astype(F32).reshape(N, H, WC)

    kern = functools.partial(_fused_mixer_kernel, K=K, H=H, heads=heads,
                             dim_head=dim_head, scale=dim_head ** -0.5)
    return pl.pallas_call(
        kern,
        out_shape=jax.ShapeDtypeStruct((N, dim), F32),
        scratch_shapes=[
            pltpu.VMEM((N, hpad, WC), F32),        # padded conv buffer
            pltpu.VMEM((N * H, K * WC), BF16),     # stacked conv row-windows
            pltpu.VMEM((N, inner), F32),           # concatenated head contexts
        ],
        compiler_params=pltpu.CompilerParams(
            vmem_limit_bytes=16 * 1024 * 1024),
    )(x, ct.reshape(N, dim), adj.astype(F32),
      params["a1"], params["t1"], params["a2"], params["t2"],
      params["wp"], params["bp"], params["sp"], params["tp"],
      params["down_m"], params["down_b"],
      params["ln1_g"], params["ln1_b"], params["wqkv"], params["wo"],
      params["bo"], params["ln2_g"], params["ln2_b"],
      params["w1"], params["b1"], params["w2"], params["b2"],
      params["wts"], params["wih"], params["whh"], params["blstm"])


if __name__ == "__main__":
    key = jax.random.PRNGKey(0)
    # Small shapes consistent with the module: channel=16 -> channel//8 = 2,
    # spatial 8x8 -> dim = 2*8*8 = 128, 16 spots, 2/2/2 depths, 2 heads x 32.
    N, C, H, W = 16, 16, 8, 8
    K = 3
    heads, dim_head = 2, 32
    cd = C // 8
    dim = cd * H * W          # 128
    mlp_dim = 128
    depth1, depth2, depth3 = 2, 2, 2

    k1, k2, k3, k4 = jax.random.split(key, 4)
    params = init_params(k1, channel=C, K=K, H=H, W=W, dim=dim,
                         depth1=depth1, depth2=depth2, depth3=depth3,
                         heads=heads, dim_head=dim_head, mlp_dim=mlp_dim)

    x = jax.random.normal(k2, (N, C, H, W), F32)
    ct = 0.1 * jax.random.normal(k3, (1, N, dim), F32)
    adj = ((jax.random.uniform(k4, (N, N)) > 0.5).astype(F32)
           + jnp.eye(N, dtype=F32))

    fwd = jax.jit(functools.partial(mixer_transformer_forward,
                                    K=K, heads=heads, dim_head=dim_head))
    out = jax.block_until_ready(fwd(params, x, ct, adj))
    assert out.shape == (N, dim), out.shape
    assert bool(jnp.all(jnp.isfinite(out)))
    print("KERNEL_OK")
</pallas_src>

<mosaic_0001>
module attributes {stable_mosaic.version = 11 : i64} {
  func.func @_fused_mixer_kernel(%arg0: memref<16x8x128xf32, #tpu.memory_space<vmem>>, %arg1: memref<16x128xf32, #tpu.memory_space<vmem>>, %arg2: memref<16x16xf32, #tpu.memory_space<vmem>>, %arg3: memref<2x384x128xbf16, #tpu.memory_space<vmem>>, %arg4: memref<2x1x128xf32, #tpu.memory_space<vmem>>, %arg5: memref<2x384x128xbf16, #tpu.memory_space<vmem>>, %arg6: memref<2x1x128xf32, #tpu.memory_space<vmem>>, %arg7: memref<2x128x128xbf16, #tpu.memory_space<vmem>>, %arg8: memref<2x1x128xf32, #tpu.memory_space<vmem>>, %arg9: memref<2x1x128xf32, #tpu.memory_space<vmem>>, %arg10: memref<2x1x128xf32, #tpu.memory_space<vmem>>, %arg11: memref<1024x128xbf16, #tpu.memory_space<vmem>>, %arg12: memref<1x128xf32, #tpu.memory_space<vmem>>, %arg13: memref<2x1x128xf32, #tpu.memory_space<vmem>>, %arg14: memref<2x1x128xf32, #tpu.memory_space<vmem>>, %arg15: memref<2x128x192xbf16, #tpu.memory_space<vmem>>, %arg16: memref<2x64x128xbf16, #tpu.memory_space<vmem>>, %arg17: memref<2x1x128xf32, #tpu.memory_space<vmem>>, %arg18: memref<2x1x128xf32, #tpu.memory_space<vmem>>, %arg19: memref<2x1x128xf32, #tpu.memory_space<vmem>>, %arg20: memref<2x128x128xbf16, #tpu.memory_space<vmem>>, %arg21: memref<2x1x128xf32, #tpu.memory_space<vmem>>, %arg22: memref<2x128x128xbf16, #tpu.memory_space<vmem>>, %arg23: memref<2x1x128xf32, #tpu.memory_space<vmem>>, %arg24: memref<2x128x128xbf16, #tpu.memory_space<vmem>>, %arg25: memref<2x128x512xbf16, #tpu.memory_space<vmem>>, %arg26: memref<2x128x512xbf16, #tpu.memory_space<vmem>>, %arg27: memref<2x1x512xf32, #tpu.memory_space<vmem>>, %arg28: memref<16x128xf32, #tpu.memory_space<vmem>>, %arg29: memref<16x16x128xf32, #tpu.memory_space<vmem>>, %arg30: memref<128x384xbf16, #tpu.memory_space<vmem>>, %arg31: memref<16x64xf32, #tpu.memory_space<vmem>>) attributes {dimension_semantics = [], scalar_prefetch = 0 : i64, scratch_operands = 3 : i64, tpu.core_type = #tpu.core_type<tc>} {
    %cst = arith.constant 0.000000e+00 : f32
    %0 = vector.broadcast %cst : f32 to vector<16x1x128xf32>
    %c0 = arith.constant 0 : index
    %c0_0 = arith.constant 0 : index
    %c0_1 = arith.constant 0 : index
    %1 = vector.load %arg29[%c0, %c0_0, %c0_1] : memref<16x16x128xf32, #tpu.memory_space<vmem>>, vector<16x1x128xf32>
    tpu.vector_store %arg29[%c0, %c0_0, %c0_1], %0 {strides = array<i32>} : memref<16x16x128xf32, #tpu.memory_space<vmem>>, vector<16x1x128xf32>,
    %c0_2 = arith.constant 0 : index
    %c9 = arith.constant 9 : index
    %c0_3 = arith.constant 0 : index
    %2 = vector.load %arg29[%c0_2, %c9, %c0_3] : memref<16x16x128xf32, #tpu.memory_space<vmem>>, vector<16x1x128xf32>
    tpu.vector_store %arg29[%c0_2, %c9, %c0_3], %0 {strides = array<i32>} : memref<16x16x128xf32, #tpu.memory_space<vmem>>, vector<16x1x128xf32>,
    %c0_4 = arith.constant 0 : index
    %c0_5 = arith.constant 0 : index
    %c0_6 = arith.constant 0 : index
    %3 = vector.load %arg0[%c0_4, %c0_5, %c0_6] : memref<16x8x128xf32, #tpu.memory_space<vmem>>, vector<16x8x128xf32>
    %c0_7 = arith.constant 0 : index
    %c1 = arith.constant 1 : index
    %c0_8 = arith.constant 0 : index
    %4 = vector.load %arg29[%c0_7, %c1, %c0_8] : memref<16x16x128xf32, #tpu.memory_space<vmem>>, vector<16x8x128xf32>
    tpu.vector_store %arg29[%c0_7, %c1, %c0_8], %3 {strides = array<i32>} : memref<16x16x128xf32, #tpu.memory_space<vmem>>, vector<16x8x128xf32>,
    %c0_9 = arith.constant 0 : index
    %c0_10 = arith.constant 0 : index
    %c0_11 = arith.constant 0 : index
    %5 = vector.load %arg3[%c0_9, %c0_10, %c0_11] : memref<2x384x128xbf16, #tpu.memory_space<vmem>>, vector<1x384x128xbf16>
    %6 = vector.shape_cast %5 : vector<1x384x128xbf16> to vector<384x128xbf16>
    %c0_12 = arith.constant 0 : index
    %c0_13 = arith.constant 0 : index
    %c0_14 = arith.constant 0 : index
    %7 = vector.load %arg4[%c0_12, %c0_13, %c0_14] : memref<2x1x128xf32, #tpu.memory_space<vmem>>, vector<1x1x128xf32>
    %8 = vector.shape_cast %7 : vector<1x1x128xf32> to vector<1x128xf32>
    %c0_15 = arith.constant 0 : index
    %c0_16 = arith.constant 0 : index
    %c0_17 = arith.constant 0 : index
    %9 = vector.load %arg29[%c0_15, %c0_16, %c0_17] : memref<16x16x128xf32, #tpu.memory_space<vmem>>, vector<16x8x128xf32>
    %10 = vector.shape_cast %9 : vector<16x8x128xf32> to vector<128x128xf32>
    %11 = arith.truncf %10 : vector<128x128xf32> to vector<128x128xbf16>
    %c0_18 = arith.constant 0 : index
    %c0_19 = arith.constant 0 : index
    %12 = vector.load %arg30[%c0_18, %c0_19] : memref<128x384xbf16, #tpu.memory_space<vmem>>, vector<128x128xbf16>
    tpu.vector_store %arg30[%c0_18, %c0_19], %11 {strides = array<i32>} : memref<128x384xbf16, #tpu.memory_space<vmem>>, vector<128x128xbf16>,
    %c0_20 = arith.constant 0 : index
    %c1_21 = arith.constant 1 : index
    %c0_22 = arith.constant 0 : index
    %13 = vector.load %arg29[%c0_20, %c1_21, %c0_22] : memref<16x16x128xf32, #tpu.memory_space<vmem>>, vector<16x8x128xf32>
    %14 = vector.shape_cast %13 : vector<16x8x128xf32> to vector<128x128xf32>
    %15 = arith.truncf %14 : vector<128x128xf32> to vector<128x128xbf16>
    %c0_23 = arith.constant 0 : index
    %c128 = arith.constant 128 : index
    %16 = vector.load %arg30[%c0_23, %c128] : memref<128x384xbf16, #tpu.memory_space<vmem>>, vector<128x128xbf16>
    tpu.vector_store %arg30[%c0_23, %c128], %15 {strides = array<i32>} : memref<128x384xbf16, #tpu.memory_space<vmem>>, vector<128x128xbf16>,
    %c0_24 = arith.constant 0 : index
    %c2 = arith.constant 2 : index
    %c0_25 = arith.constant 0 : index
    %17 = vector.load %arg29[%c0_24, %c2, %c0_25] : memref<16x16x128xf32, #tpu.memory_space<vmem>>, vector<16x8x128xf32>
    %18 = vector.shape_cast %17 : vector<16x8x128xf32> to vector<128x128xf32>
    %19 = arith.truncf %18 : vector<128x128xf32> to vector<128x128xbf16>
    %c0_26 = arith.constant 0 : index
    %c256 = arith.constant 256 : index
    %20 = vector.load %arg30[%c0_26, %c256] : memref<128x384xbf16, #tpu.memory_space<vmem>>, vector<128x128xbf16>
    tpu.vector_store %arg30[%c0_26, %c256], %19 {strides = array<i32>} : memref<128x384xbf16, #tpu.memory_space<vmem>>, vector<128x128xbf16>,
    %c0_27 = arith.constant 0 : index
    %c0_28 = arith.constant 0 : index
    %21 = vector.load %arg30[%c0_27, %c0_28] : memref<128x384xbf16, #tpu.memory_space<vmem>>, vector<128x384xbf16>
    %cst_29 = arith.constant dense<0.000000e+00> : vector<128x128xf32>
    %22 = tpu.matmul %21, %6, %cst_29 {dimension_numbers = #tpu.dot_dimension_numbers<[1], [0], [0], [1], [0, 0, 1, 1], [], []>} : vector<128x384xbf16>, vector<384x128xbf16>, vector<128x128xf32> -> vector<128x128xf32>
    %23 = vector.broadcast %8 : vector<1x128xf32> to vector<128x128xf32>
    %24 = arith.addf %22, %23 : vector<128x128xf32>
    %cst_30 = arith.constant 5.000000e-01 : f32
    %25 = vector.broadcast %cst_30 : f32 to vector<128x128xf32>
    %26 = arith.mulf %25, %24 : vector<128x128xf32>
    %cst_31 = arith.constant 4.471500e-02 : f32
    %27 = vector.broadcast %cst_31 : f32 to vector<128x128xf32>
    %28 = arith.mulf %27, %24 : vector<128x128xf32>
    %29 = arith.mulf %28, %24 : vector<128x128xf32>
    %30 = arith.mulf %29, %24 : vector<128x128xf32>
    %31 = arith.addf %24, %30 : vector<128x128xf32>
    %cst_32 = arith.constant 0.797884583 : f32
    %32 = vector.broadcast %cst_32 : f32 to vector<128x128xf32>
    %33 = arith.mulf %32, %31 : vector<128x128xf32>
    %34 = math.tanh %33 : vector<128x128xf32>
    %cst_33 = arith.constant 1.000000e+00 : f32
    %35 = vector.broadcast %cst_33 : f32 to vector<128x128xf32>
    %36 = arith.addf %35, %34 : vector<128x128xf32>
    %37 = arith.mulf %26, %36 : vector<128x128xf32>
    %38 = vector.shape_cast %37 : vector<128x128xf32> to vector<16x8x128xf32>
    %c0_34 = arith.constant 0 : index
    %c1_35 = arith.constant 1 : index
    %c0_36 = arith.constant 0 : index
    %39 = vector.load %arg29[%c0_34, %c1_35, %c0_36] : memref<16x16x128xf32, #tpu.memory_space<vmem>>, vector<16x8x128xf32>
    tpu.vector_store %arg29[%c0_34, %c1_35, %c0_36], %38 {strides = array<i32>} : memref<16x16x128xf32, #tpu.memory_space<vmem>>, vector<16x8x128xf32>,
    %c0_37 = arith.constant 0 : index
    %c0_38 = arith.constant 0 : index
    %c0_39 = arith.constant 0 : index
    %40 = vector.load %arg5[%c0_37, %c0_38, %c0_39] : memref<2x384x128xbf16, #tpu.memory_space<vmem>>, vector<1x384x128xbf16>
    %41 = vector.shape_cast %40 : vector<1x384x128xbf16> to vector<384x128xbf16>
    %c0_40 = arith.constant 0 : index
    %c0_41 = arith.constant 0 : index
    %c0_42 = arith.constant 0 : index
    %42 = vector.load %arg6[%c0_40, %c0_41, %c0_42] : memref<2x1x128xf32, #tpu.memory_space<vmem>>, vector<1x1x128xf32>
    %43 = vector.shape_cast %42 : vector<1x1x128xf32> to vector<1x128xf32>
    %c0_43 = arith.constant 0 : index
    %c0_44 = arith.constant 0 : index
    %c0_45 = arith.constant 0 : index
    %44 = vector.load %arg29[%c0_43, %c0_44, %c0_45] : memref<16x16x128xf32, #tpu.memory_space<vmem>>, vector<16x8x128xf32>
    %45 = vector.shape_cast %44 : vector<16x8x128xf32> to vector<128x128xf32>
    %46 = arith.truncf %45 : vector<128x128xf32> to vector<128x128xbf16>
    %c0_46 = arith.constant 0 : index
    %c0_47 = arith.constant 0 : index
    %47 = vector.load %arg30[%c0_46, %c0_47] : memref<128x384xbf16, #tpu.memory_space<vmem>>, vector<128x128xbf16>
    tpu.vector_store %arg30[%c0_46, %c0_47], %46 {strides = array<i32>} : memref<128x384xbf16, #tpu.memory_space<vmem>>, vector<128x128xbf16>,
    %c0_48 = arith.constant 0 : index
    %c1_49 = arith.constant 1 : index
    %c0_50 = arith.constant 0 : index
    %48 = vector.load %arg29[%c0_48, %c1_49, %c0_50] : memref<16x16x128xf32, #tpu.memory_space<vmem>>, vector<16x8x128xf32>
    %49 = vector.shape_cast %48 : vector<16x8x128xf32> to vector<128x128xf32>
    %50 = arith.truncf %49 : vector<128x128xf32> to vector<128x128xbf16>
    %c0_51 = arith.constant 0 : index
    %c128_52 = arith.constant 128 : index
    %51 = vector.load %arg30[%c0_51, %c128_52] : memref<128x384xbf16, #tpu.memory_space<vmem>>, vector<128x128xbf16>
    tpu.vector_store %arg30[%c0_51, %c128_52], %50 {strides = array<i32>} : memref<128x384xbf16, #tpu.memory_space<vmem>>, vector<128x128xbf16>,
    %c0_53 = arith.constant 0 : index
    %c2_54 = arith.constant 2 : index
    %c0_55 = arith.constant 0 : index
    %52 = vector.load %arg29[%c0_53, %c2_54, %c0_55] : memref<16x16x128xf32, #tpu.memory_space<vmem>>, vector<16x8x128xf32>
    %53 = vector.shape_cast %52 : vector<16x8x128xf32> to vector<128x128xf32>
    %54 = arith.truncf %53 : vector<128x128xf32> to vector<128x128xbf16>
    %c0_56 = arith.constant 0 : index
    %c256_57 = arith.constant 256 : index
    %55 = vector.load %arg30[%c0_56, %c256_57] : memref<128x384xbf16, #tpu.memory_space<vmem>>, vector<128x128xbf16>
    tpu.vector_store %arg30[%c0_56, %c256_57], %54 {strides = array<i32>} : memref<128x384xbf16, #tpu.memory_space<vmem>>, vector<128x128xbf16>,
    %c0_58 = arith.constant 0 : index
    %c0_59 = arith.constant 0 : index
    %56 = vector.load %arg30[%c0_58, %c0_59] : memref<128x384xbf16, #tpu.memory_space<vmem>>, vector<128x384xbf16>
    %cst_60 = arith.constant dense<0.000000e+00> : vector<128x128xf32>
    %57 = tpu.matmul %56, %41, %cst_60 {dimension_numbers = #tpu.dot_dimension_numbers<[1], [0], [0], [1], [0, 0, 1, 1], [], []>} : vector<128x384xbf16>, vector<384x128xbf16>, vector<128x128xf32> -> vector<128x128xf32>
    %58 = vector.broadcast %43 : vector<1x128xf32> to vector<128x128xf32>
    %59 = arith.addf %57, %58 : vector<128x128xf32>
    %cst_61 = arith.constant 5.000000e-01 : f32
    %60 = vector.broadcast %cst_61 : f32 to vector<128x128xf32>
    %61 = arith.mulf %60, %59 : vector<128x128xf32>
    %cst_62 = arith.constant 4.471500e-02 : f32
    %62 = vector.broadcast %cst_62 : f32 to vector<128x128xf32>
    %63 = arith.mulf %62, %59 : vector<128x128xf32>
    %64 = arith.mulf %63, %59 : vector<128x128xf32>
    %65 = arith.mulf %64, %59 : vector<128x128xf32>
    %66 = arith.addf %59, %65 : vector<128x128xf32>
    %cst_63 = arith.constant 0.797884583 : f32
    %67 = vector.broadcast %cst_63 : f32 to vector<128x128xf32>
    %68 = arith.mulf %67, %66 : vector<128x128xf32>
    %69 = math.tanh %68 : vector<128x128xf32>
    %cst_64 = arith.constant 1.000000e+00 : f32
    %70 = vector.broadcast %cst_64 : f32 to vector<128x128xf32>
    %71 = arith.addf %70, %69 : vector<128x128xf32>
    %72 = arith.mulf %61, %71 : vector<128x128xf32>
    %73 = vector.shape_cast %3 : vector<16x8x128xf32> to vector<128x128xf32>
    %74 = arith.addf %72, %73 : vector<128x128xf32>
    %75 = arith.truncf %74 : vector<128x128xf32> to vector<128x128xbf16>
    %c0_65 = arith.constant 0 : index
    %c0_66 = arith.constant 0 : index
    %c0_67 = arith.constant 0 : index
    %76 = vector.load %arg7[%c0_65, %c0_66, %c0_67] : memref<2x128x128xbf16, #tpu.memory_space<vmem>>, vector<1x128x128xbf16>
    %77 = vector.shape_cast %76 : vector<1x128x128xbf16> to vector<128x128xbf16>
    %cst_68 = arith.constant dense<0.000000e+00> : vector<128x128xf32>
    %78 = tpu.matmul %75, %77, %cst_68 {dimension_numbers = #tpu.dot_dimension_numbers<[1], [0], [0], [1], [0, 0, 1, 1], [], []>} : vector<128x128xbf16>, vector<128x128xbf16>, vector<128x128xf32> -> vector<128x128xf32>
    %c0_69 = arith.constant 0 : index
    %c0_70 = arith.constant 0 : index
    %c0_71 = arith.constant 0 : index
    %79 = vector.load %arg8[%c0_69, %c0_70, %c0_71] : memref<2x1x128xf32, #tpu.memory_space<vmem>>, vector<1x1x128xf32>
    %80 = vector.shape_cast %79 : vector<1x1x128xf32> to vector<1x128xf32>
    %81 = vector.broadcast %80 : vector<1x128xf32> to vector<128x128xf32>
    %82 = arith.addf %78, %81 : vector<128x128xf32>
    %cst_72 = arith.constant 5.000000e-01 : f32
    %83 = vector.broadcast %cst_72 : f32 to vector<128x128xf32>
    %84 = arith.mulf %83, %82 : vector<128x128xf32>
    %cst_73 = arith.constant 4.471500e-02 : f32
    %85 = vector.broadcast %cst_73 : f32 to vector<128x128xf32>
    %86 = arith.mulf %85, %82 : vector<128x128xf32>
    %87 = arith.mulf %86, %82 : vector<128x128xf32>
    %88 = arith.mulf %87, %82 : vector<128x128xf32>
    %89 = arith.addf %82, %88 : vector<128x128xf32>
    %cst_74 = arith.constant 0.797884583 : f32
    %90 = vector.broadcast %cst_74 : f32 to vector<128x128xf32>
    %91 = arith.mulf %90, %89 : vector<128x128xf32>
    %92 = math.tanh %91 : vector<128x128xf32>
    %cst_75 = arith.constant 1.000000e+00 : f32
    %93 = vector.broadcast %cst_75 : f32 to vector<128x128xf32>
    %94 = arith.addf %93, %92 : vector<128x128xf32>
    %95 = arith.mulf %84, %94 : vector<128x128xf32>
    %c0_76 = arith.constant 0 : index
    %c0_77 = arith.constant 0 : index
    %c0_78 = arith.constant 0 : index
    %96 = vector.load %arg9[%c0_76, %c0_77, %c0_78] : memref<2x1x128xf32, #tpu.memory_space<vmem>>, vector<1x1x128xf32>
    %97 = vector.shape_cast %96 : vector<1x1x128xf32> to vector<1x128xf32>
    %98 = vector.broadcast %97 : vector<1x128xf32> to vector<128x128xf32>
    %99 = arith.mulf %95, %98 : vector<128x128xf32>
    %c0_79 = arith.constant 0 : index
    %c0_80 = arith.constant 0 : index
    %c0_81 = arith.constant 0 : index
    %100 = vector.load %arg10[%c0_79, %c0_80, %c0_81] : memref<2x1x128xf32, #tpu.memory_space<vmem>>, vector<1x1x128xf32>
    %101 = vector.shape_cast %100 : vector<1x1x128xf32> to vector<1x128xf32>
    %102 = vector.broadcast %101 : vector<1x128xf32> to vector<128x128xf32>
    %103 = arith.addf %99, %102 : vector<128x128xf32>
    %104 = vector.shape_cast %103 : vector<128x128xf32> to vector<16x8x128xf32>
    %c0_82 = arith.constant 0 : index
    %c1_83 = arith.constant 1 : index
    %c0_84 = arith.constant 0 : index
    %105 = vector.load %arg29[%c0_82, %c1_83, %c0_84] : memref<16x16x128xf32, #tpu.memory_space<vmem>>, vector<16x8x128xf32>
    tpu.vector_store %arg29[%c0_82, %c1_83, %c0_84], %104 {strides = array<i32>} : memref<16x16x128xf32, #tpu.memory_space<vmem>>, vector<16x8x128xf32>,
    %c1_85 = arith.constant 1 : index
    %c0_86 = arith.constant 0 : index
    %c0_87 = arith.constant 0 : index
    %106 = vector.load %arg3[%c1_85, %c0_86, %c0_87] : memref<2x384x128xbf16, #tpu.memory_space<vmem>>, vector<1x384x128xbf16>
    %107 = vector.shape_cast %106 : vector<1x384x128xbf16> to vector<384x128xbf16>
    %c1_88 = arith.constant 1 : index
    %c0_89 = arith.constant 0 : index
    %c0_90 = arith.constant 0 : index
    %108 = vector.load %arg4[%c1_88, %c0_89, %c0_90] : memref<2x1x128xf32, #tpu.memory_space<vmem>>, vector<1x1x128xf32>
    %109 = vector.shape_cast %108 : vector<1x1x128xf32> to vector<1x128xf32>
    %c0_91 = arith.constant 0 : index
    %c0_92 = arith.constant 0 : index
    %c0_93 = arith.constant 0 : index
    %110 = vector.load %arg29[%c0_91, %c0_92, %c0_93] : memref<16x16x128xf32, #tpu.memory_space<vmem>>, vector<16x8x128xf32>
    %111 = vector.shape_cast %110 : vector<16x8x128xf32> to vector<128x128xf32>
    %112 = arith.truncf %111 : vector<128x128xf32> to vector<128x128xbf16>
    %c0_94 = arith.constant 0 : index
    %c0_95 = arith.constant 0 : index
    %113 = vector.load %arg30[%c0_94, %c0_95] : memref<128x384xbf16, #tpu.memory_space<vmem>>, vector<128x128xbf16>
    tpu.vector_store %arg30[%c0_94, %c0_95], %112 {strides = array<i32>} : memref<128x384xbf16, #tpu.memory_space<vmem>>, vector<128x128xbf16>,
    %c0_96 = arith.constant 0 : index
    %c1_97 = arith.constant 1 : index
    %c0_98 = arith.constant 0 : index
    %114 = vector.load %arg29[%c0_96, %c1_97, %c0_98] : memref<16x16x128xf32, #tpu.memory_space<vmem>>, vector<16x8x128xf32>
    %115 = vector.shape_cast %114 : vector<16x8x128xf32> to vector<128x128xf32>
    %116 = arith.truncf %115 : vector<128x128xf32> to vector<128x128xbf16>
    %c0_99 = arith.constant 0 : index
    %c128_100 = arith.constant 128 : index
    %117 = vector.load %arg30[%c0_99, %c128_100] : memref<128x384xbf16, #tpu.memory_space<vmem>>, vector<128x128xbf16>
    tpu.vector_store %arg30[%c0_99, %c128_100], %116 {strides = array<i32>} : memref<128x384xbf16, #tpu.memory_space<vmem>>, vector<128x128xbf16>,
    %c0_101 = arith.constant 0 : index
    %c2_102 = arith.constant 2 : index
    %c0_103 = arith.constant 0 : index
    %118 = vector.load %arg29[%c0_101, %c2_102, %c0_103] : memref<16x16x128xf32, #tpu.memory_space<vmem>>, vector<16x8x128xf32>
    %119 = vector.shape_cast %118 : vector<16x8x128xf32> to vector<128x128xf32>
    %120 = arith.truncf %119 : vector<128x128xf32> to vector<128x128xbf16>
    %c0_104 = arith.constant 0 : index
    %c256_105 = arith.constant 256 : index
    %121 = vector.load %arg30[%c0_104, %c256_105] : memref<128x384xbf16, #tpu.memory_space<vmem>>, vector<128x128xbf16>
    tpu.vector_store %arg30[%c0_104, %c256_105], %120 {strides = array<i32>} : memref<128x384xbf16, #tpu.memory_space<vmem>>, vector<128x128xbf16>,
    %c0_106 = arith.constant 0 : index
    %c0_107 = arith.constant 0 : index
    %122 = vector.load %arg30[%c0_106, %c0_107] : memref<128x384xbf16, #tpu.memory_space<vmem>>, vector<128x384xbf16>
    %cst_108 = arith.constant dense<0.000000e+00> : vector<128x128xf32>
    %123 = tpu.matmul %122, %107, %cst_108 {dimension_numbers = #tpu.dot_dimension_numbers<[1], [0], [0], [1], [0, 0, 1, 1], [], []>} : vector<128x384xbf16>, vector<384x128xbf16>, vector<128x128xf32> -> vector<128x128xf32>
    %124 = vector.broadcast %109 : vector<1x128xf32> to vector<128x128xf32>
    %125 = arith.addf %123, %124 : vector<128x128xf32>
    %cst_109 = arith.constant 5.000000e-01 : f32
    %126 = vector.broadcast %cst_109 : f32 to vector<128x128xf32>
    %127 = arith.mulf %126, %125 : vector<128x128xf32>
    %cst_110 = arith.constant 4.471500e-02 : f32
    %128 = vector.broadcast %cst_110 : f32 to vector<128x128xf32>
    %129 = arith.mulf %128, %125 : vector<128x128xf32>
    %130 = arith.mulf %129, %125 : vector<128x128xf32>
    %131 = arith.mulf %130, %125 : vector<128x128xf32>
    %132 = arith.addf %125, %131 : vector<128x128xf32>
    %cst_111 = arith.constant 0.797884583 : f32
    %133 = vector.broadcast %cst_111 : f32 to vector<128x128xf32>
    %134 = arith.mulf %133, %132 : vector<128x128xf32>
    %135 = math.tanh %134 : vector<128x128xf32>
    %cst_112 = arith.constant 1.000000e+00 : f32
    %136 = vector.broadcast %cst_112 : f32 to vector<128x128xf32>
    %137 = arith.addf %136, %135 : vector<128x128xf32>
    %138 = arith.mulf %127, %137 : vector<128x128xf32>
    %139 = vector.shape_cast %138 : vector<128x128xf32> to vector<16x8x128xf32>
    %c0_113 = arith.constant 0 : index
    %c1_114 = arith.constant 1 : index
    %c0_115 = arith.constant 0 : index
    %140 = vector.load %arg29[%c0_113, %c1_114, %c0_115] : memref<16x16x128xf32, #tpu.memory_space<vmem>>, vector<16x8x128xf32>
    tpu.vector_store %arg29[%c0_113, %c1_114, %c0_115], %139 {strides = array<i32>} : memref<16x16x128xf32, #tpu.memory_space<vmem>>, vector<16x8x128xf32>,
    %c1_116 = arith.constant 1 : index
    %c0_117 = arith.constant 0 : index
    %c0_118 = arith.constant 0 : index
    %141 = vector.load %arg5[%c1_116, %c0_117, %c0_118] : memref<2x384x128xbf16, #tpu.memory_space<vmem>>, vector<1x384x128xbf16>
    %142 = vector.shape_cast %141 : vector<1x384x128xbf16> to vector<384x128xbf16>
    %c1_119 = arith.constant 1 : index
    %c0_120 = arith.constant 0 : index
    %c0_121 = arith.constant 0 : index
    %143 = vector.load %arg6[%c1_119, %c0_120, %c0_121] : memref<2x1x128xf32, #tpu.memory_space<vmem>>, vector<1x1x128xf32>
    %144 = vector.shape_cast %143 : vector<1x1x128xf32> to vector<1x128xf32>
    %c0_122 = arith.constant 0 : index
    %c0_123 = arith.constant 0 : index
    %c0_124 = arith.constant 0 : index
    %145 = vector.load %arg29[%c0_122, %c0_123, %c0_124] : memref<16x16x128xf32, #tpu.memory_space<vmem>>, vector<16x8x128xf32>
    %146 = vector.shape_cast %145 : vector<16x8x128xf32> to vector<128x128xf32>
    %147 = arith.truncf %146 : vector<128x128xf32> to vector<128x128xbf16>
    %c0_125 = arith.constant 0 : index
    %c0_126 = arith.constant 0 : index
    %148 = vector.load %arg30[%c0_125, %c0_126] : memref<128x384xbf16, #tpu.memory_space<vmem>>, vector<128x128xbf16>
    tpu.vector_store %arg30[%c0_125, %c0_126], %147 {strides = array<i32>} : memref<128x384xbf16, #tpu.memory_space<vmem>>, vector<128x128xbf16>,
    %c0_127 = arith.constant 0 : index
    %c1_128 = arith.constant 1 : index
    %c0_129 = arith.constant 0 : index
    %149 = vector.load %arg29[%c0_127, %c1_128, %c0_129] : memref<16x16x128xf32, #tpu.memory_space<vmem>>, vector<16x8x128xf32>
    %150 = vector.shape_cast %149 : vector<16x8x128xf32> to vector<128x128xf32>
    %151 = arith.truncf %150 : vector<128x128xf32> to vector<128x128xbf16>
    %c0_130 = arith.constant 0 : index
    %c128_131 = arith.constant 128 : index
    %152 = vector.load %arg30[%c0_130, %c128_131] : memref<128x384xbf16, #tpu.memory_space<vmem>>, vector<128x128xbf16>
    tpu.vector_store %arg30[%c0_130, %c128_131], %151 {strides = array<i32>} : memref<128x384xbf16, #tpu.memory_space<vmem>>, vector<128x128xbf16>,
    %c0_132 = arith.constant 0 : index
    %c2_133 = arith.constant 2 : index
    %c0_134 = arith.constant 0 : index
    %153 = vector.load %arg29[%c0_132, %c2_133, %c0_134] : memref<16x16x128xf32, #tpu.memory_space<vmem>>, vector<16x8x128xf32>
    %154 = vector.shape_cast %153 : vector<16x8x128xf32> to vector<128x128xf32>
    %155 = arith.truncf %154 : vector<128x128xf32> to vector<128x128xbf16>
    %c0_135 = arith.constant 0 : index
    %c256_136 = arith.constant 256 : index
    %156 = vector.load %arg30[%c0_135, %c256_136] : memref<128x384xbf16, #tpu.memory_space<vmem>>, vector<128x128xbf16>
    tpu.vector_store %arg30[%c0_135, %c256_136], %155 {strides = array<i32>} : memref<128x384xbf16, #tpu.memory_space<vmem>>, vector<128x128xbf16>,
    %c0_137 = arith.constant 0 : index
    %c0_138 = arith.constant 0 : index
    %157 = vector.load %arg30[%c0_137, %c0_138] : memref<128x384xbf16, #tpu.memory_space<vmem>>, vector<128x384xbf16>
    %cst_139 = arith.constant dense<0.000000e+00> : vector<128x128xf32>
    %158 = tpu.matmul %157, %142, %cst_139 {dimension_numbers = #tpu.dot_dimension_numbers<[1], [0], [0], [1], [0, 0, 1, 1], [], []>} : vector<128x384xbf16>, vector<384x128xbf16>, vector<128x128xf32> -> vector<128x128xf32>
    %159 = vector.broadcast %144 : vector<1x128xf32> to vector<128x128xf32>
    %160 = arith.addf %158, %159 : vector<128x128xf32>
    %cst_140 = arith.constant 5.000000e-01 : f32
    %161 = vector.broadcast %cst_140 : f32 to vector<128x128xf32>
    %162 = arith.mulf %161, %160 : vector<128x128xf32>
    %cst_141 = arith.constant 4.471500e-02 : f32
    %163 = vector.broadcast %cst_141 : f32 to vector<128x128xf32>
    %164 = arith.mulf %163, %160 : vector<128x128xf32>
    %165 = arith.mulf %164, %160 : vector<128x128xf32>
    %166 = arith.mulf %165, %160 : vector<128x128xf32>
    %167 = arith.addf %160, %166 : vector<128x128xf32>
    %cst_142 = arith.constant 0.797884583 : f32
    %168 = vector.broadcast %cst_142 : f32 to vector<128x128xf32>
    %169 = arith.mulf %168, %167 : vector<128x128xf32>
    %170 = math.tanh %169 : vector<128x128xf32>
    %cst_143 = arith.constant 1.000000e+00 : f32
    %171 = vector.broadcast %cst_143 : f32 to vector<128x128xf32>
    %172 = arith.addf %171, %170 : vector<128x128xf32>
    %173 = arith.mulf %162, %172 : vector<128x128xf32>
    %174 = vector.shape_cast %104 : vector<16x8x128xf32> to vector<128x128xf32>
    %175 = arith.addf %173, %174 : vector<128x128xf32>
    %176 = arith.truncf %175 : vector<128x128xf32> to vector<128x128xbf16>
    %c1_144 = arith.constant 1 : index
    %c0_145 = arith.constant 0 : index
    %c0_146 = arith.constant 0 : index
    %177 = vector.load %arg7[%c1_144, %c0_145, %c0_146] : memref<2x128x128xbf16, #tpu.memory_space<vmem>>, vector<1x128x128xbf16>
    %178 = vector.shape_cast %177 : vector<1x128x128xbf16> to vector<128x128xbf16>
    %cst_147 = arith.constant dense<0.000000e+00> : vector<128x128xf32>
    %179 = tpu.matmul %176, %178, %cst_147 {dimension_numbers = #tpu.dot_dimension_numbers<[1], [0], [0], [1], [0, 0, 1, 1], [], []>} : vector<128x128xbf16>, vector<128x128xbf16>, vector<128x128xf32> -> vector<128x128xf32>
    %c1_148 = arith.constant 1 : index
    %c0_149 = arith.constant 0 : index
    %c0_150 = arith.constant 0 : index
    %180 = vector.load %arg8[%c1_148, %c0_149, %c0_150] : memref<2x1x128xf32, #tpu.memory_space<vmem>>, vector<1x1x128xf32>
    %181 = vector.shape_cast %180 : vector<1x1x128xf32> to vector<1x128xf32>
    %182 = vector.broadcast %181 : vector<1x128xf32> to vector<128x128xf32>
    %183 = arith.addf %179, %182 : vector<128x128xf32>
    %cst_151 = arith.constant 5.000000e-01 : f32
    %184 = vector.broadcast %cst_151 : f32 to vector<128x128xf32>
    %185 = arith.mulf %184, %183 : vector<128x128xf32>
    %cst_152 = arith.constant 4.471500e-02 : f32
    %186 = vector.broadcast %cst_152 : f32 to vector<128x128xf32>
    %187 = arith.mulf %186, %183 : vector<128x128xf32>
    %188 = arith.mulf %187, %183 : vector<128x128xf32>
    %189 = arith.mulf %188, %183 : vector<128x128xf32>
    %190 = arith.addf %183, %189 : vector<128x128xf32>
    %cst_153 = arith.constant 0.797884583 : f32
    %191 = vector.broadcast %cst_153 : f32 to vector<128x128xf32>
    %192 = arith.mulf %191, %190 : vector<128x128xf32>
    %193 = math.tanh %192 : vector<128x128xf32>
    %cst_154 = arith.constant 1.000000e+00 : f32
    %194 = vector.broadcast %cst_154 : f32 to vector<128x128xf32>
    %195 = arith.addf %194, %193 : vector<128x128xf32>
    %196 = arith.mulf %185, %195 : vector<128x128xf32>
    %c1_155 = arith.constant 1 : index
    %c0_156 = arith.constant 0 : index
    %c0_157 = arith.constant 0 : index
    %197 = vector.load %arg9[%c1_155, %c0_156, %c0_157] : memref<2x1x128xf32, #tpu.memory_space<vmem>>, vector<1x1x128xf32>
    %198 = vector.shape_cast %197 : vector<1x1x128xf32> to vector<1x128xf32>
    %199 = vector.broadcast %198 : vector<1x128xf32> to vector<128x128xf32>
    %200 = arith.mulf %196, %199 : vector<128x128xf32>
    %c1_158 = arith.constant 1 : index
    %c0_159 = arith.constant 0 : index
    %c0_160 = arith.constant 0 : index
    %201 = vector.load %arg10[%c1_158, %c0_159, %c0_160] : memref<2x1x128xf32, #tpu.memory_space<vmem>>, vector<1x1x128xf32>
    %202 = vector.shape_cast %201 : vector<1x1x128xf32> to vector<1x128xf32>
    %203 = vector.broadcast %202 : vector<1x128xf32> to vector<128x128xf32>
    %204 = arith.addf %200, %203 : vector<128x128xf32>
    %205 = vector.shape_cast %204 : vector<128x128xf32> to vector<16x8x128xf32>
    %206 = vector.shape_cast %205 : vector<16x8x128xf32> to vector<16x1024xf32>
    %207 = arith.truncf %206 : vector<16x1024xf32> to vector<16x1024xbf16>
    %c0_161 = arith.constant 0 : index
    %c0_162 = arith.constant 0 : index
    %208 = vector.load %arg11[%c0_161, %c0_162] : memref<1024x128xbf16, #tpu.memory_space<vmem>>, vector<1024x128xbf16>
    %cst_163 = arith.constant dense<0.000000e+00> : vector<16x128xf32>
    %209 = tpu.matmul %207, %208, %cst_163 {dimension_numbers = #tpu.dot_dimension_numbers<[1], [0], [0], [1], [0, 0, 1, 1], [], []>} : vector<16x1024xbf16>, vector<1024x128xbf16>, vector<16x128xf32> -> vector<16x128xf32>
    %c0_164 = arith.constant 0 : index
    %c0_165 = arith.constant 0 : index
    %210 = vector.load %arg12[%c0_164, %c0_165] : memref<1x128xf32, #tpu.memory_space<vmem>>, vector<1x128xf32>
    %211 = vector.broadcast %210 : vector<1x128xf32> to vector<16x128xf32>
    %212 = arith.addf %209, %211 : vector<16x128xf32>
    %c0_166 = arith.constant 0 : index
    %c0_167 = arith.constant 0 : index
    %213 = vector.load %arg1[%c0_166, %c0_167] : memref<16x128xf32, #tpu.memory_space<vmem>>, vector<16x128xf32>
    %214 = arith.addf %212, %213 : vector<16x128xf32>
    %c0_168 = arith.constant 0 : index
    %c0_169 = arith.constant 0 : index
    %c0_170 = arith.constant 0 : index
    %215 = vector.load %arg13[%c0_168, %c0_169, %c0_170] : memref<2x1x128xf32, #tpu.memory_space<vmem>>, vector<1x1x128xf32>
    %216 = vector.shape_cast %215 : vector<1x1x128xf32> to vector<1x128xf32>
    %c0_171 = arith.constant 0 : index
    %c0_172 = arith.constant 0 : index
    %c0_173 = arith.constant 0 : index
    %217 = vector.load %arg14[%c0_171, %c0_172, %c0_173] : memref<2x1x128xf32, #tpu.memory_space<vmem>>, vector<1x1x128xf32>
    %218 = vector.shape_cast %217 : vector<1x1x128xf32> to vector<1x128xf32>
    %cst_174 = arith.constant dense<0.000000e+00> : vector<16xf32>
    %219 = vector.multi_reduction <add>, %214, %cst_174 [1] : vector<16x128xf32> to vector<16xf32>
    %220 = vector.shape_cast %219 : vector<16xf32> to vector<16x1xf32>
    %cst_175 = arith.constant 1.280000e+02 : f32
    %221 = vector.broadcast %cst_175 : f32 to vector<16x1xf32>
    %222 = arith.divf %220, %221 : vector<16x1xf32>
    %223 = vector.broadcast %222 : vector<16x1xf32> to vector<16x128xf32>
    %224 = arith.subf %214, %223 : vector<16x128xf32>
    %225 = arith.mulf %224, %224 : vector<16x128xf32>
    %cst_176 = arith.constant dense<0.000000e+00> : vector<16xf32>
    %226 = vector.multi_reduction <add>, %225, %cst_176 [1] : vector<16x128xf32> to vector<16xf32>
    %227 = vector.shape_cast %226 : vector<16xf32> to vector<16x1xf32>
    %cst_177 = arith.constant 1.280000e+02 : f32
    %228 = vector.broadcast %cst_177 : f32 to vector<16x1xf32>
    %229 = arith.divf %227, %228 : vector<16x1xf32>
    %cst_178 = arith.constant 9.99999974E-6 : f32
    %230 = vector.broadcast %cst_178 : f32 to vector<16x1xf32>
    %231 = arith.addf %229, %230 : vector<16x1xf32>
    %232 = math.rsqrt %231 : vector<16x1xf32>
    %233 = vector.broadcast %232 : vector<16x1xf32> to vector<16x128xf32>
    %234 = arith.mulf %224, %233 : vector<16x128xf32>
    %235 = vector.broadcast %216 : vector<1x128xf32> to vector<16x128xf32>
    %236 = arith.mulf %234, %235 : vector<16x128xf32>
    %237 = vector.broadcast %218 : vector<1x128xf32> to vector<16x128xf32>
    %238 = arith.addf %236, %237 : vector<16x128xf32>
    %239 = arith.truncf %238 : vector<16x128xf32> to vector<16x128xbf16>
    %c0_179 = arith.constant 0 : index
    %c0_180 = arith.constant 0 : index
    %c0_181 = arith.constant 0 : index
    %240 = vector.load %arg15[%c0_179, %c0_180, %c0_181] : memref<2x128x192xbf16, #tpu.memory_space<vmem>>, vector<1x128x192xbf16>
    %241 = vector.shape_cast %240 : vector<1x128x192xbf16> to vector<128x192xbf16>
    %cst_182 = arith.constant dense<0.000000e+00> : vector<16x192xf32>
    %242 = tpu.matmul %239, %241, %cst_182 {dimension_numbers = #tpu.dot_dimension_numbers<[1], [0], [0], [1], [0, 0, 1, 1], [], []>} : vector<16x128xbf16>, vector<128x192xbf16>, vector<16x192xf32> -> vector<16x192xf32>
    %243 = vector.extract_strided_slice %242 {offsets = [0, 0], sizes = [16, 32], strides = [1, 1]} : vector<16x192xf32> to vector<16x32xf32>
    %244 = arith.truncf %243 : vector<16x32xf32> to vector<16x32xbf16>
    %245 = vector.extract_strided_slice %242 {offsets = [0, 64], sizes = [16, 32], strides = [1, 1]} : vector<16x192xf32> to vector<16x32xf32>
    %246 = arith.truncf %245 : vector<16x32xf32> to vector<16x32xbf16>
    %247 = vector.extract_strided_slice %242 {offsets = [0, 128], sizes = [16, 32], strides = [1, 1]} : vector<16x192xf32> to vector<16x32xf32>
    %248 = arith.truncf %247 : vector<16x32xf32> to vector<16x32xbf16>
    %cst_183 = arith.constant dense<0.000000e+00> : vector<16x16xf32>
    %249 = tpu.matmul %244, %246, %cst_183 {dimension_numbers = #tpu.dot_dimension_numbers<[1], [1], [0], [0], [0, 0, 1, 0], [], []>} : vector<16x32xbf16>, vector<16x32xbf16>, vector<16x16xf32> -> vector<16x16xf32>
    %cst_184 = arith.constant 0.176776692 : f32
    %250 = vector.broadcast %cst_184 : f32 to vector<16x16xf32>
    %251 = arith.mulf %249, %250 : vector<16x16xf32>
    %cst_185 = arith.constant dense<0xFF800000> : vector<16xf32>
    %252 = vector.multi_reduction <maximumf>, %251, %cst_185 [1] : vector<16x16xf32> to vector<16xf32>
    %253 = vector.shape_cast %252 : vector<16xf32> to vector<16x1xf32>
    %254 = vector.broadcast %253 : vector<16x1xf32> to vector<16x16xf32>
    %255 = arith.subf %251, %254 : vector<16x16xf32>
    %256 = math.exp %255 : vector<16x16xf32>
    %cst_186 = arith.constant dense<0.000000e+00> : vector<16xf32>
    %257 = vector.multi_reduction <add>, %256, %cst_186 [1] : vector<16x16xf32> to vector<16xf32>
    %258 = vector.shape_cast %257 : vector<16xf32> to vector<16x1xf32>
    %259 = vector.broadcast %258 : vector<16x1xf32> to vector<16x16xf32>
    %260 = arith.divf %256, %259 : vector<16x16xf32>
    %261 = arith.truncf %260 : vector<16x16xf32> to vector<16x16xbf16>
    %cst_187 = arith.constant dense<0.000000e+00> : vector<16x32xf32>
    %262 = tpu.matmul %261, %248, %cst_187 {dimension_numbers = #tpu.dot_dimension_numbers<[1], [0], [0], [1], [0, 0, 1, 1], [], []>} : vector<16x16xbf16>, vector<16x32xbf16>, vector<16x32xf32> -> vector<16x32xf32>
    %c0_188 = arith.constant 0 : index
    %c0_189 = arith.constant 0 : index
    %263 = vector.load %arg31[%c0_188, %c0_189] : memref<16x64xf32, #tpu.memory_space<vmem>>, vector<16x32xf32>
    tpu.vector_store %arg31[%c0_188, %c0_189], %262 {strides = array<i32>} : memref<16x64xf32, #tpu.memory_space<vmem>>, vector<16x32xf32>,
    %264 = vector.extract_strided_slice %242 {offsets = [0, 32], sizes = [16, 32], strides = [1, 1]} : vector<16x192xf32> to vector<16x32xf32>
    %265 = arith.truncf %264 : vector<16x32xf32> to vector<16x32xbf16>
    %266 = vector.extract_strided_slice %242 {offsets = [0, 96], sizes = [16, 32], strides = [1, 1]} : vector<16x192xf32> to vector<16x32xf32>
    %267 = arith.truncf %266 : vector<16x32xf32> to vector<16x32xbf16>
    %268 = vector.extract_strided_slice %242 {offsets = [0, 160], sizes = [16, 32], strides = [1, 1]} : vector<16x192xf32> to vector<16x32xf32>
    %269 = arith.truncf %268 : vector<16x32xf32> to vector<16x32xbf16>
    %cst_190 = arith.constant dense<0.000000e+00> : vector<16x16xf32>
    %270 = tpu.matmul %265, %267, %cst_190 {dimension_numbers = #tpu.dot_dimension_numbers<[1], [1], [0], [0], [0, 0, 1, 0], [], []>} : vector<16x32xbf16>, vector<16x32xbf16>, vector<16x16xf32> -> vector<16x16xf32>
    %cst_191 = arith.constant 0.176776692 : f32
    %271 = vector.broadcast %cst_191 : f32 to vector<16x16xf32>
    %272 = arith.mulf %270, %271 : vector<16x16xf32>
    %cst_192 = arith.constant dense<0xFF800000> : vector<16xf32>
    %273 = vector.multi_reduction <maximumf>, %272, %cst_192 [1] : vector<16x16xf32> to vector<16xf32>
    %274 = vector.shape_cast %273 : vector<16xf32> to vector<16x1xf32>
    %275 = vector.broadcast %274 : vector<16x1xf32> to vector<16x16xf32>
    %276 = arith.subf %272, %275 : vector<16x16xf32>
    %277 = math.exp %276 : vector<16x16xf32>
    %cst_193 = arith.constant dense<0.000000e+00> : vector<16xf32>
    %278 = vector.multi_reduction <add>, %277, %cst_193 [1] : vector<16x16xf32> to vector<16xf32>
    %279 = vector.shape_cast %278 : vector<16xf32> to vector<16x1xf32>
    %280 = vector.broadcast %279 : vector<16x1xf32> to vector<16x16xf32>
    %281 = arith.divf %277, %280 : vector<16x16xf32>
    %282 = arith.truncf %281 : vector<16x16xf32> to vector<16x16xbf16>
    %cst_194 = arith.constant dense<0.000000e+00> : vector<16x32xf32>
    %283 = tpu.matmul %282, %269, %cst_194 {dimension_numbers = #tpu.dot_dimension_numbers<[1], [0], [0], [1], [0, 0, 1, 1], [], []>} : vector<16x16xbf16>, vector<16x32xbf16>, vector<16x32xf32> -> vector<16x32xf32>
    %c0_195 = arith.constant 0 : index
    %c32 = arith.constant 32 : index
    %284 = vector.load %arg31[%c0_195, %c32] : memref<16x64xf32, #tpu.memory_space<vmem>>, vector<16x32xf32>
    tpu.vector_store %arg31[%c0_195, %c32], %283 {strides = array<i32>} : memref<16x64xf32, #tpu.memory_space<vmem>>, vector<16x32xf32>,
    %c0_196 = arith.constant 0 : index
    %c0_197 = arith.constant 0 : index
    %285 = vector.load %arg31[%c0_196, %c0_197] : memref<16x64xf32, #tpu.memory_space<vmem>>, vector<16x64xf32>
    %286 = arith.truncf %285 : vector<16x64xf32> to vector<16x64xbf16>
    %c0_198 = arith.constant 0 : index
    %c0_199 = arith.constant 0 : index
    %c0_200 = arith.constant 0 : index
    %287 = vector.load %arg16[%c0_198, %c0_199, %c0_200] : memref<2x64x128xbf16, #tpu.memory_space<vmem>>, vector<1x64x128xbf16>
    %288 = vector.shape_cast %287 : vector<1x64x128xbf16> to vector<64x128xbf16>
    %cst_201 = arith.constant dense<0.000000e+00> : vector<16x128xf32>
    %289 = tpu.matmul %286, %288, %cst_201 {dimension_numbers = #tpu.dot_dimension_numbers<[1], [0], [0], [1], [0, 0, 1, 1], [], []>} : vector<16x64xbf16>, vector<64x128xbf16>, vector<16x128xf32> -> vector<16x128xf32>
    %c0_202 = arith.constant 0 : index
    %c0_203 = arith.constant 0 : index
    %c0_204 = arith.constant 0 : index
    %290 = vector.load %arg17[%c0_202, %c0_203, %c0_204] : memref<2x1x128xf32, #tpu.memory_space<vmem>>, vector<1x1x128xf32>
    %291 = vector.shape_cast %290 : vector<1x1x128xf32> to vector<1x128xf32>
    %292 = vector.broadcast %291 : vector<1x128xf32> to vector<16x128xf32>
    %293 = arith.addf %289, %292 : vector<16x128xf32>
    %294 = arith.addf %293, %214 : vector<16x128xf32>
    %c0_205 = arith.constant 0 : index
    %c0_206 = arith.constant 0 : index
    %c0_207 = arith.constant 0 : index
    %295 = vector.load %arg18[%c0_205, %c0_206, %c0_207] : memref<2x1x128xf32, #tpu.memory_space<vmem>>, vector<1x1x128xf32>
    %296 = vector.shape_cast %295 : vector<1x1x128xf32> to vector<1x128xf32>
    %c0_208 = arith.constant 0 : index
    %c0_209 = arith.constant 0 : index
    %c0_210 = arith.constant 0 : index
    %297 = vector.load %arg19[%c0_208, %c0_209, %c0_210] : memref<2x1x128xf32, #tpu.memory_space<vmem>>, vector<1x1x128xf32>
    %298 = vector.shape_cast %297 : vector<1x1x128xf32> to vector<1x128xf32>
    %cst_211 = arith.constant dense<0.000000e+00> : vector<16xf32>
    %299 = vector.multi_reduction <add>, %294, %cst_211 [1] : vector<16x128xf32> to vector<16xf32>
    %300 = vector.shape_cast %299 : vector<16xf32> to vector<16x1xf32>
    %cst_212 = arith.constant 1.280000e+02 : f32
    %301 = vector.broadcast %cst_212 : f32 to vector<16x1xf32>
    %302 = arith.divf %300, %301 : vector<16x1xf32>
    %303 = vector.broadcast %302 : vector<16x1xf32> to vector<16x128xf32>
    %304 = arith.subf %294, %303 : vector<16x128xf32>
    %305 = arith.mulf %304, %304 : vector<16x128xf32>
    %cst_213 = arith.constant dense<0.000000e+00> : vector<16xf32>
    %306 = vector.multi_reduction <add>, %305, %cst_213 [1] : vector<16x128xf32> to vector<16xf32>
    %307 = vector.shape_cast %306 : vector<16xf32> to vector<16x1xf32>
    %cst_214 = arith.constant 1.280000e+02 : f32
    %308 = vector.broadcast %cst_214 : f32 to vector<16x1xf32>
    %309 = arith.divf %307, %308 : vector<16x1xf32>
    %cst_215 = arith.constant 9.99999974E-6 : f32
    %310 = vector.broadcast %cst_215 : f32 to vector<16x1xf32>
    %311 = arith.addf %309, %310 : vector<16x1xf32>
    %312 = math.rsqrt %311 : vector<16x1xf32>
    %313 = vector.broadcast %312 : vector<16x1xf32> to vector<16x128xf32>
    %314 = arith.mulf %304, %313 : vector<16x128xf32>
    %315 = vector.broadcast %296 : vector<1x128xf32> to vector<16x128xf32>
    %316 = arith.mulf %314, %315 : vector<16x128xf32>
    %317 = vector.broadcast %298 : vector<1x128xf32> to vector<16x128xf32>
    %318 = arith.addf %316, %317 : vector<16x128xf32>
    %319 = arith.truncf %318 : vector<16x128xf32> to vector<16x128xbf16>
    %c0_216 = arith.constant 0 : index
    %c0_217 = arith.constant 0 : index
    %c0_218 = arith.constant 0 : index
    %320 = vector.load %arg20[%c0_216, %c0_217, %c0_218] : memref<2x128x128xbf16, #tpu.memory_space<vmem>>, vector<1x128x128xbf16>
    %321 = vector.shape_cast %320 : vector<1x128x128xbf16> to vector<128x128xbf16>
    %cst_219 = arith.constant dense<0.000000e+00> : vector<16x128xf32>
    %322 = tpu.matmul %319, %321, %cst_219 {dimension_numbers = #tpu.dot_dimension_numbers<[1], [0], [0], [1], [0, 0, 1, 1], [], []>} : vector<16x128xbf16>, vector<128x128xbf16>, vector<16x128xf32> -> vector<16x128xf32>
    %c0_220 = arith.constant 0 : index
    %c0_221 = arith.constant 0 : index
    %c0_222 = arith.constant 0 : index
    %323 = vector.load %arg21[%c0_220, %c0_221, %c0_222] : memref<2x1x128xf32, #tpu.memory_space<vmem>>, vector<1x1x128xf32>
    %324 = vector.shape_cast %323 : vector<1x1x128xf32> to vector<1x128xf32>
    %325 = vector.broadcast %324 : vector<1x128xf32> to vector<16x128xf32>
    %326 = arith.addf %322, %325 : vector<16x128xf32>
    %cst_223 = arith.constant 5.000000e-01 : f32
    %327 = vector.broadcast %cst_223 : f32 to vector<16x128xf32>
    %328 = arith.mulf %327, %326 : vector<16x128xf32>
    %cst_224 = arith.constant 4.471500e-02 : f32
    %329 = vector.broadcast %cst_224 : f32 to vector<16x128xf32>
    %330 = arith.mulf %329, %326 : vector<16x128xf32>
    %331 = arith.mulf %330, %326 : vector<16x128xf32>
    %332 = arith.mulf %331, %326 : vector<16x128xf32>
    %333 = arith.addf %326, %332 : vector<16x128xf32>
    %cst_225 = arith.constant 0.797884583 : f32
    %334 = vector.broadcast %cst_225 : f32 to vector<16x128xf32>
    %335 = arith.mulf %334, %333 : vector<16x128xf32>
    %336 = math.tanh %335 : vector<16x128xf32>
    %cst_226 = arith.constant 1.000000e+00 : f32
    %337 = vector.broadcast %cst_226 : f32 to vector<16x128xf32>
    %338 = arith.addf %337, %336 : vector<16x128xf32>
    %339 = arith.mulf %328, %338 : vector<16x128xf32>
    %340 = arith.truncf %339 : vector<16x128xf32> to vector<16x128xbf16>
    %c0_227 = arith.constant 0 : index
    %c0_228 = arith.constant 0 : index
    %c0_229 = arith.constant 0 : index
    %341 = vector.load %arg22[%c0_227, %c0_228, %c0_229] : memref<2x128x128xbf16, #tpu.memory_space<vmem>>, vector<1x128x128xbf16>
    %342 = vector.shape_cast %341 : vector<1x128x128xbf16> to vector<128x128xbf16>
    %cst_230 = arith.constant dense<0.000000e+00> : vector<16x128xf32>
    %343 = tpu.matmul %340, %342, %cst_230 {dimension_numbers = #tpu.dot_dimension_numbers<[1], [0], [0], [1], [0, 0, 1, 1], [], []>} : vector<16x128xbf16>, vector<128x128xbf16>, vector<16x128xf32> -> vector<16x128xf32>
    %c0_231 = arith.constant 0 : index
    %c0_232 = arith.constant 0 : index
    %c0_233 = arith.constant 0 : index
    %344 = vector.load %arg23[%c0_231, %c0_232, %c0_233] : memref<2x1x128xf32, #tpu.memory_space<vmem>>, vector<1x1x128xf32>
    %345 = vector.shape_cast %344 : vector<1x1x128xf32> to vector<1x128xf32>
    %346 = vector.broadcast %345 : vector<1x128xf32> to vector<16x128xf32>
    %347 = arith.addf %343, %346 : vector<16x128xf32>
    %348 = arith.addf %347, %294 : vector<16x128xf32>
    %c1_234 = arith.constant 1 : index
    %c0_235 = arith.constant 0 : index
    %c0_236 = arith.constant 0 : index
    %349 = vector.load %arg13[%c1_234, %c0_235, %c0_236] : memref<2x1x128xf32, #tpu.memory_space<vmem>>, vector<1x1x128xf32>
    %350 = vector.shape_cast %349 : vector<1x1x128xf32> to vector<1x128xf32>
    %c1_237 = arith.constant 1 : index
    %c0_238 = arith.constant 0 : index
    %c0_239 = arith.constant 0 : index
    %351 = vector.load %arg14[%c1_237, %c0_238, %c0_239] : memref<2x1x128xf32, #tpu.memory_space<vmem>>, vector<1x1x128xf32>
    %352 = vector.shape_cast %351 : vector<1x1x128xf32> to vector<1x128xf32>
    %cst_240 = arith.constant dense<0.000000e+00> : vector<16xf32>
    %353 = vector.multi_reduction <add>, %348, %cst_240 [1] : vector<16x128xf32> to vector<16xf32>
    %354 = vector.shape_cast %353 : vector<16xf32> to vector<16x1xf32>
    %cst_241 = arith.constant 1.280000e+02 : f32
    %355 = vector.broadcast %cst_241 : f32 to vector<16x1xf32>
    %356 = arith.divf %354, %355 : vector<16x1xf32>
    %357 = vector.broadcast %356 : vector<16x1xf32> to vector<16x128xf32>
    %358 = arith.subf %348, %357 : vector<16x128xf32>
    %359 = arith.mulf %358, %358 : vector<16x128xf32>
    %cst_242 = arith.constant dense<0.000000e+00> : vector<16xf32>
    %360 = vector.multi_reduction <add>, %359, %cst_242 [1] : vector<16x128xf32> to vector<16xf32>
    %361 = vector.shape_cast %360 : vector<16xf32> to vector<16x1xf32>
    %cst_243 = arith.constant 1.280000e+02 : f32
    %362 = vector.broadcast %cst_243 : f32 to vector<16x1xf32>
    %363 = arith.divf %361, %362 : vector<16x1xf32>
    %cst_244 = arith.constant 9.99999974E-6 : f32
    %364 = vector.broadcast %cst_244 : f32 to vector<16x1xf32>
    %365 = arith.addf %363, %364 : vector<16x1xf32>
    %366 = math.rsqrt %365 : vector<16x1xf32>
    %367 = vector.broadcast %366 : vector<16x1xf32> to vector<16x128xf32>
    %368 = arith.mulf %358, %367 : vector<16x128xf32>
    %369 = vector.broadcast %350 : vector<1x128xf32> to vector<16x128xf32>
    %370 = arith.mulf %368, %369 : vector<16x128xf32>
    %371 = vector.broadcast %352 : vector<1x128xf32> to vector<16x128xf32>
    %372 = arith.addf %370, %371 : vector<16x128xf32>
    %373 = arith.truncf %372 : vector<16x128xf32> to vector<16x128xbf16>
    %c1_245 = arith.constant 1 : index
    %c0_246 = arith.constant 0 : index
    %c0_247 = arith.constant 0 : index
    %374 = vector.load %arg15[%c1_245, %c0_246, %c0_247] : memref<2x128x192xbf16, #tpu.memory_space<vmem>>, vector<1x128x192xbf16>
    %375 = vector.shape_cast %374 : vector<1x128x192xbf16> to vector<128x192xbf16>
    %cst_248 = arith.constant dense<0.000000e+00> : vector<16x192xf32>
    %376 = tpu.matmul %373, %375, %cst_248 {dimension_numbers = #tpu.dot_dimension_numbers<[1], [0], [0], [1], [0, 0, 1, 1], [], []>} : vector<16x128xbf16>, vector<128x192xbf16>, vector<16x192xf32> -> vector<16x192xf32>
    %377 = vector.extract_strided_slice %376 {offsets = [0, 0], sizes = [16, 32], strides = [1, 1]} : vector<16x192xf32> to vector<16x32xf32>
    %378 = arith.truncf %377 : vector<16x32xf32> to vector<16x32xbf16>
    %379 = vector.extract_strided_slice %376 {offsets = [0, 64], sizes = [16, 32], strides = [1, 1]} : vector<16x192xf32> to vector<16x32xf32>
    %380 = arith.truncf %379 : vector<16x32xf32> to vector<16x32xbf16>
    %381 = vector.extract_strided_slice %376 {offsets = [0, 128], sizes = [16, 32], strides = [1, 1]} : vector<16x192xf32> to vector<16x32xf32>
    %382 = arith.truncf %381 : vector<16x32xf32> to vector<16x32xbf16>
    %cst_249 = arith.constant dense<0.000000e+00> : vector<16x16xf32>
    %383 = tpu.matmul %378, %380, %cst_249 {dimension_numbers = #tpu.dot_dimension_numbers<[1], [1], [0], [0], [0, 0, 1, 0], [], []>} : vector<16x32xbf16>, vector<16x32xbf16>, vector<16x16xf32> -> vector<16x16xf32>
    %cst_250 = arith.constant 0.176776692 : f32
    %384 = vector.broadcast %cst_250 : f32 to vector<16x16xf32>
    %385 = arith.mulf %383, %384 : vector<16x16xf32>
    %cst_251 = arith.constant dense<0xFF800000> : vector<16xf32>
    %386 = vector.multi_reduction <maximumf>, %385, %cst_251 [1] : vector<16x16xf32> to vector<16xf32>
    %387 = vector.shape_cast %386 : vector<16xf32> to vector<16x1xf32>
    %388 = vector.broadcast %387 : vector<16x1xf32> to vector<16x16xf32>
    %389 = arith.subf %385, %388 : vector<16x16xf32>
    %390 = math.exp %389 : vector<16x16xf32>
    %cst_252 = arith.constant dense<0.000000e+00> : vector<16xf32>
    %391 = vector.multi_reduction <add>, %390, %cst_252 [1] : vector<16x16xf32> to vector<16xf32>
    %392 = vector.shape_cast %391 : vector<16xf32> to vector<16x1xf32>
    %393 = vector.broadcast %392 : vector<16x1xf32> to vector<16x16xf32>
    %394 = arith.divf %390, %393 : vector<16x16xf32>
    %395 = arith.truncf %394 : vector<16x16xf32> to vector<16x16xbf16>
    %cst_253 = arith.constant dense<0.000000e+00> : vector<16x32xf32>
    %396 = tpu.matmul %395, %382, %cst_253 {dimension_numbers = #tpu.dot_dimension_numbers<[1], [0], [0], [1], [0, 0, 1, 1], [], []>} : vector<16x16xbf16>, vector<16x32xbf16>, vector<16x32xf32> -> vector<16x32xf32>
    %c0_254 = arith.constant 0 : index
    %c0_255 = arith.constant 0 : index
    %397 = vector.load %arg31[%c0_254, %c0_255] : memref<16x64xf32, #tpu.memory_space<vmem>>, vector<16x32xf32>
    tpu.vector_store %arg31[%c0_254, %c0_255], %396 {strides = array<i32>} : memref<16x64xf32, #tpu.memory_space<vmem>>, vector<16x32xf32>,
    %398 = vector.extract_strided_slice %376 {offsets = [0, 32], sizes = [16, 32], strides = [1, 1]} : vector<16x192xf32> to vector<16x32xf32>
    %399 = arith.truncf %398 : vector<16x32xf32> to vector<16x32xbf16>
    %400 = vector.extract_strided_slice %376 {offsets = [0, 96], sizes = [16, 32], strides = [1, 1]} : vector<16x192xf32> to vector<16x32xf32>
    %401 = arith.truncf %400 : vector<16x32xf32> to vector<16x32xbf16>
    %402 = vector.extract_strided_slice %376 {offsets = [0, 160], sizes = [16, 32], strides = [1, 1]} : vector<16x192xf32> to vector<16x32xf32>
    %403 = arith.truncf %402 : vector<16x32xf32> to vector<16x32xbf16>
    %cst_256 = arith.constant dense<0.000000e+00> : vector<16x16xf32>
    %404 = tpu.matmul %399, %401, %cst_256 {dimension_numbers = #tpu.dot_dimension_numbers<[1], [1], [0], [0], [0, 0, 1, 0], [], []>} : vector<16x32xbf16>, vector<16x32xbf16>, vector<16x16xf32> -> vector<16x16xf32>
    %cst_257 = arith.constant 0.176776692 : f32
    %405 = vector.broadcast %cst_257 : f32 to vector<16x16xf32>
    %406 = arith.mulf %404, %405 : vector<16x16xf32>
    %cst_258 = arith.constant dense<0xFF800000> : vector<16xf32>
    %407 = vector.multi_reduction <maximumf>, %406, %cst_258 [1] : vector<16x16xf32> to vector<16xf32>
    %408 = vector.shape_cast %407 : vector<16xf32> to vector<16x1xf32>
    %409 = vector.broadcast %408 : vector<16x1xf32> to vector<16x16xf32>
    %410 = arith.subf %406, %409 : vector<16x16xf32>
    %411 = math.exp %410 : vector<16x16xf32>
    %cst_259 = arith.constant dense<0.000000e+00> : vector<16xf32>
    %412 = vector.multi_reduction <add>, %411, %cst_259 [1] : vector<16x16xf32> to vector<16xf32>
    %413 = vector.shape_cast %412 : vector<16xf32> to vector<16x1xf32>
    %414 = vector.broadcast %413 : vector<16x1xf32> to vector<16x16xf32>
    %415 = arith.divf %411, %414 : vector<16x16xf32>
    %416 = arith.truncf %415 : vector<16x16xf32> to vector<16x16xbf16>
    %cst_260 = arith.constant dense<0.000000e+00> : vector<16x32xf32>
    %417 = tpu.matmul %416, %403, %cst_260 {dimension_numbers = #tpu.dot_dimension_numbers<[1], [0], [0], [1], [0, 0, 1, 1], [], []>} : vector<16x16xbf16>, vector<16x32xbf16>, vector<16x32xf32> -> vector<16x32xf32>
    %c0_261 = arith.constant 0 : index
    %c32_262 = arith.constant 32 : index
    %418 = vector.load %arg31[%c0_261, %c32_262] : memref<16x64xf32, #tpu.memory_space<vmem>>, vector<16x32xf32>
    tpu.vector_store %arg31[%c0_261, %c32_262], %417 {strides = array<i32>} : memref<16x64xf32, #tpu.memory_space<vmem>>, vector<16x32xf32>,
    %c0_263 = arith.constant 0 : index
    %c0_264 = arith.constant 0 : index
    %419 = vector.load %arg31[%c0_263, %c0_264] : memref<16x64xf32, #tpu.memory_space<vmem>>, vector<16x64xf32>
    %420 = arith.truncf %419 : vector<16x64xf32> to vector<16x64xbf16>
    %c1_265 = arith.constant 1 : index
    %c0_266 = arith.constant 0 : index
    %c0_267 = arith.constant 0 : index
    %421 = vector.load %arg16[%c1_265, %c0_266, %c0_267] : memref<2x64x128xbf16, #tpu.memory_space<vmem>>, vector<1x64x128xbf16>
    %422 = vector.shape_cast %421 : vector<1x64x128xbf16> to vector<64x128xbf16>
    %cst_268 = arith.constant dense<0.000000e+00> : vector<16x128xf32>
    %423 = tpu.matmul %420, %422, %cst_268 {dimension_numbers = #tpu.dot_dimension_numbers<[1], [0], [0], [1], [0, 0, 1, 1], [], []>} : vector<16x64xbf16>, vector<64x128xbf16>, vector<16x128xf32> -> vector<16x128xf32>
    %c1_269 = arith.constant 1 : index
    %c0_270 = arith.constant 0 : index
    %c0_271 = arith.constant 0 : index
    %424 = vector.load %arg17[%c1_269, %c0_270, %c0_271] : memref<2x1x128xf32, #tpu.memory_space<vmem>>, vector<1x1x128xf32>
    %425 = vector.shape_cast %424 : vector<1x1x128xf32> to vector<1x128xf32>
    %426 = vector.broadcast %425 : vector<1x128xf32> to vector<16x128xf32>
    %427 = arith.addf %423, %426 : vector<16x128xf32>
    %428 = arith.addf %427, %348 : vector<16x128xf32>
    %c1_272 = arith.constant 1 : index
    %c0_273 = arith.constant 0 : index
    %c0_274 = arith.constant 0 : index
    %429 = vector.load %arg18[%c1_272, %c0_273, %c0_274] : memref<2x1x128xf32, #tpu.memory_space<vmem>>, vector<1x1x128xf32>
    %430 = vector.shape_cast %429 : vector<1x1x128xf32> to vector<1x128xf32>
    %c1_275 = arith.constant 1 : index
    %c0_276 = arith.constant 0 : index
    %c0_277 = arith.constant 0 : index
    %431 = vector.load %arg19[%c1_275, %c0_276, %c0_277] : memref<2x1x128xf32, #tpu.memory_space<vmem>>, vector<1x1x128xf32>
    %432 = vector.shape_cast %431 : vector<1x1x128xf32> to vector<1x128xf32>
    %cst_278 = arith.constant dense<0.000000e+00> : vector<16xf32>
    %433 = vector.multi_reduction <add>, %428, %cst_278 [1] : vector<16x128xf32> to vector<16xf32>
    %434 = vector.shape_cast %433 : vector<16xf32> to vector<16x1xf32>
    %cst_279 = arith.constant 1.280000e+02 : f32
    %435 = vector.broadcast %cst_279 : f32 to vector<16x1xf32>
    %436 = arith.divf %434, %435 : vector<16x1xf32>
    %437 = vector.broadcast %436 : vector<16x1xf32> to vector<16x128xf32>
    %438 = arith.subf %428, %437 : vector<16x128xf32>
    %439 = arith.mulf %438, %438 : vector<16x128xf32>
    %cst_280 = arith.constant dense<0.000000e+00> : vector<16xf32>
    %440 = vector.multi_reduction <add>, %439, %cst_280 [1] : vector<16x128xf32> to vector<16xf32>
    %441 = vector.shape_cast %440 : vector<16xf32> to vector<16x1xf32>
    %cst_281 = arith.constant 1.280000e+02 : f32
    %442 = vector.broadcast %cst_281 : f32 to vector<16x1xf32>
    %443 = arith.divf %441, %442 : vector<16x1xf32>
    %cst_282 = arith.constant 9.99999974E-6 : f32
    %444 = vector.broadcast %cst_282 : f32 to vector<16x1xf32>
    %445 = arith.addf %443, %444 : vector<16x1xf32>
    %446 = math.rsqrt %445 : vector<16x1xf32>
    %447 = vector.broadcast %446 : vector<16x1xf32> to vector<16x128xf32>
    %448 = arith.mulf %438, %447 : vector<16x128xf32>
    %449 = vector.broadcast %430 : vector<1x128xf32> to vector<16x128xf32>
    %450 = arith.mulf %448, %449 : vector<16x128xf32>
    %451 = vector.broadcast %432 : vector<1x128xf32> to vector<16x128xf32>
    %452 = arith.addf %450, %451 : vector<16x128xf32>
    %453 = arith.truncf %452 : vector<16x128xf32> to vector<16x128xbf16>
    %c1_283 = arith.constant 1 : index
    %c0_284 = arith.constant 0 : index
    %c0_285 = arith.constant 0 : index
    %454 = vector.load %arg20[%c1_283, %c0_284, %c0_285] : memref<2x128x128xbf16, #tpu.memory_space<vmem>>, vector<1x128x128xbf16>
    %455 = vector.shape_cast %454 : vector<1x128x128xbf16> to vector<128x128xbf16>
    %cst_286 = arith.constant dense<0.000000e+00> : vector<16x128xf32>
    %456 = tpu.matmul %453, %455, %cst_286 {dimension_numbers = #tpu.dot_dimension_numbers<[1], [0], [0], [1], [0, 0, 1, 1], [], []>} : vector<16x128xbf16>, vector<128x128xbf16>, vector<16x128xf32> -> vector<16x128xf32>
    %c1_287 = arith.constant 1 : index
    %c0_288 = arith.constant 0 : index
    %c0_289 = arith.constant 0 : index
    %457 = vector.load %arg21[%c1_287, %c0_288, %c0_289] : memref<2x1x128xf32, #tpu.memory_space<vmem>>, vector<1x1x128xf32>
    %458 = vector.shape_cast %457 : vector<1x1x128xf32> to vector<1x128xf32>
    %459 = vector.broadcast %458 : vector<1x128xf32> to vector<16x128xf32>
    %460 = arith.addf %456, %459 : vector<16x128xf32>
    %cst_290 = arith.constant 5.000000e-01 : f32
    %461 = vector.broadcast %cst_290 : f32 to vector<16x128xf32>
    %462 = arith.mulf %461, %460 : vector<16x128xf32>
    %cst_291 = arith.constant 4.471500e-02 : f32
    %463 = vector.broadcast %cst_291 : f32 to vector<16x128xf32>
    %464 = arith.mulf %463, %460 : vector<16x128xf32>
    %465 = arith.mulf %464, %460 : vector<16x128xf32>
    %466 = arith.mulf %465, %460 : vector<16x128xf32>
    %467 = arith.addf %460, %466 : vector<16x128xf32>
    %cst_292 = arith.constant 0.797884583 : f32
    %468 = vector.broadcast %cst_292 : f32 to vector<16x128xf32>
    %469 = arith.mulf %468, %467 : vector<16x128xf32>
    %470 = math.tanh %469 : vector<16x128xf32>
    %cst_293 = arith.constant 1.000000e+00 : f32
    %471 = vector.broadcast %cst_293 : f32 to vector<16x128xf32>
    %472 = arith.addf %471, %470 : vector<16x128xf32>
    %473 = arith.mulf %462, %472 : vector<16x128xf32>
    %474 = arith.truncf %473 : vector<16x128xf32> to vector<16x128xbf16>
    %c1_294 = arith.constant 1 : index
    %c0_295 = arith.constant 0 : index
    %c0_296 = arith.constant 0 : index
    %475 = vector.load %arg22[%c1_294, %c0_295, %c0_296] : memref<2x128x128xbf16, #tpu.memory_space<vmem>>, vector<1x128x128xbf16>
    %476 = vector.shape_cast %475 : vector<1x128x128xbf16> to vector<128x128xbf16>
    %cst_297 = arith.constant dense<0.000000e+00> : vector<16x128xf32>
    %477 = tpu.matmul %474, %476, %cst_297 {dimension_numbers = #tpu.dot_dimension_numbers<[1], [0], [0], [1], [0, 0, 1, 1], [], []>} : vector<16x128xbf16>, vector<128x128xbf16>, vector<16x128xf32> -> vector<16x128xf32>
    %c1_298 = arith.constant 1 : index
    %c0_299 = arith.constant 0 : index
    %c0_300 = arith.constant 0 : index
    %478 = vector.load %arg23[%c1_298, %c0_299, %c0_300] : memref<2x1x128xf32, #tpu.memory_space<vmem>>, vector<1x1x128xf32>
    %479 = vector.shape_cast %478 : vector<1x1x128xf32> to vector<1x128xf32>
    %480 = vector.broadcast %479 : vector<1x128xf32> to vector<16x128xf32>
    %481 = arith.addf %477, %480 : vector<16x128xf32>
    %482 = arith.addf %481, %428 : vector<16x128xf32>
    %c0_301 = arith.constant 0 : index
    %c0_302 = arith.constant 0 : index
    %483 = vector.load %arg2[%c0_301, %c0_302] : memref<16x16xf32, #tpu.memory_space<vmem>>, vector<16x16xf32>
    %cst_303 = arith.constant dense<0.000000e+00> : vector<16xf32>
    %484 = vector.multi_reduction <add>, %483, %cst_303 [1] : vector<16x16xf32> to vector<16xf32>
    %485 = vector.shape_cast %484 : vector<16xf32> to vector<16x1xf32>
    %486 = tpu.reciprocal %485 {approx = true} : vector<16x1xf32> -> vector<16x1xf32>
    %487 = vector.broadcast %486 : vector<16x1xf32> to vector<16x16xf32>
    %488 = arith.mulf %483, %487 : vector<16x16xf32>
    %489 = arith.truncf %488 : vector<16x16xf32> to vector<16x16xbf16>
    %490 = arith.truncf %482 : vector<16x128xf32> to vector<16x128xbf16>
    %cst_304 = arith.constant dense<0.000000e+00> : vector<16x128xf32>
    %491 = tpu.matmul %489, %490, %cst_304 {dimension_numbers = #tpu.dot_dimension_numbers<[1], [0], [0], [1], [0, 0, 1, 1], [], []>} : vector<16x16xbf16>, vector<16x128xbf16>, vector<16x128xf32> -> vector<16x128xf32>
    %492 = arith.truncf %491 : vector<16x128xf32> to vector<16x128xbf16>
    %c0_305 = arith.constant 0 : index
    %c0_306 = arith.constant 0 : index
    %c0_307 = arith.constant 0 : index
    %493 = vector.load %arg24[%c0_305, %c0_306, %c0_307] : memref<2x128x128xbf16, #tpu.memory_space<vmem>>, vector<1x128x128xbf16>
    %494 = vector.shape_cast %493 : vector<1x128x128xbf16> to vector<128x128xbf16>
    %cst_308 = arith.constant dense<0.000000e+00> : vector<16x128xf32>
    %495 = tpu.matmul %492, %494, %cst_308 {dimension_numbers = #tpu.dot_dimension_numbers<[1], [0], [0], [1], [0, 0, 1, 1], [], []>} : vector<16x128xbf16>, vector<128x128xbf16>, vector<16x128xf32> -> vector<16x128xf32>
    %cst_309 = arith.constant 0.000000e+00 : f32
    %496 = vector.broadcast %cst_309 : f32 to vector<16x128xf32>
    %497 = arith.maximumf %495, %496 : vector<16x128xf32>
    %498 = arith.mulf %497, %497 : vector<16x128xf32>
    %cst_310 = arith.constant dense<0.000000e+00> : vector<16xf32>
    %499 = vector.multi_reduction <add>, %498, %cst_310 [1] : vector<16x128xf32> to vector<16xf32>
    %500 = vector.shape_cast %499 : vector<16xf32> to vector<16x1xf32>
    %cst_311 = arith.constant 1.000000e-24 : f32
    %501 = vector.broadcast %cst_311 : f32 to vector<16x1xf32>
    %502 = arith.maximumf %500, %501 : vector<16x1xf32>
    %503 = math.rsqrt %502 : vector<16x1xf32>
    %504 = vector.broadcast %503 : vector<16x1xf32> to vector<16x128xf32>
    %505 = arith.mulf %497, %504 : vector<16x128xf32>
    %506 = arith.truncf %505 : vector<16x128xf32> to vector<16x128xbf16>
    %cst_312 = arith.constant dense<0.000000e+00> : vector<16x128xf32>
    %507 = tpu.matmul %489, %506, %cst_312 {dimension_numbers = #tpu.dot_dimension_numbers<[1], [0], [0], [1], [0, 0, 1, 1], [], []>} : vector<16x16xbf16>, vector<16x128xbf16>, vector<16x128xf32> -> vector<16x128xf32>
    %508 = arith.truncf %507 : vector<16x128xf32> to vector<16x128xbf16>
    %c1_313 = arith.constant 1 : index
    %c0_314 = arith.constant 0 : index
    %c0_315 = arith.constant 0 : index
    %509 = vector.load %arg24[%c1_313, %c0_314, %c0_315] : memref<2x128x128xbf16, #tpu.memory_space<vmem>>, vector<1x128x128xbf16>
    %510 = vector.shape_cast %509 : vector<1x128x128xbf16> to vector<128x128xbf16>
    %cst_316 = arith.constant dense<0.000000e+00> : vector<16x128xf32>
    %511 = tpu.matmul %508, %510, %cst_316 {dimension_numbers = #tpu.dot_dimension_numbers<[1], [0], [0], [1], [0, 0, 1, 1], [], []>} : vector<16x128xbf16>, vector<128x128xbf16>, vector<16x128xf32> -> vector<16x128xf32>
    %cst_317 = arith.constant 0.000000e+00 : f32
    %512 = vector.broadcast %cst_317 : f32 to vector<16x128xf32>
    %513 = arith.maximumf %511, %512 : vector<16x128xf32>
    %514 = arith.mulf %513, %513 : vector<16x128xf32>
    %cst_318 = arith.constant dense<0.000000e+00> : vector<16xf32>
    %515 = vector.multi_reduction <add>, %514, %cst_318 [1] : vector<16x128xf32> to vector<16xf32>
    %516 = vector.shape_cast %515 : vector<16xf32> to vector<16x1xf32>
    %cst_319 = arith.constant 1.000000e-24 : f32
    %517 = vector.broadcast %cst_319 : f32 to vector<16x1xf32>
    %518 = arith.maximumf %516, %517 : vector<16x1xf32>
    %519 = math.rsqrt %518 : vector<16x1xf32>
    %520 = vector.broadcast %519 : vector<16x1xf32> to vector<16x128xf32>
    %521 = arith.mulf %513, %520 : vector<16x128xf32>
    %cst_320 = arith.constant 0.000000e+00 : f32
    %522 = vector.broadcast %cst_320 : f32 to vector<16x128xf32>
    %c0_321 = arith.constant 0 : index
    %c0_322 = arith.constant 0 : index
    %c0_323 = arith.constant 0 : index
    %523 = vector.load %arg25[%c0_321, %c0_322, %c0_323] : memref<2x128x512xbf16, #tpu.memory_space<vmem>>, vector<1x128x512xbf16>
    %524 = vector.shape_cast %523 : vector<1x128x512xbf16> to vector<128x512xbf16>
    %c0_324 = arith.constant 0 : index
    %c0_325 = arith.constant 0 : index
    %c0_326 = arith.constant 0 : index
    %525 = vector.load %arg26[%c0_324, %c0_325, %c0_326] : memref<2x128x512xbf16, #tpu.memory_space<vmem>>, vector<1x128x512xbf16>
    %526 = vector.shape_cast %525 : vector<1x128x512xbf16> to vector<128x512xbf16>
    %c0_327 = arith.constant 0 : index
    %c0_328 = arith.constant 0 : index
    %c0_329 = arith.constant 0 : index
    %527 = vector.load %arg27[%c0_327, %c0_328, %c0_329] : memref<2x1x512xf32, #tpu.memory_space<vmem>>, vector<1x1x512xf32>
    %528 = vector.shape_cast %527 : vector<1x1x512xf32> to vector<1x512xf32>
    %529 = arith.truncf %505 : vector<16x128xf32> to vector<16x128xbf16>
    %cst_330 = arith.constant dense<0.000000e+00> : vector<16x512xf32>
    %530 = tpu.matmul %529, %524, %cst_330 {dimension_numbers = #tpu.dot_dimension_numbers<[1], [0], [0], [1], [0, 0, 1, 1], [], []>} : vector<16x128xbf16>, vector<128x512xbf16>, vector<16x512xf32> -> vector<16x512xf32>
    %531 = arith.truncf %522 : vector<16x128xf32> to vector<16x128xbf16>
    %cst_331 = arith.constant dense<0.000000e+00> : vector<16x512xf32>
    %532 = tpu.matmul %531, %526, %cst_331 {dimension_numbers = #tpu.dot_dimension_numbers<[1], [0], [0], [1], [0, 0, 1, 1], [], []>} : vector<16x128xbf16>, vector<128x512xbf16>, vector<16x512xf32> -> vector<16x512xf32>
    %533 = arith.addf %530, %532 : vector<16x512xf32>
    %534 = vector.broadcast %528 : vector<1x512xf32> to vector<16x512xf32>
    %535 = arith.addf %533, %534 : vector<16x512xf32>
    %536 = vector.extract_strided_slice %535 {offsets = [0, 0], sizes = [16, 128], strides = [1, 1]} : vector<16x512xf32> to vector<16x128xf32>
    %537 = arith.negf %536 : vector<16x128xf32>
    %538 = math.exp %537 : vector<16x128xf32>
    %cst_332 = arith.constant 1.000000e+00 : f32
    %539 = vector.broadcast %cst_332 : f32 to vector<16x128xf32>
    %540 = arith.addf %539, %538 : vector<16x128xf32>
    %541 = arith.divf %539, %540 : vector<16x128xf32>
    %542 = vector.extract_strided_slice %535 {offsets = [0, 128], sizes = [16, 128], strides = [1, 1]} : vector<16x512xf32> to vector<16x128xf32>
    %543 = arith.negf %542 : vector<16x128xf32>
    %544 = math.exp %543 : vector<16x128xf32>
    %cst_333 = arith.constant 1.000000e+00 : f32
    %545 = vector.broadcast %cst_333 : f32 to vector<16x128xf32>
    %546 = arith.addf %545, %544 : vector<16x128xf32>
    %547 = arith.divf %545, %546 : vector<16x128xf32>
    %548 = vector.extract_strided_slice %535 {offsets = [0, 256], sizes = [16, 128], strides = [1, 1]} : vector<16x512xf32> to vector<16x128xf32>
    %549 = math.tanh %548 : vector<16x128xf32>
    %550 = vector.extract_strided_slice %535 {offsets = [0, 384], sizes = [16, 128], strides = [1, 1]} : vector<16x512xf32> to vector<16x128xf32>
    %551 = arith.negf %550 : vector<16x128xf32>
    %552 = math.exp %551 : vector<16x128xf32>
    %cst_334 = arith.constant 1.000000e+00 : f32
    %553 = vector.broadcast %cst_334 : f32 to vector<16x128xf32>
    %554 = arith.addf %553, %552 : vector<16x128xf32>
    %555 = arith.divf %553, %554 : vector<16x128xf32>
    %556 = arith.mulf %547, %522 : vector<16x128xf32>
    %557 = arith.mulf %541, %549 : vector<16x128xf32>
    %558 = arith.addf %556, %557 : vector<16x128xf32>
    %559 = math.tanh %558 : vector<16x128xf32>
    %560 = arith.mulf %555, %559 : vector<16x128xf32>
    %c1_335 = arith.constant 1 : index
    %c0_336 = arith.constant 0 : index
    %c0_337 = arith.constant 0 : index
    %561 = vector.load %arg25[%c1_335, %c0_336, %c0_337] : memref<2x128x512xbf16, #tpu.memory_space<vmem>>, vector<1x128x512xbf16>
    %562 = vector.shape_cast %561 : vector<1x128x512xbf16> to vector<128x512xbf16>
    %c1_338 = arith.constant 1 : index
    %c0_339 = arith.constant 0 : index
    %c0_340 = arith.constant 0 : index
    %563 = vector.load %arg26[%c1_338, %c0_339, %c0_340] : memref<2x128x512xbf16, #tpu.memory_space<vmem>>, vector<1x128x512xbf16>
    %564 = vector.shape_cast %563 : vector<1x128x512xbf16> to vector<128x512xbf16>
    %c1_341 = arith.constant 1 : index
    %c0_342 = arith.constant 0 : index
    %c0_343 = arith.constant 0 : index
    %565 = vector.load %arg27[%c1_341, %c0_342, %c0_343] : memref<2x1x512xf32, #tpu.memory_space<vmem>>, vector<1x1x512xf32>
    %566 = vector.shape_cast %565 : vector<1x1x512xf32> to vector<1x512xf32>
    %567 = arith.truncf %560 : vector<16x128xf32> to vector<16x128xbf16>
    %cst_344 = arith.constant dense<0.000000e+00> : vector<16x512xf32>
    %568 = tpu.matmul %567, %562, %cst_344 {dimension_numbers = #tpu.dot_dimension_numbers<[1], [0], [0], [1], [0, 0, 1, 1], [], []>} : vector<16x128xbf16>, vector<128x512xbf16>, vector<16x512xf32> -> vector<16x512xf32>
    %569 = arith.truncf %522 : vector<16x128xf32> to vector<16x128xbf16>
    %cst_345 = arith.constant dense<0.000000e+00> : vector<16x512xf32>
    %570 = tpu.matmul %569, %564, %cst_345 {dimension_numbers = #tpu.dot_dimension_numbers<[1], [0], [0], [1], [0, 0, 1, 1], [], []>} : vector<16x128xbf16>, vector<128x512xbf16>, vector<16x512xf32> -> vector<16x512xf32>
    %571 = arith.addf %568, %570 : vector<16x512xf32>
    %572 = vector.broadcast %566 : vector<1x512xf32> to vector<16x512xf32>
    %573 = arith.addf %571, %572 : vector<16x512xf32>
    %574 = vector.extract_strided_slice %573 {offsets = [0, 0], sizes = [16, 128], strides = [1, 1]} : vector<16x512xf32> to vector<16x128xf32>
    %575 = arith.negf %574 : vector<16x128xf32>
    %576 = math.exp %575 : vector<16x128xf32>
    %cst_346 = arith.constant 1.000000e+00 : f32
    %577 = vector.broadcast %cst_346 : f32 to vector<16x128xf32>
    %578 = arith.addf %577, %576 : vector<16x128xf32>
    %579 = arith.divf %577, %578 : vector<16x128xf32>
    %580 = vector.extract_strided_slice %573 {offsets = [0, 128], sizes = [16, 128], strides = [1, 1]} : vector<16x512xf32> to vector<16x128xf32>
    %581 = arith.negf %580 : vector<16x128xf32>
    %582 = math.exp %581 : vector<16x128xf32>
    %cst_347 = arith.constant 1.000000e+00 : f32
    %583 = vector.broadcast %cst_347 : f32 to vector<16x128xf32>
    %584 = arith.addf %583, %582 : vector<16x128xf32>
    %585 = arith.divf %583, %584 : vector<16x128xf32>
    %586 = vector.extract_strided_slice %573 {offsets = [0, 256], sizes = [16, 128], strides = [1, 1]} : vector<16x512xf32> to vector<16x128xf32>
    %587 = math.tanh %586 : vector<16x128xf32>
    %588 = vector.extract_strided_slice %573 {offsets = [0, 384], sizes = [16, 128], strides = [1, 1]} : vector<16x512xf32> to vector<16x128xf32>
    %589 = arith.negf %588 : vector<16x128xf32>
    %590 = math.exp %589 : vector<16x128xf32>
    %cst_348 = arith.constant 1.000000e+00 : f32
    %591 = vector.broadcast %cst_348 : f32 to vector<16x128xf32>
    %592 = arith.addf %591, %590 : vector<16x128xf32>
    %593 = arith.divf %591, %592 : vector<16x128xf32>
    %594 = arith.mulf %585, %522 : vector<16x128xf32>
    %595 = arith.mulf %579, %587 : vector<16x128xf32>
    %596 = arith.addf %594, %595 : vector<16x128xf32>
    %597 = math.tanh %596 : vector<16x128xf32>
    %598 = arith.mulf %593, %597 : vector<16x128xf32>
    %599 = arith.addf %522, %598 : vector<16x128xf32>
    %c0_349 = arith.constant 0 : index
    %c0_350 = arith.constant 0 : index
    %c0_351 = arith.constant 0 : index
    %600 = vector.load %arg25[%c0_349, %c0_350, %c0_351] : memref<2x128x512xbf16, #tpu.memory_space<vmem>>, vector<1x128x512xbf16>
    %601 = vector.shape_cast %600 : vector<1x128x512xbf16> to vector<128x512xbf16>
    %c0_352 = arith.constant 0 : index
    %c0_353 = arith.constant 0 : index
    %c0_354 = arith.constant 0 : index
    %602 = vector.load %arg26[%c0_352, %c0_353, %c0_354] : memref<2x128x512xbf16, #tpu.memory_space<vmem>>, vector<1x128x512xbf16>
    %603 = vector.shape_cast %602 : vector<1x128x512xbf16> to vector<128x512xbf16>
    %c0_355 = arith.constant 0 : index
    %c0_356 = arith.constant 0 : index
    %c0_357 = arith.constant 0 : index
    %604 = vector.load %arg27[%c0_355, %c0_356, %c0_357] : memref<2x1x512xf32, #tpu.memory_space<vmem>>, vector<1x1x512xf32>
    %605 = vector.shape_cast %604 : vector<1x1x512xf32> to vector<1x512xf32>
    %606 = arith.truncf %521 : vector<16x128xf32> to vector<16x128xbf16>
    %cst_358 = arith.constant dense<0.000000e+00> : vector<16x512xf32>
    %607 = tpu.matmul %606, %601, %cst_358 {dimension_numbers = #tpu.dot_dimension_numbers<[1], [0], [0], [1], [0, 0, 1, 1], [], []>} : vector<16x128xbf16>, vector<128x512xbf16>, vector<16x512xf32> -> vector<16x512xf32>
    %608 = arith.truncf %560 : vector<16x128xf32> to vector<16x128xbf16>
    %cst_359 = arith.constant dense<0.000000e+00> : vector<16x512xf32>
    %609 = tpu.matmul %608, %603, %cst_359 {dimension_numbers = #tpu.dot_dimension_numbers<[1], [0], [0], [1], [0, 0, 1, 1], [], []>} : vector<16x128xbf16>, vector<128x512xbf16>, vector<16x512xf32> -> vector<16x512xf32>
    %610 = arith.addf %607, %609 : vector<16x512xf32>
    %611 = vector.broadcast %605 : vector<1x512xf32> to vector<16x512xf32>
    %612 = arith.addf %610, %611 : vector<16x512xf32>
    %613 = vector.extract_strided_slice %612 {offsets = [0, 0], sizes = [16, 128], strides = [1, 1]} : vector<16x512xf32> to vector<16x128xf32>
    %614 = arith.negf %613 : vector<16x128xf32>
    %615 = math.exp %614 : vector<16x128xf32>
    %cst_360 = arith.constant 1.000000e+00 : f32
    %616 = vector.broadcast %cst_360 : f32 to vector<16x128xf32>
    %617 = arith.addf %616, %615 : vector<16x128xf32>
    %618 = arith.divf %616, %617 : vector<16x128xf32>
    %619 = vector.extract_strided_slice %612 {offsets = [0, 128], sizes = [16, 128], strides = [1, 1]} : vector<16x512xf32> to vector<16x128xf32>
    %620 = arith.negf %619 : vector<16x128xf32>
    %621 = math.exp %620 : vector<16x128xf32>
    %cst_361 = arith.constant 1.000000e+00 : f32
    %622 = vector.broadcast %cst_361 : f32 to vector<16x128xf32>
    %623 = arith.addf %622, %621 : vector<16x128xf32>
    %624 = arith.divf %622, %623 : vector<16x128xf32>
    %625 = vector.extract_strided_slice %612 {offsets = [0, 256], sizes = [16, 128], strides = [1, 1]} : vector<16x512xf32> to vector<16x128xf32>
    %626 = math.tanh %625 : vector<16x128xf32>
    %627 = vector.extract_strided_slice %612 {offsets = [0, 384], sizes = [16, 128], strides = [1, 1]} : vector<16x512xf32> to vector<16x128xf32>
    %628 = arith.negf %627 : vector<16x128xf32>
    %629 = math.exp %628 : vector<16x128xf32>
    %cst_362 = arith.constant 1.000000e+00 : f32
    %630 = vector.broadcast %cst_362 : f32 to vector<16x128xf32>
    %631 = arith.addf %630, %629 : vector<16x128xf32>
    %632 = arith.divf %630, %631 : vector<16x128xf32>
    %633 = arith.mulf %624, %558 : vector<16x128xf32>
    %634 = arith.mulf %618, %626 : vector<16x128xf32>
    %635 = arith.addf %633, %634 : vector<16x128xf32>
    %636 = math.tanh %635 : vector<16x128xf32>
    %637 = arith.mulf %632, %636 : vector<16x128xf32>
    %c1_363 = arith.constant 1 : index
    %c0_364 = arith.constant 0 : index
    %c0_365 = arith.constant 0 : index
    %638 = vector.load %arg25[%c1_363, %c0_364, %c0_365] : memref<2x128x512xbf16, #tpu.memory_space<vmem>>, vector<1x128x512xbf16>
    %639 = vector.shape_cast %638 : vector<1x128x512xbf16> to vector<128x512xbf16>
    %c1_366 = arith.constant 1 : index
    %c0_367 = arith.constant 0 : index
    %c0_368 = arith.constant 0 : index
    %640 = vector.load %arg26[%c1_366, %c0_367, %c0_368] : memref<2x128x512xbf16, #tpu.memory_space<vmem>>, vector<1x128x512xbf16>
    %641 = vector.shape_cast %640 : vector<1x128x512xbf16> to vector<128x512xbf16>
    %c1_369 = arith.constant 1 : index
    %c0_370 = arith.constant 0 : index
    %c0_371 = arith.constant 0 : index
    %642 = vector.load %arg27[%c1_369, %c0_370, %c0_371] : memref<2x1x512xf32, #tpu.memory_space<vmem>>, vector<1x1x512xf32>
    %643 = vector.shape_cast %642 : vector<1x1x512xf32> to vector<1x512xf32>
    %644 = arith.truncf %637 : vector<16x128xf32> to vector<16x128xbf16>
    %cst_372 = arith.constant dense<0.000000e+00> : vector<16x512xf32>
    %645 = tpu.matmul %644, %639, %cst_372 {dimension_numbers = #tpu.dot_dimension_numbers<[1], [0], [0], [1], [0, 0, 1, 1], [], []>} : vector<16x128xbf16>, vector<128x512xbf16>, vector<16x512xf32> -> vector<16x512xf32>
    %646 = arith.truncf %598 : vector<16x128xf32> to vector<16x128xbf16>
    %cst_373 = arith.constant dense<0.000000e+00> : vector<16x512xf32>
    %647 = tpu.matmul %646, %641, %cst_373 {dimension_numbers = #tpu.dot_dimension_numbers<[1], [0], [0], [1], [0, 0, 1, 1], [], []>} : vector<16x128xbf16>, vector<128x512xbf16>, vector<16x512xf32> -> vector<16x512xf32>
    %648 = arith.addf %645, %647 : vector<16x512xf32>
    %649 = vector.broadcast %643 : vector<1x512xf32> to vector<16x512xf32>
    %650 = arith.addf %648, %649 : vector<16x512xf32>
    %651 = vector.extract_strided_slice %650 {offsets = [0, 0], sizes = [16, 128], strides = [1, 1]} : vector<16x512xf32> to vector<16x128xf32>
    %652 = arith.negf %651 : vector<16x128xf32>
    %653 = math.exp %652 : vector<16x128xf32>
    %cst_374 = arith.constant 1.000000e+00 : f32
    %654 = vector.broadcast %cst_374 : f32 to vector<16x128xf32>
    %655 = arith.addf %654, %653 : vector<16x128xf32>
    %656 = arith.divf %654, %655 : vector<16x128xf32>
    %657 = vector.extract_strided_slice %650 {offsets = [0, 128], sizes = [16, 128], strides = [1, 1]} : vector<16x512xf32> to vector<16x128xf32>
    %658 = arith.negf %657 : vector<16x128xf32>
    %659 = math.exp %658 : vector<16x128xf32>
    %cst_375 = arith.constant 1.000000e+00 : f32
    %660 = vector.broadcast %cst_375 : f32 to vector<16x128xf32>
    %661 = arith.addf %660, %659 : vector<16x128xf32>
    %662 = arith.divf %660, %661 : vector<16x128xf32>
    %663 = vector.extract_strided_slice %650 {offsets = [0, 256], sizes = [16, 128], strides = [1, 1]} : vector<16x512xf32> to vector<16x128xf32>
    %664 = math.tanh %663 : vector<16x128xf32>
    %665 = vector.extract_strided_slice %650 {offsets = [0, 384], sizes = [16, 128], strides = [1, 1]} : vector<16x512xf32> to vector<16x128xf32>
    %666 = arith.negf %665 : vector<16x128xf32>
    %667 = math.exp %666 : vector<16x128xf32>
    %cst_376 = arith.constant 1.000000e+00 : f32
    %668 = vector.broadcast %cst_376 : f32 to vector<16x128xf32>
    %669 = arith.addf %668, %667 : vector<16x128xf32>
    %670 = arith.divf %668, %669 : vector<16x128xf32>
    %671 = arith.mulf %662, %596 : vector<16x128xf32>
    %672 = arith.mulf %656, %664 : vector<16x128xf32>
    %673 = arith.addf %671, %672 : vector<16x128xf32>
    %674 = math.tanh %673 : vector<16x128xf32>
    %675 = arith.mulf %670, %674 : vector<16x128xf32>
    %676 = arith.addf %599, %675 : vector<16x128xf32>
    %cst_377 = arith.constant 5.000000e-01 : f32
    %677 = vector.broadcast %cst_377 : f32 to vector<16x128xf32>
    %678 = arith.mulf %676, %677 : vector<16x128xf32>
    %c0_378 = arith.constant 0 : index
    %c0_379 = arith.constant 0 : index
    %679 = vector.load %arg28[%c0_378, %c0_379] : memref<16x128xf32, #tpu.memory_space<vmem>>, vector<16x128xf32>
    tpu.vector_store %arg28[%c0_378, %c0_379], %678 {strides = array<i32>} : memref<16x128xf32, #tpu.memory_space<vmem>>, vector<16x128xf32>,
    return
  }
}

</mosaic_0001>

<llo_original>
// kernel: mixer_transformer_forward.1
$region0: #{mixer_transformer_forward.1}
  #allocation0 [shape = 'u32[]', space=smem, size = 0x4, offset = 0x4, fixed_abs, tag = 'smem constant byte address 0x4 - core index']
  #allocation1 [shape = 'u32[144,128]{1,0:T(1,128)}', space=vmem, size = 0x12000, scoped, tag = 'internal scratch']
  #allocation2 [shape = 'f32[16,16,128]{2,1,0:T(8,128)}', space=vmem, size = 0x20000, scoped, tag = 'scratch operand']
  #allocation3 [shape = 'bf16[128,384]{1,0:T(8,128)(2,1)}', space=vmem, size = 0x18000, scoped, tag = 'scratch operand']
  #allocation4 [shape = 'f32[16,64]{1,0:T(8,128)}', space=vmem, size = 0x2000, scoped, tag = 'scratch operand']
  %s0 = inlined_call_operand.vmem [shape: f32[16,8,128], index: 0, kind: input, shape index: {}]
  %s1 = inlined_call_operand.vmem [shape: f32[16,128], index: 1, kind: input, shape index: {}]
  %s2 = inlined_call_operand.vmem [shape: f32[16,16], index: 2, kind: input, shape index: {}]
  %s3 = inlined_call_operand.hbm [shape: bf16[2,384,128], index: 3, kind: input, shape index: {}]
  %s4 = inlined_call_operand.vmem [shape: f32[2,1,128], index: 4, kind: input, shape index: {}]
  %s5 = inlined_call_operand.hbm [shape: bf16[2,384,128], index: 5, kind: input, shape index: {}]
  %s6 = inlined_call_operand.hbm [shape: f32[2,1,128], index: 6, kind: input, shape index: {}]
  %s7 = inlined_call_operand.hbm [shape: bf16[2,128,128], index: 7, kind: input, shape index: {}]
  %s8 = inlined_call_operand.hbm [shape: f32[2,1,128], index: 8, kind: input, shape index: {}]
  %s9 = inlined_call_operand.hbm [shape: f32[2,1,128], index: 9, kind: input, shape index: {}]
  %s10 = inlined_call_operand.vmem [shape: f32[2,1,128], index: 10, kind: input, shape index: {}]
  %s11 = inlined_call_operand.vmem [shape: bf16[1024,128], index: 11, kind: input, shape index: {}]
  %s12 = inlined_call_operand.hbm [shape: f32[1,128], index: 12, kind: input, shape index: {}]
  %s13 = inlined_call_operand.hbm [shape: f32[2,1,128], index: 13, kind: input, shape index: {}]
  %s14 = inlined_call_operand.hbm [shape: f32[2,1,128], index: 14, kind: input, shape index: {}]
  %s15 = inlined_call_operand.vmem [shape: bf16[2,128,192], index: 15, kind: input, shape index: {}]
  %s16 = inlined_call_operand.vmem [shape: bf16[2,64,128], index: 16, kind: input, shape index: {}]
  %s17 = inlined_call_operand.hbm [shape: f32[2,1,128], index: 17, kind: input, shape index: {}]
  %s18 = inlined_call_operand.hbm [shape: f32[2,1,128], index: 18, kind: input, shape index: {}]
  %s19 = inlined_call_operand.hbm [shape: f32[2,1,128], index: 19, kind: input, shape index: {}]
  %s20 = inlined_call_operand.hbm [shape: bf16[2,128,128], index: 20, kind: input, shape index: {}]
  %s21 = inlined_call_operand.hbm [shape: f32[2,1,128], index: 21, kind: input, shape index: {}]
  %s22 = inlined_call_operand.hbm [shape: bf16[2,128,128], index: 22, kind: input, shape index: {}]
  %s23 = inlined_call_operand.hbm [shape: f32[2,1,128], index: 23, kind: input, shape index: {}]
  %s24 = inlined_call_operand.hbm [shape: bf16[2,128,128], index: 24, kind: input, shape index: {}]
  %s25 = inlined_call_operand.vmem [shape: bf16[2,128,512], index: 25, kind: input, shape index: {}]
  %s26 = inlined_call_operand.vmem [shape: bf16[2,128,512], index: 26, kind: input, shape index: {}]
  %s27 = inlined_call_operand.hbm [shape: f32[2,1,512], index: 27, kind: input, shape index: {}]
  %s28 = inlined_call_operand.hbm [shape: f32[16,128], index: 28, kind: output, shape index: {}]
  %s29 = sld [smem:[#allocation0]]
  $region194: #{mixer_transformer_forward.1} parent=0
    _
  %s31 = ssub.s32 1, %s29
  %s32 = scalar_select 0, %s31, %s29
  $region1: #{mixer_transformer_forward.1} parent=0
    #allocation5 [shape = 'u8[196608]{0}', space=vmem, size = 0x30000, scoped, tag = 'input window, operand 3, single buffered']
    #allocation6 [shape = 's32[1]{0}', space=sflag, size = 0x4, scoped, tag = 'scoped memory for mixer_transformer_forward.1']
    #allocation7 [shape = 's32[1]{0}', space=sflag, size = 0x4, scoped, tag = 'scoped memory for mixer_transformer_forward.1']
    #allocation8 [shape = 'u8[196608]{0}', space=vmem, size = 0x30000, scoped, tag = 'input window, operand 5, single buffered']
    #allocation9 [shape = 's32[1]{0}', space=sflag, size = 0x4, scoped, tag = 'scoped memory for mixer_transformer_forward.1']
    #allocation10 [shape = 'u8[1024]{0}', space=vmem, size = 0x400, scoped, tag = 'input window, operand 6, single buffered']
    #allocation11 [shape = 'u8[65536]{0}', space=vmem, size = 0x10000, scoped, tag = 'input window, operand 7, single buffered']
    #allocation12 [shape = 's32[1]{0}', space=sflag, size = 0x4, scoped, tag = 'scoped memory for mixer_transformer_forward.1']
    #allocation13 [shape = 'u8[1024]{0}', space=vmem, size = 0x400, scoped, tag = 'input window, operand 8, single buffered']
    #allocation14 [shape = 'u8[1024]{0}', space=vmem, size = 0x400, scoped, tag = 'input window, operand 9, single buffered']
    #allocation15 [shape = 's32[1]{0}', space=sflag, size = 0x4, scoped, tag = 'scoped memory for mixer_transformer_forward.1']
    #allocation16 [shape = 'u8[512]{0}', space=vmem, size = 0x400, scoped, tag = 'input window, operand 12, single buffered']
    #allocation17 [shape = 'u8[1024]{0}', space=vmem, size = 0x400, scoped, tag = 'input window, operand 13, single buffered']
    #allocation18 [shape = 's32[1]{0}', space=sflag, size = 0x4, scoped, tag = 'scoped memory for mixer_transformer_forward.1']
    #allocation19 [shape = 'u8[1024]{0}', space=vmem, size = 0x400, scoped, tag = 'input window, operand 14, single buffered']
    #allocation20 [shape = 'u8[1024]{0}', space=vmem, size = 0x400, scoped, tag = 'input window, operand 17, single buffered']
    #allocation21 [shape = 's32[1]{0}', space=sflag, size = 0x4, scoped, tag = 'scoped memory for mixer_transformer_forward.1']
    #allocation22 [shape = 'u8[1024]{0}', space=vmem, size = 0x400, scoped, tag = 'input window, operand 18, single buffered']
    #allocation23 [shape = 'u8[1024]{0}', space=vmem, size = 0x400, scoped, tag = 'input window, operand 19, single buffered']
    #allocation24 [shape = 's32[1]{0}', space=sflag, size = 0x4, scoped, tag = 'scoped memory for mixer_transformer_forward.1']
    #allocation25 [shape = 'u8[65536]{0}', space=vmem, size = 0x10000, scoped, tag = 'input window, operand 20, single buffered']
    #allocation26 [shape = 'u8[1024]{0}', space=vmem, size = 0x400, scoped, tag = 'input window, operand 21, single buffered']
    #allocation27 [shape = 's32[1]{0}', space=sflag, size = 0x4, scoped, tag = 'scoped memory for mixer_transformer_forward.1']
    #allocation28 [shape = 'u8[65536]{0}', space=vmem, size = 0x10000, scoped, tag = 'input window, operand 22, single buffered']
    #allocation29 [shape = 'u8[1024]{0}', space=vmem, size = 0x400, scoped, tag = 'input window, operand 23, single buffered']
    #allocation30 [shape = 's32[1]{0}', space=sflag, size = 0x4, scoped, tag = 'scoped memory for mixer_transformer_forward.1']
    #allocation31 [shape = 'u8[65536]{0}', space=vmem, size = 0x10000, scoped, tag = 'input window, operand 24, single buffered']
    #allocation32 [shape = 'u8[4096]{0}', space=vmem, size = 0x1000, scoped, tag = 'input window, operand 27, single buffered']
    #allocation33 [shape = 's32[1]{0}', space=sflag, size = 0x4, scoped, tag = 'scoped memory for mixer_transformer_forward.1']
    #allocation34 [shape = 'u8[8192]{0}', space=vmem, size = 0x2000, scoped, tag = 'output window, operand 0, single buffered']
    %33 = vsyncpa [#allocation6], 0
    %34 = vsyncpa [#allocation9], 0
    %35 = vsyncpa [#allocation12], 0
    %36 = vsyncpa [#allocation15], 0
    %37 = vsyncpa [#allocation18], 0
    %38 = vsyncpa [#allocation21], 0
    %39 = vsyncpa [#allocation24], 0
    %40 = vsyncpa [#allocation27], 0
    %41 = vsyncpa [#allocation30], 0
    %42 = vsyncpa [#allocation33], 0
    %43 = vsyncpa [#allocation7], 0
    // Predicated region
    $region2: #{mixer_transformer_forward.1} parent=1 // pred_check
      _
    $region3: #{mixer_transformer_forward.1} parent=1 // pred_check_branch
      %45 = sbr.rel (0) target = $region5
    $region4: #{mixer_transformer_forward.1} parent=1 // pred_region
      _
    $region5: #{mixer_transformer_forward.1} parent=1 // pred_fallthru
      _
    // Predicated region
    $region6: #{mixer_transformer_forward.1} parent=1 // pred_check
      _
    $region7: #{mixer_transformer_forward.1} parent=1 // pred_check_branch
      %47 = sbr.rel (0) target = $region9
    $region8: #{mixer_transformer_forward.1} parent=1 // pred_region
      _
    $region9: #{mixer_transformer_forward.1} parent=1 // pred_fallthru
      _
    // Predicated region
    $region10: #{mixer_transformer_forward.1} parent=1 // pred_check
      _
    $region11: #{mixer_transformer_forward.1} parent=1 // pred_check_branch
      %49 = sbr.rel (0) target = $region13
    $region12: #{mixer_transformer_forward.1} parent=1 // pred_region
      _
    $region13: #{mixer_transformer_forward.1} parent=1 // pred_fallthru
      _
    // Predicated region
    $region14: #{mixer_transformer_forward.1} parent=1 // pred_check
      _
    $region15: #{mixer_transformer_forward.1} parent=1 // pred_check_branch
      %51 = sbr.rel (0) target = $region17
    $region16: #{mixer_transformer_forward.1} parent=1 // pred_region
      %s53 = ssub.s32 6144, 6144
      %54 = vsyncadd [#allocation6], %s53
      %s55 = sshll.u32 [#allocation5], 4
      %s56 = int_to_ptr.vmem [resolvable:$true] %s55
      %61 = dma.hbm_to_vmem [thread:$0]  %s3, 6144, %s56, [#allocation6], 64, 64, 4
    $region17: #{mixer_transformer_forward.1} parent=1 // pred_fallthru
      _
    // Predicated region
    $region18: #{mixer_transformer_forward.1} parent=1 // pred_check
      _
    $region19: #{mixer_transformer_forward.1} parent=1 // pred_check_branch
      %63 = sbr.rel (0) target = $region21
    $region20: #{mixer_transformer_forward.1} parent=1 // pred_region
      _
    $region21: #{mixer_transformer_forward.1} parent=1 // pred_fallthru
      _
    // Predicated region
    $region22: #{mixer_transformer_forward.1} parent=1 // pred_check
      _
    $region23: #{mixer_transformer_forward.1} parent=1 // pred_check_branch
      %65 = sbr.rel (0) target = $region25
    $region24: #{mixer_transformer_forward.1} parent=1 // pred_region
      %s67 = ssub.s32 6144, 6144
      %68 = vsyncadd [#allocation9], %s67
      %s69 = sshll.u32 [#allocation8], 4
      %s70 = int_to_ptr.vmem [resolvable:$true] %s69
      %75 = dma.hbm_to_vmem [thread:$0]  %s5, 6144, %s70, [#allocation9], 64, 64, 4
    $region25: #{mixer_transformer_forward.1} parent=1 // pred_fallthru
      _
    // Predicated region
    $region26: #{mixer_transformer_forward.1} parent=1 // pred_check
      _
    $region27: #{mixer_transformer_forward.1} parent=1 // pred_check_branch
      %77 = sbr.rel (0) target = $region29
    $region28: #{mixer_transformer_forward.1} parent=1 // pred_region
      %s79 = ssub.s32 32, 32
      %80 = vsyncadd [#allocation9], %s79
      %s81 = sshll.u32 [#allocation10], 4
      %s82 = int_to_ptr.vmem [resolvable:$true] %s81
      %87 = dma.hbm_to_vmem [thread:$0]  %s6, 32, %s82, [#allocation9], 16, 16, 1
    $region29: #{mixer_transformer_forward.1} parent=1 // pred_fallthru
      _
    // Predicated region
    $region30: #{mixer_transformer_forward.1} parent=1 // pred_check
      _
    $region31: #{mixer_transformer_forward.1} parent=1 // pred_check_branch
      %89 = sbr.rel (0) target = $region33
    $region32: #{mixer_transformer_forward.1} parent=1 // pred_region
      %s91 = ssub.s32 2048, 2048
      %92 = vsyncadd [#allocation12], %s91
      %s93 = sshll.u32 [#allocation11], 4
      %s94 = int_to_ptr.vmem [resolvable:$true] %s93
      %99 = dma.hbm_to_vmem [thread:$0]  %s7, 2048, %s94, [#allocation12], 64, 64, 4
    $region33: #{mixer_transformer_forward.1} parent=1 // pred_fallthru
      _
    // Predicated region
    $region34: #{mixer_transformer_forward.1} parent=1 // pred_check
      _
    $region35: #{mixer_transformer_forward.1} parent=1 // pred_check_branch
      %101 = sbr.rel (0) target = $region37
    $region36: #{mixer_transformer_forward.1} parent=1 // pred_region
      %s103 = ssub.s32 32, 32
      %104 = vsyncadd [#allocation12], %s103
      %s105 = sshll.u32 [#allocation13], 4
      %s106 = int_to_ptr.vmem [resolvable:$true] %s105
      %111 = dma.hbm_to_vmem [thread:$0]  %s8, 32, %s106, [#allocation12], 16, 16, 1
    $region37: #{mixer_transformer_forward.1} parent=1 // pred_fallthru
      _
    // Predicated region
    $region38: #{mixer_transformer_forward.1} parent=1 // pred_check
      _
    $region39: #{mixer_transformer_forward.1} parent=1 // pred_check_branch
      %113 = sbr.rel (0) target = $region41
    $region40: #{mixer_transformer_forward.1} parent=1 // pred_region
      %s115 = ssub.s32 32, 32
      %116 = vsyncadd [#allocation15], %s115
      %s117 = sshll.u32 [#allocation14], 4
      %s118 = int_to_ptr.vmem [resolvable:$true] %s117
      %123 = dma.hbm_to_vmem [thread:$0]  %s9, 32, %s118, [#allocation15], 16, 16, 1
    $region41: #{mixer_transformer_forward.1} parent=1 // pred_fallthru
      _
    // Predicated region
    $region42: #{mixer_transformer_forward.1} parent=1 // pred_check
      _
    $region43: #{mixer_transformer_forward.1} parent=1 // pred_check_branch
      %125 = sbr.rel (0) target = $region45
    $region44: #{mixer_transformer_forward.1} parent=1 // pred_region
      _
    $region45: #{mixer_transformer_forward.1} parent=1 // pred_fallthru
      _
    // Predicated region
    $region46: #{mixer_transformer_forward.1} parent=1 // pred_check
      _
    $region47: #{mixer_transformer_forward.1} parent=1 // pred_check_branch
      %127 = sbr.rel (0) target = $region49
    $region48: #{mixer_transformer_forward.1} parent=1 // pred_region
      _
    $region49: #{mixer_transformer_forward.1} parent=1 // pred_fallthru
      _
    // Predicated region
    $region50: #{mixer_transformer_forward.1} parent=1 // pred_check
      _
    $region51: #{mixer_transformer_forward.1} parent=1 // pred_check_branch
      %129 = sbr.rel (0) target = $region53
    $region52: #{mixer_transformer_forward.1} parent=1 // pred_region
      %s131 = ssub.s32 16, 16
      %132 = vsyncadd [#allocation15], %s131
      %s134 = sshll.u32 [#allocation16], 4
      %s135 = int_to_ptr.vmem [resolvable:$true] %s134
      %137 = dma.hbm_to_vmem [thread:$0]  %s12, 16, %s135, [#allocation15]
    $region53: #{mixer_transformer_forward.1} parent=1 // pred_fallthru
      _
    // Predicated region
    $region54: #{mixer_transformer_forward.1} parent=1 // pred_check
      _
    $region55: #{mixer_transformer_forward.1} parent=1 // pred_check_branch
      %139 = sbr.rel (0) target = $region57
    $region56: #{mixer_transformer_forward.1} parent=1 // pred_region
      %s141 = ssub.s32 32, 32
      %142 = vsyncadd [#allocation18], %s141
      %s143 = sshll.u32 [#allocation17], 4
      %s144 = int_to_ptr.vmem [resolvable:$true] %s143
      %149 = dma.hbm_to_vmem [thread:$0]  %s13, 32, %s144, [#allocation18], 16, 16, 1
    $region57: #{mixer_transformer_forward.1} parent=1 // pred_fallthru
      _
    // Predicated region
    $region58: #{mixer_transformer_forward.1} parent=1 // pred_check
      _
    $region59: #{mixer_transformer_forward.1} parent=1 // pred_check_branch
      %151 = sbr.rel (0) target = $region61
    $region60: #{mixer_transformer_forward.1} parent=1 // pred_region
      %s153 = ssub.s32 32, 32
      %154 = vsyncadd [#allocation18], %s153
      %s155 = sshll.u32 [#allocation19], 4
      %s156 = int_to_ptr.vmem [resolvable:$true] %s155
      %161 = dma.hbm_to_vmem [thread:$0]  %s14, 32, %s156, [#allocation18], 16, 16, 1
    $region61: #{mixer_transformer_forward.1} parent=1 // pred_fallthru
      _
    // Predicated region
    $region62: #{mixer_transformer_forward.1} parent=1 // pred_check
      _
    $region63: #{mixer_transformer_forward.1} parent=1 // pred_check_branch
      %163 = sbr.rel (0) target = $region65
    $region64: #{mixer_transformer_forward.1} parent=1 // pred_region
      _
    $region65: #{mixer_transformer_forward.1} parent=1 // pred_fallthru
      _
    // Predicated region
    $region66: #{mixer_transformer_forward.1} parent=1 // pred_check
      _
    $region67: #{mixer_transformer_forward.1} parent=1 // pred_check_branch
      %165 = sbr.rel (0) target = $region69
    $region68: #{mixer_transformer_forward.1} parent=1 // pred_region
      _
    $region69: #{mixer_transformer_forward.1} parent=1 // pred_fallthru
      _
    // Predicated region
    $region70: #{mixer_transformer_forward.1} parent=1 // pred_check
      _
    $region71: #{mixer_transformer_forward.1} parent=1 // pred_check_branch
      %167 = sbr.rel (0) target = $region73
    $region72: #{mixer_transformer_forward.1} parent=1 // pred_region
      %s169 = ssub.s32 32, 32
      %170 = vsyncadd [#allocation21], %s169
      %s171 = sshll.u32 [#allocation20], 4
      %s172 = int_to_ptr.vmem [resolvable:$true] %s171
      %177 = dma.hbm_to_vmem [thread:$0]  %s17, 32, %s172, [#allocation21], 16, 16, 1
    $region73: #{mixer_transformer_forward.1} parent=1 // pred_fallthru
      _
    // Predicated region
    $region74: #{mixer_transformer_forward.1} parent=1 // pred_check
      _
    $region75: #{mixer_transformer_forward.1} parent=1 // pred_check_branch
      %179 = sbr.rel (0) target = $region77
    $region76: #{mixer_transformer_forward.1} parent=1 // pred_region
      %s181 = ssub.s32 32, 32
      %182 = vsyncadd [#allocation21], %s181
      %s183 = sshll.u32 [#allocation22], 4
      %s184 = int_to_ptr.vmem [resolvable:$true] %s183
      %189 = dma.hbm_to_vmem [thread:$0]  %s18, 32, %s184, [#allocation21], 16, 16, 1
    $region77: #{mixer_transformer_forward.1} parent=1 // pred_fallthru
      _
    // Predicated region
    $region78: #{mixer_transformer_forward.1} parent=1 // pred_check
      _
    $region79: #{mixer_transformer_forward.1} parent=1 // pred_check_branch
      %191 = sbr.rel (0) target = $region81
    $region80: #{mixer_transformer_forward.1} parent=1 // pred_region
      %s193 = ssub.s32 32, 32
      %194 = vsyncadd [#allocation24], %s193
      %s195 = sshll.u32 [#allocation23], 4
      %s196 = int_to_ptr.vmem [resolvable:$true] %s195
      %201 = dma.hbm_to_vmem [thread:$0]  %s19, 32, %s196, [#allocation24], 16, 16, 1
    $region81: #{mixer_transformer_forward.1} parent=1 // pred_fallthru
      _
    // Predicated region
    $region82: #{mixer_transformer_forward.1} parent=1 // pred_check
      _
    $region83: #{mixer_transformer_forward.1} parent=1 // pred_check_branch
      %203 = sbr.rel (0) target = $region85
    $region84: #{mixer_transformer_forward.1} parent=1 // pred_region
      %s205 = ssub.s32 2048, 2048
      %206 = vsyncadd [#allocation24], %s205
      %s207 = sshll.u32 [#allocation25], 4
      %s208 = int_to_ptr.vmem [resolvable:$true] %s207
      %213 = dma.hbm_to_vmem [thread:$0]  %s20, 2048, %s208, [#allocation24], 64, 64, 4
    $region85: #{mixer_transformer_forward.1} parent=1 // pred_fallthru
      _
    // Predicated region
    $region86: #{mixer_transformer_forward.1} parent=1 // pred_check
      _
    $region87: #{mixer_transformer_forward.1} parent=1 // pred_check_branch
      %215 = sbr.rel (0) target = $region89
    $region88: #{mixer_transformer_forward.1} parent=1 // pred_region
      %s217 = ssub.s32 32, 32
      %218 = vsyncadd [#allocation27], %s217
      %s219 = sshll.u32 [#allocation26], 4
      %s220 = int_to_ptr.vmem [resolvable:$true] %s219
      %225 = dma.hbm_to_vmem [thread:$0]  %s21, 32, %s220, [#allocation27], 16, 16, 1
    $region89: #{mixer_transformer_forward.1} parent=1 // pred_fallthru
      _
    // Predicated region
    $region90: #{mixer_transformer_forward.1} parent=1 // pred_check
      _
    $region91: #{mixer_transformer_forward.1} parent=1 // pred_check_branch
      %227 = sbr.rel (0) target = $region93
    $region92: #{mixer_transformer_forward.1} parent=1 // pred_region
      %s229 = ssub.s32 2048, 2048
      %230 = vsyncadd [#allocation27], %s229
      %s231 = sshll.u32 [#allocation28], 4
      %s232 = int_to_ptr.vmem [resolvable:$true] %s231
      %237 = dma.hbm_to_vmem [thread:$0]  %s22, 2048, %s232, [#allocation27], 64, 64, 4
    $region93: #{mixer_transformer_forward.1} parent=1 // pred_fallthru
      _
    // Predicated region
    $region94: #{mixer_transformer_forward.1} parent=1 // pred_check
      _
    $region95: #{mixer_transformer_forward.1} parent=1 // pred_check_branch
      %239 = sbr.rel (0) target = $region97
    $region96: #{mixer_transformer_forward.1} parent=1 // pred_region
      %s241 = ssub.s32 32, 32
      %242 = vsyncadd [#allocation30], %s241
      %s243 = sshll.u32 [#allocation29], 4
      %s244 = int_to_ptr.vmem [resolvable:$true] %s243
      %249 = dma.hbm_to_vmem [thread:$0]  %s23, 32, %s244, [#allocation30], 16, 16, 1
    $region97: #{mixer_transformer_forward.1} parent=1 // pred_fallthru
      _
    // Predicated region
    $region98: #{mixer_transformer_forward.1} parent=1 // pred_check
      _
    $region99: #{mixer_transformer_forward.1} parent=1 // pred_check_branch
      %251 = sbr.rel (0) target = $region101
    $region100: #{mixer_transformer_forward.1} parent=1 // pred_region
      %s253 = ssub.s32 2048, 2048
      %254 = vsyncadd [#allocation30], %s253
      %s255 = sshll.u32 [#allocation31], 4
      %s256 = int_to_ptr.vmem [resolvable:$true] %s255
      %261 = dma.hbm_to_vmem [thread:$0]  %s24, 2048, %s256, [#allocation30], 64, 64, 4
    $region101: #{mixer_transformer_forward.1} parent=1 // pred_fallthru
      _
    // Predicated region
    $region102: #{mixer_transformer_forward.1} parent=1 // pred_check
      _
    $region103: #{mixer_transformer_forward.1} parent=1 // pred_check_branch
      %263 = sbr.rel (0) target = $region105
    $region104: #{mixer_transformer_forward.1} parent=1 // pred_region
      _
    $region105: #{mixer_transformer_forward.1} parent=1 // pred_fallthru
      _
    // Predicated region
    $region106: #{mixer_transformer_forward.1} parent=1 // pred_check
      _
    $region107: #{mixer_transformer_forward.1} parent=1 // pred_check_branch
      %265 = sbr.rel (0) target = $region109
    $region108: #{mixer_transformer_forward.1} parent=1 // pred_region
      _
    $region109: #{mixer_transformer_forward.1} parent=1 // pred_fallthru
      _
    // Predicated region
    $region110: #{mixer_transformer_forward.1} parent=1 // pred_check
      _
    $region111: #{mixer_transformer_forward.1} parent=1 // pred_check_branch
      %267 = sbr.rel (0) target = $region113
    $region112: #{mixer_transformer_forward.1} parent=1 // pred_region
      %s269 = ssub.s32 128, 128
      %270 = vsyncadd [#allocation33], %s269
      %s271 = sshll.u32 [#allocation32], 4
      %s272 = int_to_ptr.vmem [resolvable:$true] %s271
      %277 = dma.hbm_to_vmem [thread:$0]  %s27, 128, %s272, [#allocation33], 64, 64, 4
    $region113: #{mixer_transformer_forward.1} parent=1 // pred_fallthru
      _
    // Predicated region
    $region114: #{mixer_transformer_forward.1} parent=1 // pred_check
      _
    $region115: #{mixer_transformer_forward.1} parent=1 // pred_check_branch
      %279 = sbr.rel (0) target = $region117
    $region116: #{mixer_transformer_forward.1} parent=1 // pred_region
      %280 = dma.done [#allocation6], 6144
    $region117: #{mixer_transformer_forward.1} parent=1 // pred_fallthru
      _
    // Predicated region
    $region118: #{mixer_transformer_forward.1} parent=1 // pred_check
      _
    $region119: #{mixer_transformer_forward.1} parent=1 // pred_check_branch
      %282 = sbr.rel (0) target = $region121
    $region120: #{mixer_transformer_forward.1} parent=1 // pred_region
      %283 = dma.done [#allocation9], 6144
    $region121: #{mixer_transformer_forward.1} parent=1 // pred_fallthru
      _
    // Predicated region
    $region122: #{mixer_transformer_forward.1} parent=1 // pred_check
      _
    $region123: #{mixer_transformer_forward.1} parent=1 // pred_check_branch
      %285 = sbr.rel (0) target = $region125
    $region124: #{mixer_transformer_forward.1} parent=1 // pred_region
      %286 = dma.done [#allocation9], 32
    $region125: #{mixer_transformer_forward.1} parent=1 // pred_fallthru
      _
    // Predicated region
    $region126: #{mixer_transformer_forward.1} parent=1 // pred_check
      _
    $region127: #{mixer_transformer_forward.1} parent=1 // pred_check_branch
      %288 = sbr.rel (0) target = $region129
    $region128: #{mixer_transformer_forward.1} parent=1 // pred_region
      %289 = dma.done [#allocation12], 2048
    $region129: #{mixer_transformer_forward.1} parent=1 // pred_fallthru
      _
    // Predicated region
    $region130: #{mixer_transformer_forward.1} parent=1 // pred_check
      _
    $region131: #{mixer_transformer_forward.1} parent=1 // pred_check_branch
      %291 = sbr.rel (0) target = $region133
    $region132: #{mixer_transformer_forward.1} parent=1 // pred_region
      %292 = dma.done [#allocation12], 32
    $region133: #{mixer_transformer_forward.1} parent=1 // pred_fallthru
      _
    // Predicated region
    $region134: #{mixer_transformer_forward.1} parent=1 // pred_check
      _
    $region135: #{mixer_transformer_forward.1} parent=1 // pred_check_branch
      %294 = sbr.rel (0) target = $region137
    $region136: #{mixer_transformer_forward.1} parent=1 // pred_region
      %295 = dma.done [#allocation15], 32
    $region137: #{mixer_transformer_forward.1} parent=1 // pred_fallthru
      _
    // Predicated region
    $region138: #{mixer_transformer_forward.1} parent=1 // pred_check
      _
    $region139: #{mixer_transformer_forward.1} parent=1 // pred_check_branch
      %297 = sbr.rel (0) target = $region141
    $region140: #{mixer_transformer_forward.1} parent=1 // pred_region
      %298 = dma.done [#allocation15], 16
    $region141: #{mixer_transformer_forward.1} parent=1 // pred_fallthru
      _
    // Predicated region
    $region142: #{mixer_transformer_forward.1} parent=1 // pred_check
      _
    $region143: #{mixer_transformer_forward.1} parent=1 // pred_check_branch
      %300 = sbr.rel (0) target = $region145
    $region144: #{mixer_transformer_forward.1} parent=1 // pred_region
      %301 = dma.done [#allocation18], 32
    $region145: #{mixer_transformer_forward.1} parent=1 // pred_fallthru
      _
    // Predicated region
    $region146: #{mixer_transformer_forward.1} parent=1 // pred_check
      _
    $region147: #{mixer_transformer_forward.1} parent=1 // pred_check_branch
      %303 = sbr.rel (0) target = $region149
    $region148: #{mixer_transformer_forward.1} parent=1 // pred_region
      %304 = dma.done [#allocation18], 32
    $region149: #{mixer_transformer_forward.1} parent=1 // pred_fallthru
      _
    // Predicated region
    $region150: #{mixer_transformer_forward.1} parent=1 // pred_check
      _
    $region151: #{mixer_transformer_forward.1} parent=1 // pred_check_branch
      %306 = sbr.rel (0) target = $region153
    $region152: #{mixer_transformer_forward.1} parent=1 // pred_region
      %307 = dma.done [#allocation21], 32
    $region153: #{mixer_transformer_forward.1} parent=1 // pred_fallthru
      _
    // Predicated region
    $region154: #{mixer_transformer_forward.1} parent=1 // pred_check
      _
    $region155: #{mixer_transformer_forward.1} parent=1 // pred_check_branch
      %309 = sbr.rel (0) target = $region157
    $region156: #{mixer_transformer_forward.1} parent=1 // pred_region
      %310 = dma.done [#allocation21], 32
    $region157: #{mixer_transformer_forward.1} parent=1 // pred_fallthru
      _
    // Predicated region
    $region158: #{mixer_transformer_forward.1} parent=1 // pred_check
      _
    $region159: #{mixer_transformer_forward.1} parent=1 // pred_check_branch
      %312 = sbr.rel (0) target = $region161
    $region160: #{mixer_transformer_forward.1} parent=1 // pred_region
      %313 = dma.done [#allocation24], 32
    $region161: #{mixer_transformer_forward.1} parent=1 // pred_fallthru
      _
    // Predicated region
    $region162: #{mixer_transformer_forward.1} parent=1 // pred_check
      _
    $region163: #{mixer_transformer_forward.1} parent=1 // pred_check_branch
      %315 = sbr.rel (0) target = $region165
    $region164: #{mixer_transformer_forward.1} parent=1 // pred_region
      %316 = dma.done [#allocation24], 2048
    $region165: #{mixer_transformer_forward.1} parent=1 // pred_fallthru
      _
    // Predicated region
    $region166: #{mixer_transformer_forward.1} parent=1 // pred_check
      _
    $region167: #{mixer_transformer_forward.1} parent=1 // pred_check_branch
      %318 = sbr.rel (0) target = $region169
    $region168: #{mixer_transformer_forward.1} parent=1 // pred_region
      %319 = dma.done [#allocation27], 32
    $region169: #{mixer_transformer_forward.1} parent=1 // pred_fallthru
      _
    // Predicated region
    $region170: #{mixer_transformer_forward.1} parent=1 // pred_check
      _
    $region171: #{mixer_transformer_forward.1} parent=1 // pred_check_branch
      %321 = sbr.rel (0) target = $region173
    $region172: #{mixer_transformer_forward.1} parent=1 // pred_region
      %322 = dma.done [#allocation27], 2048
    $region173: #{mixer_transformer_forward.1} parent=1 // pred_fallthru
      _
    // Predicated region
    $region174: #{mixer_transformer_forward.1} parent=1 // pred_check
      _
    $region175: #{mixer_transformer_forward.1} parent=1 // pred_check_branch
      %324 = sbr.rel (0) target = $region177
    $region176: #{mixer_transformer_forward.1} parent=1 // pred_region
      %325 = dma.done [#allocation30], 32
    $region177: #{mixer_transformer_forward.1} parent=1 // pred_fallthru
      _
    // Predicated region
    $region178: #{mixer_transformer_forward.1} parent=1 // pred_check
      _
    $region179: #{mixer_transformer_forward.1} parent=1 // pred_check_branch
      %327 = sbr.rel (0) target = $region181
    $region180: #{mixer_transformer_forward.1} parent=1 // pred_region
      %328 = dma.done [#allocation30], 2048
    $region181: #{mixer_transformer_forward.1} parent=1 // pred_fallthru
      _
    // Predicated region
    $region182: #{mixer_transformer_forward.1} parent=1 // pred_check
      _
    $region183: #{mixer_transformer_forward.1} parent=1 // pred_check_branch
      %330 = sbr.rel (0) target = $region185
    $region184: #{mixer_transformer_forward.1} parent=1 // pred_region
      %331 = dma.done [#allocation33], 128
    $region185: #{mixer_transformer_forward.1} parent=1 // pred_fallthru
      _
    %333 = vst [vmem:[#allocation2] sm:$0x1] 0.0
    %334 = vst [vmem:[#allocation2 + $0x10] sm:$0x1] 0.0
    %335 = vst [vmem:[#allocation2 + $0x20] sm:$0x1] 0.0
    %336 = vst [vmem:[#allocation2 + $0x30] sm:$0x1] 0.0
    %337 = vst [vmem:[#allocation2 + $0x40] sm:$0x1] 0.0
    %338 = vst [vmem:[#allocation2 + $0x50] sm:$0x1] 0.0
    %339 = vst [vmem:[#allocation2 + $0x60] sm:$0x1] 0.0
    %340 = vst [vmem:[#allocation2 + $0x70] sm:$0x1] 0.0
    %341 = vst [vmem:[#allocation2 + $0x80] sm:$0x1] 0.0
    %342 = vst [vmem:[#allocation2 + $0x90] sm:$0x1] 0.0
    %343 = vst [vmem:[#allocation2 + $0xa0] sm:$0x1] 0.0
    %344 = vst [vmem:[#allocation2 + $0xb0] sm:$0x1] 0.0
    %345 = vst [vmem:[#allocation2 + $0xc0] sm:$0x1] 0.0
    %346 = vst [vmem:[#allocation2 + $0xd0] sm:$0x1] 0.0
    %347 = vst [vmem:[#allocation2 + $0xe0] sm:$0x1] 0.0
    %348 = vst [vmem:[#allocation2 + $0xf0] sm:$0x1] 0.0
    %349 = vst [vmem:[#allocation2 + $0x9] sm:$0x1] 0.0
    %350 = vst [vmem:[#allocation2 + $0x19] sm:$0x1] 0.0
    %351 = vst [vmem:[#allocation2 + $0x29] sm:$0x1] 0.0
    %352 = vst [vmem:[#allocation2 + $0x39] sm:$0x1] 0.0
    %353 = vst [vmem:[#allocation2 + $0x49] sm:$0x1] 0.0
    %354 = vst [vmem:[#allocation2 + $0x59] sm:$0x1] 0.0
    %355 = vst [vmem:[#allocation2 + $0x69] sm:$0x1] 0.0
    %356 = vst [vmem:[#allocation2 + $0x79] sm:$0x1] 0.0
    %357 = vst [vmem:[#allocation2 + $0x89] sm:$0x1] 0.0
    %358 = vst [vmem:[#allocation2 + $0x99] sm:$0x1] 0.0
    %359 = vst [vmem:[#allocation2 + $0xa9] sm:$0x1] 0.0
    %360 = vst [vmem:[#allocation2 + $0xb9] sm:$0x1] 0.0
    %361 = vst [vmem:[#allocation2 + $0xc9] sm:$0x1] 0.0
    %362 = vst [vmem:[#allocation2 + $0xd9] sm:$0x1] 0.0
    %363 = vst [vmem:[#allocation2 + $0xe9] sm:$0x1] 0.0
    %364 = vst [vmem:[#allocation2 + $0xf9] sm:$0x1] 0.0
    %v365 = vld [vmem:[%s0] sm:$0xff]
    %v366 = vld [vmem:[%s0 + $0x8] sm:$0xff]
    %v367 = vld [vmem:[%s0 + $0x10] sm:$0xff]
    %v368 = vld [vmem:[%s0 + $0x18] sm:$0xff]
    %v369 = vld [vmem:[%s0 + $0x20] sm:$0xff]
    %v370 = vld [vmem:[%s0 + $0x28] sm:$0xff]
    %v371 = vld [vmem:[%s0 + $0x30] sm:$0xff]
    %v372 = vld [vmem:[%s0 + $0x38] sm:$0xff]
    %v373 = vld [vmem:[%s0 + $0x40] sm:$0xff]
    %v374 = vld [vmem:[%s0 + $0x48] sm:$0xff]
    %v375 = vld [vmem:[%s0 + $0x50] sm:$0xff]
    %v376 = vld [vmem:[%s0 + $0x58] sm:$0xff]
    %v377 = vld [vmem:[%s0 + $0x60] sm:$0xff]
    %v378 = vld [vmem:[%s0 + $0x68] sm:$0xff]
    %v379 = vld [vmem:[%s0 + $0x70] sm:$0xff]
    %v380 = vld [vmem:[%s0 + $0x78] sm:$0xff]
    %381 = vst [vmem:[#allocation2 + $0x1] sm:$0xff] %v365
    %382 = vst [vmem:[#allocation2 + $0x11] sm:$0xff] %v366
    %383 = vst [vmem:[#allocation2 + $0x21] sm:$0xff] %v367
    %384 = vst [vmem:[#allocation2 + $0x31] sm:$0xff] %v368
    %385 = vst [vmem:[#allocation2 + $0x41] sm:$0xff] %v369
    %386 = vst [vmem:[#allocation2 + $0x51] sm:$0xff] %v370
    %387 = vst [vmem:[#allocation2 + $0x61] sm:$0xff] %v371
    %388 = vst [vmem:[#allocation2 + $0x71] sm:$0xff] %v372
    %389 = vst [vmem:[#allocation2 + $0x81] sm:$0xff] %v373
    %390 = vst [vmem:[#allocation2 + $0x91] sm:$0xff] %v374
    %391 = vst [vmem:[#allocation2 + $0xa1] sm:$0xff] %v375
    %392 = vst [vmem:[#allocation2 + $0xb1] sm:$0xff] %v376
    %393 = vst [vmem:[#allocation2 + $0xc1] sm:$0xff] %v377
    %394 = vst [vmem:[#allocation2 + $0xd1] sm:$0xff] %v378
    %395 = vst [vmem:[#allocation2 + $0xe1] sm:$0xff] %v379
    %396 = vst [vmem:[#allocation2 + $0xf1] sm:$0xff] %v380
    %v397 = vld [vmem:[#allocation5] sm:$0xf]
    %v398 = vld [vmem:[#allocation5 + $0x4] sm:$0xf]
    %v399 = vld [vmem:[#allocation5 + $0x8] sm:$0xf]
    %v400 = vld [vmem:[#allocation5 + $0xc] sm:$0xf]
    %v401 = vld [vmem:[#allocation5 + $0x10] sm:$0xf]
    %v402 = vld [vmem:[#allocation5 + $0x14] sm:$0xf]
    %v403 = vld [vmem:[#allocation5 + $0x18] sm:$0xf]
    %v404 = vld [vmem:[#allocation5 + $0x1c] sm:$0xf]
    %v405 = vld [vmem:[#allocation5 + $0x20] sm:$0xf]
    %v406 = vld [vmem:[#allocation5 + $0x24] sm:$0xf]
    %v407 = vld [vmem:[#allocation5 + $0x28] sm:$0xf]
    %v408 = vld [vmem:[#allocation5 + $0x2c] sm:$0xf]
    %v409 = vld [vmem:[#allocation5 + $0x30] sm:$0xf]
    %v410 = vld [vmem:[#allocation5 + $0x34] sm:$0xf]
    %v411 = vld [vmem:[#allocation5 + $0x38] sm:$0xf]
    %v412 = vld [vmem:[#allocation5 + $0x3c] sm:$0xf]
    %v413 = vld [vmem:[#allocation5 + $0x40] sm:$0xf]
    %v414 = vld [vmem:[#allocation5 + $0x44] sm:$0xf]
    %v415 = vld [vmem:[#allocation5 + $0x48] sm:$0xf]
    %v416 = vld [vmem:[#allocation5 + $0x4c] sm:$0xf]
    %v417 = vld [vmem:[#allocation5 + $0x50] sm:$0xf]
    %v418 = vld [vmem:[#allocation5 + $0x54] sm:$0xf]
    %v419 = vld [vmem:[#allocation5 + $0x58] sm:$0xf]
    %v420 = vld [vmem:[#allocation5 + $0x5c] sm:$0xf]
    %v421 = vld [vmem:[#allocation5 + $0x60] sm:$0xf]
    %v422 = vld [vmem:[#allocation5 + $0x64] sm:$0xf]
    %v423 = vld [vmem:[#allocation5 + $0x68] sm:$0xf]
    %v424 = vld [vmem:[#allocation5 + $0x6c] sm:$0xf]
    %v425 = vld [vmem:[#allocation5 + $0x70] sm:$0xf]
    %v426 = vld [vmem:[#allocation5 + $0x74] sm:$0xf]
    %v427 = vld [vmem:[#allocation5 + $0x78] sm:$0xf]
    %v428 = vld [vmem:[#allocation5 + $0x7c] sm:$0xf]
    %v429 = vld [vmem:[#allocation5 + $0x80] sm:$0xf]
    %v430 = vld [vmem:[#allocation5 + $0x84] sm:$0xf]
    %v431 = vld [vmem:[#allocation5 + $0x88] sm:$0xf]
    %v432 = vld [vmem:[#allocation5 + $0x8c] sm:$0xf]
    %v433 = vld [vmem:[#allocation5 + $0x90] sm:$0xf]
    %v434 = vld [vmem:[#allocation5 + $0x94] sm:$0xf]
    %v435 = vld [vmem:[#allocation5 + $0x98] sm:$0xf]
    %v436 = vld [vmem:[#allocation5 + $0x9c] sm:$0xf]
    %v437 = vld [vmem:[#allocation5 + $0xa0] sm:$0xf]
    %v438 = vld [vmem:[#allocation5 + $0xa4] sm:$0xf]
    %v439 = vld [vmem:[#allocation5 + $0xa8] sm:$0xf]
    %v440 = vld [vmem:[#allocation5 + $0xac] sm:$0xf]
    %v441 = vld [vmem:[#allocation5 + $0xb0] sm:$0xf]
    %v442 = vld [vmem:[#allocation5 + $0xb4] sm:$0xf]
    %v443 = vld [vmem:[#allocation5 + $0xb8] sm:$0xf]
    %v444 = vld [vmem:[#allocation5 + $0xbc] sm:$0xf]
    %v445 = vld [vmem:[%s4] sm:$0x1]
    %v446 = vld [vmem:[#allocation2] sm:$0xff]
    %v447 = vld [vmem:[#allocation2 + $0x10] sm:$0xff]
    %v448 = vld [vmem:[#allocation2 + $0x20] sm:$0xff]
    %v449 = vld [vmem:[#allocation2 + $0x30] sm:$0xff]
    %v450 = vld [vmem:[#allocation2 + $0x40] sm:$0xff]
    %v451 = vld [vmem:[#allocation2 + $0x50] sm:$0xff]
    %v452 = vld [vmem:[#allocation2 + $0x60] sm:$0xff]
    %v453 = vld [vmem:[#allocation2 + $0x70] sm:$0xff]
    %v454 = vld [vmem:[#allocation2 + $0x80] sm:$0xff]
    %v455 = vld [vmem:[#allocation2 + $0x90] sm:$0xff]
    %v456 = vld [vmem:[#allocation2 + $0xa0] sm:$0xff]
    %v457 = vld [vmem:[#allocation2 + $0xb0] sm:$0xff]
    %v458 = vld [vmem:[#allocation2 + $0xc0] sm:$0xff]
    %v459 = vld [vmem:[#allocation2 + $0xd0] sm:$0xff]
    %v460 = vld [vmem:[#allocation2 + $0xe0] sm:$0xff]
    %v461 = vld [vmem:[#allocation2 + $0xf0] sm:$0xff]
    %v462 = vpack.c.bf16 %v447, %v446
    %v463 = vpack.c.bf16 %v449, %v448
    %v464 = vpack.c.bf16 %v451, %v450
    %v465 = vpack.c.bf16 %v453, %v452
    %v466 = vpack.c.bf16 %v455, %v454
    %v467 = vpack.c.bf16 %v457, %v456
    %v468 = vpack.c.bf16 %v459, %v458
    %v469 = vpack.c.bf16 %v461, %v460
    %v478 = vunpack.c.l.b16 %v462
    %v479 = vunpack.c.h.b16 %v462
    %v480 = vunpack.c.l.b16 %v463
    %v481 = vunpack.c.h.b16 %v463
    %v482 = vunpack.c.l.b16 %v464
    %v483 = vunpack.c.h.b16 %v464
    %v484 = vunpack.c.l.b16 %v465
    %v485 = vunpack.c.h.b16 %v465
    %v486 = vunpack.c.l.b16 %v466
    %v487 = vunpack.c.h.b16 %v466
    %v488 = vunpack.c.l.b16 %v467
    %v489 = vunpack.c.h.b16 %v467
    %v490 = vunpack.c.l.b16 %v468
    %v491 = vunpack.c.h.b16 %v468
    %v492 = vunpack.c.l.b16 %v469
    %v493 = vunpack.c.h.b16 %v469
    %v494 = vpack.c.b16 %v478, %v478
    %v495 = vpack.c.b16 %v479, %v479
    %v496 = vpack.c.b16 %v480, %v480
    %v497 = vpack.c.b16 %v481, %v481
    %v498 = vpack.c.b16 %v482, %v482
    %v499 = vpack.c.b16 %v483, %v483
    %v500 = vpack.c.b16 %v484, %v484
    %v501 = vpack.c.b16 %v485, %v485
    %v502 = vpack.c.b16 %v486, %v486
    %v503 = vpack.c.b16 %v487, %v487
    %v504 = vpack.c.b16 %v488, %v488
    %v505 = vpack.c.b16 %v489, %v489
    %v506 = vpack.c.b16 %v490, %v490
    %v507 = vpack.c.b16 %v491, %v491
    %v508 = vpack.c.b16 %v492, %v492
    %v509 = vpack.c.b16 %v493, %v493
    %526 = vst [vmem:[#allocation3] sm:$0xf] %v494
    %527 = vst [vmem:[#allocation3 + $0xc] sm:$0xf] %v495
    %528 = vst [vmem:[#allocation3 + $0x18] sm:$0xf] %v496
    %529 = vst [vmem:[#allocation3 + $0x24] sm:$0xf] %v497
    %530 = vst [vmem:[#allocation3 + $0x30] sm:$0xf] %v498
    %531 = vst [vmem:[#allocation3 + $0x3c] sm:$0xf] %v499
    %532 = vst [vmem:[#allocation3 + $0x48] sm:$0xf] %v500
    %533 = vst [vmem:[#allocation3 + $0x54] sm:$0xf] %v501
    %534 = vst [vmem:[#allocation3 + $0x60] sm:$0xf] %v502
    %535 = vst [vmem:[#allocation3 + $0x6c] sm:$0xf] %v503
    %536 = vst [vmem:[#allocation3 + $0x78] sm:$0xf] %v504
    %537 = vst [vmem:[#allocation3 + $0x84] sm:$0xf] %v505
    %538 = vst [vmem:[#allocation3 + $0x90] sm:$0xf] %v506
    %539 = vst [vmem:[#allocation3 + $0x9c] sm:$0xf] %v507
    %540 = vst [vmem:[#allocation3 + $0xa8] sm:$0xf] %v508
    %541 = vst [vmem:[#allocation3 + $0xb4] sm:$0xf] %v509
    %v542 = vld [vmem:[#allocation2 + $0x1] sm:$0xff]
    %v543 = vld [vmem:[#allocation2 + $0x11] sm:$0xff]
    %v544 = vld [vmem:[#allocation2 + $0x21] sm:$0xff]
    %v545 = vld [vmem:[#allocation2 + $0x31] sm:$0xff]
    %v546 = vld [vmem:[#allocation2 + $0x41] sm:$0xff]
    %v547 = vld [vmem:[#allocation2 + $0x51] sm:$0xff]
    %v548 = vld [vmem:[#allocation2 + $0x61] sm:$0xff]
    %v549 = vld [vmem:[#allocation2 + $0x71] sm:$0xff]
    %v550 = vld [vmem:[#allocation2 + $0x81] sm:$0xff]
    %v551 = vld [vmem:[#allocation2 + $0x91] sm:$0xff]
    %v552 = vld [vmem:[#allocation2 + $0xa1] sm:$0xff]
    %v553 = vld [vmem:[#allocation2 + $0xb1] sm:$0xff]
    %v554 = vld [vmem:[#allocation2 + $0xc1] sm:$0xff]
    %v555 = vld [vmem:[#allocation2 + $0xd1] sm:$0xff]
    %v556 = vld [vmem:[#allocation2 + $0xe1] sm:$0xff]
    %v557 = vld [vmem:[#allocation2 + $0xf1] sm:$0xff]
    %v558 = vpack.c.bf16 %v543, %v542
    %v559 = vpack.c.bf16 %v545, %v544
    %v560 = vpack.c.bf16 %v547, %v546
    %v561 = vpack.c.bf16 %v549, %v548
    %v562 = vpack.c.bf16 %v551, %v550
    %v563 = vpack.c.bf16 %v553, %v552
    %v564 = vpack.c.bf16 %v555, %v554
    %v565 = vpack.c.bf16 %v557, %v556
    %v574 = vunpack.c.l.b16 %v558
    %v575 = vunpack.c.h.b16 %v558
    %v576 = vunpack.c.l.b16 %v559
    %v577 = vunpack.c.h.b16 %v559
    %v578 = vunpack.c.l.b16 %v560
    %v579 = vunpack.c.h.b16 %v560
    %v580 = vunpack.c.l.b16 %v561
    %v581 = vunpack.c.h.b16 %v561
    %v582 = vunpack.c.l.b16 %v562
    %v583 = vunpack.c.h.b16 %v562
    %v584 = vunpack.c.l.b16 %v563
    %v585 = vunpack.c.h.b16 %v563
    %v586 = vunpack.c.l.b16 %v564
    %v587 = vunpack.c.h.b16 %v564
    %v588 = vunpack.c.l.b16 %v565
    %v589 = vunpack.c.h.b16 %v565
    %v590 = vpack.c.b16 %v574, %v574
    %v591 = vpack.c.b16 %v575, %v575
    %v592 = vpack.c.b16 %v576, %v576
    %v593 = vpack.c.b16 %v577, %v577
    %v594 = vpack.c.b16 %v578, %v578
    %v595 = vpack.c.b16 %v579, %v579
    %v596 = vpack.c.b16 %v580, %v580
    %v597 = vpack.c.b16 %v581, %v581
    %v598 = vpack.c.b16 %v582, %v582
    %v599 = vpack.c.b16 %v583, %v583
    %v600 = vpack.c.b16 %v584, %v584
    %v601 = vpack.c.b16 %v585, %v585
    %v602 = vpack.c.b16 %v586, %v586
    %v603 = vpack.c.b16 %v587, %v587
    %v604 = vpack.c.b16 %v588, %v588
    %v605 = vpack.c.b16 %v589, %v589
    %622 = vst [vmem:[#allocation3 + $0x4] sm:$0xf] %v590
    %623 = vst [vmem:[#allocation3 + $0x10] sm:$0xf] %v591
    %624 = vst [vmem:[#allocation3 + $0x1c] sm:$0xf] %v592
    %625 = vst [vmem:[#allocation3 + $0x28] sm:$0xf] %v593
    %626 = vst [vmem:[#allocation3 + $0x34] sm:$0xf] %v594
    %627 = vst [vmem:[#allocation3 + $0x40] sm:$0xf] %v595
    %628 = vst [vmem:[#allocation3 + $0x4c] sm:$0xf] %v596
    %629 = vst [vmem:[#allocation3 + $0x58] sm:$0xf] %v597
    %630 = vst [vmem:[#allocation3 + $0x64] sm:$0xf] %v598
    %631 = vst [vmem:[#allocation3 + $0x70] sm:$0xf] %v599
    %632 = vst [vmem:[#allocation3 + $0x7c] sm:$0xf] %v600
    %633 = vst [vmem:[#allocation3 + $0x88] sm:$0xf] %v601
    %634 = vst [vmem:[#allocation3 + $0x94] sm:$0xf] %v602
    %635 = vst [vmem:[#allocation3 + $0xa0] sm:$0xf] %v603
    %636 = vst [vmem:[#allocation3 + $0xac] sm:$0xf] %v604
    %637 = vst [vmem:[#allocation3 + $0xb8] sm:$0xf] %v605
    %v638 = vld [vmem:[#allocation2 + $0x2] sm:$0xff]
    %v639 = vld [vmem:[#allocation2 + $0x12] sm:$0xff]
    %v640 = vld [vmem:[#allocation2 + $0x22] sm:$0xff]
    %v641 = vld [vmem:[#allocation2 + $0x32] sm:$0xff]
    %v642 = vld [vmem:[#allocation2 + $0x42] sm:$0xff]
    %v643 = vld [vmem:[#allocation2 + $0x52] sm:$0xff]
    %v644 = vld [vmem:[#allocation2 + $0x62] sm:$0xff]
    %v645 = vld [vmem:[#allocation2 + $0x72] sm:$0xff]
    %v646 = vld [vmem:[#allocation2 + $0x82] sm:$0xff]
    %v647 = vld [vmem:[#allocation2 + $0x92] sm:$0xff]
    %v648 = vld [vmem:[#allocation2 + $0xa2] sm:$0xff]
    %v649 = vld [vmem:[#allocation2 + $0xb2] sm:$0xff]
    %v650 = vld [vmem:[#allocation2 + $0xc2] sm:$0xff]
    %v651 = vld [vmem:[#allocation2 + $0xd2] sm:$0xff]
    %v652 = vld [vmem:[#allocation2 + $0xe2] sm:$0xff]
    %v653 = vld [vmem:[#allocation2 + $0xf2] sm:$0xff]
    %v654 = vpack.c.bf16 %v639, %v638
    %v655 = vpack.c.bf16 %v641, %v640
    %v656 = vpack.c.bf16 %v643, %v642
    %v657 = vpack.c.bf16 %v645, %v644
    %v658 = vpack.c.bf16 %v647, %v646
    %v659 = vpack.c.bf16 %v649, %v648
    %v660 = vpack.c.bf16 %v651, %v650
    %v661 = vpack.c.bf16 %v653, %v652
    %v670 = vunpack.c.l.b16 %v654
    %v671 = vunpack.c.h.b16 %v654
    %v672 = vunpack.c.l.b16 %v655
    %v673 = vunpack.c.h.b16 %v655
    %v674 = vunpack.c.l.b16 %v656
    %v675 = vunpack.c.h.b16 %v656
    %v676 = vunpack.c.l.b16 %v657
    %v677 = vunpack.c.h.b16 %v657
    %v678 = vunpack.c.l.b16 %v658
    %v679 = vunpack.c.h.b16 %v658
    %v680 = vunpack.c.l.b16 %v659
    %v681 = vunpack.c.h.b16 %v659
    %v682 = vunpack.c.l.b16 %v660
    %v683 = vunpack.c.h.b16 %v660
    %v684 = vunpack.c.l.b16 %v661
    %v685 = vunpack.c.h.b16 %v661
    %v686 = vpack.c.b16 %v670, %v670
    %v687 = vpack.c.b16 %v671, %v671
    %v688 = vpack.c.b16 %v672, %v672
    %v689 = vpack.c.b16 %v673, %v673
    %v690 = vpack.c.b16 %v674, %v674
    %v691 = vpack.c.b16 %v675, %v675
    %v692 = vpack.c.b16 %v676, %v676
    %v693 = vpack.c.b16 %v677, %v677
    %v694 = vpack.c.b16 %v678, %v678
    %v695 = vpack.c.b16 %v679, %v679
    %v696 = vpack.c.b16 %v680, %v680
    %v697 = vpack.c.b16 %v681, %v681
    %v698 = vpack.c.b16 %v682, %v682
    %v699 = vpack.c.b16 %v683, %v683
    %v700 = vpack.c.b16 %v684, %v684
    %v701 = vpack.c.b16 %v685, %v685
    %718 = vst [vmem:[#allocation3 + $0x8] sm:$0xf] %v686
    %719 = vst [vmem:[#allocation3 + $0x14] sm:$0xf] %v687
    %720 = vst [vmem:[#allocation3 + $0x20] sm:$0xf] %v688
    %721 = vst [vmem:[#allocation3 + $0x2c] sm:$0xf] %v689
    %722 = vst [vmem:[#allocation3 + $0x38] sm:$0xf] %v690
    %723 = vst [vmem:[#allocation3 + $0x44] sm:$0xf] %v691
    %724 = vst [vmem:[#allocation3 + $0x50] sm:$0xf] %v692
    %725 = vst [vmem:[#allocation3 + $0x5c] sm:$0xf] %v693
    %726 = vst [vmem:[#allocation3 + $0x68] sm:$0xf] %v694
    %727 = vst [vmem:[#allocation3 + $0x74] sm:$0xf] %v695
    %728 = vst [vmem:[#allocation3 + $0x80] sm:$0xf] %v696
    %729 = vst [vmem:[#allocation3 + $0x8c] sm:$0xf] %v697
    %730 = vst [vmem:[#allocation3 + $0x98] sm:$0xf] %v698
    %731 = vst [vmem:[#allocation3 + $0xa4] sm:$0xf] %v699
    %732 = vst [vmem:[#allocation3 + $0xb0] sm:$0xf] %v700
    %733 = vst [vmem:[#allocation3 + $0xbc] sm:$0xf] %v701
    %v734 = vld [vmem:[#allocation3] sm:$0xff]
    %v735 = vld [vmem:[#allocation3 + $0x8] sm:$0xf]
    %v736 = vld [vmem:[#allocation3 + $0xc] sm:$0xff]
    %v737 = vld [vmem:[#allocation3 + $0x14] sm:$0xf]
    %v738 = vld [vmem:[#allocation3 + $0x18] sm:$0xff]
    %v739 = vld [vmem:[#allocation3 + $0x20] sm:$0xf]
    %v740 = vld [vmem:[#allocation3 + $0x24] sm:$0xff]
    %v741 = vld [vmem:[#allocation3 + $0x2c] sm:$0xf]
    %v742 = vld [vmem:[#allocation3 + $0x30] sm:$0xff]
    %v743 = vld [vmem:[#allocation3 + $0x38] sm:$0xf]
    %v744 = vld [vmem:[#allocation3 + $0x3c] sm:$0xff]
    %v745 = vld [vmem:[#allocation3 + $0x44] sm:$0xf]
    %v746 = vld [vmem:[#allocation3 + $0x48] sm:$0xff]
    %v747 = vld [vmem:[#allocation3 + $0x50] sm:$0xf]
    %v748 = vld [vmem:[#allocation3 + $0x54] sm:$0xff]
    %v749 = vld [vmem:[#allocation3 + $0x5c] sm:$0xf]
    %v750 = vld [vmem:[#allocation3 + $0x60] sm:$0xff]
    %v751 = vld [vmem:[#allocation3 + $0x68] sm:$0xf]
    %v752 = vld [vmem:[#allocation3 + $0x6c] sm:$0xff]
    %v753 = vld [vmem:[#allocation3 + $0x74] sm:$0xf]
    %v754 = vld [vmem:[#allocation3 + $0x78] sm:$0xff]
    %v755 = vld [vmem:[#allocation3 + $0x80] sm:$0xf]
    %v756 = vld [vmem:[#allocation3 + $0x84] sm:$0xff]
    %v757 = vld [vmem:[#allocation3 + $0x8c] sm:$0xf]
    %v758 = vld [vmem:[#allocation3 + $0x90] sm:$0xff]
    %v759 = vld [vmem:[#allocation3 + $0x98] sm:$0xf]
    %v760 = vld [vmem:[#allocation3 + $0x9c] sm:$0xff]
    %v761 = vld [vmem:[#allocation3 + $0xa4] sm:$0xf]
    %v762 = vld [vmem:[#allocation3 + $0xa8] sm:$0xff]
    %v763 = vld [vmem:[#allocation3 + $0xb0] sm:$0xf]
    %v764 = vld [vmem:[#allocation3 + $0xb4] sm:$0xff]
    %v765 = vld [vmem:[#allocation3 + $0xbc] sm:$0xf]
    %v767 = vlaneseq
    %v768 = vshrl.u32 %v767, 7
    %v769 = vsub.s32 0, %v768
    %v770 = vrot.slane %v445, %v769
    %v804 = vunpack.c.l.b16 %v734
    %v805 = vunpack.c.h.b16 %v734
    %v806 = vunpack.c.l.b16 %v735
    %v807 = vunpack.c.l.b16 %v736
    %v808 = vunpack.c.h.b16 %v736
    %v809 = vunpack.c.l.b16 %v737
    %v810 = vunpack.c.l.b16 %v738
    %v811 = vunpack.c.h.b16 %v738
    %v812 = vunpack.c.l.b16 %v739
    %v813 = vunpack.c.l.b16 %v740
    %v814 = vunpack.c.h.b16 %v740
    %v815 = vunpack.c.l.b16 %v741
    %v816 = vunpack.c.l.b16 %v742
    %v817 = vunpack.c.h.b16 %v742
    %v818 = vunpack.c.l.b16 %v743
    %v819 = vunpack.c.l.b16 %v744
    %v820 = vunpack.c.h.b16 %v744
    %v821 = vunpack.c.l.b16 %v745
    %v822 = vunpack.c.l.b16 %v746
    %v823 = vunpack.c.h.b16 %v746
    %v824 = vunpack.c.l.b16 %v747
    %v825 = vunpack.c.l.b16 %v748
    %v826 = vunpack.c.h.b16 %v748
    %v827 = vunpack.c.l.b16 %v749
    %v828 = vunpack.c.l.b16 %v750
    %v829 = vunpack.c.h.b16 %v750
    %v830 = vunpack.c.l.b16 %v751
    %v831 = vunpack.c.l.b16 %v752
    %v832 = vunpack.c.h.b16 %v752
    %v833 = vunpack.c.l.b16 %v753
    %v834 = vunpack.c.l.b16 %v754
    %v835 = vunpack.c.h.b16 %v754
    %v836 = vunpack.c.l.b16 %v755
    %v837 = vunpack.c.l.b16 %v756
    %v838 = vunpack.c.h.b16 %v756
    %v839 = vunpack.c.l.b16 %v757
    %v840 = vunpack.c.l.b16 %v758
    %v841 = vunpack.c.h.b16 %v758
    %v842 = vunpack.c.l.b16 %v759
    %v843 = vunpack.c.l.b16 %v760
    %v844 = vunpack.c.h.b16 %v760
    %v845 = vunpack.c.l.b16 %v761
    %v846 = vunpack.c.l.b16 %v762
    %v847 = vunpack.c.h.b16 %v762
    %v848 = vunpack.c.l.b16 %v763
    %v849 = vunpack.c.l.b16 %v764
    %v850 = vunpack.c.h.b16 %v764
    %v851 = vunpack.c.l.b16 %v765
    %v852 = vpack.c.b16 %v807, %v804
    %v853 = vpack.c.b16 %v808, %v805
    %v854 = vpack.c.b16 %v809, %v806
    %v855 = vpack.c.b16 %v813, %v810
    %v856 = vpack.c.b16 %v814, %v811
    %v857 = vpack.c.b16 %v815, %v812
    %v858 = vpack.c.b16 %v819, %v816
    %v859 = vpack.c.b16 %v820, %v817
    %v860 = vpack.c.b16 %v821, %v818
    %v861 = vpack.c.b16 %v825, %v822
    %v862 = vpack.c.b16 %v826, %v823
    %v863 = vpack.c.b16 %v827, %v824
    %v864 = vpack.c.b16 %v831, %v828
    %v865 = vpack.c.b16 %v832, %v829
    %v866 = vpack.c.b16 %v833, %v830
    %v867 = vpack.c.b16 %v837, %v834
    %v868 = vpack.c.b16 %v838, %v835
    %v869 = vpack.c.b16 %v839, %v836
    %v870 = vpack.c.b16 %v843, %v840
    %v871 = vpack.c.b16 %v844, %v841
    %v872 = vpack.c.b16 %v845, %v842
    %v873 = vpack.c.b16 %v849, %v846
    %v874 = vpack.c.b16 %v850, %v847
    %v875 = vpack.c.b16 %v851, %v848
    %v948 = vunpack.c.l.b16 %v397
    %v949 = vunpack.c.l.b16 %v398
    %v950 = vunpack.c.l.b16 %v399
    %v951 = vunpack.c.l.b16 %v400
    %v952 = vunpack.c.l.b16 %v401
    %v953 = vunpack.c.l.b16 %v402
    %v954 = vunpack.c.l.b16 %v403
    %v955 = vunpack.c.l.b16 %v404
    %v956 = vunpack.c.l.b16 %v405
    %v957 = vunpack.c.l.b16 %v406
    %v958 = vunpack.c.l.b16 %v407
    %v959 = vunpack.c.l.b16 %v408
    %v960 = vunpack.c.l.b16 %v409
    %v961 = vunpack.c.l.b16 %v410
    %v962 = vunpack.c.l.b16 %v411
    %v963 = vunpack.c.l.b16 %v412
    %v964 = vunpack.c.l.b16 %v413
    %v965 = vunpack.c.l.b16 %v414
    %v966 = vunpack.c.l.b16 %v415
    %v967 = vunpack.c.l.b16 %v416
    %v968 = vunpack.c.l.b16 %v417
    %v969 = vunpack.c.l.b16 %v418
    %v970 = vunpack.c.l.b16 %v419
    %v971 = vunpack.c.l.b16 %v420
    %v972 = vunpack.c.l.b16 %v421
    %v973 = vunpack.c.l.b16 %v422
    %v974 = vunpack.c.l.b16 %v423
    %v975 = vunpack.c.l.b16 %v424
    %v976 = vunpack.c.l.b16 %v425
    %v977 = vunpack.c.l.b16 %v426
    %v978 = vunpack.c.l.b16 %v427
    %v979 = vunpack.c.l.b16 %v428
    %v980 = vunpack.c.l.b16 %v429
    %v981 = vunpack.c.l.b16 %v430
    %v982 = vunpack.c.l.b16 %v431
    %v983 = vunpack.c.l.b16 %v432
    %v984 = vunpack.c.l.b16 %v433
    %v985 = vunpack.c.l.b16 %v434
    %v986 = vunpack.c.l.b16 %v435
    %v987 = vunpack.c.l.b16 %v436
    %v988 = vunpack.c.l.b16 %v437
    %v989 = vunpack.c.l.b16 %v438
    %v990 = vunpack.c.l.b16 %v439
    %v991 = vunpack.c.l.b16 %v440
    %v992 = vunpack.c.l.b16 %v441
    %v993 = vunpack.c.l.b16 %v442
    %v994 = vunpack.c.l.b16 %v443
    %v995 = vunpack.c.l.b16 %v444
    %v996 = vpack.c.b16 %v949, %v948
    %v997 = vpack.c.b16 %v951, %v950
    %v998 = vpack.c.b16 %v953, %v952
    %v999 = vpack.c.b16 %v955, %v954
    %v1000 = vpack.c.b16 %v957, %v956
    %v1001 = vpack.c.b16 %v959, %v958
    %v1002 = vpack.c.b16 %v961, %v960
    %v1003 = vpack.c.b16 %v963, %v962
    %v1004 = vpack.c.b16 %v965, %v964
    %v1005 = vpack.c.b16 %v967, %v966
    %v1006 = vpack.c.b16 %v969, %v968
    %v1007 = vpack.c.b16 %v971, %v970
    %v1008 = vpack.c.b16 %v973, %v972
    %v1009 = vpack.c.b16 %v975, %v974
    %v1010 = vpack.c.b16 %v977, %v976
    %v1011 = vpack.c.b16 %v979, %v978
    %v1012 = vpack.c.b16 %v981, %v980
    %v1013 = vpack.c.b16 %v983, %v982
    %v1014 = vpack.c.b16 %v985, %v984
    %v1015 = vpack.c.b16 %v987, %v986
    %v1016 = vpack.c.b16 %v989, %v988
    %v1017 = vpack.c.b16 %v991, %v990
    %v1018 = vpack.c.b16 %v993, %v992
    %v1019 = vpack.c.b16 %v995, %v994
    %1044 = vmatprep.subr.bf16.mxu0 0
    %1045 = vmatpush1.bf16.msra.mxu0 %v1003
    %1046 = vmatprep.subr.bf16.mxu0 0
    %1047 = vmatpush1.bf16.msra.mxu0 %v1002
    %1048 = vmatprep.subr.bf16.mxu0 0
    %1049 = vmatpush1.bf16.msra.mxu0 %v1001
    %1050 = vmatprep.subr.bf16.mxu0 0
    %1051 = vmatpush1.bf16.msra.mxu0 %v1000
    %1052 = vmatprep.subr.bf16.mxu0 0
    %1053 = vmatpush1.bf16.msra.mxu0 %v999
    %1054 = vmatprep.subr.bf16.mxu0 0
    %1055 = vmatpush1.bf16.msra.mxu0 %v998
    %1056 = vmatprep.subr.bf16.mxu0 0
    %1057 = vmatpush1.bf16.msra.mxu0 %v997
    %1058 = vmatprep.subr.bf16.mxu0 0
    %1059 = vmatpush1.bf16.msra.mxu0 %v996
    %1060 = vmatprep.subr.bf16.mxu0 0
    %1061 = vmatpush2.bf16.msra.mxu0 %v1011
    %1062 = vmatprep.subr.bf16.mxu0 0
    %1063 = vmatpush2.bf16.msra.mxu0 %v1010
    %1064 = vmatprep.subr.bf16.mxu0 0
    %1065 = vmatpush2.bf16.msra.mxu0 %v1009
    %1066 = vmatprep.subr.bf16.mxu0 0
    %1067 = vmatpush2.bf16.msra.mxu0 %v1008
    %1068 = vmatprep.subr.bf16.mxu0 0
    %1069 = vmatpush2.bf16.msra.mxu0 %v1007
    %1070 = vmatprep.subr.bf16.mxu0 0
    %1071 = vmatpush2.bf16.msra.mxu0 %v1006
    %1072 = vmatprep.subr.bf16.mxu0 0
    %1073 = vmatpush2.bf16.msra.mxu0 %v1005
    %1074 = vmatprep.subr.bf16.mxu0 0
    %1075 = vmatpush2.bf16.msra.mxu0 %v1004
    %1076 = vmatprep.mubr.bf16.mxu0 %v853
    %1077 = vmatmul.mubr.bf16.gmra.mxu0 %v852
    %v1078 = vpop.f32.mrf.mxu0
    %v1079 = vadd.f32 %v770, %v1078
    %v1080 = vpop.f32.mrf.mxu0
    %v1081 = vpop.f32.mrf.mxu0
    %v1082 = vadd.f32 %v770, %v1081
    %v1083 = vpop.f32.mrf.mxu0
    %1084 = vmatprep.mubr.bf16.mxu0 %v856
    %1085 = vmatmul.mubr.bf16.gmra.mxu0 %v855
    %v1086 = vpop.f32.mrf.mxu0
    %v1087 = vadd.f32 %v770, %v1086
    %v1088 = vpop.f32.mrf.mxu0
    %v1089 = vpop.f32.mrf.mxu0
    %v1090 = vadd.f32 %v770, %v1089
    %v1091 = vpop.f32.mrf.mxu0
    %1092 = vmatprep.mubr.bf16.mxu0 %v859
    %1093 = vmatmul.mubr.bf16.gmra.mxu0 %v858
    %v1094 = vpop.f32.mrf.mxu0
    %v1095 = vadd.f32 %v770, %v1094
    %v1096 = vpop.f32.mrf.mxu0
    %v1097 = vpop.f32.mrf.mxu0
    %v1098 = vadd.f32 %v770, %v1097
    %v1099 = vpop.f32.mrf.mxu0
    %1100 = vmatprep.mubr.bf16.mxu0 %v862
    %1101 = vmatmul.mubr.bf16.gmra.mxu0 %v861
    %v1102 = vpop.f32.mrf.mxu0
    %v1103 = vadd.f32 %v770, %v1102
    %v1104 = vpop.f32.mrf.mxu0
    %v1105 = vpop.f32.mrf.mxu0
    %v1106 = vadd.f32 %v770, %v1105
    %v1107 = vpop.f32.mrf.mxu0
    %1108 = vmatprep.mubr.bf16.mxu0 %v865
    %1109 = vmatmul.mubr.bf16.gmra.mxu0 %v864
    %v1110 = vpop.f32.mrf.mxu0
    %v1111 = vadd.f32 %v770, %v1110
    %v1112 = vpop.f32.mrf.mxu0
    %v1113 = vpop.f32.mrf.mxu0
    %v1114 = vadd.f32 %v770, %v1113
    %v1115 = vpop.f32.mrf.mxu0
    %1116 = vmatprep.mubr.bf16.mxu0 %v868
    %1117 = vmatmul.mubr.bf16.gmra.mxu0 %v867
    %v1118 = vpop.f32.mrf.mxu0
    %v1119 = vadd.f32 %v770, %v1118
    %v1120 = vpop.f32.mrf.mxu0
    %v1121 = vpop.f32.mrf.mxu0
    %v1122 = vadd.f32 %v770, %v1121
    %v1123 = vpop.f32.mrf.mxu0
    %1124 = vmatprep.mubr.bf16.mxu0 %v871
    %1125 = vmatmul.mubr.bf16.gmra.mxu0 %v870
    %v1126 = vpop.f32.mrf.mxu0
    %v1127 = vadd.f32 %v770, %v1126
    %v1128 = vpop.f32.mrf.mxu0
    %v1129 = vpop.f32.mrf.mxu0
    %v1130 = vadd.f32 %v770, %v1129
    %v1131 = vpop.f32.mrf.mxu0
    %1132 = vmatprep.mubr.bf16.mxu0 %v874
    %1133 = vmatmul.mubr.bf16.gmra.mxu0 %v873
    %v1134 = vpop.f32.mrf.mxu0
    %v1135 = vadd.f32 %v770, %v1134
    %v1136 = vpop.f32.mrf.mxu0
    %v1137 = vpop.f32.mrf.mxu0
    %v1138 = vadd.f32 %v770, %v1137
    %v1139 = vpop.f32.mrf.mxu0
    %1140 = vdwg.mxu0
    %1141 = vmatprep.subr.bf16.mxu0 0
    %1142 = vmatpush1.bf16.msra.mxu0 %v1019
    %1143 = vmatprep.subr.bf16.mxu0 0
    %1144 = vmatpush1.bf16.msra.mxu0 %v1018
    %1145 = vmatprep.subr.bf16.mxu0 0
    %1146 = vmatpush1.bf16.msra.mxu0 %v1017
    %1147 = vmatprep.subr.bf16.mxu0 0
    %1148 = vmatpush1.bf16.msra.mxu0 %v1016
    %1149 = vmatprep.subr.bf16.mxu0 0
    %1150 = vmatpush1.bf16.msra.mxu0 %v1015
    %1151 = vmatprep.subr.bf16.mxu0 0
    %1152 = vmatpush1.bf16.msra.mxu0 %v1014
    %1153 = vmatprep.subr.bf16.mxu0 0
    %1154 = vmatpush1.bf16.msra.mxu0 %v1013
    %1155 = vmatprep.subr.bf16.mxu0 0
    %1156 = vmatpush1.bf16.msra.mxu0 %v1012
    %1157 = vmatprep.subr.bf16.mxu0 0
    %1158 = vmatpush2.bf16.msra.mxu0 0
    %1159 = vmatprep.subr.bf16.mxu0 0
    %1160 = vmatpush2.bf16.msra.mxu0 0
    %1161 = vmatprep.subr.bf16.mxu0 0
    %1162 = vmatpush2.bf16.msra.mxu0 0
    %1163 = vmatprep.subr.bf16.mxu0 0
    %1164 = vmatpush2.bf16.msra.mxu0 0
    %1165 = vmatprep.subr.bf16.mxu0 0
    %1166 = vmatpush2.bf16.msra.mxu0 0
    %1167 = vmatprep.subr.bf16.mxu0 0
    %1168 = vmatpush2.bf16.msra.mxu0 0
    %1169 = vmatprep.subr.bf16.mxu0 0
    %1170 = vmatpush2.bf16.msra.mxu0 0
    %1171 = vmatprep.subr.bf16.mxu0 0
    %1172 = vmatpush2.bf16.msra.mxu0 0
    %1173 = vmatprep.mubr.bf16.mxu0 0
    %1174 = vmatmul.mubr.bf16.gmra.mxu0 %v854
    %v1175 = vpop.f32.mrf.mxu0
    %v1176 = vadd.f32 %v1079, %v1175
    %v1177 = vpop.f32.mrf.mxu0
    %v1178 = vpop.f32.mrf.mxu0
    %v1179 = vadd.f32 %v1082, %v1178
    %v1180 = vpop.f32.mrf.mxu0
    %1181 = vmatprep.mubr.bf16.mxu0 0
    %1182 = vmatmul.mubr.bf16.gmra.mxu0 %v857
    %v1183 = vpop.f32.mrf.mxu0
    %v1184 = vadd.f32 %v1087, %v1183
    %v1185 = vpop.f32.mrf.mxu0
    %v1186 = vpop.f32.mrf.mxu0
    %v1187 = vadd.f32 %v1090, %v1186
    %v1188 = vpop.f32.mrf.mxu0
    %1189 = vmatprep.mubr.bf16.mxu0 0
    %1190 = vmatmul.mubr.bf16.gmra.mxu0 %v860
    %v1191 = vpop.f32.mrf.mxu0
    %v1192 = vadd.f32 %v1095, %v1191
    %v1193 = vpop.f32.mrf.mxu0
    %v1194 = vpop.f32.mrf.mxu0
    %v1195 = vadd.f32 %v1098, %v1194
    %v1196 = vpop.f32.mrf.mxu0
    %1197 = vmatprep.mubr.bf16.mxu0 0
    %1198 = vmatmul.mubr.bf16.gmra.mxu0 %v863
    %v1199 = vpop.f32.mrf.mxu0
    %v1200 = vadd.f32 %v1103, %v1199
    %v1201 = vpop.f32.mrf.mxu0
    %v1202 = vpop.f32.mrf.mxu0
    %v1203 = vadd.f32 %v1106, %v1202
    %v1204 = vpop.f32.mrf.mxu0
    %1205 = vmatprep.mubr.bf16.mxu0 0
    %1206 = vmatmul.mubr.bf16.gmra.mxu0 %v866
    %v1207 = vpop.f32.mrf.mxu0
    %v1208 = vadd.f32 %v1111, %v1207
    %v1209 = vpop.f32.mrf.mxu0
    %v1210 = vpop.f32.mrf.mxu0
    %v1211 = vadd.f32 %v1114, %v1210
    %v1212 = vpop.f32.mrf.mxu0
    %1213 = vmatprep.mubr.bf16.mxu0 0
    %1214 = vmatmul.mubr.bf16.gmra.mxu0 %v869
    %v1215 = vpop.f32.mrf.mxu0
    %v1216 = vadd.f32 %v1119, %v1215
    %v1217 = vpop.f32.mrf.mxu0
    %v1218 = vpop.f32.mrf.mxu0
    %v1219 = vadd.f32 %v1122, %v1218
    %v1220 = vpop.f32.mrf.mxu0
    %1221 = vmatprep.mubr.bf16.mxu0 0
    %1222 = vmatmul.mubr.bf16.gmra.mxu0 %v872
    %v1223 = vpop.f32.mrf.mxu0
    %v1224 = vadd.f32 %v1127, %v1223
    %v1225 = vpop.f32.mrf.mxu0
    %v1226 = vpop.f32.mrf.mxu0
    %v1227 = vadd.f32 %v1130, %v1226
    %v1228 = vpop.f32.mrf.mxu0
    %1229 = vmatprep.mubr.bf16.mxu0 0
    %1230 = vmatmul.mubr.bf16.gmra.mxu0 %v875
    %v1231 = vpop.f32.mrf.mxu0
    %v1232 = vadd.f32 %v1135, %v1231
    %v1233 = vpop.f32.mrf.mxu0
    %v1234 = vpop.f32.mrf.mxu0
    %v1235 = vadd.f32 %v1138, %v1234
    %v1236 = vpop.f32.mrf.mxu0
    %1237 = vdwg.mxu0
    %v1238 = vmul.f32 %v1176, 0.5
    %v1239 = vmul.f32 %v1179, 0.5
    %v1240 = vmul.f32 %v1184, 0.5
    %v1241 = vmul.f32 %v1187, 0.5
    %v1242 = vmul.f32 %v1192, 0.5
    %v1243 = vmul.f32 %v1195, 0.5
    %v1244 = vmul.f32 %v1200, 0.5
    %v1245 = vmul.f32 %v1203, 0.5
    %v1246 = vmul.f32 %v1208, 0.5
    %v1247 = vmul.f32 %v1211, 0.5
    %v1248 = vmul.f32 %v1216, 0.5
    %v1249 = vmul.f32 %v1219, 0.5
    %v1250 = vmul.f32 %v1224, 0.5
    %v1251 = vmul.f32 %v1227, 0.5
    %v1252 = vmul.f32 %v1232, 0.5
    %v1253 = vmul.f32 %v1235, 0.5
    %v1254 = vmul.f32 %v1176, 0.044715
    %v1255 = vmul.f32 %v1179, 0.044715
    %v1256 = vmul.f32 %v1184, 0.044715
    %v1257 = vmul.f32 %v1187, 0.044715
    %v1258 = vmul.f32 %v1192, 0.044715
    %v1259 = vmul.f32 %v1195, 0.044715
    %v1260 = vmul.f32 %v1200, 0.044715
    %v1261 = vmul.f32 %v1203, 0.044715
    %v1262 = vmul.f32 %v1208, 0.044715
    %v1263 = vmul.f32 %v1211, 0.044715
    %v1264 = vmul.f32 %v1216, 0.044715
    %v1265 = vmul.f32 %v1219, 0.044715
    %v1266 = vmul.f32 %v1224, 0.044715
    %v1267 = vmul.f32 %v1227, 0.044715
    %v1268 = vmul.f32 %v1232, 0.044715
    %v1269 = vmul.f32 %v1235, 0.044715
    %v1270 = vmul.f32 %v1254, %v1176
    %v1271 = vmul.f32 %v1255, %v1179
    %v1272 = vmul.f32 %v1256, %v1184
    %v1273 = vmul.f32 %v1257, %v1187
    %v1274 = vmul.f32 %v1258, %v1192
    %v1275 = vmul.f32 %v1259, %v1195
    %v1276 = vmul.f32 %v1260, %v1200
    %v1277 = vmul.f32 %v1261, %v1203
    %v1278 = vmul.f32 %v1262, %v1208
    %v1279 = vmul.f32 %v1263, %v1211
    %v1280 = vmul.f32 %v1264, %v1216
    %v1281 = vmul.f32 %v1265, %v1219
    %v1282 = vmul.f32 %v1266, %v1224
    %v1283 = vmul.f32 %v1267, %v1227
    %v1284 = vmul.f32 %v1268, %v1232
    %v1285 = vmul.f32 %v1269, %v1235
    %v1286 = vmul.f32 %v1270, %v1176
    %v1287 = vmul.f32 %v1271, %v1179
    %v1288 = vmul.f32 %v1272, %v1184
    %v1289 = vmul.f32 %v1273, %v1187
    %v1290 = vmul.f32 %v1274, %v1192
    %v1291 = vmul.f32 %v1275, %v1195
    %v1292 = vmul.f32 %v1276, %v1200
    %v1293 = vmul.f32 %v1277, %v1203
    %v1294 = vmul.f32 %v1278, %v1208
    %v1295 = vmul.f32 %v1279, %v1211
    %v1296 = vmul.f32 %v1280, %v1216
    %v1297 = vmul.f32 %v1281, %v1219
    %v1298 = vmul.f32 %v1282, %v1224
    %v1299 = vmul.f32 %v1283, %v1227
    %v1300 = vmul.f32 %v1284, %v1232
    %v1301 = vmul.f32 %v1285, %v1235
    %v1302 = vadd.f32 %v1176, %v1286
    %v1303 = vadd.f32 %v1179, %v1287
    %v1304 = vadd.f32 %v1184, %v1288
    %v1305 = vadd.f32 %v1187, %v1289
    %v1306 = vadd.f32 %v1192, %v1290
    %v1307 = vadd.f32 %v1195, %v1291
    %v1308 = vadd.f32 %v1200, %v1292
    %v1309 = vadd.f32 %v1203, %v1293
    %v1310 = vadd.f32 %v1208, %v1294
    %v1311 = vadd.f32 %v1211, %v1295
    %v1312 = vadd.f32 %v1216, %v1296
    %v1313 = vadd.f32 %v1219, %v1297
    %v1314 = vadd.f32 %v1224, %v1298
    %v1315 = vadd.f32 %v1227, %v1299
    %v1316 = vadd.f32 %v1232, %v1300
    %v1317 = vadd.f32 %v1235, %v1301
    %v1318 = vmul.f32 %v1302, 0.7978846
    %v1319 = vmul.f32 %v1303, 0.7978846
    %v1320 = vmul.f32 %v1304, 0.7978846
    %v1321 = vmul.f32 %v1305, 0.7978846
    %v1322 = vmul.f32 %v1306, 0.7978846
    %v1323 = vmul.f32 %v1307, 0.7978846
    %v1324 = vmul.f32 %v1308, 0.7978846
    %v1325 = vmul.f32 %v1309, 0.7978846
    %v1326 = vmul.f32 %v1310, 0.7978846
    %v1327 = vmul.f32 %v1311, 0.7978846
    %v1328 = vmul.f32 %v1312, 0.7978846
    %v1329 = vmul.f32 %v1313, 0.7978846
    %v1330 = vmul.f32 %v1314, 0.7978846
    %v1331 = vmul.f32 %v1315, 0.7978846
    %v1332 = vmul.f32 %v1316, 0.7978846
    %v1333 = vmul.f32 %v1317, 0.7978846
    %v1334 = vtanh.pop %v1318
    %v1335 = vtanh.pop %v1319
    %v1336 = vtanh.pop %v1320
    %v1337 = vtanh.pop %v1321
    %v1338 = vtanh.pop %v1322
    %v1339 = vtanh.pop %v1323
    %v1340 = vtanh.pop %v1324
    %v1341 = vtanh.pop %v1325
    %v1342 = vtanh.pop %v1326
    %v1343 = vtanh.pop %v1327
    %v1344 = vtanh.pop %v1328
    %v1345 = vtanh.pop %v1329
    %v1346 = vtanh.pop %v1330
    %v1347 = vtanh.pop %v1331
    %v1348 = vtanh.pop %v1332
    %v1349 = vtanh.pop %v1333
    %v1350 = vadd.f32 %v1334, 1.0
    %v1351 = vadd.f32 %v1335, 1.0
    %v1352 = vadd.f32 %v1336, 1.0
    %v1353 = vadd.f32 %v1337, 1.0
    %v1354 = vadd.f32 %v1338, 1.0
    %v1355 = vadd.f32 %v1339, 1.0
    %v1356 = vadd.f32 %v1340, 1.0
    %v1357 = vadd.f32 %v1341, 1.0
    %v1358 = vadd.f32 %v1342, 1.0
    %v1359 = vadd.f32 %v1343, 1.0
    %v1360 = vadd.f32 %v1344, 1.0
    %v1361 = vadd.f32 %v1345, 1.0
    %v1362 = vadd.f32 %v1346, 1.0
    %v1363 = vadd.f32 %v1347, 1.0
    %v1364 = vadd.f32 %v1348, 1.0
    %v1365 = vadd.f32 %v1349, 1.0
    %v1366 = vmul.f32 %v1238, %v1350
    %v1367 = vmul.f32 %v1239, %v1351
    %v1368 = vmul.f32 %v1240, %v1352
    %v1369 = vmul.f32 %v1241, %v1353
    %v1370 = vmul.f32 %v1242, %v1354
    %v1371 = vmul.f32 %v1243, %v1355
    %v1372 = vmul.f32 %v1244, %v1356
    %v1373 = vmul.f32 %v1245, %v1357
    %v1374 = vmul.f32 %v1246, %v1358
    %v1375 = vmul.f32 %v1247, %v1359
    %v1376 = vmul.f32 %v1248, %v1360
    %v1377 = vmul.f32 %v1249, %v1361
    %v1378 = vmul.f32 %v1250, %v1362
    %v1379 = vmul.f32 %v1251, %v1363
    %v1380 = vmul.f32 %v1252, %v1364
    %v1381 = vmul.f32 %v1253, %v1365
    %1382 = vst [vmem:[#allocation2 + $0x1] sm:$0xff] %v1366
    %1383 = vst [vmem:[#allocation2 + $0x11] sm:$0xff] %v1367
    %1384 = vst [vmem:[#allocation2 + $0x21] sm:$0xff] %v1368
    %1385 = vst [vmem:[#allocation2 + $0x31] sm:$0xff] %v1369
    %1386 = vst [vmem:[#allocation2 + $0x41] sm:$0xff] %v1370
    %1387 = vst [vmem:[#allocation2 + $0x51] sm:$0xff] %v1371
    %1388 = vst [vmem:[#allocation2 + $0x61] sm:$0xff] %v1372
    %1389 = vst [vmem:[#allocation2 + $0x71] sm:$0xff] %v1373
    %1390 = vst [vmem:[#allocation2 + $0x81] sm:$0xff] %v1374
    %1391 = vst [vmem:[#allocation2 + $0x91] sm:$0xff] %v1375
    %1392 = vst [vmem:[#allocation2 + $0xa1] sm:$0xff] %v1376
    %1393 = vst [vmem:[#allocation2 + $0xb1] sm:$0xff] %v1377
    %1394 = vst [vmem:[#allocation2 + $0xc1] sm:$0xff] %v1378
    %1395 = vst [vmem:[#allocation2 + $0xd1] sm:$0xff] %v1379
    %1396 = vst [vmem:[#allocation2 + $0xe1] sm:$0xff] %v1380
    %1397 = vst [vmem:[#allocation2 + $0xf1] sm:$0xff] %v1381
    %v1398 = vld [vmem:[#allocation8] sm:$0xf]
    %v1399 = vld [vmem:[#allocation8 + $0x4] sm:$0xf]
    %v1400 = vld [vmem:[#allocation8 + $0x8] sm:$0xf]
    %v1401 = vld [vmem:[#allocation8 + $0xc] sm:$0xf]
    %v1402 = vld [vmem:[#allocation8 + $0x10] sm:$0xf]
    %v1403 = vld [vmem:[#allocation8 + $0x14] sm:$0xf]
    %v1404 = vld [vmem:[#allocation8 + $0x18] sm:$0xf]
    %v1405 = vld [vmem:[#allocation8 + $0x1c] sm:$0xf]
    %v1406 = vld [vmem:[#allocation8 + $0x20] sm:$0xf]
    %v1407 = vld [vmem:[#allocation8 + $0x24] sm:$0xf]
    %v1408 = vld [vmem:[#allocation8 + $0x28] sm:$0xf]
    %v1409 = vld [vmem:[#allocation8 + $0x2c] sm:$0xf]
    %v1410 = vld [vmem:[#allocation8 + $0x30] sm:$0xf]
    %v1411 = vld [vmem:[#allocation8 + $0x34] sm:$0xf]
    %v1412 = vld [vmem:[#allocation8 + $0x38] sm:$0xf]
    %v1413 = vld [vmem:[#allocation8 + $0x3c] sm:$0xf]
    %v1414 = vld [vmem:[#allocation8 + $0x40] sm:$0xf]
    %v1415 = vld [vmem:[#allocation8 + $0x44] sm:$0xf]
    %v1416 = vld [vmem:[#allocation8 + $0x48] sm:$0xf]
    %v1417 = vld [vmem:[#allocation8 + $0x4c] sm:$0xf]
    %v1418 = vld [vmem:[#allocation8 + $0x50] sm:$0xf]
    %v1419 = vld [vmem:[#allocation8 + $0x54] sm:$0xf]
    %v1420 = vld [vmem:[#allocation8 + $0x58] sm:$0xf]
    %v1421 = vld [vmem:[#allocation8 + $0x5c] sm:$0xf]
    %v1422 = vld [vmem:[#allocation8 + $0x60] sm:$0xf]
    %v1423 = vld [vmem:[#allocation8 + $0x64] sm:$0xf]
    %v1424 = vld [vmem:[#allocation8 + $0x68] sm:$0xf]
    %v1425 = vld [vmem:[#allocation8 + $0x6c] sm:$0xf]
    %v1426 = vld [vmem:[#allocation8 + $0x70] sm:$0xf]
    %v1427 = vld [vmem:[#allocation8 + $0x74] sm:$0xf]
    %v1428 = vld [vmem:[#allocation8 + $0x78] sm:$0xf]
    %v1429 = vld [vmem:[#allocation8 + $0x7c] sm:$0xf]
    %v1430 = vld [vmem:[#allocation8 + $0x80] sm:$0xf]
    %v1431 = vld [vmem:[#allocation8 + $0x84] sm:$0xf]
    %v1432 = vld [vmem:[#allocation8 + $0x88] sm:$0xf]
    %v1433 = vld [vmem:[#allocation8 + $0x8c] sm:$0xf]
    %v1434 = vld [vmem:[#allocation8 + $0x90] sm:$0xf]
    %v1435 = vld [vmem:[#allocation8 + $0x94] sm:$0xf]
    %v1436 = vld [vmem:[#allocation8 + $0x98] sm:$0xf]
    %v1437 = vld [vmem:[#allocation8 + $0x9c] sm:$0xf]
    %v1438 = vld [vmem:[#allocation8 + $0xa0] sm:$0xf]
    %v1439 = vld [vmem:[#allocation8 + $0xa4] sm:$0xf]
    %v1440 = vld [vmem:[#allocation8 + $0xa8] sm:$0xf]
    %v1441 = vld [vmem:[#allocation8 + $0xac] sm:$0xf]
    %v1442 = vld [vmem:[#allocation8 + $0xb0] sm:$0xf]
    %v1443 = vld [vmem:[#allocation8 + $0xb4] sm:$0xf]
    %v1444 = vld [vmem:[#allocation8 + $0xb8] sm:$0xf]
    %v1445 = vld [vmem:[#allocation8 + $0xbc] sm:$0xf]
    %v1446 = vld [vmem:[#allocation10] sm:$0x1]
    %v1447 = vld [vmem:[#allocation2] sm:$0xff]
    %v1448 = vld [vmem:[#allocation2 + $0x10] sm:$0xff]
    %v1449 = vld [vmem:[#allocation2 + $0x20] sm:$0xff]
    %v1450 = vld [vmem:[#allocation2 + $0x30] sm:$0xff]
    %v1451 = vld [vmem:[#allocation2 + $0x40] sm:$0xff]
    %v1452 = vld [vmem:[#allocation2 + $0x50] sm:$0xff]
    %v1453 = vld [vmem:[#allocation2 + $0x60] sm:$0xff]
    %v1454 = vld [vmem:[#allocation2 + $0x70] sm:$0xff]
    %v1455 = vld [vmem:[#allocation2 + $0x80] sm:$0xff]
    %v1456 = vld [vmem:[#allocation2 + $0x90] sm:$0xff]
    %v1457 = vld [vmem:[#allocation2 + $0xa0] sm:$0xff]
    %v1458 = vld [vmem:[#allocation2 + $0xb0] sm:$0xff]
    %v1459 = vld [vmem:[#allocation2 + $0xc0] sm:$0xff]
    %v1460 = vld [vmem:[#allocation2 + $0xd0] sm:$0xff]
    %v1461 = vld [vmem:[#allocation2 + $0xe0] sm:$0xff]
    %v1462 = vld [vmem:[#allocation2 + $0xf0] sm:$0xff]
    %v1463 = vpack.c.bf16 %v1448, %v1447
    %v1464 = vpack.c.bf16 %v1450, %v1449
    %v1465 = vpack.c.bf16 %v1452, %v1451
    %v1466 = vpack.c.bf16 %v1454, %v1453
    %v1467 = vpack.c.bf16 %v1456, %v1455
    %v1468 = vpack.c.bf16 %v1458, %v1457
    %v1469 = vpack.c.bf16 %v1460, %v1459
    %v1470 = vpack.c.bf16 %v1462, %v1461
    %v1479 = vunpack.c.l.b16 %v1463
    %v1480 = vunpack.c.h.b16 %v1463
    %v1481 = vunpack.c.l.b16 %v1464
    %v1482 = vunpack.c.h.b16 %v1464
    %v1483 = vunpack.c.l.b16 %v1465
    %v1484 = vunpack.c.h.b16 %v1465
    %v1485 = vunpack.c.l.b16 %v1466
    %v1486 = vunpack.c.h.b16 %v1466
    %v1487 = vunpack.c.l.b16 %v1467
    %v1488 = vunpack.c.h.b16 %v1467
    %v1489 = vunpack.c.l.b16 %v1468
    %v1490 = vunpack.c.h.b16 %v1468
    %v1491 = vunpack.c.l.b16 %v1469
    %v1492 = vunpack.c.h.b16 %v1469
    %v1493 = vunpack.c.l.b16 %v1470
    %v1494 = vunpack.c.h.b16 %v1470
    %v1495 = vpack.c.b16 %v1479, %v1479
    %v1496 = vpack.c.b16 %v1480, %v1480
    %v1497 = vpack.c.b16 %v1481, %v1481
    %v1498 = vpack.c.b16 %v1482, %v1482
    %v1499 = vpack.c.b16 %v1483, %v1483
    %v1500 = vpack.c.b16 %v1484, %v1484
    %v1501 = vpack.c.b16 %v1485, %v1485
    %v1502 = vpack.c.b16 %v1486, %v1486
    %v1503 = vpack.c.b16 %v1487, %v1487
    %v1504 = vpack.c.b16 %v1488, %v1488
    %v1505 = vpack.c.b16 %v1489, %v1489
    %v1506 = vpack.c.b16 %v1490, %v1490
    %v1507 = vpack.c.b16 %v1491, %v1491
    %v1508 = vpack.c.b16 %v1492, %v1492
    %v1509 = vpack.c.b16 %v1493, %v1493
    %v1510 = vpack.c.b16 %v1494, %v1494
    %1527 = vst [vmem:[#allocation3] sm:$0xf] %v1495
    %1528 = vst [vmem:[#allocation3 + $0xc] sm:$0xf] %v1496
    %1529 = vst [vmem:[#allocation3 + $0x18] sm:$0xf] %v1497
    %1530 = vst [vmem:[#allocation3 + $0x24] sm:$0xf] %v1498
    %1531 = vst [vmem:[#allocation3 + $0x30] sm:$0xf] %v1499
    %1532 = vst [vmem:[#allocation3 + $0x3c] sm:$0xf] %v1500
    %1533 = vst [vmem:[#allocation3 + $0x48] sm:$0xf] %v1501
    %1534 = vst [vmem:[#allocation3 + $0x54] sm:$0xf] %v1502
    %1535 = vst [vmem:[#allocation3 + $0x60] sm:$0xf] %v1503
    %1536 = vst [vmem:[#allocation3 + $0x6c] sm:$0xf] %v1504
    %1537 = vst [vmem:[#allocation3 + $0x78] sm:$0xf] %v1505
    %1538 = vst [vmem:[#allocation3 + $0x84] sm:$0xf] %v1506
    %1539 = vst [vmem:[#allocation3 + $0x90] sm:$0xf] %v1507
    %1540 = vst [vmem:[#allocation3 + $0x9c] sm:$0xf] %v1508
    %1541 = vst [vmem:[#allocation3 + $0xa8] sm:$0xf] %v1509
    %1542 = vst [vmem:[#allocation3 + $0xb4] sm:$0xf] %v1510
    %v1543 = vld [vmem:[#allocation2 + $0x1] sm:$0xff]
    %v1544 = vld [vmem:[#allocation2 + $0x11] sm:$0xff]
    %v1545 = vld [vmem:[#allocation2 + $0x21] sm:$0xff]
    %v1546 = vld [vmem:[#allocation2 + $0x31] sm:$0xff]
    %v1547 = vld [vmem:[#allocation2 + $0x41] sm:$0xff]
    %v1548 = vld [vmem:[#allocation2 + $0x51] sm:$0xff]
    %v1549 = vld [vmem:[#allocation2 + $0x61] sm:$0xff]
    %v1550 = vld [vmem:[#allocation2 + $0x71] sm:$0xff]
    %v1551 = vld [vmem:[#allocation2 + $0x81] sm:$0xff]
    %v1552 = vld [vmem:[#allocation2 + $0x91] sm:$0xff]
    %v1553 = vld [vmem:[#allocation2 + $0xa1] sm:$0xff]
    %v1554 = vld [vmem:[#allocation2 + $0xb1] sm:$0xff]
    %v1555 = vld [vmem:[#allocation2 + $0xc1] sm:$0xff]
    %v1556 = vld [vmem:[#allocation2 + $0xd1] sm:$0xff]
    %v1557 = vld [vmem:[#allocation2 + $0xe1] sm:$0xff]
    %v1558 = vld [vmem:[#allocation2 + $0xf1] sm:$0xff]
    %v1559 = vpack.c.bf16 %v1544, %v1543
    %v1560 = vpack.c.bf16 %v1546, %v1545
    %v1561 = vpack.c.bf16 %v1548, %v1547
    %v1562 = vpack.c.bf16 %v1550, %v1549
    %v1563 = vpack.c.bf16 %v1552, %v1551
    %v1564 = vpack.c.bf16 %v1554, %v1553
    %v1565 = vpack.c.bf16 %v1556, %v1555
    %v1566 = vpack.c.bf16 %v1558, %v1557
    %v1575 = vunpack.c.l.b16 %v1559
    %v1576 = vunpack.c.h.b16 %v1559
    %v1577 = vunpack.c.l.b16 %v1560
    %v1578 = vunpack.c.h.b16 %v1560
    %v1579 = vunpack.c.l.b16 %v1561
    %v1580 = vunpack.c.h.b16 %v1561
    %v1581 = vunpack.c.l.b16 %v1562
    %v1582 = vunpack.c.h.b16 %v1562
    %v1583 = vunpack.c.l.b16 %v1563
    %v1584 = vunpack.c.h.b16 %v1563
    %v1585 = vunpack.c.l.b16 %v1564
    %v1586 = vunpack.c.h.b16 %v1564
    %v1587 = vunpack.c.l.b16 %v1565
    %v1588 = vunpack.c.h.b16 %v1565
    %v1589 = vunpack.c.l.b16 %v1566
    %v1590 = vunpack.c.h.b16 %v1566
    %v1591 = vpack.c.b16 %v1575, %v1575
    %v1592 = vpack.c.b16 %v1576, %v1576
    %v1593 = vpack.c.b16 %v1577, %v1577
    %v1594 = vpack.c.b16 %v1578, %v1578
    %v1595 = vpack.c.b16 %v1579, %v1579
    %v1596 = vpack.c.b16 %v1580, %v1580
    %v1597 = vpack.c.b16 %v1581, %v1581
    %v1598 = vpack.c.b16 %v1582, %v1582
    %v1599 = vpack.c.b16 %v1583, %v1583
    %v1600 = vpack.c.b16 %v1584, %v1584
    %v1601 = vpack.c.b16 %v1585, %v1585
    %v1602 = vpack.c.b16 %v1586, %v1586
    %v1603 = vpack.c.b16 %v1587, %v1587
    %v1604 = vpack.c.b16 %v1588, %v1588
    %v1605 = vpack.c.b16 %v1589, %v1589
    %v1606 = vpack.c.b16 %v1590, %v1590
    %1623 = vst [vmem:[#allocation3 + $0x4] sm:$0xf] %v1591
    %1624 = vst [vmem:[#allocation3 + $0x10] sm:$0xf] %v1592
    %1625 = vst [vmem:[#allocation3 + $0x1c] sm:$0xf] %v1593
    %1626 = vst [vmem:[#allocation3 + $0x28] sm:$0xf] %v1594
    %1627 = vst [vmem:[#allocation3 + $0x34] sm:$0xf] %v1595
    %1628 = vst [vmem:[#allocation3 + $0x40] sm:$0xf] %v1596
    %1629 = vst [vmem:[#allocation3 + $0x4c] sm:$0xf] %v1597
    %1630 = vst [vmem:[#allocation3 + $0x58] sm:$0xf] %v1598
    %1631 = vst [vmem:[#allocation3 + $0x64] sm:$0xf] %v1599
    %1632 = vst [vmem:[#allocation3 + $0x70] sm:$0xf] %v1600
    %1633 = vst [vmem:[#allocation3 + $0x7c] sm:$0xf] %v1601
    %1634 = vst [vmem:[#allocation3 + $0x88] sm:$0xf] %v1602
    %1635 = vst [vmem:[#allocation3 + $0x94] sm:$0xf] %v1603
    %1636 = vst [vmem:[#allocation3 + $0xa0] sm:$0xf] %v1604
    %1637 = vst [vmem:[#allocation3 + $0xac] sm:$0xf] %v1605
    %1638 = vst [vmem:[#allocation3 + $0xb8] sm:$0xf] %v1606
    %v1639 = vld [vmem:[#allocation2 + $0x2] sm:$0xff]
    %v1640 = vld [vmem:[#allocation2 + $0x12] sm:$0xff]
    %v1641 = vld [vmem:[#allocation2 + $0x22] sm:$0xff]
    %v1642 = vld [vmem:[#allocation2 + $0x32] sm:$0xff]
    %v1643 = vld [vmem:[#allocation2 + $0x42] sm:$0xff]
    %v1644 = vld [vmem:[#allocation2 + $0x52] sm:$0xff]
    %v1645 = vld [vmem:[#allocation2 + $0x62] sm:$0xff]
    %v1646 = vld [vmem:[#allocation2 + $0x72] sm:$0xff]
    %v1647 = vld [vmem:[#allocation2 + $0x82] sm:$0xff]
    %v1648 = vld [vmem:[#allocation2 + $0x92] sm:$0xff]
    %v1649 = vld [vmem:[#allocation2 + $0xa2] sm:$0xff]
    %v1650 = vld [vmem:[#allocation2 + $0xb2] sm:$0xff]
    %v1651 = vld [vmem:[#allocation2 + $0xc2] sm:$0xff]
    %v1652 = vld [vmem:[#allocation2 + $0xd2] sm:$0xff]
    %v1653 = vld [vmem:[#allocation2 + $0xe2] sm:$0xff]
    %v1654 = vld [vmem:[#allocation2 + $0xf2] sm:$0xff]
    %v1655 = vpack.c.bf16 %v1640, %v1639
    %v1656 = vpack.c.bf16 %v1642, %v1641
    %v1657 = vpack.c.bf16 %v1644, %v1643
    %v1658 = vpack.c.bf16 %v1646, %v1645
    %v1659 = vpack.c.bf16 %v1648, %v1647
    %v1660 = vpack.c.bf16 %v1650, %v1649
    %v1661 = vpack.c.bf16 %v1652, %v1651
    %v1662 = vpack.c.bf16 %v1654, %v1653
    %v1671 = vunpack.c.l.b16 %v1655
    %v1672 = vunpack.c.h.b16 %v1655
    %v1673 = vunpack.c.l.b16 %v1656
    %v1674 = vunpack.c.h.b16 %v1656
    %v1675 = vunpack.c.l.b16 %v1657
    %v1676 = vunpack.c.h.b16 %v1657
    %v1677 = vunpack.c.l.b16 %v1658
    %v1678 = vunpack.c.h.b16 %v1658
    %v1679 = vunpack.c.l.b16 %v1659
    %v1680 = vunpack.c.h.b16 %v1659
    %v1681 = vunpack.c.l.b16 %v1660
    %v1682 = vunpack.c.h.b16 %v1660
    %v1683 = vunpack.c.l.b16 %v1661
    %v1684 = vunpack.c.h.b16 %v1661
    %v1685 = vunpack.c.l.b16 %v1662
    %v1686 = vunpack.c.h.b16 %v1662
    %v1687 = vpack.c.b16 %v1671, %v1671
    %v1688 = vpack.c.b16 %v1672, %v1672
    %v1689 = vpack.c.b16 %v1673, %v1673
    %v1690 = vpack.c.b16 %v1674, %v1674
    %v1691 = vpack.c.b16 %v1675, %v1675
    %v1692 = vpack.c.b16 %v1676, %v1676
    %v1693 = vpack.c.b16 %v1677, %v1677
    %v1694 = vpack.c.b16 %v1678, %v1678
    %v1695 = vpack.c.b16 %v1679, %v1679
    %v1696 = vpack.c.b16 %v1680, %v1680
    %v1697 = vpack.c.b16 %v1681, %v1681
    %v1698 = vpack.c.b16 %v1682, %v1682
    %v1699 = vpack.c.b16 %v1683, %v1683
    %v1700 = vpack.c.b16 %v1684, %v1684
    %v1701 = vpack.c.b16 %v1685, %v1685
    %v1702 = vpack.c.b16 %v1686, %v1686
    %1719 = vst [vmem:[#allocation3 + $0x8] sm:$0xf] %v1687
    %1720 = vst [vmem:[#allocation3 + $0x14] sm:$0xf] %v1688
    %1721 = vst [vmem:[#allocation3 + $0x20] sm:$0xf] %v1689
    %1722 = vst [vmem:[#allocation3 + $0x2c] sm:$0xf] %v1690
    %1723 = vst [vmem:[#allocation3 + $0x38] sm:$0xf] %v1691
    %1724 = vst [vmem:[#allocation3 + $0x44] sm:$0xf] %v1692
    %1725 = vst [vmem:[#allocation3 + $0x50] sm:$0xf] %v1693
    %1726 = vst [vmem:[#allocation3 + $0x5c] sm:$0xf] %v1694
    %1727 = vst [vmem:[#allocation3 + $0x68] sm:$0xf] %v1695
    %1728 = vst [vmem:[#allocation3 + $0x74] sm:$0xf] %v1696
    %1729 = vst [vmem:[#allocation3 + $0x80] sm:$0xf] %v1697
    %1730 = vst [vmem:[#allocation3 + $0x8c] sm:$0xf] %v1698
    %1731 = vst [vmem:[#allocation3 + $0x98] sm:$0xf] %v1699
    %1732 = vst [vmem:[#allocation3 + $0xa4] sm:$0xf] %v1700
    %1733 = vst [vmem:[#allocation3 + $0xb0] sm:$0xf] %v1701
    %1734 = vst [vmem:[#allocation3 + $0xbc] sm:$0xf] %v1702
    %v1735 = vld [vmem:[#allocation3] sm:$0xff]
    %v1736 = vld [vmem:[#allocation3 + $0x8] sm:$0xf]
    %v1737 = vld [vmem:[#allocation3 + $0xc] sm:$0xff]
    %v1738 = vld [vmem:[#allocation3 + $0x14] sm:$0xf]
    %v1739 = vld [vmem:[#allocation3 + $0x18] sm:$0xff]
    %v1740 = vld [vmem:[#allocation3 + $0x20] sm:$0xf]
    %v1741 = vld [vmem:[#allocation3 + $0x24] sm:$0xff]
    %v1742 = vld [vmem:[#allocation3 + $0x2c] sm:$0xf]
    %v1743 = vld [vmem:[#allocation3 + $0x30] sm:$0xff]
    %v1744 = vld [vmem:[#allocation3 + $0x38] sm:$0xf]
    %v1745 = vld [vmem:[#allocation3 + $0x3c] sm:$0xff]
    %v1746 = vld [vmem:[#allocation3 + $0x44] sm:$0xf]
    %v1747 = vld [vmem:[#allocation3 + $0x48] sm:$0xff]
    %v1748 = vld [vmem:[#allocation3 + $0x50] sm:$0xf]
    %v1749 = vld [vmem:[#allocation3 + $0x54] sm:$0xff]
    %v1750 = vld [vmem:[#allocation3 + $0x5c] sm:$0xf]
    %v1751 = vld [vmem:[#allocation3 + $0x60] sm:$0xff]
    %v1752 = vld [vmem:[#allocation3 + $0x68] sm:$0xf]
    %v1753 = vld [vmem:[#allocation3 + $0x6c] sm:$0xff]
    %v1754 = vld [vmem:[#allocation3 + $0x74] sm:$0xf]
    %v1755 = vld [vmem:[#allocation3 + $0x78] sm:$0xff]
    %v1756 = vld [vmem:[#allocation3 + $0x80] sm:$0xf]
    %v1757 = vld [vmem:[#allocation3 + $0x84] sm:$0xff]
    %v1758 = vld [vmem:[#allocation3 + $0x8c] sm:$0xf]
    %v1759 = vld [vmem:[#allocation3 + $0x90] sm:$0xff]
    %v1760 = vld [vmem:[#allocation3 + $0x98] sm:$0xf]
    %v1761 = vld [vmem:[#allocation3 + $0x9c] sm:$0xff]
    %v1762 = vld [vmem:[#allocation3 + $0xa4] sm:$0xf]
    %v1763 = vld [vmem:[#allocation3 + $0xa8] sm:$0xff]
    %v1764 = vld [vmem:[#allocation3 + $0xb0] sm:$0xf]
    %v1765 = vld [vmem:[#allocation3 + $0xb4] sm:$0xff]
    %v1766 = vld [vmem:[#allocation3 + $0xbc] sm:$0xf]
    %v1768 = vlaneseq
    %v1769 = vshrl.u32 %v1768, 7
    %v1770 = vsub.s32 0, %v1769
    %v1771 = vrot.slane %v1446, %v1770
    %v1805 = vunpack.c.l.b16 %v1735
    %v1806 = vunpack.c.h.b16 %v1735
    %v1807 = vunpack.c.l.b16 %v1736
    %v1808 = vunpack.c.l.b16 %v1737
    %v1809 = vunpack.c.h.b16 %v1737
    %v1810 = vunpack.c.l.b16 %v1738
    %v1811 = vunpack.c.l.b16 %v1739
    %v1812 = vunpack.c.h.b16 %v1739
    %v1813 = vunpack.c.l.b16 %v1740
    %v1814 = vunpack.c.l.b16 %v1741
    %v1815 = vunpack.c.h.b16 %v1741
    %v1816 = vunpack.c.l.b16 %v1742
    %v1817 = vunpack.c.l.b16 %v1743
    %v1818 = vunpack.c.h.b16 %v1743
    %v1819 = vunpack.c.l.b16 %v1744
    %v1820 = vunpack.c.l.b16 %v1745
    %v1821 = vunpack.c.h.b16 %v1745
    %v1822 = vunpack.c.l.b16 %v1746
    %v1823 = vunpack.c.l.b16 %v1747
    %v1824 = vunpack.c.h.b16 %v1747
    %v1825 = vunpack.c.l.b16 %v1748
    %v1826 = vunpack.c.l.b16 %v1749
    %v1827 = vunpack.c.h.b16 %v1749
    %v1828 = vunpack.c.l.b16 %v1750
    %v1829 = vunpack.c.l.b16 %v1751
    %v1830 = vunpack.c.h.b16 %v1751
    %v1831 = vunpack.c.l.b16 %v1752
    %v1832 = vunpack.c.l.b16 %v1753
    %v1833 = vunpack.c.h.b16 %v1753
    %v1834 = vunpack.c.l.b16 %v1754
    %v1835 = vunpack.c.l.b16 %v1755
    %v1836 = vunpack.c.h.b16 %v1755
    %v1837 = vunpack.c.l.b16 %v1756
    %v1838 = vunpack.c.l.b16 %v1757
    %v1839 = vunpack.c.h.b16 %v1757
    %v1840 = vunpack.c.l.b16 %v1758
    %v1841 = vunpack.c.l.b16 %v1759
    %v1842 = vunpack.c.h.b16 %v1759
    %v1843 = vunpack.c.l.b16 %v1760
    %v1844 = vunpack.c.l.b16 %v1761
    %v1845 = vunpack.c.h.b16 %v1761
    %v1846 = vunpack.c.l.b16 %v1762
    %v1847 = vunpack.c.l.b16 %v1763
    %v1848 = vunpack.c.h.b16 %v1763
    %v1849 = vunpack.c.l.b16 %v1764
    %v1850 = vunpack.c.l.b16 %v1765
    %v1851 = vunpack.c.h.b16 %v1765
    %v1852 = vunpack.c.l.b16 %v1766
    %v1853 = vpack.c.b16 %v1808, %v1805
    %v1854 = vpack.c.b16 %v1809, %v1806
    %v1855 = vpack.c.b16 %v1810, %v1807
    %v1856 = vpack.c.b16 %v1814, %v1811
    %v1857 = vpack.c.b16 %v1815, %v1812
    %v1858 = vpack.c.b16 %v1816, %v1813
    %v1859 = vpack.c.b16 %v1820, %v1817
    %v1860 = vpack.c.b16 %v1821, %v1818
    %v1861 = vpack.c.b16 %v1822, %v1819
    %v1862 = vpack.c.b16 %v1826, %v1823
    %v1863 = vpack.c.b16 %v1827, %v1824
    %v1864 = vpack.c.b16 %v1828, %v1825
    %v1865 = vpack.c.b16 %v1832, %v1829
    %v1866 = vpack.c.b16 %v1833, %v1830
    %v1867 = vpack.c.b16 %v1834, %v1831
    %v1868 = vpack.c.b16 %v1838, %v1835
    %v1869 = vpack.c.b16 %v1839, %v1836
    %v1870 = vpack.c.b16 %v1840, %v1837
    %v1871 = vpack.c.b16 %v1844, %v1841
    %v1872 = vpack.c.b16 %v1845, %v1842
    %v1873 = vpack.c.b16 %v1846, %v1843
    %v1874 = vpack.c.b16 %v1850, %v1847
    %v1875 = vpack.c.b16 %v1851, %v1848
    %v1876 = vpack.c.b16 %v1852, %v1849
    %v1949 = vunpack.c.l.b16 %v1398
    %v1950 = vunpack.c.l.b16 %v1399
    %v1951 = vunpack.c.l.b16 %v1400
    %v1952 = vunpack.c.l.b16 %v1401
    %v1953 = vunpack.c.l.b16 %v1402
    %v1954 = vunpack.c.l.b16 %v1403
    %v1955 = vunpack.c.l.b16 %v1404
    %v1956 = vunpack.c.l.b16 %v1405
    %v1957 = vunpack.c.l.b16 %v1406
    %v1958 = vunpack.c.l.b16 %v1407
    %v1959 = vunpack.c.l.b16 %v1408
    %v1960 = vunpack.c.l.b16 %v1409
    %v1961 = vunpack.c.l.b16 %v1410
    %v1962 = vunpack.c.l.b16 %v1411
    %v1963 = vunpack.c.l.b16 %v1412
    %v1964 = vunpack.c.l.b16 %v1413
    %v1965 = vunpack.c.l.b16 %v1414
    %v1966 = vunpack.c.l.b16 %v1415
    %v1967 = vunpack.c.l.b16 %v1416
    %v1968 = vunpack.c.l.b16 %v1417
    %v1969 = vunpack.c.l.b16 %v1418
    %v1970 = vunpack.c.l.b16 %v1419
    %v1971 = vunpack.c.l.b16 %v1420
    %v1972 = vunpack.c.l.b16 %v1421
    %v1973 = vunpack.c.l.b16 %v1422
    %v1974 = vunpack.c.l.b16 %v1423
    %v1975 = vunpack.c.l.b16 %v1424
    %v1976 = vunpack.c.l.b16 %v1425
    %v1977 = vunpack.c.l.b16 %v1426
    %v1978 = vunpack.c.l.b16 %v1427
    %v1979 = vunpack.c.l.b16 %v1428
    %v1980 = vunpack.c.l.b16 %v1429
    %v1981 = vunpack.c.l.b16 %v1430
    %v1982 = vunpack.c.l.b16 %v1431
    %v1983 = vunpack.c.l.b16 %v1432
    %v1984 = vunpack.c.l.b16 %v1433
    %v1985 = vunpack.c.l.b16 %v1434
    %v1986 = vunpack.c.l.b16 %v1435
    %v1987 = vunpack.c.l.b16 %v1436
    %v1988 = vunpack.c.l.b16 %v1437
    %v1989 = vunpack.c.l.b16 %v1438
    %v1990 = vunpack.c.l.b16 %v1439
    %v1991 = vunpack.c.l.b16 %v1440
    %v1992 = vunpack.c.l.b16 %v1441
    %v1993 = vunpack.c.l.b16 %v1442
    %v1994 = vunpack.c.l.b16 %v1443
    %v1995 = vunpack.c.l.b16 %v1444
    %v1996 = vunpack.c.l.b16 %v1445
    %v1997 = vpack.c.b16 %v1950, %v1949
    %v1998 = vpack.c.b16 %v1952, %v1951
    %v1999 = vpack.c.b16 %v1954, %v1953
    %v2000 = vpack.c.b16 %v1956, %v1955
    %v2001 = vpack.c.b16 %v1958, %v1957
    %v2002 = vpack.c.b16 %v1960, %v1959
    %v2003 = vpack.c.b16 %v1962, %v1961
    %v2004 = vpack.c.b16 %v1964, %v1963
    %v2005 = vpack.c.b16 %v1966, %v1965
    %v2006 = vpack.c.b16 %v1968, %v1967
    %v2007 = vpack.c.b16 %v1970, %v1969
    %v2008 = vpack.c.b16 %v1972, %v1971
    %v2009 = vpack.c.b16 %v1974, %v1973
    %v2010 = vpack.c.b16 %v1976, %v1975
    %v2011 = vpack.c.b16 %v1978, %v1977
    %v2012 = vpack.c.b16 %v1980, %v1979
    %v2013 = vpack.c.b16 %v1982, %v1981
    %v2014 = vpack.c.b16 %v1984, %v1983
    %v2015 = vpack.c.b16 %v1986, %v1985
    %v2016 = vpack.c.b16 %v1988, %v1987
    %v2017 = vpack.c.b16 %v1990, %v1989
    %v2018 = vpack.c.b16 %v1992, %v1991
    %v2019 = vpack.c.b16 %v1994, %v1993
    %v2020 = vpack.c.b16 %v1996, %v1995
    %2045 = vmatprep.subr.bf16.mxu0 0
    %2046 = vmatpush1.bf16.msra.mxu0 %v2004
    %2047 = vmatprep.subr.bf16.mxu0 0
    %2048 = vmatpush1.bf16.msra.mxu0 %v2003
    %2049 = vmatprep.subr.bf16.mxu0 0
    %2050 = vmatpush1.bf16.msra.mxu0 %v2002
    %2051 = vmatprep.subr.bf16.mxu0 0
    %2052 = vmatpush1.bf16.msra.mxu0 %v2001
    %2053 = vmatprep.subr.bf16.mxu0 0
    %2054 = vmatpush1.bf16.msra.mxu0 %v2000
    %2055 = vmatprep.subr.bf16.mxu0 0
    %2056 = vmatpush1.bf16.msra.mxu0 %v1999
    %2057 = vmatprep.subr.bf16.mxu0 0
    %2058 = vmatpush1.bf16.msra.mxu0 %v1998
    %2059 = vmatprep.subr.bf16.mxu0 0
    %2060 = vmatpush1.bf16.msra.mxu0 %v1997
    %2061 = vmatprep.subr.bf16.mxu0 0
    %2062 = vmatpush2.bf16.msra.mxu0 %v2012
    %2063 = vmatprep.subr.bf16.mxu0 0
    %2064 = vmatpush2.bf16.msra.mxu0 %v2011
    %2065 = vmatprep.subr.bf16.mxu0 0
    %2066 = vmatpush2.bf16.msra.mxu0 %v2010
    %2067 = vmatprep.subr.bf16.mxu0 0
    %2068 = vmatpush2.bf16.msra.mxu0 %v2009
    %2069 = vmatprep.subr.bf16.mxu0 0
    %2070 = vmatpush2.bf16.msra.mxu0 %v2008
    %2071 = vmatprep.subr.bf16.mxu0 0
    %2072 = vmatpush2.bf16.msra.mxu0 %v2007
    %2073 = vmatprep.subr.bf16.mxu0 0
    %2074 = vmatpush2.bf16.msra.mxu0 %v2006
    %2075 = vmatprep.subr.bf16.mxu0 0
    %2076 = vmatpush2.bf16.msra.mxu0 %v2005
    %2077 = vmatprep.mubr.bf16.mxu0 %v1854
    %2078 = vmatmul.mubr.bf16.gmra.mxu0 %v1853
    %v2079 = vpop.f32.mrf.mxu0
    %v2080 = vadd.f32 %v1771, %v2079
    %v2081 = vpop.f32.mrf.mxu0
    %v2082 = vpop.f32.mrf.mxu0
    %v2083 = vadd.f32 %v1771, %v2082
    %v2084 = vpop.f32.mrf.mxu0
    %2085 = vmatprep.mubr.bf16.mxu0 %v1857
    %2086 = vmatmul.mubr.bf16.gmra.mxu0 %v1856
    %v2087 = vpop.f32.mrf.mxu0
    %v2088 = vadd.f32 %v1771, %v2087
    %v2089 = vpop.f32.mrf.mxu0
    %v2090 = vpop.f32.mrf.mxu0
    %v2091 = vadd.f32 %v1771, %v2090
    %v2092 = vpop.f32.mrf.mxu0
    %2093 = vmatprep.mubr.bf16.mxu0 %v1860
    %2094 = vmatmul.mubr.bf16.gmra.mxu0 %v1859
    %v2095 = vpop.f32.mrf.mxu0
    %v2096 = vadd.f32 %v1771, %v2095
    %v2097 = vpop.f32.mrf.mxu0
    %v2098 = vpop.f32.mrf.mxu0
    %v2099 = vadd.f32 %v1771, %v2098
    %v2100 = vpop.f32.mrf.mxu0
    %2101 = vmatprep.mubr.bf16.mxu0 %v1863
    %2102 = vmatmul.mubr.bf16.gmra.mxu0 %v1862
    %v2103 = vpop.f32.mrf.mxu0
    %v2104 = vadd.f32 %v1771, %v2103
    %v2105 = vpop.f32.mrf.mxu0
    %v2106 = vpop.f32.mrf.mxu0
    %v2107 = vadd.f32 %v1771, %v2106
    %v2108 = vpop.f32.mrf.mxu0
    %2109 = vmatprep.mubr.bf16.mxu0 %v1866
    %2110 = vmatmul.mubr.bf16.gmra.mxu0 %v1865
    %v2111 = vpop.f32.mrf.mxu0
    %v2112 = vadd.f32 %v1771, %v2111
    %v2113 = vpop.f32.mrf.mxu0
    %v2114 = vpop.f32.mrf.mxu0
    %v2115 = vadd.f32 %v1771, %v2114
    %v2116 = vpop.f32.mrf.mxu0
    %2117 = vmatprep.mubr.bf16.mxu0 %v1869
    %2118 = vmatmul.mubr.bf16.gmra.mxu0 %v1868
    %v2119 = vpop.f32.mrf.mxu0
    %v2120 = vadd.f32 %v1771, %v2119
    %v2121 = vpop.f32.mrf.mxu0
    %v2122 = vpop.f32.mrf.mxu0
    %v2123 = vadd.f32 %v1771, %v2122
    %v2124 = vpop.f32.mrf.mxu0
    %2125 = vmatprep.mubr.bf16.mxu0 %v1872
    %2126 = vmatmul.mubr.bf16.gmra.mxu0 %v1871
    %v2127 = vpop.f32.mrf.mxu0
    %v2128 = vadd.f32 %v1771, %v2127
    %v2129 = vpop.f32.mrf.mxu0
    %v2130 = vpop.f32.mrf.mxu0
    %v2131 = vadd.f32 %v1771, %v2130
    %v2132 = vpop.f32.mrf.mxu0
    %2133 = vmatprep.mubr.bf16.mxu0 %v1875
    %2134 = vmatmul.mubr.bf16.gmra.mxu0 %v1874
    %v2135 = vpop.f32.mrf.mxu0
    %v2136 = vadd.f32 %v1771, %v2135
    %v2137 = vpop.f32.mrf.mxu0
    %v2138 = vpop.f32.mrf.mxu0
    %v2139 = vadd.f32 %v1771, %v2138
    %v2140 = vpop.f32.mrf.mxu0
    %2141 = vdwg.mxu0
    %2142 = vmatprep.subr.bf16.mxu0 0
    %2143 = vmatpush1.bf16.msra.mxu0 %v2020
    %2144 = vmatprep.subr.bf16.mxu0 0
    %2145 = vmatpush1.bf16.msra.mxu0 %v2019
    %2146 = vmatprep.subr.bf16.mxu0 0
    %2147 = vmatpush1.bf16.msra.mxu0 %v2018
    %2148 = vmatprep.subr.bf16.mxu0 0
    %2149 = vmatpush1.bf16.msra.mxu0 %v2017
    %2150 = vmatprep.subr.bf16.mxu0 0
    %2151 = vmatpush1.bf16.msra.mxu0 %v2016
    %2152 = vmatprep.subr.bf16.mxu0 0
    %2153 = vmatpush1.bf16.msra.mxu0 %v2015
    %2154 = vmatprep.subr.bf16.mxu0 0
    %2155 = vmatpush1.bf16.msra.mxu0 %v2014
    %2156 = vmatprep.subr.bf16.mxu0 0
    %2157 = vmatpush1.bf16.msra.mxu0 %v2013
    %2158 = vmatprep.subr.bf16.mxu0 0
    %2159 = vmatpush2.bf16.msra.mxu0 0
    %2160 = vmatprep.subr.bf16.mxu0 0
    %2161 = vmatpush2.bf16.msra.mxu0 0
    %2162 = vmatprep.subr.bf16.mxu0 0
    %2163 = vmatpush2.bf16.msra.mxu0 0
    %2164 = vmatprep.subr.bf16.mxu0 0
    %2165 = vmatpush2.bf16.msra.mxu0 0
    %2166 = vmatprep.subr.bf16.mxu0 0
    %2167 = vmatpush2.bf16.msra.mxu0 0
    %2168 = vmatprep.subr.bf16.mxu0 0
    %2169 = vmatpush2.bf16.msra.mxu0 0
    %2170 = vmatprep.subr.bf16.mxu0 0
    %2171 = vmatpush2.bf16.msra.mxu0 0
    %2172 = vmatprep.subr.bf16.mxu0 0
    %2173 = vmatpush2.bf16.msra.mxu0 0
    %2174 = vmatprep.mubr.bf16.mxu0 0
    %2175 = vmatmul.mubr.bf16.gmra.mxu0 %v1855
    %v2176 = vpop.f32.mrf.mxu0
    %v2177 = vadd.f32 %v2080, %v2176
    %v2178 = vpop.f32.mrf.mxu0
    %v2179 = vpop.f32.mrf.mxu0
    %v2180 = vadd.f32 %v2083, %v2179
    %v2181 = vpop.f32.mrf.mxu0
    %2182 = vmatprep.mubr.bf16.mxu0 0
    %2183 = vmatmul.mubr.bf16.gmra.mxu0 %v1858
    %v2184 = vpop.f32.mrf.mxu0
    %v2185 = vadd.f32 %v2088, %v2184
    %v2186 = vpop.f32.mrf.mxu0
    %v2187 = vpop.f32.mrf.mxu0
    %v2188 = vadd.f32 %v2091, %v2187
    %v2189 = vpop.f32.mrf.mxu0
    %2190 = vmatprep.mubr.bf16.mxu0 0
    %2191 = vmatmul.mubr.bf16.gmra.mxu0 %v1861
    %v2192 = vpop.f32.mrf.mxu0
    %v2193 = vadd.f32 %v2096, %v2192
    %v2194 = vpop.f32.mrf.mxu0
    %v2195 = vpop.f32.mrf.mxu0
    %v2196 = vadd.f32 %v2099, %v2195
    %v2197 = vpop.f32.mrf.mxu0
    %2198 = vmatprep.mubr.bf16.mxu0 0
    %2199 = vmatmul.mubr.bf16.gmra.mxu0 %v1864
    %v2200 = vpop.f32.mrf.mxu0
    %v2201 = vadd.f32 %v2104, %v2200
    %v2202 = vpop.f32.mrf.mxu0
    %v2203 = vpop.f32.mrf.mxu0
    %v2204 = vadd.f32 %v2107, %v2203
    %v2205 = vpop.f32.mrf.mxu0
    %2206 = vmatprep.mubr.bf16.mxu0 0
    %2207 = vmatmul.mubr.bf16.gmra.mxu0 %v1867
    %v2208 = vpop.f32.mrf.mxu0
    %v2209 = vadd.f32 %v2112, %v2208
    %v2210 = vpop.f32.mrf.mxu0
    %v2211 = vpop.f32.mrf.mxu0
    %v2212 = vadd.f32 %v2115, %v2211
    %v2213 = vpop.f32.mrf.mxu0
    %2214 = vmatprep.mubr.bf16.mxu0 0
    %2215 = vmatmul.mubr.bf16.gmra.mxu0 %v1870
    %v2216 = vpop.f32.mrf.mxu0
    %v2217 = vadd.f32 %v2120, %v2216
    %v2218 = vpop.f32.mrf.mxu0
    %v2219 = vpop.f32.mrf.mxu0
    %v2220 = vadd.f32 %v2123, %v2219
    %v2221 = vpop.f32.mrf.mxu0
    %2222 = vmatprep.mubr.bf16.mxu0 0
    %2223 = vmatmul.mubr.bf16.gmra.mxu0 %v1873
    %v2224 = vpop.f32.mrf.mxu0
    %v2225 = vadd.f32 %v2128, %v2224
    %v2226 = vpop.f32.mrf.mxu0
    %v2227 = vpop.f32.mrf.mxu0
    %v2228 = vadd.f32 %v2131, %v2227
    %v2229 = vpop.f32.mrf.mxu0
    %2230 = vmatprep.mubr.bf16.mxu0 0
    %2231 = vmatmul.mubr.bf16.gmra.mxu0 %v1876
    %v2232 = vpop.f32.mrf.mxu0
    %v2233 = vadd.f32 %v2136, %v2232
    %v2234 = vpop.f32.mrf.mxu0
    %v2235 = vpop.f32.mrf.mxu0
    %v2236 = vadd.f32 %v2139, %v2235
    %v2237 = vpop.f32.mrf.mxu0
    %2238 = vdwg.mxu0
    %v2239 = vmul.f32 %v2177, 0.5
    %v2240 = vmul.f32 %v2180, 0.5
    %v2241 = vmul.f32 %v2185, 0.5
    %v2242 = vmul.f32 %v2188, 0.5
    %v2243 = vmul.f32 %v2193, 0.5
    %v2244 = vmul.f32 %v2196, 0.5
    %v2245 = vmul.f32 %v2201, 0.5
    %v2246 = vmul.f32 %v2204, 0.5
    %v2247 = vmul.f32 %v2209, 0.5
    %v2248 = vmul.f32 %v2212, 0.5
    %v2249 = vmul.f32 %v2217, 0.5
    %v2250 = vmul.f32 %v2220, 0.5
    %v2251 = vmul.f32 %v2225, 0.5
    %v2252 = vmul.f32 %v2228, 0.5
    %v2253 = vmul.f32 %v2233, 0.5
    %v2254 = vmul.f32 %v2236, 0.5
    %v2255 = vmul.f32 %v2177, 0.044715
    %v2256 = vmul.f32 %v2180, 0.044715
    %v2257 = vmul.f32 %v2185, 0.044715
    %v2258 = vmul.f32 %v2188, 0.044715
    %v2259 = vmul.f32 %v2193, 0.044715
    %v2260 = vmul.f32 %v2196, 0.044715
    %v2261 = vmul.f32 %v2201, 0.044715
    %v2262 = vmul.f32 %v2204, 0.044715
    %v2263 = vmul.f32 %v2209, 0.044715
    %v2264 = vmul.f32 %v2212, 0.044715
    %v2265 = vmul.f32 %v2217, 0.044715
    %v2266 = vmul.f32 %v2220, 0.044715
    %v2267 = vmul.f32 %v2225, 0.044715
    %v2268 = vmul.f32 %v2228, 0.044715
    %v2269 = vmul.f32 %v2233, 0.044715
    %v2270 = vmul.f32 %v2236, 0.044715
    %v2271 = vmul.f32 %v2255, %v2177
    %v2272 = vmul.f32 %v2256, %v2180
    %v2273 = vmul.f32 %v2257, %v2185
    %v2274 = vmul.f32 %v2258, %v2188
    %v2275 = vmul.f32 %v2259, %v2193
    %v2276 = vmul.f32 %v2260, %v2196
    %v2277 = vmul.f32 %v2261, %v2201
    %v2278 = vmul.f32 %v2262, %v2204
    %v2279 = vmul.f32 %v2263, %v2209
    %v2280 = vmul.f32 %v2264, %v2212
    %v2281 = vmul.f32 %v2265, %v2217
    %v2282 = vmul.f32 %v2266, %v2220
    %v2283 = vmul.f32 %v2267, %v2225
    %v2284 = vmul.f32 %v2268, %v2228
    %v2285 = vmul.f32 %v2269, %v2233
    %v2286 = vmul.f32 %v2270, %v2236
    %v2287 = vmul.f32 %v2271, %v2177
    %v2288 = vmul.f32 %v2272, %v2180
    %v2289 = vmul.f32 %v2273, %v2185
    %v2290 = vmul.f32 %v2274, %v2188
    %v2291 = vmul.f32 %v2275, %v2193
    %v2292 = vmul.f32 %v2276, %v2196
    %v2293 = vmul.f32 %v2277, %v2201
    %v2294 = vmul.f32 %v2278, %v2204
    %v2295 = vmul.f32 %v2279, %v2209
    %v2296 = vmul.f32 %v2280, %v2212
    %v2297 = vmul.f32 %v2281, %v2217
    %v2298 = vmul.f32 %v2282, %v2220
    %v2299 = vmul.f32 %v2283, %v2225
    %v2300 = vmul.f32 %v2284, %v2228
    %v2301 = vmul.f32 %v2285, %v2233
    %v2302 = vmul.f32 %v2286, %v2236
    %v2303 = vadd.f32 %v2177, %v2287
    %v2304 = vadd.f32 %v2180, %v2288
    %v2305 = vadd.f32 %v2185, %v2289
    %v2306 = vadd.f32 %v2188, %v2290
    %v2307 = vadd.f32 %v2193, %v2291
    %v2308 = vadd.f32 %v2196, %v2292
    %v2309 = vadd.f32 %v2201, %v2293
    %v2310 = vadd.f32 %v2204, %v2294
    %v2311 = vadd.f32 %v2209, %v2295
    %v2312 = vadd.f32 %v2212, %v2296
    %v2313 = vadd.f32 %v2217, %v2297
    %v2314 = vadd.f32 %v2220, %v2298
    %v2315 = vadd.f32 %v2225, %v2299
    %v2316 = vadd.f32 %v2228, %v2300
    %v2317 = vadd.f32 %v2233, %v2301
    %v2318 = vadd.f32 %v2236, %v2302
    %v2319 = vmul.f32 %v2303, 0.7978846
    %v2320 = vmul.f32 %v2304, 0.7978846
    %v2321 = vmul.f32 %v2305, 0.7978846
    %v2322 = vmul.f32 %v2306, 0.7978846
    %v2323 = vmul.f32 %v2307, 0.7978846
    %v2324 = vmul.f32 %v2308, 0.7978846
    %v2325 = vmul.f32 %v2309, 0.7978846
    %v2326 = vmul.f32 %v2310, 0.7978846
    %v2327 = vmul.f32 %v2311, 0.7978846
    %v2328 = vmul.f32 %v2312, 0.7978846
    %v2329 = vmul.f32 %v2313, 0.7978846
    %v2330 = vmul.f32 %v2314, 0.7978846
    %v2331 = vmul.f32 %v2315, 0.7978846
    %v2332 = vmul.f32 %v2316, 0.7978846
    %v2333 = vmul.f32 %v2317, 0.7978846
    %v2334 = vmul.f32 %v2318, 0.7978846
    %v2335 = vtanh.pop %v2319
    %v2336 = vtanh.pop %v2320
    %v2337 = vtanh.pop %v2321
    %v2338 = vtanh.pop %v2322
    %v2339 = vtanh.pop %v2323
    %v2340 = vtanh.pop %v2324
    %v2341 = vtanh.pop %v2325
    %v2342 = vtanh.pop %v2326
    %v2343 = vtanh.pop %v2327
    %v2344 = vtanh.pop %v2328
    %v2345 = vtanh.pop %v2329
    %v2346 = vtanh.pop %v2330
    %v2347 = vtanh.pop %v2331
    %v2348 = vtanh.pop %v2332
    %v2349 = vtanh.pop %v2333
    %v2350 = vtanh.pop %v2334
    %v2351 = vadd.f32 %v2335, 1.0
    %v2352 = vadd.f32 %v2336, 1.0
    %v2353 = vadd.f32 %v2337, 1.0
    %v2354 = vadd.f32 %v2338, 1.0
    %v2355 = vadd.f32 %v2339, 1.0
    %v2356 = vadd.f32 %v2340, 1.0
    %v2357 = vadd.f32 %v2341, 1.0
    %v2358 = vadd.f32 %v2342, 1.0
    %v2359 = vadd.f32 %v2343, 1.0
    %v2360 = vadd.f32 %v2344, 1.0
    %v2361 = vadd.f32 %v2345, 1.0
    %v2362 = vadd.f32 %v2346, 1.0
    %v2363 = vadd.f32 %v2347, 1.0
    %v2364 = vadd.f32 %v2348, 1.0
    %v2365 = vadd.f32 %v2349, 1.0
    %v2366 = vadd.f32 %v2350, 1.0
    %v2367 = vmul.f32 %v2239, %v2351
    %v2368 = vmul.f32 %v2240, %v2352
    %v2369 = vmul.f32 %v2241, %v2353
    %v2370 = vmul.f32 %v2242, %v2354
    %v2371 = vmul.f32 %v2243, %v2355
    %v2372 = vmul.f32 %v2244, %v2356
    %v2373 = vmul.f32 %v2245, %v2357
    %v2374 = vmul.f32 %v2246, %v2358
    %v2375 = vmul.f32 %v2247, %v2359
    %v2376 = vmul.f32 %v2248, %v2360
    %v2377 = vmul.f32 %v2249, %v2361
    %v2378 = vmul.f32 %v2250, %v2362
    %v2379 = vmul.f32 %v2251, %v2363
    %v2380 = vmul.f32 %v2252, %v2364
    %v2381 = vmul.f32 %v2253, %v2365
    %v2382 = vmul.f32 %v2254, %v2366
    %v2383 = vadd.f32 %v2367, %v365
    %v2384 = vadd.f32 %v2368, %v366
    %v2385 = vadd.f32 %v2369, %v367
    %v2386 = vadd.f32 %v2370, %v368
    %v2387 = vadd.f32 %v2371, %v369
    %v2388 = vadd.f32 %v2372, %v370
    %v2389 = vadd.f32 %v2373, %v371
    %v2390 = vadd.f32 %v2374, %v372
    %v2391 = vadd.f32 %v2375, %v373
    %v2392 = vadd.f32 %v2376, %v374
    %v2393 = vadd.f32 %v2377, %v375
    %v2394 = vadd.f32 %v2378, %v376
    %v2395 = vadd.f32 %v2379, %v377
    %v2396 = vadd.f32 %v2380, %v378
    %v2397 = vadd.f32 %v2381, %v379
    %v2398 = vadd.f32 %v2382, %v380
    %v2399 = vpack.c.bf16 %v2384, %v2383
    %v2400 = vpack.c.bf16 %v2386, %v2385
    %v2401 = vpack.c.bf16 %v2388, %v2387
    %v2402 = vpack.c.bf16 %v2390, %v2389
    %v2403 = vpack.c.bf16 %v2392, %v2391
    %v2404 = vpack.c.bf16 %v2394, %v2393
    %v2405 = vpack.c.bf16 %v2396, %v2395
    %v2406 = vpack.c.bf16 %v2398, %v2397
    %v2407 = vld [vmem:[#allocation11] sm:$0xf]
    %v2408 = vld [vmem:[#allocation11 + $0x4] sm:$0xf]
    %v2409 = vld [vmem:[#allocation11 + $0x8] sm:$0xf]
    %v2410 = vld [vmem:[#allocation11 + $0xc] sm:$0xf]
    %v2411 = vld [vmem:[#allocation11 + $0x10] sm:$0xf]
    %v2412 = vld [vmem:[#allocation11 + $0x14] sm:$0xf]
    %v2413 = vld [vmem:[#allocation11 + $0x18] sm:$0xf]
    %v2414 = vld [vmem:[#allocation11 + $0x1c] sm:$0xf]
    %v2415 = vld [vmem:[#allocation11 + $0x20] sm:$0xf]
    %v2416 = vld [vmem:[#allocation11 + $0x24] sm:$0xf]
    %v2417 = vld [vmem:[#allocation11 + $0x28] sm:$0xf]
    %v2418 = vld [vmem:[#allocation11 + $0x2c] sm:$0xf]
    %v2419 = vld [vmem:[#allocation11 + $0x30] sm:$0xf]
    %v2420 = vld [vmem:[#allocation11 + $0x34] sm:$0xf]
    %v2421 = vld [vmem:[#allocation11 + $0x38] sm:$0xf]
    %v2422 = vld [vmem:[#allocation11 + $0x3c] sm:$0xf]
    %v2423 = vld [vmem:[#allocation13] sm:$0x1]
    %v2425 = vlaneseq
    %v2426 = vshrl.u32 %v2425, 7
    %v2427 = vsub.s32 0, %v2426
    %v2428 = vrot.slane %v2423, %v2427
    %v2446 = vunpack.c.l.b16 %v2407
    %v2447 = vunpack.c.l.b16 %v2408
    %v2448 = vunpack.c.l.b16 %v2409
    %v2449 = vunpack.c.l.b16 %v2410
    %v2450 = vunpack.c.l.b16 %v2411
    %v2451 = vunpack.c.l.b16 %v2412
    %v2452 = vunpack.c.l.b16 %v2413
    %v2453 = vunpack.c.l.b16 %v2414
    %v2454 = vunpack.c.l.b16 %v2415
    %v2455 = vunpack.c.l.b16 %v2416
    %v2456 = vunpack.c.l.b16 %v2417
    %v2457 = vunpack.c.l.b16 %v2418
    %v2458 = vunpack.c.l.b16 %v2419
    %v2459 = vunpack.c.l.b16 %v2420
    %v2460 = vunpack.c.l.b16 %v2421
    %v2461 = vunpack.c.l.b16 %v2422
    %v2462 = vpack.c.b16 %v2447, %v2446
    %v2463 = vpack.c.b16 %v2449, %v2448
    %v2464 = vpack.c.b16 %v2451, %v2450
    %v2465 = vpack.c.b16 %v2453, %v2452
    %v2466 = vpack.c.b16 %v2455, %v2454
    %v2467 = vpack.c.b16 %v2457, %v2456
    %v2468 = vpack.c.b16 %v2459, %v2458
    %v2469 = vpack.c.b16 %v2461, %v2460
    %2478 = vmatprep.subr.bf16.mxu0 0
    %2479 = vmatpush1.bf16.msra.mxu0 %v2469
    %2480 = vmatprep.subr.bf16.mxu0 0
    %2481 = vmatpush1.bf16.msra.mxu0 %v2468
    %2482 = vmatprep.subr.bf16.mxu0 0
    %2483 = vmatpush1.bf16.msra.mxu0 %v2467
    %2484 = vmatprep.subr.bf16.mxu0 0
    %2485 = vmatpush1.bf16.msra.mxu0 %v2466
    %2486 = vmatprep.subr.bf16.mxu0 0
    %2487 = vmatpush1.bf16.msra.mxu0 %v2465
    %2488 = vmatprep.subr.bf16.mxu0 0
    %2489 = vmatpush1.bf16.msra.mxu0 %v2464
    %2490 = vmatprep.subr.bf16.mxu0 0
    %2491 = vmatpush1.bf16.msra.mxu0 %v2463
    %2492 = vmatprep.subr.bf16.mxu0 0
    %2493 = vmatpush1.bf16.msra.mxu0 %v2462
    %2494 = vmatprep.subr.bf16.mxu0 0
    %2495 = vmatpush2.bf16.msra.mxu0 0
    %2496 = vmatprep.subr.bf16.mxu0 0
    %2497 = vmatpush2.bf16.msra.mxu0 0
    %2498 = vmatprep.subr.bf16.mxu0 0
    %2499 = vmatpush2.bf16.msra.mxu0 0
    %2500 = vmatprep.subr.bf16.mxu0 0
    %2501 = vmatpush2.bf16.msra.mxu0 0
    %2502 = vmatprep.subr.bf16.mxu0 0
    %2503 = vmatpush2.bf16.msra.mxu0 0
    %2504 = vmatprep.subr.bf16.mxu0 0
    %2505 = vmatpush2.bf16.msra.mxu0 0
    %2506 = vmatprep.subr.bf16.mxu0 0
    %2507 = vmatpush2.bf16.msra.mxu0 0
    %2508 = vmatprep.subr.bf16.mxu0 0
    %2509 = vmatpush2.bf16.msra.mxu0 0
    %2510 = vmatprep.mubr.bf16.mxu0 0
    %2511 = vmatmul.mubr.bf16.gmra.mxu0 %v2399
    %v2512 = vpop.f32.mrf.mxu0
    %v2513 = vadd.f32 %v2428, %v2512
    %v2514 = vpop.f32.mrf.mxu0
    %v2515 = vpop.f32.mrf.mxu0
    %v2516 = vadd.f32 %v2428, %v2515
    %v2517 = vpop.f32.mrf.mxu0
    %2518 = vmatprep.mubr.bf16.mxu0 0
    %2519 = vmatmul.mubr.bf16.gmra.mxu0 %v2400
    %v2520 = vpop.f32.mrf.mxu0
    %v2521 = vadd.f32 %v2428, %v2520
    %v2522 = vpop.f32.mrf.mxu0
    %v2523 = vpop.f32.mrf.mxu0
    %v2524 = vadd.f32 %v2428, %v2523
    %v2525 = vpop.f32.mrf.mxu0
    %2526 = vmatprep.mubr.bf16.mxu0 0
    %2527 = vmatmul.mubr.bf16.gmra.mxu0 %v2401
    %v2528 = vpop.f32.mrf.mxu0
    %v2529 = vadd.f32 %v2428, %v2528
    %v2530 = vpop.f32.mrf.mxu0
    %v2531 = vpop.f32.mrf.mxu0
    %v2532 = vadd.f32 %v2428, %v2531
    %v2533 = vpop.f32.mrf.mxu0
    %2534 = vmatprep.mubr.bf16.mxu0 0
    %2535 = vmatmul.mubr.bf16.gmra.mxu0 %v2402
    %v2536 = vpop.f32.mrf.mxu0
    %v2537 = vadd.f32 %v2428, %v2536
    %v2538 = vpop.f32.mrf.mxu0
    %v2539 = vpop.f32.mrf.mxu0
    %v2540 = vadd.f32 %v2428, %v2539
    %v2541 = vpop.f32.mrf.mxu0
    %2542 = vmatprep.mubr.bf16.mxu0 0
    %2543 = vmatmul.mubr.bf16.gmra.mxu0 %v2403
    %v2544 = vpop.f32.mrf.mxu0
    %v2545 = vadd.f32 %v2428, %v2544
    %v2546 = vpop.f32.mrf.mxu0
    %v2547 = vpop.f32.mrf.mxu0
    %v2548 = vadd.f32 %v2428, %v2547
    %v2549 = vpop.f32.mrf.mxu0
    %2550 = vmatprep.mubr.bf16.mxu0 0
    %2551 = vmatmul.mubr.bf16.gmra.mxu0 %v2404
    %v2552 = vpop.f32.mrf.mxu0
    %v2553 = vadd.f32 %v2428, %v2552
    %v2554 = vpop.f32.mrf.mxu0
    %v2555 = vpop.f32.mrf.mxu0
    %v2556 = vadd.f32 %v2428, %v2555
    %v2557 = vpop.f32.mrf.mxu0
    %2558 = vmatprep.mubr.bf16.mxu0 0
    %2559 = vmatmul.mubr.bf16.gmra.mxu0 %v2405
    %v2560 = vpop.f32.mrf.mxu0
    %v2561 = vadd.f32 %v2428, %v2560
    %v2562 = vpop.f32.mrf.mxu0
    %v2563 = vpop.f32.mrf.mxu0
    %v2564 = vadd.f32 %v2428, %v2563
    %v2565 = vpop.f32.mrf.mxu0
    %2566 = vmatprep.mubr.bf16.mxu0 0
    %2567 = vmatmul.mubr.bf16.gmra.mxu0 %v2406
    %v2568 = vpop.f32.mrf.mxu0
    %v2569 = vadd.f32 %v2428, %v2568
    %v2570 = vpop.f32.mrf.mxu0
    %v2571 = vpop.f32.mrf.mxu0
    %v2572 = vadd.f32 %v2428, %v2571
    %v2573 = vpop.f32.mrf.mxu0
    %2574 = vdwg.mxu0
    %v2575 = vmul.f32 %v2513, 0.5
    %v2576 = vmul.f32 %v2516, 0.5
    %v2577 = vmul.f32 %v2521, 0.5
    %v2578 = vmul.f32 %v2524, 0.5
    %v2579 = vmul.f32 %v2529, 0.5
    %v2580 = vmul.f32 %v2532, 0.5
    %v2581 = vmul.f32 %v2537, 0.5
    %v2582 = vmul.f32 %v2540, 0.5
    %v2583 = vmul.f32 %v2545, 0.5
    %v2584 = vmul.f32 %v2548, 0.5
    %v2585 = vmul.f32 %v2553, 0.5
    %v2586 = vmul.f32 %v2556, 0.5
    %v2587 = vmul.f32 %v2561, 0.5
    %v2588 = vmul.f32 %v2564, 0.5
    %v2589 = vmul.f32 %v2569, 0.5
    %v2590 = vmul.f32 %v2572, 0.5
    %v2591 = vmul.f32 %v2513, 0.044715
    %v2592 = vmul.f32 %v2516, 0.044715
    %v2593 = vmul.f32 %v2521, 0.044715
    %v2594 = vmul.f32 %v2524, 0.044715
    %v2595 = vmul.f32 %v2529, 0.044715
    %v2596 = vmul.f32 %v2532, 0.044715
    %v2597 = vmul.f32 %v2537, 0.044715
    %v2598 = vmul.f32 %v2540, 0.044715
    %v2599 = vmul.f32 %v2545, 0.044715
    %v2600 = vmul.f32 %v2548, 0.044715
    %v2601 = vmul.f32 %v2553, 0.044715
    %v2602 = vmul.f32 %v2556, 0.044715
    %v2603 = vmul.f32 %v2561, 0.044715
    %v2604 = vmul.f32 %v2564, 0.044715
    %v2605 = vmul.f32 %v2569, 0.044715
    %v2606 = vmul.f32 %v2572, 0.044715
    %v2607 = vmul.f32 %v2591, %v2513
    %v2608 = vmul.f32 %v2592, %v2516
    %v2609 = vmul.f32 %v2593, %v2521
    %v2610 = vmul.f32 %v2594, %v2524
    %v2611 = vmul.f32 %v2595, %v2529
    %v2612 = vmul.f32 %v2596, %v2532
    %v2613 = vmul.f32 %v2597, %v2537
    %v2614 = vmul.f32 %v2598, %v2540
    %v2615 = vmul.f32 %v2599, %v2545
    %v2616 = vmul.f32 %v2600, %v2548
    %v2617 = vmul.f32 %v2601, %v2553
    %v2618 = vmul.f32 %v2602, %v2556
    %v2619 = vmul.f32 %v2603, %v2561
    %v2620 = vmul.f32 %v2604, %v2564
    %v2621 = vmul.f32 %v2605, %v2569
    %v2622 = vmul.f32 %v2606, %v2572
    %v2623 = vmul.f32 %v2607, %v2513
    %v2624 = vmul.f32 %v2608, %v2516
    %v2625 = vmul.f32 %v2609, %v2521
    %v2626 = vmul.f32 %v2610, %v2524
    %v2627 = vmul.f32 %v2611, %v2529
    %v2628 = vmul.f32 %v2612, %v2532
    %v2629 = vmul.f32 %v2613, %v2537
    %v2630 = vmul.f32 %v2614, %v2540
    %v2631 = vmul.f32 %v2615, %v2545
    %v2632 = vmul.f32 %v2616, %v2548
    %v2633 = vmul.f32 %v2617, %v2553
    %v2634 = vmul.f32 %v2618, %v2556
    %v2635 = vmul.f32 %v2619, %v2561
    %v2636 = vmul.f32 %v2620, %v2564
    %v2637 = vmul.f32 %v2621, %v2569
    %v2638 = vmul.f32 %v2622, %v2572
    %v2639 = vadd.f32 %v2513, %v2623
    %v2640 = vadd.f32 %v2516, %v2624
    %v2641 = vadd.f32 %v2521, %v2625
    %v2642 = vadd.f32 %v2524, %v2626
    %v2643 = vadd.f32 %v2529, %v2627
    %v2644 = vadd.f32 %v2532, %v2628
    %v2645 = vadd.f32 %v2537, %v2629
    %v2646 = vadd.f32 %v2540, %v2630
    %v2647 = vadd.f32 %v2545, %v2631
    %v2648 = vadd.f32 %v2548, %v2632
    %v2649 = vadd.f32 %v2553, %v2633
    %v2650 = vadd.f32 %v2556, %v2634
    %v2651 = vadd.f32 %v2561, %v2635
    %v2652 = vadd.f32 %v2564, %v2636
    %v2653 = vadd.f32 %v2569, %v2637
    %v2654 = vadd.f32 %v2572, %v2638
    %v2655 = vmul.f32 %v2639, 0.7978846
    %v2656 = vmul.f32 %v2640, 0.7978846
    %v2657 = vmul.f32 %v2641, 0.7978846
    %v2658 = vmul.f32 %v2642, 0.7978846
    %v2659 = vmul.f32 %v2643, 0.7978846
    %v2660 = vmul.f32 %v2644, 0.7978846
    %v2661 = vmul.f32 %v2645, 0.7978846
    %v2662 = vmul.f32 %v2646, 0.7978846
    %v2663 = vmul.f32 %v2647, 0.7978846
    %v2664 = vmul.f32 %v2648, 0.7978846
    %v2665 = vmul.f32 %v2649, 0.7978846
    %v2666 = vmul.f32 %v2650, 0.7978846
    %v2667 = vmul.f32 %v2651, 0.7978846
    %v2668 = vmul.f32 %v2652, 0.7978846
    %v2669 = vmul.f32 %v2653, 0.7978846
    %v2670 = vmul.f32 %v2654, 0.7978846
    %v2671 = vtanh.pop %v2655
    %v2672 = vtanh.pop %v2656
    %v2673 = vtanh.pop %v2657
    %v2674 = vtanh.pop %v2658
    %v2675 = vtanh.pop %v2659
    %v2676 = vtanh.pop %v2660
    %v2677 = vtanh.pop %v2661
    %v2678 = vtanh.pop %v2662
    %v2679 = vtanh.pop %v2663
    %v2680 = vtanh.pop %v2664
    %v2681 = vtanh.pop %v2665
    %v2682 = vtanh.pop %v2666
    %v2683 = vtanh.pop %v2667
    %v2684 = vtanh.pop %v2668
    %v2685 = vtanh.pop %v2669
    %v2686 = vtanh.pop %v2670
    %v2687 = vadd.f32 %v2671, 1.0
    %v2688 = vadd.f32 %v2672, 1.0
    %v2689 = vadd.f32 %v2673, 1.0
    %v2690 = vadd.f32 %v2674, 1.0
    %v2691 = vadd.f32 %v2675, 1.0
    %v2692 = vadd.f32 %v2676, 1.0
    %v2693 = vadd.f32 %v2677, 1.0
    %v2694 = vadd.f32 %v2678, 1.0
    %v2695 = vadd.f32 %v2679, 1.0
    %v2696 = vadd.f32 %v2680, 1.0
    %v2697 = vadd.f32 %v2681, 1.0
    %v2698 = vadd.f32 %v2682, 1.0
    %v2699 = vadd.f32 %v2683, 1.0
    %v2700 = vadd.f32 %v2684, 1.0
    %v2701 = vadd.f32 %v2685, 1.0
    %v2702 = vadd.f32 %v2686, 1.0
    %v2703 = vmul.f32 %v2575, %v2687
    %v2704 = vmul.f32 %v2576, %v2688
    %v2705 = vmul.f32 %v2577, %v2689
    %v2706 = vmul.f32 %v2578, %v2690
    %v2707 = vmul.f32 %v2579, %v2691
    %v2708 = vmul.f32 %v2580, %v2692
    %v2709 = vmul.f32 %v2581, %v2693
    %v2710 = vmul.f32 %v2582, %v2694
    %v2711 = vmul.f32 %v2583, %v2695
    %v2712 = vmul.f32 %v2584, %v2696
    %v2713 = vmul.f32 %v2585, %v2697
    %v2714 = vmul.f32 %v2586, %v2698
    %v2715 = vmul.f32 %v2587, %v2699
    %v2716 = vmul.f32 %v2588, %v2700
    %v2717 = vmul.f32 %v2589, %v2701
    %v2718 = vmul.f32 %v2590, %v2702
    %v2719 = vld [vmem:[#allocation14] sm:$0x1]
    %v2721 = vlaneseq
    %v2722 = vshrl.u32 %v2721, 7
    %v2723 = vsub.s32 0, %v2722
    %v2724 = vrot.slane %v2719, %v2723
    %v2726 = vmul.f32 %v2703, %v2724
    %v2727 = vmul.f32 %v2704, %v2724
    %v2728 = vmul.f32 %v2705, %v2724
    %v2729 = vmul.f32 %v2706, %v2724
    %v2730 = vmul.f32 %v2707, %v2724
    %v2731 = vmul.f32 %v2708, %v2724
    %v2732 = vmul.f32 %v2709, %v2724
    %v2733 = vmul.f32 %v2710, %v2724
    %v2734 = vmul.f32 %v2711, %v2724
    %v2735 = vmul.f32 %v2712, %v2724
    %v2736 = vmul.f32 %v2713, %v2724
    %v2737 = vmul.f32 %v2714, %v2724
    %v2738 = vmul.f32 %v2715, %v2724
    %v2739 = vmul.f32 %v2716, %v2724
    %v2740 = vmul.f32 %v2717, %v2724
    %v2741 = vmul.f32 %v2718, %v2724
    %v2742 = vld [vmem:[%s10] sm:$0x1]
    %v2744 = vlaneseq
    %v2745 = vshrl.u32 %v2744, 7
    %v2746 = vsub.s32 0, %v2745
    %v2747 = vrot.slane %v2742, %v2746
    %v2749 = vadd.f32 %v2726, %v2747
    %v2750 = vadd.f32 %v2727, %v2747
    %v2751 = vadd.f32 %v2728, %v2747
    %v2752 = vadd.f32 %v2729, %v2747
    %v2753 = vadd.f32 %v2730, %v2747
    %v2754 = vadd.f32 %v2731, %v2747
    %v2755 = vadd.f32 %v2732, %v2747
    %v2756 = vadd.f32 %v2733, %v2747
    %v2757 = vadd.f32 %v2734, %v2747
    %v2758 = vadd.f32 %v2735, %v2747
    %v2759 = vadd.f32 %v2736, %v2747
    %v2760 = vadd.f32 %v2737, %v2747
    %v2761 = vadd.f32 %v2738, %v2747
    %v2762 = vadd.f32 %v2739, %v2747
    %v2763 = vadd.f32 %v2740, %v2747
    %v2764 = vadd.f32 %v2741, %v2747
    %2765 = vst [vmem:[#allocation2 + $0x1] sm:$0xff] %v2749
    %2766 = vst [vmem:[#allocation2 + $0x11] sm:$0xff] %v2750
    %2767 = vst [vmem:[#allocation2 + $0x21] sm:$0xff] %v2751
    %2768 = vst [vmem:[#allocation2 + $0x31] sm:$0xff] %v2752
    %2769 = vst [vmem:[#allocation2 + $0x41] sm:$0xff] %v2753
    %2770 = vst [vmem:[#allocation2 + $0x51] sm:$0xff] %v2754
    %2771 = vst [vmem:[#allocation2 + $0x61] sm:$0xff] %v2755
    %2772 = vst [vmem:[#allocation2 + $0x71] sm:$0xff] %v2756
    %2773 = vst [vmem:[#allocation2 + $0x81] sm:$0xff] %v2757
    %2774 = vst [vmem:[#allocation2 + $0x91] sm:$0xff] %v2758
    %2775 = vst [vmem:[#allocation2 + $0xa1] sm:$0xff] %v2759
    %2776 = vst [vmem:[#allocation2 + $0xb1] sm:$0xff] %v2760
    %2777 = vst [vmem:[#allocation2 + $0xc1] sm:$0xff] %v2761
    %2778 = vst [vmem:[#allocation2 + $0xd1] sm:$0xff] %v2762
    %2779 = vst [vmem:[#allocation2 + $0xe1] sm:$0xff] %v2763
    %2780 = vst [vmem:[#allocation2 + $0xf1] sm:$0xff] %v2764
    %s2781 = scalar_lea.vmem [#allocation5], 192
    %v2782 = vld [vmem:[%s2781] sm:$0xf]
    %v2783 = vld [vmem:[%s2781 + $0x4] sm:$0xf]
    %v2784 = vld [vmem:[%s2781 + $0x8] sm:$0xf]
    %v2785 = vld [vmem:[%s2781 + $0xc] sm:$0xf]
    %v2786 = vld [vmem:[%s2781 + $0x10] sm:$0xf]
    %v2787 = vld [vmem:[%s2781 + $0x14] sm:$0xf]
    %v2788 = vld [vmem:[%s2781 + $0x18] sm:$0xf]
    %v2789 = vld [vmem:[%s2781 + $0x1c] sm:$0xf]
    %v2790 = vld [vmem:[%s2781 + $0x20] sm:$0xf]
    %v2791 = vld [vmem:[%s2781 + $0x24] sm:$0xf]
    %v2792 = vld [vmem:[%s2781 + $0x28] sm:$0xf]
    %v2793 = vld [vmem:[%s2781 + $0x2c] sm:$0xf]
    %v2794 = vld [vmem:[%s2781 + $0x30] sm:$0xf]
    %v2795 = vld [vmem:[%s2781 + $0x34] sm:$0xf]
    %v2796 = vld [vmem:[%s2781 + $0x38] sm:$0xf]
    %v2797 = vld [vmem:[%s2781 + $0x3c] sm:$0xf]
    %v2798 = vld [vmem:[%s2781 + $0x40] sm:$0xf]
    %v2799 = vld [vmem:[%s2781 + $0x44] sm:$0xf]
    %v2800 = vld [vmem:[%s2781 + $0x48] sm:$0xf]
    %v2801 = vld [vmem:[%s2781 + $0x4c] sm:$0xf]
    %v2802 = vld [vmem:[%s2781 + $0x50] sm:$0xf]
    %v2803 = vld [vmem:[%s2781 + $0x54] sm:$0xf]
    %v2804 = vld [vmem:[%s2781 + $0x58] sm:$0xf]
    %v2805 = vld [vmem:[%s2781 + $0x5c] sm:$0xf]
    %v2806 = vld [vmem:[%s2781 + $0x60] sm:$0xf]
    %v2807 = vld [vmem:[%s2781 + $0x64] sm:$0xf]
    %v2808 = vld [vmem:[%s2781 + $0x68] sm:$0xf]
    %v2809 = vld [vmem:[%s2781 + $0x6c] sm:$0xf]
    %v2810 = vld [vmem:[%s2781 + $0x70] sm:$0xf]
    %v2811 = vld [vmem:[%s2781 + $0x74] sm:$0xf]
    %v2812 = vld [vmem:[%s2781 + $0x78] sm:$0xf]
    %v2813 = vld [vmem:[%s2781 + $0x7c] sm:$0xf]
    %v2814 = vld [vmem:[%s2781 + $0x80] sm:$0xf]
    %v2815 = vld [vmem:[%s2781 + $0x84] sm:$0xf]
    %v2816 = vld [vmem:[%s2781 + $0x88] sm:$0xf]
    %v2817 = vld [vmem:[%s2781 + $0x8c] sm:$0xf]
    %v2818 = vld [vmem:[%s2781 + $0x90] sm:$0xf]
    %v2819 = vld [vmem:[%s2781 + $0x94] sm:$0xf]
    %v2820 = vld [vmem:[%s2781 + $0x98] sm:$0xf]
    %v2821 = vld [vmem:[%s2781 + $0x9c] sm:$0xf]
    %v2822 = vld [vmem:[%s2781 + $0xa0] sm:$0xf]
    %v2823 = vld [vmem:[%s2781 + $0xa4] sm:$0xf]
    %v2824 = vld [vmem:[%s2781 + $0xa8] sm:$0xf]
    %v2825 = vld [vmem:[%s2781 + $0xac] sm:$0xf]
    %v2826 = vld [vmem:[%s2781 + $0xb0] sm:$0xf]
    %v2827 = vld [vmem:[%s2781 + $0xb4] sm:$0xf]
    %v2828 = vld [vmem:[%s2781 + $0xb8] sm:$0xf]
    %v2829 = vld [vmem:[%s2781 + $0xbc] sm:$0xf]
    %s2830 = scalar_lea.vmem %s4, 1
    %v2831 = vld [vmem:[%s2830] sm:$0x1]
    %v2832 = vld [vmem:[#allocation2] sm:$0xff]
    %v2833 = vld [vmem:[#allocation2 + $0x10] sm:$0xff]
    %v2834 = vld [vmem:[#allocation2 + $0x20] sm:$0xff]
    %v2835 = vld [vmem:[#allocation2 + $0x30] sm:$0xff]
    %v2836 = vld [vmem:[#allocation2 + $0x40] sm:$0xff]
    %v2837 = vld [vmem:[#allocation2 + $0x50] sm:$0xff]
    %v2838 = vld [vmem:[#allocation2 + $0x60] sm:$0xff]
    %v2839 = vld [vmem:[#allocation2 + $0x70] sm:$0xff]
    %v2840 = vld [vmem:[#allocation2 + $0x80] sm:$0xff]
    %v2841 = vld [vmem:[#allocation2 + $0x90] sm:$0xff]
    %v2842 = vld [vmem:[#allocation2 + $0xa0] sm:$0xff]
    %v2843 = vld [vmem:[#allocation2 + $0xb0] sm:$0xff]
    %v2844 = vld [vmem:[#allocation2 + $0xc0] sm:$0xff]
    %v2845 = vld [vmem:[#allocation2 + $0xd0] sm:$0xff]
    %v2846 = vld [vmem:[#allocation2 + $0xe0] sm:$0xff]
    %v2847 = vld [vmem:[#allocation2 + $0xf0] sm:$0xff]
    %v2848 = vpack.c.bf16 %v2833, %v2832
    %v2849 = vpack.c.bf16 %v2835, %v2834
    %v2850 = vpack.c.bf16 %v2837, %v2836
    %v2851 = vpack.c.bf16 %v2839, %v2838
    %v2852 = vpack.c.bf16 %v2841, %v2840
    %v2853 = vpack.c.bf16 %v2843, %v2842
    %v2854 = vpack.c.bf16 %v2845, %v2844
    %v2855 = vpack.c.bf16 %v2847, %v2846
    %v2864 = vunpack.c.l.b16 %v2848
    %v2865 = vunpack.c.h.b16 %v2848
    %v2866 = vunpack.c.l.b16 %v2849
    %v2867 = vunpack.c.h.b16 %v2849
    %v2868 = vunpack.c.l.b16 %v2850
    %v2869 = vunpack.c.h.b16 %v2850
    %v2870 = vunpack.c.l.b16 %v2851
    %v2871 = vunpack.c.h.b16 %v2851
    %v2872 = vunpack.c.l.b16 %v2852
    %v2873 = vunpack.c.h.b16 %v2852
    %v2874 = vunpack.c.l.b16 %v2853
    %v2875 = vunpack.c.h.b16 %v2853
    %v2876 = vunpack.c.l.b16 %v2854
    %v2877 = vunpack.c.h.b16 %v2854
    %v2878 = vunpack.c.l.b16 %v2855
    %v2879 = vunpack.c.h.b16 %v2855
    %v2880 = vpack.c.b16 %v2864, %v2864
    %v2881 = vpack.c.b16 %v2865, %v2865
    %v2882 = vpack.c.b16 %v2866, %v2866
    %v2883 = vpack.c.b16 %v2867, %v2867
    %v2884 = vpack.c.b16 %v2868, %v2868
    %v2885 = vpack.c.b16 %v2869, %v2869
    %v2886 = vpack.c.b16 %v2870, %v2870
    %v2887 = vpack.c.b16 %v2871, %v2871
    %v2888 = vpack.c.b16 %v2872, %v2872
    %v2889 = vpack.c.b16 %v2873, %v2873
    %v2890 = vpack.c.b16 %v2874, %v2874
    %v2891 = vpack.c.b16 %v2875, %v2875
    %v2892 = vpack.c.b16 %v2876, %v2876
    %v2893 = vpack.c.b16 %v2877, %v2877
    %v2894 = vpack.c.b16 %v2878, %v2878
    %v2895 = vpack.c.b16 %v2879, %v2879
    %2912 = vst [vmem:[#allocation3] sm:$0xf] %v2880
    %2913 = vst [vmem:[#allocation3 + $0xc] sm:$0xf] %v2881
    %2914 = vst [vmem:[#allocation3 + $0x18] sm:$0xf] %v2882
    %2915 = vst [vmem:[#allocation3 + $0x24] sm:$0xf] %v2883
    %2916 = vst [vmem:[#allocation3 + $0x30] sm:$0xf] %v2884
    %2917 = vst [vmem:[#allocation3 + $0x3c] sm:$0xf] %v2885
    %2918 = vst [vmem:[#allocation3 + $0x48] sm:$0xf] %v2886
    %2919 = vst [vmem:[#allocation3 + $0x54] sm:$0xf] %v2887
    %2920 = vst [vmem:[#allocation3 + $0x60] sm:$0xf] %v2888
    %2921 = vst [vmem:[#allocation3 + $0x6c] sm:$0xf] %v2889
    %2922 = vst [vmem:[#allocation3 + $0x78] sm:$0xf] %v2890
    %2923 = vst [vmem:[#allocation3 + $0x84] sm:$0xf] %v2891
    %2924 = vst [vmem:[#allocation3 + $0x90] sm:$0xf] %v2892
    %2925 = vst [vmem:[#allocation3 + $0x9c] sm:$0xf] %v2893
    %2926 = vst [vmem:[#allocation3 + $0xa8] sm:$0xf] %v2894
    %2927 = vst [vmem:[#allocation3 + $0xb4] sm:$0xf] %v2895
    %v2928 = vld [vmem:[#allocation2 + $0x1] sm:$0xff]
    %v2929 = vld [vmem:[#allocation2 + $0x11] sm:$0xff]
    %v2930 = vld [vmem:[#allocation2 + $0x21] sm:$0xff]
    %v2931 = vld [vmem:[#allocation2 + $0x31] sm:$0xff]
    %v2932 = vld [vmem:[#allocation2 + $0x41] sm:$0xff]
    %v2933 = vld [vmem:[#allocation2 + $0x51] sm:$0xff]
    %v2934 = vld [vmem:[#allocation2 + $0x61] sm:$0xff]
    %v2935 = vld [vmem:[#allocation2 + $0x71] sm:$0xff]
    %v2936 = vld [vmem:[#allocation2 + $0x81] sm:$0xff]
    %v2937 = vld [vmem:[#allocation2 + $0x91] sm:$0xff]
    %v2938 = vld [vmem:[#allocation2 + $0xa1] sm:$0xff]
    %v2939 = vld [vmem:[#allocation2 + $0xb1] sm:$0xff]
    %v2940 = vld [vmem:[#allocation2 + $0xc1] sm:$0xff]
    %v2941 = vld [vmem:[#allocation2 + $0xd1] sm:$0xff]
    %v2942 = vld [vmem:[#allocation2 + $0xe1] sm:$0xff]
    %v2943 = vld [vmem:[#allocation2 + $0xf1] sm:$0xff]
    %v2944 = vpack.c.bf16 %v2929, %v2928
    %v2945 = vpack.c.bf16 %v2931, %v2930
    %v2946 = vpack.c.bf16 %v2933, %v2932
    %v2947 = vpack.c.bf16 %v2935, %v2934
    %v2948 = vpack.c.bf16 %v2937, %v2936
    %v2949 = vpack.c.bf16 %v2939, %v2938
    %v2950 = vpack.c.bf16 %v2941, %v2940
    %v2951 = vpack.c.bf16 %v2943, %v2942
    %v2960 = vunpack.c.l.b16 %v2944
    %v2961 = vunpack.c.h.b16 %v2944
    %v2962 = vunpack.c.l.b16 %v2945
    %v2963 = vunpack.c.h.b16 %v2945
    %v2964 = vunpack.c.l.b16 %v2946
    %v2965 = vunpack.c.h.b16 %v2946
    %v2966 = vunpack.c.l.b16 %v2947
    %v2967 = vunpack.c.h.b16 %v2947
    %v2968 = vunpack.c.l.b16 %v2948
    %v2969 = vunpack.c.h.b16 %v2948
    %v2970 = vunpack.c.l.b16 %v2949
    %v2971 = vunpack.c.h.b16 %v2949
    %v2972 = vunpack.c.l.b16 %v2950
    %v2973 = vunpack.c.h.b16 %v2950
    %v2974 = vunpack.c.l.b16 %v2951
    %v2975 = vunpack.c.h.b16 %v2951
    %v2976 = vpack.c.b16 %v2960, %v2960
    %v2977 = vpack.c.b16 %v2961, %v2961
    %v2978 = vpack.c.b16 %v2962, %v2962
    %v2979 = vpack.c.b16 %v2963, %v2963
    %v2980 = vpack.c.b16 %v2964, %v2964
    %v2981 = vpack.c.b16 %v2965, %v2965
    %v2982 = vpack.c.b16 %v2966, %v2966
    %v2983 = vpack.c.b16 %v2967, %v2967
    %v2984 = vpack.c.b16 %v2968, %v2968
    %v2985 = vpack.c.b16 %v2969, %v2969
    %v2986 = vpack.c.b16 %v2970, %v2970
    %v2987 = vpack.c.b16 %v2971, %v2971
    %v2988 = vpack.c.b16 %v2972, %v2972
    %v2989 = vpack.c.b16 %v2973, %v2973
    %v2990 = vpack.c.b16 %v2974, %v2974
    %v2991 = vpack.c.b16 %v2975, %v2975
    %3008 = vst [vmem:[#allocation3 + $0x4] sm:$0xf] %v2976
    %3009 = vst [vmem:[#allocation3 + $0x10] sm:$0xf] %v2977
    %3010 = vst [vmem:[#allocation3 + $0x1c] sm:$0xf] %v2978
    %3011 = vst [vmem:[#allocation3 + $0x28] sm:$0xf] %v2979
    %3012 = vst [vmem:[#allocation3 + $0x34] sm:$0xf] %v2980
    %3013 = vst [vmem:[#allocation3 + $0x40] sm:$0xf] %v2981
    %3014 = vst [vmem:[#allocation3 + $0x4c] sm:$0xf] %v2982
    %3015 = vst [vmem:[#allocation3 + $0x58] sm:$0xf] %v2983
    %3016 = vst [vmem:[#allocation3 + $0x64] sm:$0xf] %v2984
    %3017 = vst [vmem:[#allocation3 + $0x70] sm:$0xf] %v2985
    %3018 = vst [vmem:[#allocation3 + $0x7c] sm:$0xf] %v2986
    %3019 = vst [vmem:[#allocation3 + $0x88] sm:$0xf] %v2987
    %3020 = vst [vmem:[#allocation3 + $0x94] sm:$0xf] %v2988
    %3021 = vst [vmem:[#allocation3 + $0xa0] sm:$0xf] %v2989
    %3022 = vst [vmem:[#allocation3 + $0xac] sm:$0xf] %v2990
    %3023 = vst [vmem:[#allocation3 + $0xb8] sm:$0xf] %v2991
    %v3024 = vld [vmem:[#allocation2 + $0x2] sm:$0xff]
    %v3025 = vld [vmem:[#allocation2 + $0x12] sm:$0xff]
    %v3026 = vld [vmem:[#allocation2 + $0x22] sm:$0xff]
    %v3027 = vld [vmem:[#allocation2 + $0x32] sm:$0xff]
    %v3028 = vld [vmem:[#allocation2 + $0x42] sm:$0xff]
    %v3029 = vld [vmem:[#allocation2 + $0x52] sm:$0xff]
    %v3030 = vld [vmem:[#allocation2 + $0x62] sm:$0xff]
    %v3031 = vld [vmem:[#allocation2 + $0x72] sm:$0xff]
    %v3032 = vld [vmem:[#allocation2 + $0x82] sm:$0xff]
    %v3033 = vld [vmem:[#allocation2 + $0x92] sm:$0xff]
    %v3034 = vld [vmem:[#allocation2 + $0xa2] sm:$0xff]
    %v3035 = vld [vmem:[#allocation2 + $0xb2] sm:$0xff]
    %v3036 = vld [vmem:[#allocation2 + $0xc2] sm:$0xff]
    %v3037 = vld [vmem:[#allocation2 + $0xd2] sm:$0xff]
    %v3038 = vld [vmem:[#allocation2 + $0xe2] sm:$0xff]
    %v3039 = vld [vmem:[#allocation2 + $0xf2] sm:$0xff]
    %v3040 = vpack.c.bf16 %v3025, %v3024
    %v3041 = vpack.c.bf16 %v3027, %v3026
    %v3042 = vpack.c.bf16 %v3029, %v3028
    %v3043 = vpack.c.bf16 %v3031, %v3030
    %v3044 = vpack.c.bf16 %v3033, %v3032
    %v3045 = vpack.c.bf16 %v3035, %v3034
    %v3046 = vpack.c.bf16 %v3037, %v3036
    %v3047 = vpack.c.bf16 %v3039, %v3038
    %v3056 = vunpack.c.l.b16 %v3040
    %v3057 = vunpack.c.h.b16 %v3040
    %v3058 = vunpack.c.l.b16 %v3041
    %v3059 = vunpack.c.h.b16 %v3041
    %v3060 = vunpack.c.l.b16 %v3042
    %v3061 = vunpack.c.h.b16 %v3042
    %v3062 = vunpack.c.l.b16 %v3043
    %v3063 = vunpack.c.h.b16 %v3043
    %v3064 = vunpack.c.l.b16 %v3044
    %v3065 = vunpack.c.h.b16 %v3044
    %v3066 = vunpack.c.l.b16 %v3045
    %v3067 = vunpack.c.h.b16 %v3045
    %v3068 = vunpack.c.l.b16 %v3046
    %v3069 = vunpack.c.h.b16 %v3046
    %v3070 = vunpack.c.l.b16 %v3047
    %v3071 = vunpack.c.h.b16 %v3047
    %v3072 = vpack.c.b16 %v3056, %v3056
    %v3073 = vpack.c.b16 %v3057, %v3057
    %v3074 = vpack.c.b16 %v3058, %v3058
    %v3075 = vpack.c.b16 %v3059, %v3059
    %v3076 = vpack.c.b16 %v3060, %v3060
    %v3077 = vpack.c.b16 %v3061, %v3061
    %v3078 = vpack.c.b16 %v3062, %v3062
    %v3079 = vpack.c.b16 %v3063, %v3063
    %v3080 = vpack.c.b16 %v3064, %v3064
    %v3081 = vpack.c.b16 %v3065, %v3065
    %v3082 = vpack.c.b16 %v3066, %v3066
    %v3083 = vpack.c.b16 %v3067, %v3067
    %v3084 = vpack.c.b16 %v3068, %v3068
    %v3085 = vpack.c.b16 %v3069, %v3069
    %v3086 = vpack.c.b16 %v3070, %v3070
    %v3087 = vpack.c.b16 %v3071, %v3071
    %3104 = vst [vmem:[#allocation3 + $0x8] sm:$0xf] %v3072
    %3105 = vst [vmem:[#allocation3 + $0x14] sm:$0xf] %v3073
    %3106 = vst [vmem:[#allocation3 + $0x20] sm:$0xf] %v3074
    %3107 = vst [vmem:[#allocation3 + $0x2c] sm:$0xf] %v3075
    %3108 = vst [vmem:[#allocation3 + $0x38] sm:$0xf] %v3076
    %3109 = vst [vmem:[#allocation3 + $0x44] sm:$0xf] %v3077
    %3110 = vst [vmem:[#allocation3 + $0x50] sm:$0xf] %v3078
    %3111 = vst [vmem:[#allocation3 + $0x5c] sm:$0xf] %v3079
    %3112 = vst [vmem:[#allocation3 + $0x68] sm:$0xf] %v3080
    %3113 = vst [vmem:[#allocation3 + $0x74] sm:$0xf] %v3081
    %3114 = vst [vmem:[#allocation3 + $0x80] sm:$0xf] %v3082
    %3115 = vst [vmem:[#allocation3 + $0x8c] sm:$0xf] %v3083
    %3116 = vst [vmem:[#allocation3 + $0x98] sm:$0xf] %v3084
    %3117 = vst [vmem:[#allocation3 + $0xa4] sm:$0xf] %v3085
    %3118 = vst [vmem:[#allocation3 + $0xb0] sm:$0xf] %v3086
    %3119 = vst [vmem:[#allocation3 + $0xbc] sm:$0xf] %v3087
    %v3120 = vld [vmem:[#allocation3] sm:$0xff]
    %v3121 = vld [vmem:[#allocation3 + $0x8] sm:$0xf]
    %v3122 = vld [vmem:[#allocation3 + $0xc] sm:$0xff]
    %v3123 = vld [vmem:[#allocation3 + $0x14] sm:$0xf]
    %v3124 = vld [vmem:[#allocation3 + $0x18] sm:$0xff]
    %v3125 = vld [vmem:[#allocation3 + $0x20] sm:$0xf]
    %v3126 = vld [vmem:[#allocation3 + $0x24] sm:$0xff]
    %v3127 = vld [vmem:[#allocation3 + $0x2c] sm:$0xf]
    %v3128 = vld [vmem:[#allocation3 + $0x30] sm:$0xff]
    %v3129 = vld [vmem:[#allocation3 + $0x38] sm:$0xf]
    %v3130 = vld [vmem:[#allocation3 + $0x3c] sm:$0xff]
    %v3131 = vld [vmem:[#allocation3 + $0x44] sm:$0xf]
    %v3132 = vld [vmem:[#allocation3 + $0x48] sm:$0xff]
    %v3133 = vld [vmem:[#allocation3 + $0x50] sm:$0xf]
    %v3134 = vld [vmem:[#allocation3 + $0x54] sm:$0xff]
    %v3135 = vld [vmem:[#allocation3 + $0x5c] sm:$0xf]
    %v3136 = vld [vmem:[#allocation3 + $0x60] sm:$0xff]
    %v3137 = vld [vmem:[#allocation3 + $0x68] sm:$0xf]
    %v3138 = vld [vmem:[#allocation3 + $0x6c] sm:$0xff]
    %v3139 = vld [vmem:[#allocation3 + $0x74] sm:$0xf]
    %v3140 = vld [vmem:[#allocation3 + $0x78] sm:$0xff]
    %v3141 = vld [vmem:[#allocation3 + $0x80] sm:$0xf]
    %v3142 = vld [vmem:[#allocation3 + $0x84] sm:$0xff]
    %v3143 = vld [vmem:[#allocation3 + $0x8c] sm:$0xf]
    %v3144 = vld [vmem:[#allocation3 + $0x90] sm:$0xff]
    %v3145 = vld [vmem:[#allocation3 + $0x98] sm:$0xf]
    %v3146 = vld [vmem:[#allocation3 + $0x9c] sm:$0xff]
    %v3147 = vld [vmem:[#allocation3 + $0xa4] sm:$0xf]
    %v3148 = vld [vmem:[#allocation3 + $0xa8] sm:$0xff]
    %v3149 = vld [vmem:[#allocation3 + $0xb0] sm:$0xf]
    %v3150 = vld [vmem:[#allocation3 + $0xb4] sm:$0xff]
    %v3151 = vld [vmem:[#allocation3 + $0xbc] sm:$0xf]
    %v3153 = vlaneseq
    %v3154 = vshrl.u32 %v3153, 7
    %v3155 = vsub.s32 0, %v3154
    %v3156 = vrot.slane %v2831, %v3155
    %v3190 = vunpack.c.l.b16 %v3120
    %v3191 = vunpack.c.h.b16 %v3120
    %v3192 = vunpack.c.l.b16 %v3121
    %v3193 = vunpack.c.l.b16 %v3122
    %v3194 = vunpack.c.h.b16 %v3122
    %v3195 = vunpack.c.l.b16 %v3123
    %v3196 = vunpack.c.l.b16 %v3124
    %v3197 = vunpack.c.h.b16 %v3124
    %v3198 = vunpack.c.l.b16 %v3125
    %v3199 = vunpack.c.l.b16 %v3126
    %v3200 = vunpack.c.h.b16 %v3126
    %v3201 = vunpack.c.l.b16 %v3127
    %v3202 = vunpack.c.l.b16 %v3128
    %v3203 = vunpack.c.h.b16 %v3128
    %v3204 = vunpack.c.l.b16 %v3129
    %v3205 = vunpack.c.l.b16 %v3130
    %v3206 = vunpack.c.h.b16 %v3130
    %v3207 = vunpack.c.l.b16 %v3131
    %v3208 = vunpack.c.l.b16 %v3132
    %v3209 = vunpack.c.h.b16 %v3132
    %v3210 = vunpack.c.l.b16 %v3133
    %v3211 = vunpack.c.l.b16 %v3134
    %v3212 = vunpack.c.h.b16 %v3134
    %v3213 = vunpack.c.l.b16 %v3135
    %v3214 = vunpack.c.l.b16 %v3136
    %v3215 = vunpack.c.h.b16 %v3136
    %v3216 = vunpack.c.l.b16 %v3137
    %v3217 = vunpack.c.l.b16 %v3138
    %v3218 = vunpack.c.h.b16 %v3138
    %v3219 = vunpack.c.l.b16 %v3139
    %v3220 = vunpack.c.l.b16 %v3140
    %v3221 = vunpack.c.h.b16 %v3140
    %v3222 = vunpack.c.l.b16 %v3141
    %v3223 = vunpack.c.l.b16 %v3142
    %v3224 = vunpack.c.h.b16 %v3142
    %v3225 = vunpack.c.l.b16 %v3143
    %v3226 = vunpack.c.l.b16 %v3144
    %v3227 = vunpack.c.h.b16 %v3144
    %v3228 = vunpack.c.l.b16 %v3145
    %v3229 = vunpack.c.l.b16 %v3146
    %v3230 = vunpack.c.h.b16 %v3146
    %v3231 = vunpack.c.l.b16 %v3147
    %v3232 = vunpack.c.l.b16 %v3148
    %v3233 = vunpack.c.h.b16 %v3148
    %v3234 = vunpack.c.l.b16 %v3149
    %v3235 = vunpack.c.l.b16 %v3150
    %v3236 = vunpack.c.h.b16 %v3150
    %v3237 = vunpack.c.l.b16 %v3151
    %v3238 = vpack.c.b16 %v3193, %v3190
    %v3239 = vpack.c.b16 %v3194, %v3191
    %v3240 = vpack.c.b16 %v3195, %v3192
    %v3241 = vpack.c.b16 %v3199, %v3196
    %v3242 = vpack.c.b16 %v3200, %v3197
    %v3243 = vpack.c.b16 %v3201, %v3198
    %v3244 = vpack.c.b16 %v3205, %v3202
    %v3245 = vpack.c.b16 %v3206, %v3203
    %v3246 = vpack.c.b16 %v3207, %v3204
    %v3247 = vpack.c.b16 %v3211, %v3208
    %v3248 = vpack.c.b16 %v3212, %v3209
    %v3249 = vpack.c.b16 %v3213, %v3210
    %v3250 = vpack.c.b16 %v3217, %v3214
    %v3251 = vpack.c.b16 %v3218, %v3215
    %v3252 = vpack.c.b16 %v3219, %v3216
    %v3253 = vpack.c.b16 %v3223, %v3220
    %v3254 = vpack.c.b16 %v3224, %v3221
    %v3255 = vpack.c.b16 %v3225, %v3222
    %v3256 = vpack.c.b16 %v3229, %v3226
    %v3257 = vpack.c.b16 %v3230, %v3227
    %v3258 = vpack.c.b16 %v3231, %v3228
    %v3259 = vpack.c.b16 %v3235, %v3232
    %v3260 = vpack.c.b16 %v3236, %v3233
    %v3261 = vpack.c.b16 %v3237, %v3234
    %v3334 = vunpack.c.l.b16 %v2782
    %v3335 = vunpack.c.l.b16 %v2783
    %v3336 = vunpack.c.l.b16 %v2784
    %v3337 = vunpack.c.l.b16 %v2785
    %v3338 = vunpack.c.l.b16 %v2786
    %v3339 = vunpack.c.l.b16 %v2787
    %v3340 = vunpack.c.l.b16 %v2788
    %v3341 = vunpack.c.l.b16 %v2789
    %v3342 = vunpack.c.l.b16 %v2790
    %v3343 = vunpack.c.l.b16 %v2791
    %v3344 = vunpack.c.l.b16 %v2792
    %v3345 = vunpack.c.l.b16 %v2793
    %v3346 = vunpack.c.l.b16 %v2794
    %v3347 = vunpack.c.l.b16 %v2795
    %v3348 = vunpack.c.l.b16 %v2796
    %v3349 = vunpack.c.l.b16 %v2797
    %v3350 = vunpack.c.l.b16 %v2798
    %v3351 = vunpack.c.l.b16 %v2799
    %v3352 = vunpack.c.l.b16 %v2800
    %v3353 = vunpack.c.l.b16 %v2801
    %v3354 = vunpack.c.l.b16 %v2802
    %v3355 = vunpack.c.l.b16 %v2803
    %v3356 = vunpack.c.l.b16 %v2804
    %v3357 = vunpack.c.l.b16 %v2805
    %v3358 = vunpack.c.l.b16 %v2806
    %v3359 = vunpack.c.l.b16 %v2807
    %v3360 = vunpack.c.l.b16 %v2808
    %v3361 = vunpack.c.l.b16 %v2809
    %v3362 = vunpack.c.l.b16 %v2810
    %v3363 = vunpack.c.l.b16 %v2811
    %v3364 = vunpack.c.l.b16 %v2812
    %v3365 = vunpack.c.l.b16 %v2813
    %v3366 = vunpack.c.l.b16 %v2814
    %v3367 = vunpack.c.l.b16 %v2815
    %v3368 = vunpack.c.l.b16 %v2816
    %v3369 = vunpack.c.l.b16 %v2817
    %v3370 = vunpack.c.l.b16 %v2818
    %v3371 = vunpack.c.l.b16 %v2819
    %v3372 = vunpack.c.l.b16 %v2820
    %v3373 = vunpack.c.l.b16 %v2821
    %v3374 = vunpack.c.l.b16 %v2822
    %v3375 = vunpack.c.l.b16 %v2823
    %v3376 = vunpack.c.l.b16 %v2824
    %v3377 = vunpack.c.l.b16 %v2825
    %v3378 = vunpack.c.l.b16 %v2826
    %v3379 = vunpack.c.l.b16 %v2827
    %v3380 = vunpack.c.l.b16 %v2828
    %v3381 = vunpack.c.l.b16 %v2829
    %v3382 = vpack.c.b16 %v3335, %v3334
    %v3383 = vpack.c.b16 %v3337, %v3336
    %v3384 = vpack.c.b16 %v3339, %v3338
    %v3385 = vpack.c.b16 %v3341, %v3340
    %v3386 = vpack.c.b16 %v3343, %v3342
    %v3387 = vpack.c.b16 %v3345, %v3344
    %v3388 = vpack.c.b16 %v3347, %v3346
    %v3389 = vpack.c.b16 %v3349, %v3348
    %v3390 = vpack.c.b16 %v3351, %v3350
    %v3391 = vpack.c.b16 %v3353, %v3352
    %v3392 = vpack.c.b16 %v3355, %v3354
    %v3393 = vpack.c.b16 %v3357, %v3356
    %v3394 = vpack.c.b16 %v3359, %v3358
    %v3395 = vpack.c.b16 %v3361, %v3360
    %v3396 = vpack.c.b16 %v3363, %v3362
    %v3397 = vpack.c.b16 %v3365, %v3364
    %v3398 = vpack.c.b16 %v3367, %v3366
    %v3399 = vpack.c.b16 %v3369, %v3368
    %v3400 = vpack.c.b16 %v3371, %v3370
    %v3401 = vpack.c.b16 %v3373, %v3372
    %v3402 = vpack.c.b16 %v3375, %v3374
    %v3403 = vpack.c.b16 %v3377, %v3376
    %v3404 = vpack.c.b16 %v3379, %v3378
    %v3405 = vpack.c.b16 %v3381, %v3380
    %3430 = vmatprep.subr.bf16.mxu0 0
    %3431 = vmatpush1.bf16.msra.mxu0 %v3389
    %3432 = vmatprep.subr.bf16.mxu0 0
    %3433 = vmatpush1.bf16.msra.mxu0 %v3388
    %3434 = vmatprep.subr.bf16.mxu0 0
    %3435 = vmatpush1.bf16.msra.mxu0 %v3387
    %3436 = vmatprep.subr.bf16.mxu0 0
    %3437 = vmatpush1.bf16.msra.mxu0 %v3386
    %3438 = vmatprep.subr.bf16.mxu0 0
    %3439 = vmatpush1.bf16.msra.mxu0 %v3385
    %3440 = vmatprep.subr.bf16.mxu0 0
    %3441 = vmatpush1.bf16.msra.mxu0 %v3384
    %3442 = vmatprep.subr.bf16.mxu0 0
    %3443 = vmatpush1.bf16.msra.mxu0 %v3383
    %3444 = vmatprep.subr.bf16.mxu0 0
    %3445 = vmatpush1.bf16.msra.mxu0 %v3382
    %3446 = vmatprep.subr.bf16.mxu0 0
    %3447 = vmatpush2.bf16.msra.mxu0 %v3397
    %3448 = vmatprep.subr.bf16.mxu0 0
    %3449 = vmatpush2.bf16.msra.mxu0 %v3396
    %3450 = vmatprep.subr.bf16.mxu0 0
    %3451 = vmatpush2.bf16.msra.mxu0 %v3395
    %3452 = vmatprep.subr.bf16.mxu0 0
    %3453 = vmatpush2.bf16.msra.mxu0 %v3394
    %3454 = vmatprep.subr.bf16.mxu0 0
    %3455 = vmatpush2.bf16.msra.mxu0 %v3393
    %3456 = vmatprep.subr.bf16.mxu0 0
    %3457 = vmatpush2.bf16.msra.mxu0 %v3392
    %3458 = vmatprep.subr.bf16.mxu0 0
    %3459 = vmatpush2.bf16.msra.mxu0 %v3391
    %3460 = vmatprep.subr.bf16.mxu0 0
    %3461 = vmatpush2.bf16.msra.mxu0 %v3390
    %3462 = vmatprep.mubr.bf16.mxu0 %v3239
    %3463 = vmatmul.mubr.bf16.gmra.mxu0 %v3238
    %v3464 = vpop.f32.mrf.mxu0
    %v3465 = vadd.f32 %v3156, %v3464
    %v3466 = vpop.f32.mrf.mxu0
    %v3467 = vpop.f32.mrf.mxu0
    %v3468 = vadd.f32 %v3156, %v3467
    %v3469 = vpop.f32.mrf.mxu0
    %3470 = vmatprep.mubr.bf16.mxu0 %v3242
    %3471 = vmatmul.mubr.bf16.gmra.mxu0 %v3241
    %v3472 = vpop.f32.mrf.mxu0
    %v3473 = vadd.f32 %v3156, %v3472
    %v3474 = vpop.f32.mrf.mxu0
    %v3475 = vpop.f32.mrf.mxu0
    %v3476 = vadd.f32 %v3156, %v3475
    %v3477 = vpop.f32.mrf.mxu0
    %3478 = vmatprep.mubr.bf16.mxu0 %v3245
    %3479 = vmatmul.mubr.bf16.gmra.mxu0 %v3244
    %v3480 = vpop.f32.mrf.mxu0
    %v3481 = vadd.f32 %v3156, %v3480
    %v3482 = vpop.f32.mrf.mxu0
    %v3483 = vpop.f32.mrf.mxu0
    %v3484 = vadd.f32 %v3156, %v3483
    %v3485 = vpop.f32.mrf.mxu0
    %3486 = vmatprep.mubr.bf16.mxu0 %v3248
    %3487 = vmatmul.mubr.bf16.gmra.mxu0 %v3247
    %v3488 = vpop.f32.mrf.mxu0
    %v3489 = vadd.f32 %v3156, %v3488
    %v3490 = vpop.f32.mrf.mxu0
    %v3491 = vpop.f32.mrf.mxu0
    %v3492 = vadd.f32 %v3156, %v3491
    %v3493 = vpop.f32.mrf.mxu0
    %3494 = vmatprep.mubr.bf16.mxu0 %v3251
    %3495 = vmatmul.mubr.bf16.gmra.mxu0 %v3250
    %v3496 = vpop.f32.mrf.mxu0
    %v3497 = vadd.f32 %v3156, %v3496
    %v3498 = vpop.f32.mrf.mxu0
    %v3499 = vpop.f32.mrf.mxu0
    %v3500 = vadd.f32 %v3156, %v3499
    %v3501 = vpop.f32.mrf.mxu0
    %3502 = vmatprep.mubr.bf16.mxu0 %v3254
    %3503 = vmatmul.mubr.bf16.gmra.mxu0 %v3253
    %v3504 = vpop.f32.mrf.mxu0
    %v3505 = vadd.f32 %v3156, %v3504
    %v3506 = vpop.f32.mrf.mxu0
    %v3507 = vpop.f32.mrf.mxu0
    %v3508 = vadd.f32 %v3156, %v3507
    %v3509 = vpop.f32.mrf.mxu0
    %3510 = vmatprep.mubr.bf16.mxu0 %v3257
    %3511 = vmatmul.mubr.bf16.gmra.mxu0 %v3256
    %v3512 = vpop.f32.mrf.mxu0
    %v3513 = vadd.f32 %v3156, %v3512
    %v3514 = vpop.f32.mrf.mxu0
    %v3515 = vpop.f32.mrf.mxu0
    %v3516 = vadd.f32 %v3156, %v3515
    %v3517 = vpop.f32.mrf.mxu0
    %3518 = vmatprep.mubr.bf16.mxu0 %v3260
    %3519 = vmatmul.mubr.bf16.gmra.mxu0 %v3259
    %v3520 = vpop.f32.mrf.mxu0
    %v3521 = vadd.f32 %v3156, %v3520
    %v3522 = vpop.f32.mrf.mxu0
    %v3523 = vpop.f32.mrf.mxu0
    %v3524 = vadd.f32 %v3156, %v3523
    %v3525 = vpop.f32.mrf.mxu0
    %3526 = vdwg.mxu0
    %3527 = vmatprep.subr.bf16.mxu0 0
    %3528 = vmatpush1.bf16.msra.mxu0 %v3405
    %3529 = vmatprep.subr.bf16.mxu0 0
    %3530 = vmatpush1.bf16.msra.mxu0 %v3404
    %3531 = vmatprep.subr.bf16.mxu0 0
    %3532 = vmatpush1.bf16.msra.mxu0 %v3403
    %3533 = vmatprep.subr.bf16.mxu0 0
    %3534 = vmatpush1.bf16.msra.mxu0 %v3402
    %3535 = vmatprep.subr.bf16.mxu0 0
    %3536 = vmatpush1.bf16.msra.mxu0 %v3401
    %3537 = vmatprep.subr.bf16.mxu0 0
    %3538 = vmatpush1.bf16.msra.mxu0 %v3400
    %3539 = vmatprep.subr.bf16.mxu0 0
    %3540 = vmatpush1.bf16.msra.mxu0 %v3399
    %3541 = vmatprep.subr.bf16.mxu0 0
    %3542 = vmatpush1.bf16.msra.mxu0 %v3398
    %3543 = vmatprep.subr.bf16.mxu0 0
    %3544 = vmatpush2.bf16.msra.mxu0 0
    %3545 = vmatprep.subr.bf16.mxu0 0
    %3546 = vmatpush2.bf16.msra.mxu0 0
    %3547 = vmatprep.subr.bf16.mxu0 0
    %3548 = vmatpush2.bf16.msra.mxu0 0
    %3549 = vmatprep.subr.bf16.mxu0 0
    %3550 = vmatpush2.bf16.msra.mxu0 0
    %3551 = vmatprep.subr.bf16.mxu0 0
    %3552 = vmatpush2.bf16.msra.mxu0 0
    %3553 = vmatprep.subr.bf16.mxu0 0
    %3554 = vmatpush2.bf16.msra.mxu0 0
    %3555 = vmatprep.subr.bf16.mxu0 0
    %3556 = vmatpush2.bf16.msra.mxu0 0
    %3557 = vmatprep.subr.bf16.mxu0 0
    %3558 = vmatpush2.bf16.msra.mxu0 0
    %3559 = vmatprep.mubr.bf16.mxu0 0
    %3560 = vmatmul.mubr.bf16.gmra.mxu0 %v3240
    %v3561 = vpop.f32.mrf.mxu0
    %v3562 = vadd.f32 %v3465, %v3561
    %v3563 = vpop.f32.mrf.mxu0
    %v3564 = vpop.f32.mrf.mxu0
    %v3565 = vadd.f32 %v3468, %v3564
    %v3566 = vpop.f32.mrf.mxu0
    %3567 = vmatprep.mubr.bf16.mxu0 0
    %3568 = vmatmul.mubr.bf16.gmra.mxu0 %v3243
    %v3569 = vpop.f32.mrf.mxu0
    %v3570 = vadd.f32 %v3473, %v3569
    %v3571 = vpop.f32.mrf.mxu0
    %v3572 = vpop.f32.mrf.mxu0
    %v3573 = vadd.f32 %v3476, %v3572
    %v3574 = vpop.f32.mrf.mxu0
    %3575 = vmatprep.mubr.bf16.mxu0 0
    %3576 = vmatmul.mubr.bf16.gmra.mxu0 %v3246
    %v3577 = vpop.f32.mrf.mxu0
    %v3578 = vadd.f32 %v3481, %v3577
    %v3579 = vpop.f32.mrf.mxu0
    %v3580 = vpop.f32.mrf.mxu0
    %v3581 = vadd.f32 %v3484, %v3580
    %v3582 = vpop.f32.mrf.mxu0
    %3583 = vmatprep.mubr.bf16.mxu0 0
    %3584 = vmatmul.mubr.bf16.gmra.mxu0 %v3249
    %v3585 = vpop.f32.mrf.mxu0
    %v3586 = vadd.f32 %v3489, %v3585
    %v3587 = vpop.f32.mrf.mxu0
    %v3588 = vpop.f32.mrf.mxu0
    %v3589 = vadd.f32 %v3492, %v3588
    %v3590 = vpop.f32.mrf.mxu0
    %3591 = vmatprep.mubr.bf16.mxu0 0
    %3592 = vmatmul.mubr.bf16.gmra.mxu0 %v3252
    %v3593 = vpop.f32.mrf.mxu0
    %v3594 = vadd.f32 %v3497, %v3593
    %v3595 = vpop.f32.mrf.mxu0
    %v3596 = vpop.f32.mrf.mxu0
    %v3597 = vadd.f32 %v3500, %v3596
    %v3598 = vpop.f32.mrf.mxu0
    %3599 = vmatprep.mubr.bf16.mxu0 0
    %3600 = vmatmul.mubr.bf16.gmra.mxu0 %v3255
    %v3601 = vpop.f32.mrf.mxu0
    %v3602 = vadd.f32 %v3505, %v3601
    %v3603 = vpop.f32.mrf.mxu0
    %v3604 = vpop.f32.mrf.mxu0
    %v3605 = vadd.f32 %v3508, %v3604
    %v3606 = vpop.f32.mrf.mxu0
    %3607 = vmatprep.mubr.bf16.mxu0 0
    %3608 = vmatmul.mubr.bf16.gmra.mxu0 %v3258
    %v3609 = vpop.f32.mrf.mxu0
    %v3610 = vadd.f32 %v3513, %v3609
    %v3611 = vpop.f32.mrf.mxu0
    %v3612 = vpop.f32.mrf.mxu0
    %v3613 = vadd.f32 %v3516, %v3612
    %v3614 = vpop.f32.mrf.mxu0
    %3615 = vmatprep.mubr.bf16.mxu0 0
    %3616 = vmatmul.mubr.bf16.gmra.mxu0 %v3261
    %v3617 = vpop.f32.mrf.mxu0
    %v3618 = vadd.f32 %v3521, %v3617
    %v3619 = vpop.f32.mrf.mxu0
    %v3620 = vpop.f32.mrf.mxu0
    %v3621 = vadd.f32 %v3524, %v3620
    %v3622 = vpop.f32.mrf.mxu0
    %3623 = vdwg.mxu0
    %v3624 = vmul.f32 %v3562, 0.5
    %v3625 = vmul.f32 %v3565, 0.5
    %v3626 = vmul.f32 %v3570, 0.5
    %v3627 = vmul.f32 %v3573, 0.5
    %v3628 = vmul.f32 %v3578, 0.5
    %v3629 = vmul.f32 %v3581, 0.5
    %v3630 = vmul.f32 %v3586, 0.5
    %v3631 = vmul.f32 %v3589, 0.5
    %v3632 = vmul.f32 %v3594, 0.5
    %v3633 = vmul.f32 %v3597, 0.5
    %v3634 = vmul.f32 %v3602, 0.5
    %v3635 = vmul.f32 %v3605, 0.5
    %v3636 = vmul.f32 %v3610, 0.5
    %v3637 = vmul.f32 %v3613, 0.5
    %v3638 = vmul.f32 %v3618, 0.5
    %v3639 = vmul.f32 %v3621, 0.5
    %v3640 = vmul.f32 %v3562, 0.044715
    %v3641 = vmul.f32 %v3565, 0.044715
    %v3642 = vmul.f32 %v3570, 0.044715
    %v3643 = vmul.f32 %v3573, 0.044715
    %v3644 = vmul.f32 %v3578, 0.044715
    %v3645 = vmul.f32 %v3581, 0.044715
    %v3646 = vmul.f32 %v3586, 0.044715
    %v3647 = vmul.f32 %v3589, 0.044715
    %v3648 = vmul.f32 %v3594, 0.044715
    %v3649 = vmul.f32 %v3597, 0.044715
    %v3650 = vmul.f32 %v3602, 0.044715
    %v3651 = vmul.f32 %v3605, 0.044715
    %v3652 = vmul.f32 %v3610, 0.044715
    %v3653 = vmul.f32 %v3613, 0.044715
    %v3654 = vmul.f32 %v3618, 0.044715
    %v3655 = vmul.f32 %v3621, 0.044715
    %v3656 = vmul.f32 %v3640, %v3562
    %v3657 = vmul.f32 %v3641, %v3565
    %v3658 = vmul.f32 %v3642, %v3570
    %v3659 = vmul.f32 %v3643, %v3573
    %v3660 = vmul.f32 %v3644, %v3578
    %v3661 = vmul.f32 %v3645, %v3581
    %v3662 = vmul.f32 %v3646, %v3586
    %v3663 = vmul.f32 %v3647, %v3589
    %v3664 = vmul.f32 %v3648, %v3594
    %v3665 = vmul.f32 %v3649, %v3597
    %v3666 = vmul.f32 %v3650, %v3602
    %v3667 = vmul.f32 %v3651, %v3605
    %v3668 = vmul.f32 %v3652, %v3610
    %v3669 = vmul.f32 %v3653, %v3613
    %v3670 = vmul.f32 %v3654, %v3618
    %v3671 = vmul.f32 %v3655, %v3621
    %v3672 = vmul.f32 %v3656, %v3562
    %v3673 = vmul.f32 %v3657, %v3565
    %v3674 = vmul.f32 %v3658, %v3570
    %v3675 = vmul.f32 %v3659, %v3573
    %v3676 = vmul.f32 %v3660, %v3578
    %v3677 = vmul.f32 %v3661, %v3581
    %v3678 = vmul.f32 %v3662, %v3586
    %v3679 = vmul.f32 %v3663, %v3589
    %v3680 = vmul.f32 %v3664, %v3594
    %v3681 = vmul.f32 %v3665, %v3597
    %v3682 = vmul.f32 %v3666, %v3602
    %v3683 = vmul.f32 %v3667, %v3605
    %v3684 = vmul.f32 %v3668, %v3610
    %v3685 = vmul.f32 %v3669, %v3613
    %v3686 = vmul.f32 %v3670, %v3618
    %v3687 = vmul.f32 %v3671, %v3621
    %v3688 = vadd.f32 %v3562, %v3672
    %v3689 = vadd.f32 %v3565, %v3673
    %v3690 = vadd.f32 %v3570, %v3674
    %v3691 = vadd.f32 %v3573, %v3675
    %v3692 = vadd.f32 %v3578, %v3676
    %v3693 = vadd.f32 %v3581, %v3677
    %v3694 = vadd.f32 %v3586, %v3678
    %v3695 = vadd.f32 %v3589, %v3679
    %v3696 = vadd.f32 %v3594, %v3680
    %v3697 = vadd.f32 %v3597, %v3681
    %v3698 = vadd.f32 %v3602, %v3682
    %v3699 = vadd.f32 %v3605, %v3683
    %v3700 = vadd.f32 %v3610, %v3684
    %v3701 = vadd.f32 %v3613, %v3685
    %v3702 = vadd.f32 %v3618, %v3686
    %v3703 = vadd.f32 %v3621, %v3687
    %v3704 = vmul.f32 %v3688, 0.7978846
    %v3705 = vmul.f32 %v3689, 0.7978846
    %v3706 = vmul.f32 %v3690, 0.7978846
    %v3707 = vmul.f32 %v3691, 0.7978846
    %v3708 = vmul.f32 %v3692, 0.7978846
    %v3709 = vmul.f32 %v3693, 0.7978846
    %v3710 = vmul.f32 %v3694, 0.7978846
    %v3711 = vmul.f32 %v3695, 0.7978846
    %v3712 = vmul.f32 %v3696, 0.7978846
    %v3713 = vmul.f32 %v3697, 0.7978846
    %v3714 = vmul.f32 %v3698, 0.7978846
    %v3715 = vmul.f32 %v3699, 0.7978846
    %v3716 = vmul.f32 %v3700, 0.7978846
    %v3717 = vmul.f32 %v3701, 0.7978846
    %v3718 = vmul.f32 %v3702, 0.7978846
    %v3719 = vmul.f32 %v3703, 0.7978846
    %v3720 = vtanh.pop %v3704
    %v3721 = vtanh.pop %v3705
    %v3722 = vtanh.pop %v3706
    %v3723 = vtanh.pop %v3707
    %v3724 = vtanh.pop %v3708
    %v3725 = vtanh.pop %v3709
    %v3726 = vtanh.pop %v3710
    %v3727 = vtanh.pop %v3711
    %v3728 = vtanh.pop %v3712
    %v3729 = vtanh.pop %v3713
    %v3730 = vtanh.pop %v3714
    %v3731 = vtanh.pop %v3715
    %v3732 = vtanh.pop %v3716
    %v3733 = vtanh.pop %v3717
    %v3734 = vtanh.pop %v3718
    %v3735 = vtanh.pop %v3719
    %v3736 = vadd.f32 %v3720, 1.0
    %v3737 = vadd.f32 %v3721, 1.0
    %v3738 = vadd.f32 %v3722, 1.0
    %v3739 = vadd.f32 %v3723, 1.0
    %v3740 = vadd.f32 %v3724, 1.0
    %v3741 = vadd.f32 %v3725, 1.0
    %v3742 = vadd.f32 %v3726, 1.0
    %v3743 = vadd.f32 %v3727, 1.0
    %v3744 = vadd.f32 %v3728, 1.0
    %v3745 = vadd.f32 %v3729, 1.0
    %v3746 = vadd.f32 %v3730, 1.0
    %v3747 = vadd.f32 %v3731, 1.0
    %v3748 = vadd.f32 %v3732, 1.0
    %v3749 = vadd.f32 %v3733, 1.0
    %v3750 = vadd.f32 %v3734, 1.0
    %v3751 = vadd.f32 %v3735, 1.0
    %v3752 = vmul.f32 %v3624, %v3736
    %v3753 = vmul.f32 %v3625, %v3737
    %v3754 = vmul.f32 %v3626, %v3738
    %v3755 = vmul.f32 %v3627, %v3739
    %v3756 = vmul.f32 %v3628, %v3740
    %v3757 = vmul.f32 %v3629, %v3741
    %v3758 = vmul.f32 %v3630, %v3742
    %v3759 = vmul.f32 %v3631, %v3743
    %v3760 = vmul.f32 %v3632, %v3744
    %v3761 = vmul.f32 %v3633, %v3745
    %v3762 = vmul.f32 %v3634, %v3746
    %v3763 = vmul.f32 %v3635, %v3747
    %v3764 = vmul.f32 %v3636, %v3748
    %v3765 = vmul.f32 %v3637, %v3749
    %v3766 = vmul.f32 %v3638, %v3750
    %v3767 = vmul.f32 %v3639, %v3751
    %3768 = vst [vmem:[#allocation2 + $0x1] sm:$0xff] %v3752
    %3769 = vst [vmem:[#allocation2 + $0x11] sm:$0xff] %v3753
    %3770 = vst [vmem:[#allocation2 + $0x21] sm:$0xff] %v3754
    %3771 = vst [vmem:[#allocation2 + $0x31] sm:$0xff] %v3755
    %3772 = vst [vmem:[#allocation2 + $0x41] sm:$0xff] %v3756
    %3773 = vst [vmem:[#allocation2 + $0x51] sm:$0xff] %v3757
    %3774 = vst [vmem:[#allocation2 + $0x61] sm:$0xff] %v3758
    %3775 = vst [vmem:[#allocation2 + $0x71] sm:$0xff] %v3759
    %3776 = vst [vmem:[#allocation2 + $0x81] sm:$0xff] %v3760
    %3777 = vst [vmem:[#allocation2 + $0x91] sm:$0xff] %v3761
    %3778 = vst [vmem:[#allocation2 + $0xa1] sm:$0xff] %v3762
    %3779 = vst [vmem:[#allocation2 + $0xb1] sm:$0xff] %v3763
    %3780 = vst [vmem:[#allocation2 + $0xc1] sm:$0xff] %v3764
    %3781 = vst [vmem:[#allocation2 + $0xd1] sm:$0xff] %v3765
    %3782 = vst [vmem:[#allocation2 + $0xe1] sm:$0xff] %v3766
    %3783 = vst [vmem:[#allocation2 + $0xf1] sm:$0xff] %v3767
    %s3784 = scalar_lea.vmem [#allocation8], 192
    %v3785 = vld [vmem:[%s3784] sm:$0xf]
    %v3786 = vld [vmem:[%s3784 + $0x4] sm:$0xf]
    %v3787 = vld [vmem:[%s3784 + $0x8] sm:$0xf]
    %v3788 = vld [vmem:[%s3784 + $0xc] sm:$0xf]
    %v3789 = vld [vmem:[%s3784 + $0x10] sm:$0xf]
    %v3790 = vld [vmem:[%s3784 + $0x14] sm:$0xf]
    %v3791 = vld [vmem:[%s3784 + $0x18] sm:$0xf]
    %v3792 = vld [vmem:[%s3784 + $0x1c] sm:$0xf]
    %v3793 = vld [vmem:[%s3784 + $0x20] sm:$0xf]
    %v3794 = vld [vmem:[%s3784 + $0x24] sm:$0xf]
    %v3795 = vld [vmem:[%s3784 + $0x28] sm:$0xf]
    %v3796 = vld [vmem:[%s3784 + $0x2c] sm:$0xf]
    %v3797 = vld [vmem:[%s3784 + $0x30] sm:$0xf]
    %v3798 = vld [vmem:[%s3784 + $0x34] sm:$0xf]
    %v3799 = vld [vmem:[%s3784 + $0x38] sm:$0xf]
    %v3800 = vld [vmem:[%s3784 + $0x3c] sm:$0xf]
    %v3801 = vld [vmem:[%s3784 + $0x40] sm:$0xf]
    %v3802 = vld [vmem:[%s3784 + $0x44] sm:$0xf]
    %v3803 = vld [vmem:[%s3784 + $0x48] sm:$0xf]
    %v3804 = vld [vmem:[%s3784 + $0x4c] sm:$0xf]
    %v3805 = vld [vmem:[%s3784 + $0x50] sm:$0xf]
    %v3806 = vld [vmem:[%s3784 + $0x54] sm:$0xf]
    %v3807 = vld [vmem:[%s3784 + $0x58] sm:$0xf]
    %v3808 = vld [vmem:[%s3784 + $0x5c] sm:$0xf]
    %v3809 = vld [vmem:[%s3784 + $0x60] sm:$0xf]
    %v3810 = vld [vmem:[%s3784 + $0x64] sm:$0xf]
    %v3811 = vld [vmem:[%s3784 + $0x68] sm:$0xf]
    %v3812 = vld [vmem:[%s3784 + $0x6c] sm:$0xf]
    %v3813 = vld [vmem:[%s3784 + $0x70] sm:$0xf]
    %v3814 = vld [vmem:[%s3784 + $0x74] sm:$0xf]
    %v3815 = vld [vmem:[%s3784 + $0x78] sm:$0xf]
    %v3816 = vld [vmem:[%s3784 + $0x7c] sm:$0xf]
    %v3817 = vld [vmem:[%s3784 + $0x80] sm:$0xf]
    %v3818 = vld [vmem:[%s3784 + $0x84] sm:$0xf]
    %v3819 = vld [vmem:[%s3784 + $0x88] sm:$0xf]
    %v3820 = vld [vmem:[%s3784 + $0x8c] sm:$0xf]
    %v3821 = vld [vmem:[%s3784 + $0x90] sm:$0xf]
    %v3822 = vld [vmem:[%s3784 + $0x94] sm:$0xf]
    %v3823 = vld [vmem:[%s3784 + $0x98] sm:$0xf]
    %v3824 = vld [vmem:[%s3784 + $0x9c] sm:$0xf]
    %v3825 = vld [vmem:[%s3784 + $0xa0] sm:$0xf]
    %v3826 = vld [vmem:[%s3784 + $0xa4] sm:$0xf]
    %v3827 = vld [vmem:[%s3784 + $0xa8] sm:$0xf]
    %v3828 = vld [vmem:[%s3784 + $0xac] sm:$0xf]
    %v3829 = vld [vmem:[%s3784 + $0xb0] sm:$0xf]
    %v3830 = vld [vmem:[%s3784 + $0xb4] sm:$0xf]
    %v3831 = vld [vmem:[%s3784 + $0xb8] sm:$0xf]
    %v3832 = vld [vmem:[%s3784 + $0xbc] sm:$0xf]
    %s3833 = scalar_lea.vmem [#allocation10], 1
    %v3834 = vld [vmem:[%s3833] sm:$0x1]
    %v3835 = vld [vmem:[#allocation2] sm:$0xff]
    %v3836 = vld [vmem:[#allocation2 + $0x10] sm:$0xff]
    %v3837 = vld [vmem:[#allocation2 + $0x20] sm:$0xff]
    %v3838 = vld [vmem:[#allocation2 + $0x30] sm:$0xff]
    %v3839 = vld [vmem:[#allocation2 + $0x40] sm:$0xff]
    %v3840 = vld [vmem:[#allocation2 + $0x50] sm:$0xff]
    %v3841 = vld [vmem:[#allocation2 + $0x60] sm:$0xff]
    %v3842 = vld [vmem:[#allocation2 + $0x70] sm:$0xff]
    %v3843 = vld [vmem:[#allocation2 + $0x80] sm:$0xff]
    %v3844 = vld [vmem:[#allocation2 + $0x90] sm:$0xff]
    %v3845 = vld [vmem:[#allocation2 + $0xa0] sm:$0xff]
    %v3846 = vld [vmem:[#allocation2 + $0xb0] sm:$0xff]
    %v3847 = vld [vmem:[#allocation2 + $0xc0] sm:$0xff]
    %v3848 = vld [vmem:[#allocation2 + $0xd0] sm:$0xff]
    %v3849 = vld [vmem:[#allocation2 + $0xe0] sm:$0xff]
    %v3850 = vld [vmem:[#allocation2 + $0xf0] sm:$0xff]
    %v3851 = vpack.c.bf16 %v3836, %v3835
    %v3852 = vpack.c.bf16 %v3838, %v3837
    %v3853 = vpack.c.bf16 %v3840, %v3839
    %v3854 = vpack.c.bf16 %v3842, %v3841
    %v3855 = vpack.c.bf16 %v3844, %v3843
    %v3856 = vpack.c.bf16 %v3846, %v3845
    %v3857 = vpack.c.bf16 %v3848, %v3847
    %v3858 = vpack.c.bf16 %v3850, %v3849
    %v3867 = vunpack.c.l.b16 %v3851
    %v3868 = vunpack.c.h.b16 %v3851
    %v3869 = vunpack.c.l.b16 %v3852
    %v3870 = vunpack.c.h.b16 %v3852
    %v3871 = vunpack.c.l.b16 %v3853
    %v3872 = vunpack.c.h.b16 %v3853
    %v3873 = vunpack.c.l.b16 %v3854
    %v3874 = vunpack.c.h.b16 %v3854
    %v3875 = vunpack.c.l.b16 %v3855
    %v3876 = vunpack.c.h.b16 %v3855
    %v3877 = vunpack.c.l.b16 %v3856
    %v3878 = vunpack.c.h.b16 %v3856
    %v3879 = vunpack.c.l.b16 %v3857
    %v3880 = vunpack.c.h.b16 %v3857
    %v3881 = vunpack.c.l.b16 %v3858
    %v3882 = vunpack.c.h.b16 %v3858
    %v3883 = vpack.c.b16 %v3867, %v3867
    %v3884 = vpack.c.b16 %v3868, %v3868
    %v3885 = vpack.c.b16 %v3869, %v3869
    %v3886 = vpack.c.b16 %v3870, %v3870
    %v3887 = vpack.c.b16 %v3871, %v3871
    %v3888 = vpack.c.b16 %v3872, %v3872
    %v3889 = vpack.c.b16 %v3873, %v3873
    %v3890 = vpack.c.b16 %v3874, %v3874
    %v3891 = vpack.c.b16 %v3875, %v3875
    %v3892 = vpack.c.b16 %v3876, %v3876
    %v3893 = vpack.c.b16 %v3877, %v3877
    %v3894 = vpack.c.b16 %v3878, %v3878
    %v3895 = vpack.c.b16 %v3879, %v3879
    %v3896 = vpack.c.b16 %v3880, %v3880
    %v3897 = vpack.c.b16 %v3881, %v3881
    %v3898 = vpack.c.b16 %v3882, %v3882
    %3915 = vst [vmem:[#allocation3] sm:$0xf] %v3883
    %3916 = vst [vmem:[#allocation3 + $0xc] sm:$0xf] %v3884
    %3917 = vst [vmem:[#allocation3 + $0x18] sm:$0xf] %v3885
    %3918 = vst [vmem:[#allocation3 + $0x24] sm:$0xf] %v3886
    %3919 = vst [vmem:[#allocation3 + $0x30] sm:$0xf] %v3887
    %3920 = vst [vmem:[#allocation3 + $0x3c] sm:$0xf] %v3888
    %3921 = vst [vmem:[#allocation3 + $0x48] sm:$0xf] %v3889
    %3922 = vst [vmem:[#allocation3 + $0x54] sm:$0xf] %v3890
    %3923 = vst [vmem:[#allocation3 + $0x60] sm:$0xf] %v3891
    %3924 = vst [vmem:[#allocation3 + $0x6c] sm:$0xf] %v3892
    %3925 = vst [vmem:[#allocation3 + $0x78] sm:$0xf] %v3893
    %3926 = vst [vmem:[#allocation3 + $0x84] sm:$0xf] %v3894
    %3927 = vst [vmem:[#allocation3 + $0x90] sm:$0xf] %v3895
    %3928 = vst [vmem:[#allocation3 + $0x9c] sm:$0xf] %v3896
    %3929 = vst [vmem:[#allocation3 + $0xa8] sm:$0xf] %v3897
    %3930 = vst [vmem:[#allocation3 + $0xb4] sm:$0xf] %v3898
    %v3931 = vld [vmem:[#allocation2 + $0x1] sm:$0xff]
    %v3932 = vld [vmem:[#allocation2 + $0x11] sm:$0xff]
    %v3933 = vld [vmem:[#allocation2 + $0x21] sm:$0xff]
    %v3934 = vld [vmem:[#allocation2 + $0x31] sm:$0xff]
    %v3935 = vld [vmem:[#allocation2 + $0x41] sm:$0xff]
    %v3936 = vld [vmem:[#allocation2 + $0x51] sm:$0xff]
    %v3937 = vld [vmem:[#allocation2 + $0x61] sm:$0xff]
    %v3938 = vld [vmem:[#allocation2 + $0x71] sm:$0xff]
    %v3939 = vld [vmem:[#allocation2 + $0x81] sm:$0xff]
    %v3940 = vld [vmem:[#allocation2 + $0x91] sm:$0xff]
    %v3941 = vld [vmem:[#allocation2 + $0xa1] sm:$0xff]
    %v3942 = vld [vmem:[#allocation2 + $0xb1] sm:$0xff]
    %v3943 = vld [vmem:[#allocation2 + $0xc1] sm:$0xff]
    %v3944 = vld [vmem:[#allocation2 + $0xd1] sm:$0xff]
    %v3945 = vld [vmem:[#allocation2 + $0xe1] sm:$0xff]
    %v3946 = vld [vmem:[#allocation2 + $0xf1] sm:$0xff]
    %v3947 = vpack.c.bf16 %v3932, %v3931
    %v3948 = vpack.c.bf16 %v3934, %v3933
    %v3949 = vpack.c.bf16 %v3936, %v3935
    %v3950 = vpack.c.bf16 %v3938, %v3937
    %v3951 = vpack.c.bf16 %v3940, %v3939
    %v3952 = vpack.c.bf16 %v3942, %v3941
    %v3953 = vpack.c.bf16 %v3944, %v3943
    %v3954 = vpack.c.bf16 %v3946, %v3945
    %v3963 = vunpack.c.l.b16 %v3947
    %v3964 = vunpack.c.h.b16 %v3947
    %v3965 = vunpack.c.l.b16 %v3948
    %v3966 = vunpack.c.h.b16 %v3948
    %v3967 = vunpack.c.l.b16 %v3949
    %v3968 = vunpack.c.h.b16 %v3949
    %v3969 = vunpack.c.l.b16 %v3950
    %v3970 = vunpack.c.h.b16 %v3950
    %v3971 = vunpack.c.l.b16 %v3951
    %v3972 = vunpack.c.h.b16 %v3951
    %v3973 = vunpack.c.l.b16 %v3952
    %v3974 = vunpack.c.h.b16 %v3952
    %v3975 = vunpack.c.l.b16 %v3953
    %v3976 = vunpack.c.h.b16 %v3953
    %v3977 = vunpack.c.l.b16 %v3954
    %v3978 = vunpack.c.h.b16 %v3954
    %v3979 = vpack.c.b16 %v3963, %v3963
    %v3980 = vpack.c.b16 %v3964, %v3964
    %v3981 = vpack.c.b16 %v3965, %v3965
    %v3982 = vpack.c.b16 %v3966, %v3966
    %v3983 = vpack.c.b16 %v3967, %v3967
    %v3984 = vpack.c.b16 %v3968, %v3968
    %v3985 = vpack.c.b16 %v3969, %v3969
    %v3986 = vpack.c.b16 %v3970, %v3970
    %v3987 = vpack.c.b16 %v3971, %v3971
    %v3988 = vpack.c.b16 %v3972, %v3972
    %v3989 = vpack.c.b16 %v3973, %v3973
    %v3990 = vpack.c.b16 %v3974, %v3974
    %v3991 = vpack.c.b16 %v3975, %v3975
    %v3992 = vpack.c.b16 %v3976, %v3976
    %v3993 = vpack.c.b16 %v3977, %v3977
    %v3994 = vpack.c.b16 %v3978, %v3978
    %4011 = vst [vmem:[#allocation3 + $0x4] sm:$0xf] %v3979
    %4012 = vst [vmem:[#allocation3 + $0x10] sm:$0xf] %v3980
    %4013 = vst [vmem:[#allocation3 + $0x1c] sm:$0xf] %v3981
    %4014 = vst [vmem:[#allocation3 + $0x28] sm:$0xf] %v3982
    %4015 = vst [vmem:[#allocation3 + $0x34] sm:$0xf] %v3983
    %4016 = vst [vmem:[#allocation3 + $0x40] sm:$0xf] %v3984
    %4017 = vst [vmem:[#allocation3 + $0x4c] sm:$0xf] %v3985
    %4018 = vst [vmem:[#allocation3 + $0x58] sm:$0xf] %v3986
    %4019 = vst [vmem:[#allocation3 + $0x64] sm:$0xf] %v3987
    %4020 = vst [vmem:[#allocation3 + $0x70] sm:$0xf] %v3988
    %4021 = vst [vmem:[#allocation3 + $0x7c] sm:$0xf] %v3989
    %4022 = vst [vmem:[#allocation3 + $0x88] sm:$0xf] %v3990
    %4023 = vst [vmem:[#allocation3 + $0x94] sm:$0xf] %v3991
    %4024 = vst [vmem:[#allocation3 + $0xa0] sm:$0xf] %v3992
    %4025 = vst [vmem:[#allocation3 + $0xac] sm:$0xf] %v3993
    %4026 = vst [vmem:[#allocation3 + $0xb8] sm:$0xf] %v3994
    %v4027 = vld [vmem:[#allocation2 + $0x2] sm:$0xff]
    %v4028 = vld [vmem:[#allocation2 + $0x12] sm:$0xff]
    %v4029 = vld [vmem:[#allocation2 + $0x22] sm:$0xff]
    %v4030 = vld [vmem:[#allocation2 + $0x32] sm:$0xff]
    %v4031 = vld [vmem:[#allocation2 + $0x42] sm:$0xff]
    %v4032 = vld [vmem:[#allocation2 + $0x52] sm:$0xff]
    %v4033 = vld [vmem:[#allocation2 + $0x62] sm:$0xff]
    %v4034 = vld [vmem:[#allocation2 + $0x72] sm:$0xff]
    %v4035 = vld [vmem:[#allocation2 + $0x82] sm:$0xff]
    %v4036 = vld [vmem:[#allocation2 + $0x92] sm:$0xff]
    %v4037 = vld [vmem:[#allocation2 + $0xa2] sm:$0xff]
    %v4038 = vld [vmem:[#allocation2 + $0xb2] sm:$0xff]
    %v4039 = vld [vmem:[#allocation2 + $0xc2] sm:$0xff]
    %v4040 = vld [vmem:[#allocation2 + $0xd2] sm:$0xff]
    %v4041 = vld [vmem:[#allocation2 + $0xe2] sm:$0xff]
    %v4042 = vld [vmem:[#allocation2 + $0xf2] sm:$0xff]
    %v4043 = vpack.c.bf16 %v4028, %v4027
    %v4044 = vpack.c.bf16 %v4030, %v4029
    %v4045 = vpack.c.bf16 %v4032, %v4031
    %v4046 = vpack.c.bf16 %v4034, %v4033
    %v4047 = vpack.c.bf16 %v4036, %v4035
    %v4048 = vpack.c.bf16 %v4038, %v4037
    %v4049 = vpack.c.bf16 %v4040, %v4039
    %v4050 = vpack.c.bf16 %v4042, %v4041
    %v4059 = vunpack.c.l.b16 %v4043
    %v4060 = vunpack.c.h.b16 %v4043
    %v4061 = vunpack.c.l.b16 %v4044
    %v4062 = vunpack.c.h.b16 %v4044
    %v4063 = vunpack.c.l.b16 %v4045
    %v4064 = vunpack.c.h.b16 %v4045
    %v4065 = vunpack.c.l.b16 %v4046
    %v4066 = vunpack.c.h.b16 %v4046
    %v4067 = vunpack.c.l.b16 %v4047
    %v4068 = vunpack.c.h.b16 %v4047
    %v4069 = vunpack.c.l.b16 %v4048
    %v4070 = vunpack.c.h.b16 %v4048
    %v4071 = vunpack.c.l.b16 %v4049
    %v4072 = vunpack.c.h.b16 %v4049
    %v4073 = vunpack.c.l.b16 %v4050
    %v4074 = vunpack.c.h.b16 %v4050
    %v4075 = vpack.c.b16 %v4059, %v4059
    %v4076 = vpack.c.b16 %v4060, %v4060
    %v4077 = vpack.c.b16 %v4061, %v4061
    %v4078 = vpack.c.b16 %v4062, %v4062
    %v4079 = vpack.c.b16 %v4063, %v4063
    %v4080 = vpack.c.b16 %v4064, %v4064
    %v4081 = vpack.c.b16 %v4065, %v4065
    %v4082 = vpack.c.b16 %v4066, %v4066
    %v4083 = vpack.c.b16 %v4067, %v4067
    %v4084 = vpack.c.b16 %v4068, %v4068
    %v4085 = vpack.c.b16 %v4069, %v4069
    %v4086 = vpack.c.b16 %v4070, %v4070
    %v4087 = vpack.c.b16 %v4071, %v4071
    %v4088 = vpack.c.b16 %v4072, %v4072
    %v4089 = vpack.c.b16 %v4073, %v4073
    %v4090 = vpack.c.b16 %v4074, %v4074
    %4107 = vst [vmem:[#allocation3 + $0x8] sm:$0xf] %v4075
    %4108 = vst [vmem:[#allocation3 + $0x14] sm:$0xf] %v4076
    %4109 = vst [vmem:[#allocation3 + $0x20] sm:$0xf] %v4077
    %4110 = vst [vmem:[#allocation3 + $0x2c] sm:$0xf] %v4078
    %4111 = vst [vmem:[#allocation3 + $0x38] sm:$0xf] %v4079
    %4112 = vst [vmem:[#allocation3 + $0x44] sm:$0xf] %v4080
    %4113 = vst [vmem:[#allocation3 + $0x50] sm:$0xf] %v4081
    %4114 = vst [vmem:[#allocation3 + $0x5c] sm:$0xf] %v4082
    %4115 = vst [vmem:[#allocation3 + $0x68] sm:$0xf] %v4083
    %4116 = vst [vmem:[#allocation3 + $0x74] sm:$0xf] %v4084
    %4117 = vst [vmem:[#allocation3 + $0x80] sm:$0xf] %v4085
    %4118 = vst [vmem:[#allocation3 + $0x8c] sm:$0xf] %v4086
    %4119 = vst [vmem:[#allocation3 + $0x98] sm:$0xf] %v4087
    %4120 = vst [vmem:[#allocation3 + $0xa4] sm:$0xf] %v4088
    %4121 = vst [vmem:[#allocation3 + $0xb0] sm:$0xf] %v4089
    %4122 = vst [vmem:[#allocation3 + $0xbc] sm:$0xf] %v4090
    %v4123 = vld [vmem:[#allocation3] sm:$0xff]
    %v4124 = vld [vmem:[#allocation3 + $0x8] sm:$0xf]
    %v4125 = vld [vmem:[#allocation3 + $0xc] sm:$0xff]
    %v4126 = vld [vmem:[#allocation3 + $0x14] sm:$0xf]
    %v4127 = vld [vmem:[#allocation3 + $0x18] sm:$0xff]
    %v4128 = vld [vmem:[#allocation3 + $0x20] sm:$0xf]
    %v4129 = vld [vmem:[#allocation3 + $0x24] sm:$0xff]
    %v4130 = vld [vmem:[#allocation3 + $0x2c] sm:$0xf]
    %v4131 = vld [vmem:[#allocation3 + $0x30] sm:$0xff]
    %v4132 = vld [vmem:[#allocation3 + $0x38] sm:$0xf]
    %v4133 = vld [vmem:[#allocation3 + $0x3c] sm:$0xff]
    %v4134 = vld [vmem:[#allocation3 + $0x44] sm:$0xf]
    %v4135 = vld [vmem:[#allocation3 + $0x48] sm:$0xff]
    %v4136 = vld [vmem:[#allocation3 + $0x50] sm:$0xf]
    %v4137 = vld [vmem:[#allocation3 + $0x54] sm:$0xff]
    %v4138 = vld [vmem:[#allocation3 + $0x5c] sm:$0xf]
    %v4139 = vld [vmem:[#allocation3 + $0x60] sm:$0xff]
    %v4140 = vld [vmem:[#allocation3 + $0x68] sm:$0xf]
    %v4141 = vld [vmem:[#allocation3 + $0x6c] sm:$0xff]
    %v4142 = vld [vmem:[#allocation3 + $0x74] sm:$0xf]
    %v4143 = vld [vmem:[#allocation3 + $0x78] sm:$0xff]
    %v4144 = vld [vmem:[#allocation3 + $0x80] sm:$0xf]
    %v4145 = vld [vmem:[#allocation3 + $0x84] sm:$0xff]
    %v4146 = vld [vmem:[#allocation3 + $0x8c] sm:$0xf]
    %v4147 = vld [vmem:[#allocation3 + $0x90] sm:$0xff]
    %v4148 = vld [vmem:[#allocation3 + $0x98] sm:$0xf]
    %v4149 = vld [vmem:[#allocation3 + $0x9c] sm:$0xff]
    %v4150 = vld [vmem:[#allocation3 + $0xa4] sm:$0xf]
    %v4151 = vld [vmem:[#allocation3 + $0xa8] sm:$0xff]
    %v4152 = vld [vmem:[#allocation3 + $0xb0] sm:$0xf]
    %v4153 = vld [vmem:[#allocation3 + $0xb4] sm:$0xff]
    %v4154 = vld [vmem:[#allocation3 + $0xbc] sm:$0xf]
    %v4156 = vlaneseq
    %v4157 = vshrl.u32 %v4156, 7
    %v4158 = vsub.s32 0, %v4157
    %v4159 = vrot.slane %v3834, %v4158
    %v4193 = vunpack.c.l.b16 %v4123
    %v4194 = vunpack.c.h.b16 %v4123
    %v4195 = vunpack.c.l.b16 %v4124
    %v4196 = vunpack.c.l.b16 %v4125
    %v4197 = vunpack.c.h.b16 %v4125
    %v4198 = vunpack.c.l.b16 %v4126
    %v4199 = vunpack.c.l.b16 %v4127
    %v4200 = vunpack.c.h.b16 %v4127
    %v4201 = vunpack.c.l.b16 %v4128
    %v4202 = vunpack.c.l.b16 %v4129
    %v4203 = vunpack.c.h.b16 %v4129
    %v4204 = vunpack.c.l.b16 %v4130
    %v4205 = vunpack.c.l.b16 %v4131
    %v4206 = vunpack.c.h.b16 %v4131
    %v4207 = vunpack.c.l.b16 %v4132
    %v4208 = vunpack.c.l.b16 %v4133
    %v4209 = vunpack.c.h.b16 %v4133
    %v4210 = vunpack.c.l.b16 %v4134
    %v4211 = vunpack.c.l.b16 %v4135
    %v4212 = vunpack.c.h.b16 %v4135
    %v4213 = vunpack.c.l.b16 %v4136
    %v4214 = vunpack.c.l.b16 %v4137
    %v4215 = vunpack.c.h.b16 %v4137
    %v4216 = vunpack.c.l.b16 %v4138
    %v4217 = vunpack.c.l.b16 %v4139
    %v4218 = vunpack.c.h.b16 %v4139
    %v4219 = vunpack.c.l.b16 %v4140
    %v4220 = vunpack.c.l.b16 %v4141
    %v4221 = vunpack.c.h.b16 %v4141
    %v4222 = vunpack.c.l.b16 %v4142
    %v4223 = vunpack.c.l.b16 %v4143
    %v4224 = vunpack.c.h.b16 %v4143
    %v4225 = vunpack.c.l.b16 %v4144
    %v4226 = vunpack.c.l.b16 %v4145
    %v4227 = vunpack.c.h.b16 %v4145
    %v4228 = vunpack.c.l.b16 %v4146
    %v4229 = vunpack.c.l.b16 %v4147
    %v4230 = vunpack.c.h.b16 %v4147
    %v4231 = vunpack.c.l.b16 %v4148
    %v4232 = vunpack.c.l.b16 %v4149
    %v4233 = vunpack.c.h.b16 %v4149
    %v4234 = vunpack.c.l.b16 %v4150
    %v4235 = vunpack.c.l.b16 %v4151
    %v4236 = vunpack.c.h.b16 %v4151
    %v4237 = vunpack.c.l.b16 %v4152
    %v4238 = vunpack.c.l.b16 %v4153
    %v4239 = vunpack.c.h.b16 %v4153
    %v4240 = vunpack.c.l.b16 %v4154
    %v4241 = vpack.c.b16 %v4196, %v4193
    %v4242 = vpack.c.b16 %v4197, %v4194
    %v4243 = vpack.c.b16 %v4198, %v4195
    %v4244 = vpack.c.b16 %v4202, %v4199
    %v4245 = vpack.c.b16 %v4203, %v4200
    %v4246 = vpack.c.b16 %v4204, %v4201
    %v4247 = vpack.c.b16 %v4208, %v4205
    %v4248 = vpack.c.b16 %v4209, %v4206
    %v4249 = vpack.c.b16 %v4210, %v4207
    %v4250 = vpack.c.b16 %v4214, %v4211
    %v4251 = vpack.c.b16 %v4215, %v4212
    %v4252 = vpack.c.b16 %v4216, %v4213
    %v4253 = vpack.c.b16 %v4220, %v4217
    %v4254 = vpack.c.b16 %v4221, %v4218
    %v4255 = vpack.c.b16 %v4222, %v4219
    %v4256 = vpack.c.b16 %v4226, %v4223
    %v4257 = vpack.c.b16 %v4227, %v4224
    %v4258 = vpack.c.b16 %v4228, %v4225
    %v4259 = vpack.c.b16 %v4232, %v4229
    %v4260 = vpack.c.b16 %v4233, %v4230
    %v4261 = vpack.c.b16 %v4234, %v4231
    %v4262 = vpack.c.b16 %v4238, %v4235
    %v4263 = vpack.c.b16 %v4239, %v4236
    %v4264 = vpack.c.b16 %v4240, %v4237
    %v4337 = vunpack.c.l.b16 %v3785
    %v4338 = vunpack.c.l.b16 %v3786
    %v4339 = vunpack.c.l.b16 %v3787
    %v4340 = vunpack.c.l.b16 %v3788
    %v4341 = vunpack.c.l.b16 %v3789
    %v4342 = vunpack.c.l.b16 %v3790
    %v4343 = vunpack.c.l.b16 %v3791
    %v4344 = vunpack.c.l.b16 %v3792
    %v4345 = vunpack.c.l.b16 %v3793
    %v4346 = vunpack.c.l.b16 %v3794
    %v4347 = vunpack.c.l.b16 %v3795
    %v4348 = vunpack.c.l.b16 %v3796
    %v4349 = vunpack.c.l.b16 %v3797
    %v4350 = vunpack.c.l.b16 %v3798
    %v4351 = vunpack.c.l.b16 %v3799
    %v4352 = vunpack.c.l.b16 %v3800
    %v4353 = vunpack.c.l.b16 %v3801
    %v4354 = vunpack.c.l.b16 %v3802
    %v4355 = vunpack.c.l.b16 %v3803
    %v4356 = vunpack.c.l.b16 %v3804
    %v4357 = vunpack.c.l.b16 %v3805
    %v4358 = vunpack.c.l.b16 %v3806
    %v4359 = vunpack.c.l.b16 %v3807
    %v4360 = vunpack.c.l.b16 %v3808
    %v4361 = vunpack.c.l.b16 %v3809
    %v4362 = vunpack.c.l.b16 %v3810
    %v4363 = vunpack.c.l.b16 %v3811
    %v4364 = vunpack.c.l.b16 %v3812
    %v4365 = vunpack.c.l.b16 %v3813
    %v4366 = vunpack.c.l.b16 %v3814
    %v4367 = vunpack.c.l.b16 %v3815
    %v4368 = vunpack.c.l.b16 %v3816
    %v4369 = vunpack.c.l.b16 %v3817
    %v4370 = vunpack.c.l.b16 %v3818
    %v4371 = vunpack.c.l.b16 %v3819
    %v4372 = vunpack.c.l.b16 %v3820
    %v4373 = vunpack.c.l.b16 %v3821
    %v4374 = vunpack.c.l.b16 %v3822
    %v4375 = vunpack.c.l.b16 %v3823
    %v4376 = vunpack.c.l.b16 %v3824
    %v4377 = vunpack.c.l.b16 %v3825
    %v4378 = vunpack.c.l.b16 %v3826
    %v4379 = vunpack.c.l.b16 %v3827
    %v4380 = vunpack.c.l.b16 %v3828
    %v4381 = vunpack.c.l.b16 %v3829
    %v4382 = vunpack.c.l.b16 %v3830
    %v4383 = vunpack.c.l.b16 %v3831
    %v4384 = vunpack.c.l.b16 %v3832
    %v4385 = vpack.c.b16 %v4338, %v4337
    %v4386 = vpack.c.b16 %v4340, %v4339
    %v4387 = vpack.c.b16 %v4342, %v4341
    %v4388 = vpack.c.b16 %v4344, %v4343
    %v4389 = vpack.c.b16 %v4346, %v4345
    %v4390 = vpack.c.b16 %v4348, %v4347
    %v4391 = vpack.c.b16 %v4350, %v4349
    %v4392 = vpack.c.b16 %v4352, %v4351
    %v4393 = vpack.c.b16 %v4354, %v4353
    %v4394 = vpack.c.b16 %v4356, %v4355
    %v4395 = vpack.c.b16 %v4358, %v4357
    %v4396 = vpack.c.b16 %v4360, %v4359
    %v4397 = vpack.c.b16 %v4362, %v4361
    %v4398 = vpack.c.b16 %v4364, %v4363
    %v4399 = vpack.c.b16 %v4366, %v4365
    %v4400 = vpack.c.b16 %v4368, %v4367
    %v4401 = vpack.c.b16 %v4370, %v4369
    %v4402 = vpack.c.b16 %v4372, %v4371
    %v4403 = vpack.c.b16 %v4374, %v4373
    %v4404 = vpack.c.b16 %v4376, %v4375
    %v4405 = vpack.c.b16 %v4378, %v4377
    %v4406 = vpack.c.b16 %v4380, %v4379
    %v4407 = vpack.c.b16 %v4382, %v4381
    %v4408 = vpack.c.b16 %v4384, %v4383
    %4433 = vmatprep.subr.bf16.mxu0 0
    %4434 = vmatpush1.bf16.msra.mxu0 %v4392
    %4435 = vmatprep.subr.bf16.mxu0 0
    %4436 = vmatpush1.bf16.msra.mxu0 %v4391
    %4437 = vmatprep.subr.bf16.mxu0 0
    %4438 = vmatpush1.bf16.msra.mxu0 %v4390
    %4439 = vmatprep.subr.bf16.mxu0 0
    %4440 = vmatpush1.bf16.msra.mxu0 %v4389
    %4441 = vmatprep.subr.bf16.mxu0 0
    %4442 = vmatpush1.bf16.msra.mxu0 %v4388
    %4443 = vmatprep.subr.bf16.mxu0 0
    %4444 = vmatpush1.bf16.msra.mxu0 %v4387
    %4445 = vmatprep.subr.bf16.mxu0 0
    %4446 = vmatpush1.bf16.msra.mxu0 %v4386
    %4447 = vmatprep.subr.bf16.mxu0 0
    %4448 = vmatpush1.bf16.msra.mxu0 %v4385
    %4449 = vmatprep.subr.bf16.mxu0 0
    %4450 = vmatpush2.bf16.msra.mxu0 %v4400
    %4451 = vmatprep.subr.bf16.mxu0 0
    %4452 = vmatpush2.bf16.msra.mxu0 %v4399
    %4453 = vmatprep.subr.bf16.mxu0 0
    %4454 = vmatpush2.bf16.msra.mxu0 %v4398
    %4455 = vmatprep.subr.bf16.mxu0 0
    %4456 = vmatpush2.bf16.msra.mxu0 %v4397
    %4457 = vmatprep.subr.bf16.mxu0 0
    %4458 = vmatpush2.bf16.msra.mxu0 %v4396
    %4459 = vmatprep.subr.bf16.mxu0 0
    %4460 = vmatpush2.bf16.msra.mxu0 %v4395
    %4461 = vmatprep.subr.bf16.mxu0 0
    %4462 = vmatpush2.bf16.msra.mxu0 %v4394
    %4463 = vmatprep.subr.bf16.mxu0 0
    %4464 = vmatpush2.bf16.msra.mxu0 %v4393
    %4465 = vmatprep.mubr.bf16.mxu0 %v4242
    %4466 = vmatmul.mubr.bf16.gmra.mxu0 %v4241
    %v4467 = vpop.f32.mrf.mxu0
    %v4468 = vadd.f32 %v4159, %v4467
    %v4469 = vpop.f32.mrf.mxu0
    %v4470 = vpop.f32.mrf.mxu0
    %v4471 = vadd.f32 %v4159, %v4470
    %v4472 = vpop.f32.mrf.mxu0
    %4473 = vmatprep.mubr.bf16.mxu0 %v4245
    %4474 = vmatmul.mubr.bf16.gmra.mxu0 %v4244
    %v4475 = vpop.f32.mrf.mxu0
    %v4476 = vadd.f32 %v4159, %v4475
    %v4477 = vpop.f32.mrf.mxu0
    %v4478 = vpop.f32.mrf.mxu0
    %v4479 = vadd.f32 %v4159, %v4478
    %v4480 = vpop.f32.mrf.mxu0
    %4481 = vmatprep.mubr.bf16.mxu0 %v4248
    %4482 = vmatmul.mubr.bf16.gmra.mxu0 %v4247
    %v4483 = vpop.f32.mrf.mxu0
    %v4484 = vadd.f32 %v4159, %v4483
    %v4485 = vpop.f32.mrf.mxu0
    %v4486 = vpop.f32.mrf.mxu0
    %v4487 = vadd.f32 %v4159, %v4486
    %v4488 = vpop.f32.mrf.mxu0
    %4489 = vmatprep.mubr.bf16.mxu0 %v4251
    %4490 = vmatmul.mubr.bf16.gmra.mxu0 %v4250
    %v4491 = vpop.f32.mrf.mxu0
    %v4492 = vadd.f32 %v4159, %v4491
    %v4493 = vpop.f32.mrf.mxu0
    %v4494 = vpop.f32.mrf.mxu0
    %v4495 = vadd.f32 %v4159, %v4494
    %v4496 = vpop.f32.mrf.mxu0
    %4497 = vmatprep.mubr.bf16.mxu0 %v4254
    %4498 = vmatmul.mubr.bf16.gmra.mxu0 %v4253
    %v4499 = vpop.f32.mrf.mxu0
    %v4500 = vadd.f32 %v4159, %v4499
    %v4501 = vpop.f32.mrf.mxu0
    %v4502 = vpop.f32.mrf.mxu0
    %v4503 = vadd.f32 %v4159, %v4502
    %v4504 = vpop.f32.mrf.mxu0
    %4505 = vmatprep.mubr.bf16.mxu0 %v4257
    %4506 = vmatmul.mubr.bf16.gmra.mxu0 %v4256
    %v4507 = vpop.f32.mrf.mxu0
    %v4508 = vadd.f32 %v4159, %v4507
    %v4509 = vpop.f32.mrf.mxu0
    %v4510 = vpop.f32.mrf.mxu0
    %v4511 = vadd.f32 %v4159, %v4510
    %v4512 = vpop.f32.mrf.mxu0
    %4513 = vmatprep.mubr.bf16.mxu0 %v4260
    %4514 = vmatmul.mubr.bf16.gmra.mxu0 %v4259
    %v4515 = vpop.f32.mrf.mxu0
    %v4516 = vadd.f32 %v4159, %v4515
    %v4517 = vpop.f32.mrf.mxu0
    %v4518 = vpop.f32.mrf.mxu0
    %v4519 = vadd.f32 %v4159, %v4518
    %v4520 = vpop.f32.mrf.mxu0
    %4521 = vmatprep.mubr.bf16.mxu0 %v4263
    %4522 = vmatmul.mubr.bf16.gmra.mxu0 %v4262
    %v4523 = vpop.f32.mrf.mxu0
    %v4524 = vadd.f32 %v4159, %v4523
    %v4525 = vpop.f32.mrf.mxu0
    %v4526 = vpop.f32.mrf.mxu0
    %v4527 = vadd.f32 %v4159, %v4526
    %v4528 = vpop.f32.mrf.mxu0
    %4529 = vdwg.mxu0
    %4530 = vmatprep.subr.bf16.mxu0 0
    %4531 = vmatpush1.bf16.msra.mxu0 %v4408
    %4532 = vmatprep.subr.bf16.mxu0 0
    %4533 = vmatpush1.bf16.msra.mxu0 %v4407
    %4534 = vmatprep.subr.bf16.mxu0 0
    %4535 = vmatpush1.bf16.msra.mxu0 %v4406
    %4536 = vmatprep.subr.bf16.mxu0 0
    %4537 = vmatpush1.bf16.msra.mxu0 %v4405
    %4538 = vmatprep.subr.bf16.mxu0 0
    %4539 = vmatpush1.bf16.msra.mxu0 %v4404
    %4540 = vmatprep.subr.bf16.mxu0 0
    %4541 = vmatpush1.bf16.msra.mxu0 %v4403
    %4542 = vmatprep.subr.bf16.mxu0 0
    %4543 = vmatpush1.bf16.msra.mxu0 %v4402
    %4544 = vmatprep.subr.bf16.mxu0 0
    %4545 = vmatpush1.bf16.msra.mxu0 %v4401
    %4546 = vmatprep.subr.bf16.mxu0 0
    %4547 = vmatpush2.bf16.msra.mxu0 0
    %4548 = vmatprep.subr.bf16.mxu0 0
    %4549 = vmatpush2.bf16.msra.mxu0 0
    %4550 = vmatprep.subr.bf16.mxu0 0
    %4551 = vmatpush2.bf16.msra.mxu0 0
    %4552 = vmatprep.subr.bf16.mxu0 0
    %4553 = vmatpush2.bf16.msra.mxu0 0
    %4554 = vmatprep.subr.bf16.mxu0 0
    %4555 = vmatpush2.bf16.msra.mxu0 0
    %4556 = vmatprep.subr.bf16.mxu0 0
    %4557 = vmatpush2.bf16.msra.mxu0 0
    %4558 = vmatprep.subr.bf16.mxu0 0
    %4559 = vmatpush2.bf16.msra.mxu0 0
    %4560 = vmatprep.subr.bf16.mxu0 0
    %4561 = vmatpush2.bf16.msra.mxu0 0
    %4562 = vmatprep.mubr.bf16.mxu0 0
    %4563 = vmatmul.mubr.bf16.gmra.mxu0 %v4243
    %v4564 = vpop.f32.mrf.mxu0
    %v4565 = vadd.f32 %v4468, %v4564
    %v4566 = vpop.f32.mrf.mxu0
    %v4567 = vpop.f32.mrf.mxu0
    %v4568 = vadd.f32 %v4471, %v4567
    %v4569 = vpop.f32.mrf.mxu0
    %4570 = vmatprep.mubr.bf16.mxu0 0
    %4571 = vmatmul.mubr.bf16.gmra.mxu0 %v4246
    %v4572 = vpop.f32.mrf.mxu0
    %v4573 = vadd.f32 %v4476, %v4572
    %v4574 = vpop.f32.mrf.mxu0
    %v4575 = vpop.f32.mrf.mxu0
    %v4576 = vadd.f32 %v4479, %v4575
    %v4577 = vpop.f32.mrf.mxu0
    %4578 = vmatprep.mubr.bf16.mxu0 0
    %4579 = vmatmul.mubr.bf16.gmra.mxu0 %v4249
    %v4580 = vpop.f32.mrf.mxu0
    %v4581 = vadd.f32 %v4484, %v4580
    %v4582 = vpop.f32.mrf.mxu0
    %v4583 = vpop.f32.mrf.mxu0
    %v4584 = vadd.f32 %v4487, %v4583
    %v4585 = vpop.f32.mrf.mxu0
    %4586 = vmatprep.mubr.bf16.mxu0 0
    %4587 = vmatmul.mubr.bf16.gmra.mxu0 %v4252
    %v4588 = vpop.f32.mrf.mxu0
    %v4589 = vadd.f32 %v4492, %v4588
    %v4590 = vpop.f32.mrf.mxu0
    %v4591 = vpop.f32.mrf.mxu0
    %v4592 = vadd.f32 %v4495, %v4591
    %v4593 = vpop.f32.mrf.mxu0
    %4594 = vmatprep.mubr.bf16.mxu0 0
    %4595 = vmatmul.mubr.bf16.gmra.mxu0 %v4255
    %v4596 = vpop.f32.mrf.mxu0
    %v4597 = vadd.f32 %v4500, %v4596
    %v4598 = vpop.f32.mrf.mxu0
    %v4599 = vpop.f32.mrf.mxu0
    %v4600 = vadd.f32 %v4503, %v4599
    %v4601 = vpop.f32.mrf.mxu0
    %4602 = vmatprep.mubr.bf16.mxu0 0
    %4603 = vmatmul.mubr.bf16.gmra.mxu0 %v4258
    %v4604 = vpop.f32.mrf.mxu0
    %v4605 = vadd.f32 %v4508, %v4604
    %v4606 = vpop.f32.mrf.mxu0
    %v4607 = vpop.f32.mrf.mxu0
    %v4608 = vadd.f32 %v4511, %v4607
    %v4609 = vpop.f32.mrf.mxu0
    %4610 = vmatprep.mubr.bf16.mxu0 0
    %4611 = vmatmul.mubr.bf16.gmra.mxu0 %v4261
    %v4612 = vpop.f32.mrf.mxu0
    %v4613 = vadd.f32 %v4516, %v4612
    %v4614 = vpop.f32.mrf.mxu0
    %v4615 = vpop.f32.mrf.mxu0
    %v4616 = vadd.f32 %v4519, %v4615
    %v4617 = vpop.f32.mrf.mxu0
    %4618 = vmatprep.mubr.bf16.mxu0 0
    %4619 = vmatmul.mubr.bf16.gmra.mxu0 %v4264
    %v4620 = vpop.f32.mrf.mxu0
    %v4621 = vadd.f32 %v4524, %v4620
    %v4622 = vpop.f32.mrf.mxu0
    %v4623 = vpop.f32.mrf.mxu0
    %v4624 = vadd.f32 %v4527, %v4623
    %v4625 = vpop.f32.mrf.mxu0
    %4626 = vdwg.mxu0
    %v4627 = vmul.f32 %v4565, 0.5
    %v4628 = vmul.f32 %v4568, 0.5
    %v4629 = vmul.f32 %v4573, 0.5
    %v4630 = vmul.f32 %v4576, 0.5
    %v4631 = vmul.f32 %v4581, 0.5
    %v4632 = vmul.f32 %v4584, 0.5
    %v4633 = vmul.f32 %v4589, 0.5
    %v4634 = vmul.f32 %v4592, 0.5
    %v4635 = vmul.f32 %v4597, 0.5
    %v4636 = vmul.f32 %v4600, 0.5
    %v4637 = vmul.f32 %v4605, 0.5
    %v4638 = vmul.f32 %v4608, 0.5
    %v4639 = vmul.f32 %v4613, 0.5
    %v4640 = vmul.f32 %v4616, 0.5
    %v4641 = vmul.f32 %v4621, 0.5
    %v4642 = vmul.f32 %v4624, 0.5
    %v4643 = vmul.f32 %v4565, 0.044715
    %v4644 = vmul.f32 %v4568, 0.044715
    %v4645 = vmul.f32 %v4573, 0.044715
    %v4646 = vmul.f32 %v4576, 0.044715
    %v4647 = vmul.f32 %v4581, 0.044715
    %v4648 = vmul.f32 %v4584, 0.044715
    %v4649 = vmul.f32 %v4589, 0.044715
    %v4650 = vmul.f32 %v4592, 0.044715
    %v4651 = vmul.f32 %v4597, 0.044715
    %v4652 = vmul.f32 %v4600, 0.044715
    %v4653 = vmul.f32 %v4605, 0.044715
    %v4654 = vmul.f32 %v4608, 0.044715
    %v4655 = vmul.f32 %v4613, 0.044715
    %v4656 = vmul.f32 %v4616, 0.044715
    %v4657 = vmul.f32 %v4621, 0.044715
    %v4658 = vmul.f32 %v4624, 0.044715
    %v4659 = vmul.f32 %v4643, %v4565
    %v4660 = vmul.f32 %v4644, %v4568
    %v4661 = vmul.f32 %v4645, %v4573
    %v4662 = vmul.f32 %v4646, %v4576
    %v4663 = vmul.f32 %v4647, %v4581
    %v4664 = vmul.f32 %v4648, %v4584
    %v4665 = vmul.f32 %v4649, %v4589
    %v4666 = vmul.f32 %v4650, %v4592
    %v4667 = vmul.f32 %v4651, %v4597
    %v4668 = vmul.f32 %v4652, %v4600
    %v4669 = vmul.f32 %v4653, %v4605
    %v4670 = vmul.f32 %v4654, %v4608
    %v4671 = vmul.f32 %v4655, %v4613
    %v4672 = vmul.f32 %v4656, %v4616
    %v4673 = vmul.f32 %v4657, %v4621
    %v4674 = vmul.f32 %v4658, %v4624
    %v4675 = vmul.f32 %v4659, %v4565
    %v4676 = vmul.f32 %v4660, %v4568
    %v4677 = vmul.f32 %v4661, %v4573
    %v4678 = vmul.f32 %v4662, %v4576
    %v4679 = vmul.f32 %v4663, %v4581
    %v4680 = vmul.f32 %v4664, %v4584
    %v4681 = vmul.f32 %v4665, %v4589
    %v4682 = vmul.f32 %v4666, %v4592
    %v4683 = vmul.f32 %v4667, %v4597
    %v4684 = vmul.f32 %v4668, %v4600
    %v4685 = vmul.f32 %v4669, %v4605
    %v4686 = vmul.f32 %v4670, %v4608
    %v4687 = vmul.f32 %v4671, %v4613
    %v4688 = vmul.f32 %v4672, %v4616
    %v4689 = vmul.f32 %v4673, %v4621
    %v4690 = vmul.f32 %v4674, %v4624
    %v4691 = vadd.f32 %v4565, %v4675
    %v4692 = vadd.f32 %v4568, %v4676
    %v4693 = vadd.f32 %v4573, %v4677
    %v4694 = vadd.f32 %v4576, %v4678
    %v4695 = vadd.f32 %v4581, %v4679
    %v4696 = vadd.f32 %v4584, %v4680
    %v4697 = vadd.f32 %v4589, %v4681
    %v4698 = vadd.f32 %v4592, %v4682
    %v4699 = vadd.f32 %v4597, %v4683
    %v4700 = vadd.f32 %v4600, %v4684
    %v4701 = vadd.f32 %v4605, %v4685
    %v4702 = vadd.f32 %v4608, %v4686
    %v4703 = vadd.f32 %v4613, %v4687
    %v4704 = vadd.f32 %v4616, %v4688
    %v4705 = vadd.f32 %v4621, %v4689
    %v4706 = vadd.f32 %v4624, %v4690
    %v4707 = vmul.f32 %v4691, 0.7978846
    %v4708 = vmul.f32 %v4692, 0.7978846
    %v4709 = vmul.f32 %v4693, 0.7978846
    %v4710 = vmul.f32 %v4694, 0.7978846
    %v4711 = vmul.f32 %v4695, 0.7978846
    %v4712 = vmul.f32 %v4696, 0.7978846
    %v4713 = vmul.f32 %v4697, 0.7978846
    %v4714 = vmul.f32 %v4698, 0.7978846
    %v4715 = vmul.f32 %v4699, 0.7978846
    %v4716 = vmul.f32 %v4700, 0.7978846
    %v4717 = vmul.f32 %v4701, 0.7978846
    %v4718 = vmul.f32 %v4702, 0.7978846
    %v4719 = vmul.f32 %v4703, 0.7978846
    %v4720 = vmul.f32 %v4704, 0.7978846
    %v4721 = vmul.f32 %v4705, 0.7978846
    %v4722 = vmul.f32 %v4706, 0.7978846
    %v4723 = vtanh.pop %v4707
    %v4724 = vtanh.pop %v4708
    %v4725 = vtanh.pop %v4709
    %v4726 = vtanh.pop %v4710
    %v4727 = vtanh.pop %v4711
    %v4728 = vtanh.pop %v4712
    %v4729 = vtanh.pop %v4713
    %v4730 = vtanh.pop %v4714
    %v4731 = vtanh.pop %v4715
    %v4732 = vtanh.pop %v4716
    %v4733 = vtanh.pop %v4717
    %v4734 = vtanh.pop %v4718
    %v4735 = vtanh.pop %v4719
    %v4736 = vtanh.pop %v4720
    %v4737 = vtanh.pop %v4721
    %v4738 = vtanh.pop %v4722
    %v4739 = vadd.f32 %v4723, 1.0
    %v4740 = vadd.f32 %v4724, 1.0
    %v4741 = vadd.f32 %v4725, 1.0
    %v4742 = vadd.f32 %v4726, 1.0
    %v4743 = vadd.f32 %v4727, 1.0
    %v4744 = vadd.f32 %v4728, 1.0
    %v4745 = vadd.f32 %v4729, 1.0
    %v4746 = vadd.f32 %v4730, 1.0
    %v4747 = vadd.f32 %v4731, 1.0
    %v4748 = vadd.f32 %v4732, 1.0
    %v4749 = vadd.f32 %v4733, 1.0
    %v4750 = vadd.f32 %v4734, 1.0
    %v4751 = vadd.f32 %v4735, 1.0
    %v4752 = vadd.f32 %v4736, 1.0
    %v4753 = vadd.f32 %v4737, 1.0
    %v4754 = vadd.f32 %v4738, 1.0
    %v4755 = vmul.f32 %v4627, %v4739
    %v4756 = vmul.f32 %v4628, %v4740
    %v4757 = vmul.f32 %v4629, %v4741
    %v4758 = vmul.f32 %v4630, %v4742
    %v4759 = vmul.f32 %v4631, %v4743
    %v4760 = vmul.f32 %v4632, %v4744
    %v4761 = vmul.f32 %v4633, %v4745
    %v4762 = vmul.f32 %v4634, %v4746
    %v4763 = vmul.f32 %v4635, %v4747
    %v4764 = vmul.f32 %v4636, %v4748
    %v4765 = vmul.f32 %v4637, %v4749
    %v4766 = vmul.f32 %v4638, %v4750
    %v4767 = vmul.f32 %v4639, %v4751
    %v4768 = vmul.f32 %v4640, %v4752
    %v4769 = vmul.f32 %v4641, %v4753
    %v4770 = vmul.f32 %v4642, %v4754
    %v4771 = vadd.f32 %v4755, %v2749
    %v4772 = vadd.f32 %v4756, %v2750
    %v4773 = vadd.f32 %v4757, %v2751
    %v4774 = vadd.f32 %v4758, %v2752
    %v4775 = vadd.f32 %v4759, %v2753
    %v4776 = vadd.f32 %v4760, %v2754
    %v4777 = vadd.f32 %v4761, %v2755
    %v4778 = vadd.f32 %v4762, %v2756
    %v4779 = vadd.f32 %v4763, %v2757
    %v4780 = vadd.f32 %v4764, %v2758
    %v4781 = vadd.f32 %v4765, %v2759
    %v4782 = vadd.f32 %v4766, %v2760
    %v4783 = vadd.f32 %v4767, %v2761
    %v4784 = vadd.f32 %v4768, %v2762
    %v4785 = vadd.f32 %v4769, %v2763
    %v4786 = vadd.f32 %v4770, %v2764
    %v4787 = vpack.c.bf16 %v4772, %v4771
    %v4788 = vpack.c.bf16 %v4774, %v4773
    %v4789 = vpack.c.bf16 %v4776, %v4775
    %v4790 = vpack.c.bf16 %v4778, %v4777
    %v4791 = vpack.c.bf16 %v4780, %v4779
    %v4792 = vpack.c.bf16 %v4782, %v4781
    %v4793 = vpack.c.bf16 %v4784, %v4783
    %v4794 = vpack.c.bf16 %v4786, %v4785
    %s4795 = scalar_lea.vmem [#allocation11], 64
    %v4796 = vld [vmem:[%s4795] sm:$0xf]
    %v4797 = vld [vmem:[%s4795 + $0x4] sm:$0xf]
    %v4798 = vld [vmem:[%s4795 + $0x8] sm:$0xf]
    %v4799 = vld [vmem:[%s4795 + $0xc] sm:$0xf]
    %v4800 = vld [vmem:[%s4795 + $0x10] sm:$0xf]
    %v4801 = vld [vmem:[%s4795 + $0x14] sm:$0xf]
    %v4802 = vld [vmem:[%s4795 + $0x18] sm:$0xf]
    %v4803 = vld [vmem:[%s4795 + $0x1c] sm:$0xf]
    %v4804 = vld [vmem:[%s4795 + $0x20] sm:$0xf]
    %v4805 = vld [vmem:[%s4795 + $0x24] sm:$0xf]
    %v4806 = vld [vmem:[%s4795 + $0x28] sm:$0xf]
    %v4807 = vld [vmem:[%s4795 + $0x2c] sm:$0xf]
    %v4808 = vld [vmem:[%s4795 + $0x30] sm:$0xf]
    %v4809 = vld [vmem:[%s4795 + $0x34] sm:$0xf]
    %v4810 = vld [vmem:[%s4795 + $0x38] sm:$0xf]
    %v4811 = vld [vmem:[%s4795 + $0x3c] sm:$0xf]
    %s4812 = scalar_lea.vmem [#allocation13], 1
    %v4813 = vld [vmem:[%s4812] sm:$0x1]
    %v4815 = vlaneseq
    %v4816 = vshrl.u32 %v4815, 7
    %v4817 = vsub.s32 0, %v4816
    %v4818 = vrot.slane %v4813, %v4817
    %v4836 = vunpack.c.l.b16 %v4796
    %v4837 = vunpack.c.l.b16 %v4797
    %v4838 = vunpack.c.l.b16 %v4798
    %v4839 = vunpack.c.l.b16 %v4799
    %v4840 = vunpack.c.l.b16 %v4800
    %v4841 = vunpack.c.l.b16 %v4801
    %v4842 = vunpack.c.l.b16 %v4802
    %v4843 = vunpack.c.l.b16 %v4803
    %v4844 = vunpack.c.l.b16 %v4804
    %v4845 = vunpack.c.l.b16 %v4805
    %v4846 = vunpack.c.l.b16 %v4806
    %v4847 = vunpack.c.l.b16 %v4807
    %v4848 = vunpack.c.l.b16 %v4808
    %v4849 = vunpack.c.l.b16 %v4809
    %v4850 = vunpack.c.l.b16 %v4810
    %v4851 = vunpack.c.l.b16 %v4811
    %v4852 = vpack.c.b16 %v4837, %v4836
    %v4853 = vpack.c.b16 %v4839, %v4838
    %v4854 = vpack.c.b16 %v4841, %v4840
    %v4855 = vpack.c.b16 %v4843, %v4842
    %v4856 = vpack.c.b16 %v4845, %v4844
    %v4857 = vpack.c.b16 %v4847, %v4846
    %v4858 = vpack.c.b16 %v4849, %v4848
    %v4859 = vpack.c.b16 %v4851, %v4850
    %4868 = vmatprep.subr.bf16.mxu0 0
    %4869 = vmatpush1.bf16.msra.mxu0 %v4859
    %4870 = vmatprep.subr.bf16.mxu0 0
    %4871 = vmatpush1.bf16.msra.mxu0 %v4858
    %4872 = vmatprep.subr.bf16.mxu0 0
    %4873 = vmatpush1.bf16.msra.mxu0 %v4857
    %4874 = vmatprep.subr.bf16.mxu0 0
    %4875 = vmatpush1.bf16.msra.mxu0 %v4856
    %4876 = vmatprep.subr.bf16.mxu0 0
    %4877 = vmatpush1.bf16.msra.mxu0 %v4855
    %4878 = vmatprep.subr.bf16.mxu0 0
    %4879 = vmatpush1.bf16.msra.mxu0 %v4854
    %4880 = vmatprep.subr.bf16.mxu0 0
    %4881 = vmatpush1.bf16.msra.mxu0 %v4853
    %4882 = vmatprep.subr.bf16.mxu0 0
    %4883 = vmatpush1.bf16.msra.mxu0 %v4852
    %4884 = vmatprep.subr.bf16.mxu0 0
    %4885 = vmatpush2.bf16.msra.mxu0 0
    %4886 = vmatprep.subr.bf16.mxu0 0
    %4887 = vmatpush2.bf16.msra.mxu0 0
    %4888 = vmatprep.subr.bf16.mxu0 0
    %4889 = vmatpush2.bf16.msra.mxu0 0
    %4890 = vmatprep.subr.bf16.mxu0 0
    %4891 = vmatpush2.bf16.msra.mxu0 0
    %4892 = vmatprep.subr.bf16.mxu0 0
    %4893 = vmatpush2.bf16.msra.mxu0 0
    %4894 = vmatprep.subr.bf16.mxu0 0
    %4895 = vmatpush2.bf16.msra.mxu0 0
    %4896 = vmatprep.subr.bf16.mxu0 0
    %4897 = vmatpush2.bf16.msra.mxu0 0
    %4898 = vmatprep.subr.bf16.mxu0 0
    %4899 = vmatpush2.bf16.msra.mxu0 0
    %4900 = vmatprep.mubr.bf16.mxu0 0
    %4901 = vmatmul.mubr.bf16.gmra.mxu0 %v4787
    %v4902 = vpop.f32.mrf.mxu0
    %v4903 = vadd.f32 %v4818, %v4902
    %v4904 = vpop.f32.mrf.mxu0
    %v4905 = vpop.f32.mrf.mxu0
    %v4906 = vadd.f32 %v4818, %v4905
    %v4907 = vpop.f32.mrf.mxu0
    %4908 = vmatprep.mubr.bf16.mxu0 0
    %4909 = vmatmul.mubr.bf16.gmra.mxu0 %v4788
    %v4910 = vpop.f32.mrf.mxu0
    %v4911 = vadd.f32 %v4818, %v4910
    %v4912 = vpop.f32.mrf.mxu0
    %v4913 = vpop.f32.mrf.mxu0
    %v4914 = vadd.f32 %v4818, %v4913
    %v4915 = vpop.f32.mrf.mxu0
    %4916 = vmatprep.mubr.bf16.mxu0 0
    %4917 = vmatmul.mubr.bf16.gmra.mxu0 %v4789
    %v4918 = vpop.f32.mrf.mxu0
    %v4919 = vadd.f32 %v4818, %v4918
    %v4920 = vpop.f32.mrf.mxu0
    %v4921 = vpop.f32.mrf.mxu0
    %v4922 = vadd.f32 %v4818, %v4921
    %v4923 = vpop.f32.mrf.mxu0
    %4924 = vmatprep.mubr.bf16.mxu0 0
    %4925 = vmatmul.mubr.bf16.gmra.mxu0 %v4790
    %v4926 = vpop.f32.mrf.mxu0
    %v4927 = vadd.f32 %v4818, %v4926
    %v4928 = vpop.f32.mrf.mxu0
    %v4929 = vpop.f32.mrf.mxu0
    %v4930 = vadd.f32 %v4818, %v4929
    %v4931 = vpop.f32.mrf.mxu0
    %4932 = vmatprep.mubr.bf16.mxu0 0
    %4933 = vmatmul.mubr.bf16.gmra.mxu0 %v4791
    %v4934 = vpop.f32.mrf.mxu0
    %v4935 = vadd.f32 %v4818, %v4934
    %v4936 = vpop.f32.mrf.mxu0
    %v4937 = vpop.f32.mrf.mxu0
    %v4938 = vadd.f32 %v4818, %v4937
    %v4939 = vpop.f32.mrf.mxu0
    %4940 = vmatprep.mubr.bf16.mxu0 0
    %4941 = vmatmul.mubr.bf16.gmra.mxu0 %v4792
    %v4942 = vpop.f32.mrf.mxu0
    %v4943 = vadd.f32 %v4818, %v4942
    %v4944 = vpop.f32.mrf.mxu0
    %v4945 = vpop.f32.mrf.mxu0
    %v4946 = vadd.f32 %v4818, %v4945
    %v4947 = vpop.f32.mrf.mxu0
    %4948 = vmatprep.mubr.bf16.mxu0 0
    %4949 = vmatmul.mubr.bf16.gmra.mxu0 %v4793
    %v4950 = vpop.f32.mrf.mxu0
    %v4951 = vadd.f32 %v4818, %v4950
    %v4952 = vpop.f32.mrf.mxu0
    %v4953 = vpop.f32.mrf.mxu0
    %v4954 = vadd.f32 %v4818, %v4953
    %v4955 = vpop.f32.mrf.mxu0
    %4956 = vmatprep.mubr.bf16.mxu0 0
    %4957 = vmatmul.mubr.bf16.gmra.mxu0 %v4794
    %v4958 = vpop.f32.mrf.mxu0
    %v4959 = vadd.f32 %v4818, %v4958
    %v4960 = vpop.f32.mrf.mxu0
    %v4961 = vpop.f32.mrf.mxu0
    %v4962 = vadd.f32 %v4818, %v4961
    %v4963 = vpop.f32.mrf.mxu0
    %4964 = vdwg.mxu0
    %v4965 = vmul.f32 %v4903, 0.5
    %v4966 = vmul.f32 %v4906, 0.5
    %v4967 = vmul.f32 %v4911, 0.5
    %v4968 = vmul.f32 %v4914, 0.5
    %v4969 = vmul.f32 %v4919, 0.5
    %v4970 = vmul.f32 %v4922, 0.5
    %v4971 = vmul.f32 %v4927, 0.5
    %v4972 = vmul.f32 %v4930, 0.5
    %v4973 = vmul.f32 %v4935, 0.5
    %v4974 = vmul.f32 %v4938, 0.5
    %v4975 = vmul.f32 %v4943, 0.5
    %v4976 = vmul.f32 %v4946, 0.5
    %v4977 = vmul.f32 %v4951, 0.5
    %v4978 = vmul.f32 %v4954, 0.5
    %v4979 = vmul.f32 %v4959, 0.5
    %v4980 = vmul.f32 %v4962, 0.5
    %v4981 = vmul.f32 %v4903, 0.044715
    %v4982 = vmul.f32 %v4906, 0.044715
    %v4983 = vmul.f32 %v4911, 0.044715
    %v4984 = vmul.f32 %v4914, 0.044715
    %v4985 = vmul.f32 %v4919, 0.044715
    %v4986 = vmul.f32 %v4922, 0.044715
    %v4987 = vmul.f32 %v4927, 0.044715
    %v4988 = vmul.f32 %v4930, 0.044715
    %v4989 = vmul.f32 %v4935, 0.044715
    %v4990 = vmul.f32 %v4938, 0.044715
    %v4991 = vmul.f32 %v4943, 0.044715
    %v4992 = vmul.f32 %v4946, 0.044715
    %v4993 = vmul.f32 %v4951, 0.044715
    %v4994 = vmul.f32 %v4954, 0.044715
    %v4995 = vmul.f32 %v4959, 0.044715
    %v4996 = vmul.f32 %v4962, 0.044715
    %v4997 = vmul.f32 %v4981, %v4903
    %v4998 = vmul.f32 %v4982, %v4906
    %v4999 = vmul.f32 %v4983, %v4911
    %v5000 = vmul.f32 %v4984, %v4914
    %v5001 = vmul.f32 %v4985, %v4919
    %v5002 = vmul.f32 %v4986, %v4922
    %v5003 = vmul.f32 %v4987, %v4927
    %v5004 = vmul.f32 %v4988, %v4930
    %v5005 = vmul.f32 %v4989, %v4935
    %v5006 = vmul.f32 %v4990, %v4938
    %v5007 = vmul.f32 %v4991, %v4943
    %v5008 = vmul.f32 %v4992, %v4946
    %v5009 = vmul.f32 %v4993, %v4951
    %v5010 = vmul.f32 %v4994, %v4954
    %v5011 = vmul.f32 %v4995, %v4959
    %v5012 = vmul.f32 %v4996, %v4962
    %v5013 = vmul.f32 %v4997, %v4903
    %v5014 = vmul.f32 %v4998, %v4906
    %v5015 = vmul.f32 %v4999, %v4911
    %v5016 = vmul.f32 %v5000, %v4914
    %v5017 = vmul.f32 %v5001, %v4919
    %v5018 = vmul.f32 %v5002, %v4922
    %v5019 = vmul.f32 %v5003, %v4927
    %v5020 = vmul.f32 %v5004, %v4930
    %v5021 = vmul.f32 %v5005, %v4935
    %v5022 = vmul.f32 %v5006, %v4938
    %v5023 = vmul.f32 %v5007, %v4943
    %v5024 = vmul.f32 %v5008, %v4946
    %v5025 = vmul.f32 %v5009, %v4951
    %v5026 = vmul.f32 %v5010, %v4954
    %v5027 = vmul.f32 %v5011, %v4959
    %v5028 = vmul.f32 %v5012, %v4962
    %v5029 = vadd.f32 %v4903, %v5013
    %v5030 = vadd.f32 %v4906, %v5014
    %v5031 = vadd.f32 %v4911, %v5015
    %v5032 = vadd.f32 %v4914, %v5016
    %v5033 = vadd.f32 %v4919, %v5017
    %v5034 = vadd.f32 %v4922, %v5018
    %v5035 = vadd.f32 %v4927, %v5019
    %v5036 = vadd.f32 %v4930, %v5020
    %v5037 = vadd.f32 %v4935, %v5021
    %v5038 = vadd.f32 %v4938, %v5022
    %v5039 = vadd.f32 %v4943, %v5023
    %v5040 = vadd.f32 %v4946, %v5024
    %v5041 = vadd.f32 %v4951, %v5025
    %v5042 = vadd.f32 %v4954, %v5026
    %v5043 = vadd.f32 %v4959, %v5027
    %v5044 = vadd.f32 %v4962, %v5028
    %v5045 = vmul.f32 %v5029, 0.7978846
    %v5046 = vmul.f32 %v5030, 0.7978846
    %v5047 = vmul.f32 %v5031, 0.7978846
    %v5048 = vmul.f32 %v5032, 0.7978846
    %v5049 = vmul.f32 %v5033, 0.7978846
    %v5050 = vmul.f32 %v5034, 0.7978846
    %v5051 = vmul.f32 %v5035, 0.7978846
    %v5052 = vmul.f32 %v5036, 0.7978846
    %v5053 = vmul.f32 %v5037, 0.7978846
    %v5054 = vmul.f32 %v5038, 0.7978846
    %v5055 = vmul.f32 %v5039, 0.7978846
    %v5056 = vmul.f32 %v5040, 0.7978846
    %v5057 = vmul.f32 %v5041, 0.7978846
    %v5058 = vmul.f32 %v5042, 0.7978846
    %v5059 = vmul.f32 %v5043, 0.7978846
    %v5060 = vmul.f32 %v5044, 0.7978846
    %v5061 = vtanh.pop %v5045
    %v5062 = vtanh.pop %v5046
    %v5063 = vtanh.pop %v5047
    %v5064 = vtanh.pop %v5048
    %v5065 = vtanh.pop %v5049
    %v5066 = vtanh.pop %v5050
    %v5067 = vtanh.pop %v5051
    %v5068 = vtanh.pop %v5052
    %v5069 = vtanh.pop %v5053
    %v5070 = vtanh.pop %v5054
    %v5071 = vtanh.pop %v5055
    %v5072 = vtanh.pop %v5056
    %v5073 = vtanh.pop %v5057
    %v5074 = vtanh.pop %v5058
    %v5075 = vtanh.pop %v5059
    %v5076 = vtanh.pop %v5060
    %v5077 = vadd.f32 %v5061, 1.0
    %v5078 = vadd.f32 %v5062, 1.0
    %v5079 = vadd.f32 %v5063, 1.0
    %v5080 = vadd.f32 %v5064, 1.0
    %v5081 = vadd.f32 %v5065, 1.0
    %v5082 = vadd.f32 %v5066, 1.0
    %v5083 = vadd.f32 %v5067, 1.0
    %v5084 = vadd.f32 %v5068, 1.0
    %v5085 = vadd.f32 %v5069, 1.0
    %v5086 = vadd.f32 %v5070, 1.0
    %v5087 = vadd.f32 %v5071, 1.0
    %v5088 = vadd.f32 %v5072, 1.0
    %v5089 = vadd.f32 %v5073, 1.0
    %v5090 = vadd.f32 %v5074, 1.0
    %v5091 = vadd.f32 %v5075, 1.0
    %v5092 = vadd.f32 %v5076, 1.0
    %v5093 = vmul.f32 %v4965, %v5077
    %v5094 = vmul.f32 %v4966, %v5078
    %v5095 = vmul.f32 %v4967, %v5079
    %v5096 = vmul.f32 %v4968, %v5080
    %v5097 = vmul.f32 %v4969, %v5081
    %v5098 = vmul.f32 %v4970, %v5082
    %v5099 = vmul.f32 %v4971, %v5083
    %v5100 = vmul.f32 %v4972, %v5084
    %v5101 = vmul.f32 %v4973, %v5085
    %v5102 = vmul.f32 %v4974, %v5086
    %v5103 = vmul.f32 %v4975, %v5087
    %v5104 = vmul.f32 %v4976, %v5088
    %v5105 = vmul.f32 %v4977, %v5089
    %v5106 = vmul.f32 %v4978, %v5090
    %v5107 = vmul.f32 %v4979, %v5091
    %v5108 = vmul.f32 %v4980, %v5092
    %s5109 = scalar_lea.vmem [#allocation14], 1
    %v5110 = vld [vmem:[%s5109] sm:$0x1]
    %v5112 = vlaneseq
    %v5113 = vshrl.u32 %v5112, 7
    %v5114 = vsub.s32 0, %v5113
    %v5115 = vrot.slane %v5110, %v5114
    %v5117 = vmul.f32 %v5093, %v5115
    %v5118 = vmul.f32 %v5094, %v5115
    %v5119 = vmul.f32 %v5095, %v5115
    %v5120 = vmul.f32 %v5096, %v5115
    %v5121 = vmul.f32 %v5097, %v5115
    %v5122 = vmul.f32 %v5098, %v5115
    %v5123 = vmul.f32 %v5099, %v5115
    %v5124 = vmul.f32 %v5100, %v5115
    %v5125 = vmul.f32 %v5101, %v5115
    %v5126 = vmul.f32 %v5102, %v5115
    %v5127 = vmul.f32 %v5103, %v5115
    %v5128 = vmul.f32 %v5104, %v5115
    %v5129 = vmul.f32 %v5105, %v5115
    %v5130 = vmul.f32 %v5106, %v5115
    %v5131 = vmul.f32 %v5107, %v5115
    %v5132 = vmul.f32 %v5108, %v5115
    %s5133 = scalar_lea.vmem %s10, 1
    %v5134 = vld [vmem:[%s5133] sm:$0x1]
    %v5136 = vlaneseq
    %v5137 = vshrl.u32 %v5136, 7
    %v5138 = vsub.s32 0, %v5137
    %v5139 = vrot.slane %v5134, %v5138
    %v5141 = vadd.f32 %v5117, %v5139
    %v5142 = vadd.f32 %v5118, %v5139
    %v5143 = vadd.f32 %v5119, %v5139
    %v5144 = vadd.f32 %v5120, %v5139
    %v5145 = vadd.f32 %v5121, %v5139
    %v5146 = vadd.f32 %v5122, %v5139
    %v5147 = vadd.f32 %v5123, %v5139
    %v5148 = vadd.f32 %v5124, %v5139
    %v5149 = vadd.f32 %v5125, %v5139
    %v5150 = vadd.f32 %v5126, %v5139
    %v5151 = vadd.f32 %v5127, %v5139
    %v5152 = vadd.f32 %v5128, %v5139
    %v5153 = vadd.f32 %v5129, %v5139
    %v5154 = vadd.f32 %v5130, %v5139
    %v5155 = vadd.f32 %v5131, %v5139
    %v5156 = vadd.f32 %v5132, %v5139
    %v5173 = vcombine.low %v5141, %v5142
    %v5174 = vcombine.high %v5141, %v5142
    %v5175 = vcombine.low %v5143, %v5144
    %v5176 = vcombine.high %v5143, %v5144
    %v5177 = vcombine.low %v5145, %v5146
    %v5178 = vcombine.high %v5145, %v5146
    %v5179 = vcombine.low %v5147, %v5148
    %v5180 = vcombine.high %v5147, %v5148
    %v5182 = vunpack.c.l.s4 1966171168
    %v5183 = vunpack.c.0.s8 %v5182
    %v5184 = vlaneseq
    %v5185 = vshrl.u32 %v5184, 7
    %v5186 = vsub.s32 %v5183, %v5185
    %v5187 = vrot.slane %v5173, %v5186
    %v5189 = vunpack.c.l.s4 1966171168
    %v5190 = vunpack.c.0.s8 %v5189
    %v5191 = vlaneseq
    %v5192 = vshrl.u32 %v5191, 7
    %v5193 = vsub.s32 %v5190, %v5192
    %v5194 = vrot.slane %v5174, %v5193
    %v5196 = vunpack.c.l.s4 1966171168
    %v5197 = vunpack.c.0.s8 %v5196
    %v5198 = vlaneseq
    %v5199 = vshrl.u32 %v5198, 7
    %v5200 = vsub.s32 %v5197, %v5199
    %v5201 = vrot.slane %v5175, %v5200
    %v5203 = vunpack.c.l.s4 1966171168
    %v5204 = vunpack.c.0.s8 %v5203
    %v5205 = vlaneseq
    %v5206 = vshrl.u32 %v5205, 7
    %v5207 = vsub.s32 %v5204, %v5206
    %v5208 = vrot.slane %v5176, %v5207
    %v5210 = vunpack.c.l.s4 1966171168
    %v5211 = vunpack.c.0.s8 %v5210
    %v5212 = vlaneseq
    %v5213 = vshrl.u32 %v5212, 7
    %v5214 = vsub.s32 %v5211, %v5213
    %v5215 = vrot.slane %v5177, %v5214
    %v5217 = vunpack.c.l.s4 1966171168
    %v5218 = vunpack.c.0.s8 %v5217
    %v5219 = vlaneseq
    %v5220 = vshrl.u32 %v5219, 7
    %v5221 = vsub.s32 %v5218, %v5220
    %v5222 = vrot.slane %v5178, %v5221
    %v5224 = vunpack.c.l.s4 1966171168
    %v5225 = vunpack.c.0.s8 %v5224
    %v5226 = vlaneseq
    %v5227 = vshrl.u32 %v5226, 7
    %v5228 = vsub.s32 %v5225, %v5227
    %v5229 = vrot.slane %v5179, %v5228
    %v5231 = vunpack.c.l.s4 1966171168
    %v5232 = vunpack.c.0.s8 %v5231
    %v5233 = vlaneseq
    %v5234 = vshrl.u32 %v5233, 7
    %v5235 = vsub.s32 %v5232, %v5234
    %v5236 = vrot.slane %v5180, %v5235
    %v5237 = vcombine.low %v5187, %v5201
    %v5238 = vcombine.high %v5187, %v5201
    %v5239 = vcombine.low %v5194, %v5208
    %v5240 = vcombine.high %v5194, %v5208
    %v5241 = vcombine.low %v5215, %v5229
    %v5242 = vcombine.high %v5215, %v5229
    %v5243 = vcombine.low %v5222, %v5236
    %v5244 = vcombine.high %v5222, %v5236
    %v5246 = vunpack.c.l.s4 1966171168
    %v5247 = vunpack.c.0.s8 %v5246
    %v5248 = vlaneseq
    %v5249 = vshrl.u32 %v5248, 7
    %v5250 = vsub.s32 %v5247, %v5249
    %v5251 = vrot.slane %v5237, %v5250
    %v5253 = vunpack.c.l.s4 1966171168
    %v5254 = vunpack.c.0.s8 %v5253
    %v5255 = vlaneseq
    %v5256 = vshrl.u32 %v5255, 7
    %v5257 = vsub.s32 %v5254, %v5256
    %v5258 = vrot.slane %v5239, %v5257
    %v5260 = vunpack.c.l.s4 1966171168
    %v5261 = vunpack.c.0.s8 %v5260
    %v5262 = vlaneseq
    %v5263 = vshrl.u32 %v5262, 7
    %v5264 = vsub.s32 %v5261, %v5263
    %v5265 = vrot.slane %v5238, %v5264
    %v5267 = vunpack.c.l.s4 1966171168
    %v5268 = vunpack.c.0.s8 %v5267
    %v5269 = vlaneseq
    %v5270 = vshrl.u32 %v5269, 7
    %v5271 = vsub.s32 %v5268, %v5270
    %v5272 = vrot.slane %v5240, %v5271
    %v5274 = vunpack.c.l.s4 1966171168
    %v5275 = vunpack.c.0.s8 %v5274
    %v5276 = vlaneseq
    %v5277 = vshrl.u32 %v5276, 7
    %v5278 = vsub.s32 %v5275, %v5277
    %v5279 = vrot.slane %v5241, %v5278
    %v5281 = vunpack.c.l.s4 1966171168
    %v5282 = vunpack.c.0.s8 %v5281
    %v5283 = vlaneseq
    %v5284 = vshrl.u32 %v5283, 7
    %v5285 = vsub.s32 %v5282, %v5284
    %v5286 = vrot.slane %v5243, %v5285
    %v5288 = vunpack.c.l.s4 1966171168
    %v5289 = vunpack.c.0.s8 %v5288
    %v5290 = vlaneseq
    %v5291 = vshrl.u32 %v5290, 7
    %v5292 = vsub.s32 %v5289, %v5291
    %v5293 = vrot.slane %v5242, %v5292
    %v5295 = vunpack.c.l.s4 1966171168
    %v5296 = vunpack.c.0.s8 %v5295
    %v5297 = vlaneseq
    %v5298 = vshrl.u32 %v5297, 7
    %v5299 = vsub.s32 %v5296, %v5298
    %v5300 = vrot.slane %v5244, %v5299
    %v5301 = vcombine.low %v5251, %v5279
    %v5302 = vcombine.high %v5251, %v5279
    %v5303 = vcombine.low %v5258, %v5286
    %v5304 = vcombine.high %v5258, %v5286
    %v5305 = vcombine.low %v5265, %v5293
    %v5306 = vcombine.high %v5265, %v5293
    %v5307 = vcombine.low %v5272, %v5300
    %v5308 = vcombine.high %v5272, %v5300
    %v5309 = vcombine.low %v5149, %v5150
    %v5310 = vcombine.high %v5149, %v5150
    %v5311 = vcombine.low %v5151, %v5152
    %v5312 = vcombine.high %v5151, %v5152
    %v5313 = vcombine.low %v5153, %v5154
    %v5314 = vcombine.high %v5153, %v5154
    %v5315 = vcombine.low %v5155, %v5156
    %v5316 = vcombine.high %v5155, %v5156
    %v5318 = vunpack.c.l.s4 1966171168
    %v5319 = vunpack.c.0.s8 %v5318
    %v5320 = vlaneseq
    %v5321 = vshrl.u32 %v5320, 7
    %v5322 = vsub.s32 %v5319, %v5321
    %v5323 = vrot.slane %v5309, %v5322
    %v5325 = vunpack.c.l.s4 1966171168
    %v5326 = vunpack.c.0.s8 %v5325
    %v5327 = vlaneseq
    %v5328 = vshrl.u32 %v5327, 7
    %v5329 = vsub.s32 %v5326, %v5328
    %v5330 = vrot.slane %v5310, %v5329
    %v5332 = vunpack.c.l.s4 1966171168
    %v5333 = vunpack.c.0.s8 %v5332
    %v5334 = vlaneseq
    %v5335 = vshrl.u32 %v5334, 7
    %v5336 = vsub.s32 %v5333, %v5335
    %v5337 = vrot.slane %v5311, %v5336
    %v5339 = vunpack.c.l.s4 1966171168
    %v5340 = vunpack.c.0.s8 %v5339
    %v5341 = vlaneseq
    %v5342 = vshrl.u32 %v5341, 7
    %v5343 = vsub.s32 %v5340, %v5342
    %v5344 = vrot.slane %v5312, %v5343
    %v5346 = vunpack.c.l.s4 1966171168
    %v5347 = vunpack.c.0.s8 %v5346
    %v5348 = vlaneseq
    %v5349 = vshrl.u32 %v5348, 7
    %v5350 = vsub.s32 %v5347, %v5349
    %v5351 = vrot.slane %v5313, %v5350
    %v5353 = vunpack.c.l.s4 1966171168
    %v5354 = vunpack.c.0.s8 %v5353
    %v5355 = vlaneseq
    %v5356 = vshrl.u32 %v5355, 7
    %v5357 = vsub.s32 %v5354, %v5356
    %v5358 = vrot.slane %v5314, %v5357
    %v5360 = vunpack.c.l.s4 1966171168
    %v5361 = vunpack.c.0.s8 %v5360
    %v5362 = vlaneseq
    %v5363 = vshrl.u32 %v5362, 7
    %v5364 = vsub.s32 %v5361, %v5363
    %v5365 = vrot.slane %v5315, %v5364
    %v5367 = vunpack.c.l.s4 1966171168
    %v5368 = vunpack.c.0.s8 %v5367
    %v5369 = vlaneseq
    %v5370 = vshrl.u32 %v5369, 7
    %v5371 = vsub.s32 %v5368, %v5370
    %v5372 = vrot.slane %v5316, %v5371
    %v5373 = vcombine.low %v5323, %v5337
    %v5374 = vcombine.high %v5323, %v5337
    %v5375 = vcombine.low %v5330, %v5344
    %v5376 = vcombine.high %v5330, %v5344
    %v5377 = vcombine.low %v5351, %v5365
    %v5378 = vcombine.high %v5351, %v5365
    %v5379 = vcombine.low %v5358, %v5372
    %v5380 = vcombine.high %v5358, %v5372
    %v5382 = vunpack.c.l.s4 1966171168
    %v5383 = vunpack.c.0.s8 %v5382
    %v5384 = vlaneseq
    %v5385 = vshrl.u32 %v5384, 7
    %v5386 = vsub.s32 %v5383, %v5385
    %v5387 = vrot.slane %v5373, %v5386
    %v5389 = vunpack.c.l.s4 1966171168
    %v5390 = vunpack.c.0.s8 %v5389
    %v5391 = vlaneseq
    %v5392 = vshrl.u32 %v5391, 7
    %v5393 = vsub.s32 %v5390, %v5392
    %v5394 = vrot.slane %v5375, %v5393
    %v5396 = vunpack.c.l.s4 1966171168
    %v5397 = vunpack.c.0.s8 %v5396
    %v5398 = vlaneseq
    %v5399 = vshrl.u32 %v5398, 7
    %v5400 = vsub.s32 %v5397, %v5399
    %v5401 = vrot.slane %v5374, %v5400
    %v5403 = vunpack.c.l.s4 1966171168
    %v5404 = vunpack.c.0.s8 %v5403
    %v5405 = vlaneseq
    %v5406 = vshrl.u32 %v5405, 7
    %v5407 = vsub.s32 %v5404, %v5406
    %v5408 = vrot.slane %v5376, %v5407
    %v5410 = vunpack.c.l.s4 1966171168
    %v5411 = vunpack.c.0.s8 %v5410
    %v5412 = vlaneseq
    %v5413 = vshrl.u32 %v5412, 7
    %v5414 = vsub.s32 %v5411, %v5413
    %v5415 = vrot.slane %v5377, %v5414
    %v5417 = vunpack.c.l.s4 1966171168
    %v5418 = vunpack.c.0.s8 %v5417
    %v5419 = vlaneseq
    %v5420 = vshrl.u32 %v5419, 7
    %v5421 = vsub.s32 %v5418, %v5420
    %v5422 = vrot.slane %v5379, %v5421
    %v5424 = vunpack.c.l.s4 1966171168
    %v5425 = vunpack.c.0.s8 %v5424
    %v5426 = vlaneseq
    %v5427 = vshrl.u32 %v5426, 7
    %v5428 = vsub.s32 %v5425, %v5427
    %v5429 = vrot.slane %v5378, %v5428
    %v5431 = vunpack.c.l.s4 1966171168
    %v5432 = vunpack.c.0.s8 %v5431
    %v5433 = vlaneseq
    %v5434 = vshrl.u32 %v5433, 7
    %v5435 = vsub.s32 %v5432, %v5434
    %v5436 = vrot.slane %v5380, %v5435
    %v5437 = vcombine.low %v5387, %v5415
    %v5438 = vcombine.high %v5387, %v5415
    %v5439 = vcombine.low %v5394, %v5422
    %v5440 = vcombine.high %v5394, %v5422
    %v5441 = vcombine.low %v5401, %v5429
    %v5442 = vcombine.high %v5401, %v5429
    %v5443 = vcombine.low %v5408, %v5436
    %v5444 = vcombine.high %v5408, %v5436
    %v5461 = vpack.c.bf16 %v5437, %v5301
    %v5462 = vpack.c.bf16 %v5441, %v5305
    %v5463 = vpack.c.bf16 %v5438, %v5302
    %v5464 = vpack.c.bf16 %v5442, %v5306
    %v5465 = vpack.c.bf16 %v5439, %v5303
    %v5466 = vpack.c.bf16 %v5443, %v5307
    %v5467 = vpack.c.bf16 %v5440, %v5304
    %v5468 = vpack.c.bf16 %v5444, %v5308
    %v5469 = vld [vmem:[%s11] sm:$0xf]
    %v5470 = vld [vmem:[%s11 + $0x4] sm:$0xf]
    %v5471 = vld [vmem:[%s11 + $0x8] sm:$0xf]
    %v5472 = vld [vmem:[%s11 + $0xc] sm:$0xf]
    %v5473 = vld [vmem:[%s11 + $0x10] sm:$0xf]
    %v5474 = vld [vmem:[%s11 + $0x14] sm:$0xf]
    %v5475 = vld [vmem:[%s11 + $0x18] sm:$0xf]
    %v5476 = vld [vmem:[%s11 + $0x1c] sm:$0xf]
    %v5477 = vld [vmem:[%s11 + $0x20] sm:$0xf]
    %v5478 = vld [vmem:[%s11 + $0x24] sm:$0xf]
    %v5479 = vld [vmem:[%s11 + $0x28] sm:$0xf]
    %v5480 = vld [vmem:[%s11 + $0x2c] sm:$0xf]
    %v5481 = vld [vmem:[%s11 + $0x30] sm:$0xf]
    %v5482 = vld [vmem:[%s11 + $0x34] sm:$0xf]
    %v5483 = vld [vmem:[%s11 + $0x38] sm:$0xf]
    %v5484 = vld [vmem:[%s11 + $0x3c] sm:$0xf]
    %v5485 = vld [vmem:[%s11 + $0x40] sm:$0xf]
    %v5486 = vld [vmem:[%s11 + $0x44] sm:$0xf]
    %v5487 = vld [vmem:[%s11 + $0x48] sm:$0xf]
    %v5488 = vld [vmem:[%s11 + $0x4c] sm:$0xf]
    %v5489 = vld [vmem:[%s11 + $0x50] sm:$0xf]
    %v5490 = vld [vmem:[%s11 + $0x54] sm:$0xf]
    %v5491 = vld [vmem:[%s11 + $0x58] sm:$0xf]
    %v5492 = vld [vmem:[%s11 + $0x5c] sm:$0xf]
    %v5493 = vld [vmem:[%s11 + $0x60] sm:$0xf]
    %v5494 = vld [vmem:[%s11 + $0x64] sm:$0xf]
    %v5495 = vld [vmem:[%s11 + $0x68] sm:$0xf]
    %v5496 = vld [vmem:[%s11 + $0x6c] sm:$0xf]
    %v5497 = vld [vmem:[%s11 + $0x70] sm:$0xf]
    %v5498 = vld [vmem:[%s11 + $0x74] sm:$0xf]
    %v5499 = vld [vmem:[%s11 + $0x78] sm:$0xf]
    %v5500 = vld [vmem:[%s11 + $0x7c] sm:$0xf]
    %v5501 = vld [vmem:[%s11 + $0x80] sm:$0xf]
    %v5502 = vld [vmem:[%s11 + $0x84] sm:$0xf]
    %v5503 = vld [vmem:[%s11 + $0x88] sm:$0xf]
    %v5504 = vld [vmem:[%s11 + $0x8c] sm:$0xf]
    %v5505 = vld [vmem:[%s11 + $0x90] sm:$0xf]
    %v5506 = vld [vmem:[%s11 + $0x94] sm:$0xf]
    %v5507 = vld [vmem:[%s11 + $0x98] sm:$0xf]
    %v5508 = vld [vmem:[%s11 + $0x9c] sm:$0xf]
    %v5509 = vld [vmem:[%s11 + $0xa0] sm:$0xf]
    %v5510 = vld [vmem:[%s11 + $0xa4] sm:$0xf]
    %v5511 = vld [vmem:[%s11 + $0xa8] sm:$0xf]
    %v5512 = vld [vmem:[%s11 + $0xac] sm:$0xf]
    %v5513 = vld [vmem:[%s11 + $0xb0] sm:$0xf]
    %v5514 = vld [vmem:[%s11 + $0xb4] sm:$0xf]
    %v5515 = vld [vmem:[%s11 + $0xb8] sm:$0xf]
    %v5516 = vld [vmem:[%s11 + $0xbc] sm:$0xf]
    %v5517 = vld [vmem:[%s11 + $0xc0] sm:$0xf]
    %v5518 = vld [vmem:[%s11 + $0xc4] sm:$0xf]
    %v5519 = vld [vmem:[%s11 + $0xc8] sm:$0xf]
    %v5520 = vld [vmem:[%s11 + $0xcc] sm:$0xf]
    %v5521 = vld [vmem:[%s11 + $0xd0] sm:$0xf]
    %v5522 = vld [vmem:[%s11 + $0xd4] sm:$0xf]
    %v5523 = vld [vmem:[%s11 + $0xd8] sm:$0xf]
    %v5524 = vld [vmem:[%s11 + $0xdc] sm:$0xf]
    %v5525 = vld [vmem:[%s11 + $0xe0] sm:$0xf]
    %v5526 = vld [vmem:[%s11 + $0xe4] sm:$0xf]
    %v5527 = vld [vmem:[%s11 + $0xe8] sm:$0xf]
    %v5528 = vld [vmem:[%s11 + $0xec] sm:$0xf]
    %v5529 = vld [vmem:[%s11 + $0xf0] sm:$0xf]
    %v5530 = vld [vmem:[%s11 + $0xf4] sm:$0xf]
    %v5531 = vld [vmem:[%s11 + $0xf8] sm:$0xf]
    %v5532 = vld [vmem:[%s11 + $0xfc] sm:$0xf]
    %v5533 = vld [vmem:[%s11 + $0x100] sm:$0xf]
    %v5534 = vld [vmem:[%s11 + $0x104] sm:$0xf]
    %v5535 = vld [vmem:[%s11 + $0x108] sm:$0xf]
    %v5536 = vld [vmem:[%s11 + $0x10c] sm:$0xf]
    %v5537 = vld [vmem:[%s11 + $0x110] sm:$0xf]
    %v5538 = vld [vmem:[%s11 + $0x114] sm:$0xf]
    %v5539 = vld [vmem:[%s11 + $0x118] sm:$0xf]
    %v5540 = vld [vmem:[%s11 + $0x11c] sm:$0xf]
    %v5541 = vld [vmem:[%s11 + $0x120] sm:$0xf]
    %v5542 = vld [vmem:[%s11 + $0x124] sm:$0xf]
    %v5543 = vld [vmem:[%s11 + $0x128] sm:$0xf]
    %v5544 = vld [vmem:[%s11 + $0x12c] sm:$0xf]
    %v5545 = vld [vmem:[%s11 + $0x130] sm:$0xf]
    %v5546 = vld [vmem:[%s11 + $0x134] sm:$0xf]
    %v5547 = vld [vmem:[%s11 + $0x138] sm:$0xf]
    %v5548 = vld [vmem:[%s11 + $0x13c] sm:$0xf]
    %v5549 = vld [vmem:[%s11 + $0x140] sm:$0xf]
    %v5550 = vld [vmem:[%s11 + $0x144] sm:$0xf]
    %v5551 = vld [vmem:[%s11 + $0x148] sm:$0xf]
    %v5552 = vld [vmem:[%s11 + $0x14c] sm:$0xf]
    %v5553 = vld [vmem:[%s11 + $0x150] sm:$0xf]
    %v5554 = vld [vmem:[%s11 + $0x154] sm:$0xf]
    %v5555 = vld [vmem:[%s11 + $0x158] sm:$0xf]
    %v5556 = vld [vmem:[%s11 + $0x15c] sm:$0xf]
    %v5557 = vld [vmem:[%s11 + $0x160] sm:$0xf]
    %v5558 = vld [vmem:[%s11 + $0x164] sm:$0xf]
    %v5559 = vld [vmem:[%s11 + $0x168] sm:$0xf]
    %v5560 = vld [vmem:[%s11 + $0x16c] sm:$0xf]
    %v5561 = vld [vmem:[%s11 + $0x170] sm:$0xf]
    %v5562 = vld [vmem:[%s11 + $0x174] sm:$0xf]
    %v5563 = vld [vmem:[%s11 + $0x178] sm:$0xf]
    %v5564 = vld [vmem:[%s11 + $0x17c] sm:$0xf]
    %v5565 = vld [vmem:[%s11 + $0x180] sm:$0xf]
    %v5566 = vld [vmem:[%s11 + $0x184] sm:$0xf]
    %v5567 = vld [vmem:[%s11 + $0x188] sm:$0xf]
    %v5568 = vld [vmem:[%s11 + $0x18c] sm:$0xf]
    %v5569 = vld [vmem:[%s11 + $0x190] sm:$0xf]
    %v5570 = vld [vmem:[%s11 + $0x194] sm:$0xf]
    %v5571 = vld [vmem:[%s11 + $0x198] sm:$0xf]
    %v5572 = vld [vmem:[%s11 + $0x19c] sm:$0xf]
    %v5573 = vld [vmem:[%s11 + $0x1a0] sm:$0xf]
    %v5574 = vld [vmem:[%s11 + $0x1a4] sm:$0xf]
    %v5575 = vld [vmem:[%s11 + $0x1a8] sm:$0xf]
    %v5576 = vld [vmem:[%s11 + $0x1ac] sm:$0xf]
    %v5577 = vld [vmem:[%s11 + $0x1b0] sm:$0xf]
    %v5578 = vld [vmem:[%s11 + $0x1b4] sm:$0xf]
    %v5579 = vld [vmem:[%s11 + $0x1b8] sm:$0xf]
    %v5580 = vld [vmem:[%s11 + $0x1bc] sm:$0xf]
    %v5581 = vld [vmem:[%s11 + $0x1c0] sm:$0xf]
    %v5582 = vld [vmem:[%s11 + $0x1c4] sm:$0xf]
    %v5583 = vld [vmem:[%s11 + $0x1c8] sm:$0xf]
    %v5584 = vld [vmem:[%s11 + $0x1cc] sm:$0xf]
    %v5585 = vld [vmem:[%s11 + $0x1d0] sm:$0xf]
    %v5586 = vld [vmem:[%s11 + $0x1d4] sm:$0xf]
    %v5587 = vld [vmem:[%s11 + $0x1d8] sm:$0xf]
    %v5588 = vld [vmem:[%s11 + $0x1dc] sm:$0xf]
    %v5589 = vld [vmem:[%s11 + $0x1e0] sm:$0xf]
    %v5590 = vld [vmem:[%s11 + $0x1e4] sm:$0xf]
    %v5591 = vld [vmem:[%s11 + $0x1e8] sm:$0xf]
    %v5592 = vld [vmem:[%s11 + $0x1ec] sm:$0xf]
    %v5593 = vld [vmem:[%s11 + $0x1f0] sm:$0xf]
    %v5594 = vld [vmem:[%s11 + $0x1f4] sm:$0xf]
    %v5595 = vld [vmem:[%s11 + $0x1f8] sm:$0xf]
    %v5596 = vld [vmem:[%s11 + $0x1fc] sm:$0xf]
    %v5597 = vld [vmem:[#allocation16] sm:$0x1]
    %v5599 = vlaneseq
    %v5600 = vshrl.u32 %v5599, 7
    %v5601 = vsub.s32 0, %v5600
    %v5602 = vrot.slane %v5597, %v5601
    %v5732 = vunpack.c.l.b16 %v5469
    %v5733 = vunpack.c.l.b16 %v5470
    %v5734 = vunpack.c.l.b16 %v5471
    %v5735 = vunpack.c.l.b16 %v5472
    %v5736 = vunpack.c.l.b16 %v5473
    %v5737 = vunpack.c.l.b16 %v5474
    %v5738 = vunpack.c.l.b16 %v5475
    %v5739 = vunpack.c.l.b16 %v5476
    %v5740 = vunpack.c.l.b16 %v5477
    %v5741 = vunpack.c.l.b16 %v5478
    %v5742 = vunpack.c.l.b16 %v5479
    %v5743 = vunpack.c.l.b16 %v5480
    %v5744 = vunpack.c.l.b16 %v5481
    %v5745 = vunpack.c.l.b16 %v5482
    %v5746 = vunpack.c.l.b16 %v5483
    %v5747 = vunpack.c.l.b16 %v5484
    %v5748 = vunpack.c.l.b16 %v5485
    %v5749 = vunpack.c.l.b16 %v5486
    %v5750 = vunpack.c.l.b16 %v5487
    %v5751 = vunpack.c.l.b16 %v5488
    %v5752 = vunpack.c.l.b16 %v5489
    %v5753 = vunpack.c.l.b16 %v5490
    %v5754 = vunpack.c.l.b16 %v5491
    %v5755 = vunpack.c.l.b16 %v5492
    %v5756 = vunpack.c.l.b16 %v5493
    %v5757 = vunpack.c.l.b16 %v5494
    %v5758 = vunpack.c.l.b16 %v5495
    %v5759 = vunpack.c.l.b16 %v5496
    %v5760 = vunpack.c.l.b16 %v5497
    %v5761 = vunpack.c.l.b16 %v5498
    %v5762 = vunpack.c.l.b16 %v5499
    %v5763 = vunpack.c.l.b16 %v5500
    %v5764 = vunpack.c.l.b16 %v5501
    %v5765 = vunpack.c.l.b16 %v5502
    %v5766 = vunpack.c.l.b16 %v5503
    %v5767 = vunpack.c.l.b16 %v5504
    %v5768 = vunpack.c.l.b16 %v5505
    %v5769 = vunpack.c.l.b16 %v5506
    %v5770 = vunpack.c.l.b16 %v5507
    %v5771 = vunpack.c.l.b16 %v5508
    %v5772 = vunpack.c.l.b16 %v5509
    %v5773 = vunpack.c.l.b16 %v5510
    %v5774 = vunpack.c.l.b16 %v5511
    %v5775 = vunpack.c.l.b16 %v5512
    %v5776 = vunpack.c.l.b16 %v5513
    %v5777 = vunpack.c.l.b16 %v5514
    %v5778 = vunpack.c.l.b16 %v5515
    %v5779 = vunpack.c.l.b16 %v5516
    %v5780 = vunpack.c.l.b16 %v5517
    %v5781 = vunpack.c.l.b16 %v5518
    %v5782 = vunpack.c.l.b16 %v5519
    %v5783 = vunpack.c.l.b16 %v5520
    %v5784 = vunpack.c.l.b16 %v5521
    %v5785 = vunpack.c.l.b16 %v5522
    %v5786 = vunpack.c.l.b16 %v5523
    %v5787 = vunpack.c.l.b16 %v5524
    %v5788 = vunpack.c.l.b16 %v5525
    %v5789 = vunpack.c.l.b16 %v5526
    %v5790 = vunpack.c.l.b16 %v5527
    %v5791 = vunpack.c.l.b16 %v5528
    %v5792 = vunpack.c.l.b16 %v5529
    %v5793 = vunpack.c.l.b16 %v5530
    %v5794 = vunpack.c.l.b16 %v5531
    %v5795 = vunpack.c.l.b16 %v5532
    %v5796 = vunpack.c.l.b16 %v5533
    %v5797 = vunpack.c.l.b16 %v5534
    %v5798 = vunpack.c.l.b16 %v5535
    %v5799 = vunpack.c.l.b16 %v5536
    %v5800 = vunpack.c.l.b16 %v5537
    %v5801 = vunpack.c.l.b16 %v5538
    %v5802 = vunpack.c.l.b16 %v5539
    %v5803 = vunpack.c.l.b16 %v5540
    %v5804 = vunpack.c.l.b16 %v5541
    %v5805 = vunpack.c.l.b16 %v5542
    %v5806 = vunpack.c.l.b16 %v5543
    %v5807 = vunpack.c.l.b16 %v5544
    %v5808 = vunpack.c.l.b16 %v5545
    %v5809 = vunpack.c.l.b16 %v5546
    %v5810 = vunpack.c.l.b16 %v5547
    %v5811 = vunpack.c.l.b16 %v5548
    %v5812 = vunpack.c.l.b16 %v5549
    %v5813 = vunpack.c.l.b16 %v5550
    %v5814 = vunpack.c.l.b16 %v5551
    %v5815 = vunpack.c.l.b16 %v5552
    %v5816 = vunpack.c.l.b16 %v5553
    %v5817 = vunpack.c.l.b16 %v5554
    %v5818 = vunpack.c.l.b16 %v5555
    %v5819 = vunpack.c.l.b16 %v5556
    %v5820 = vunpack.c.l.b16 %v5557
    %v5821 = vunpack.c.l.b16 %v5558
    %v5822 = vunpack.c.l.b16 %v5559
    %v5823 = vunpack.c.l.b16 %v5560
    %v5824 = vunpack.c.l.b16 %v5561
    %v5825 = vunpack.c.l.b16 %v5562
    %v5826 = vunpack.c.l.b16 %v5563
    %v5827 = vunpack.c.l.b16 %v5564
    %v5828 = vunpack.c.l.b16 %v5565
    %v5829 = vunpack.c.l.b16 %v5566
    %v5830 = vunpack.c.l.b16 %v5567
    %v5831 = vunpack.c.l.b16 %v5568
    %v5832 = vunpack.c.l.b16 %v5569
    %v5833 = vunpack.c.l.b16 %v5570
    %v5834 = vunpack.c.l.b16 %v5571
    %v5835 = vunpack.c.l.b16 %v5572
    %v5836 = vunpack.c.l.b16 %v5573
    %v5837 = vunpack.c.l.b16 %v5574
    %v5838 = vunpack.c.l.b16 %v5575
    %v5839 = vunpack.c.l.b16 %v5576
    %v5840 = vunpack.c.l.b16 %v5577
    %v5841 = vunpack.c.l.b16 %v5578
    %v5842 = vunpack.c.l.b16 %v5579
    %v5843 = vunpack.c.l.b16 %v5580
    %v5844 = vunpack.c.l.b16 %v5581
    %v5845 = vunpack.c.l.b16 %v5582
    %v5846 = vunpack.c.l.b16 %v5583
    %v5847 = vunpack.c.l.b16 %v5584
    %v5848 = vunpack.c.l.b16 %v5585
    %v5849 = vunpack.c.l.b16 %v5586
    %v5850 = vunpack.c.l.b16 %v5587
    %v5851 = vunpack.c.l.b16 %v5588
    %v5852 = vunpack.c.l.b16 %v5589
    %v5853 = vunpack.c.l.b16 %v5590
    %v5854 = vunpack.c.l.b16 %v5591
    %v5855 = vunpack.c.l.b16 %v5592
    %v5856 = vunpack.c.l.b16 %v5593
    %v5857 = vunpack.c.l.b16 %v5594
    %v5858 = vunpack.c.l.b16 %v5595
    %v5859 = vunpack.c.l.b16 %v5596
    %v5860 = vpack.c.b16 %v5733, %v5732
    %v5861 = vpack.c.b16 %v5735, %v5734
    %v5862 = vpack.c.b16 %v5737, %v5736
    %v5863 = vpack.c.b16 %v5739, %v5738
    %v5864 = vpack.c.b16 %v5741, %v5740
    %v5865 = vpack.c.b16 %v5743, %v5742
    %v5866 = vpack.c.b16 %v5745, %v5744
    %v5867 = vpack.c.b16 %v5747, %v5746
    %v5868 = vpack.c.b16 %v5749, %v5748
    %v5869 = vpack.c.b16 %v5751, %v5750
    %v5870 = vpack.c.b16 %v5753, %v5752
    %v5871 = vpack.c.b16 %v5755, %v5754
    %v5872 = vpack.c.b16 %v5757, %v5756
    %v5873 = vpack.c.b16 %v5759, %v5758
    %v5874 = vpack.c.b16 %v5761, %v5760
    %v5875 = vpack.c.b16 %v5763, %v5762
    %v5876 = vpack.c.b16 %v5765, %v5764
    %v5877 = vpack.c.b16 %v5767, %v5766
    %v5878 = vpack.c.b16 %v5769, %v5768
    %v5879 = vpack.c.b16 %v5771, %v5770
    %v5880 = vpack.c.b16 %v5773, %v5772
    %v5881 = vpack.c.b16 %v5775, %v5774
    %v5882 = vpack.c.b16 %v5777, %v5776
    %v5883 = vpack.c.b16 %v5779, %v5778
    %v5884 = vpack.c.b16 %v5781, %v5780
    %v5885 = vpack.c.b16 %v5783, %v5782
    %v5886 = vpack.c.b16 %v5785, %v5784
    %v5887 = vpack.c.b16 %v5787, %v5786
    %v5888 = vpack.c.b16 %v5789, %v5788
    %v5889 = vpack.c.b16 %v5791, %v5790
    %v5890 = vpack.c.b16 %v5793, %v5792
    %v5891 = vpack.c.b16 %v5795, %v5794
    %v5892 = vpack.c.b16 %v5797, %v5796
    %v5893 = vpack.c.b16 %v5799, %v5798
    %v5894 = vpack.c.b16 %v5801, %v5800
    %v5895 = vpack.c.b16 %v5803, %v5802
    %v5896 = vpack.c.b16 %v5805, %v5804
    %v5897 = vpack.c.b16 %v5807, %v5806
    %v5898 = vpack.c.b16 %v5809, %v5808
    %v5899 = vpack.c.b16 %v5811, %v5810
    %v5900 = vpack.c.b16 %v5813, %v5812
    %v5901 = vpack.c.b16 %v5815, %v5814
    %v5902 = vpack.c.b16 %v5817, %v5816
    %v5903 = vpack.c.b16 %v5819, %v5818
    %v5904 = vpack.c.b16 %v5821, %v5820
    %v5905 = vpack.c.b16 %v5823, %v5822
    %v5906 = vpack.c.b16 %v5825, %v5824
    %v5907 = vpack.c.b16 %v5827, %v5826
    %v5908 = vpack.c.b16 %v5829, %v5828
    %v5909 = vpack.c.b16 %v5831, %v5830
    %v5910 = vpack.c.b16 %v5833, %v5832
    %v5911 = vpack.c.b16 %v5835, %v5834
    %v5912 = vpack.c.b16 %v5837, %v5836
    %v5913 = vpack.c.b16 %v5839, %v5838
    %v5914 = vpack.c.b16 %v5841, %v5840
    %v5915 = vpack.c.b16 %v5843, %v5842
    %v5916 = vpack.c.b16 %v5845, %v5844
    %v5917 = vpack.c.b16 %v5847, %v5846
    %v5918 = vpack.c.b16 %v5849, %v5848
    %v5919 = vpack.c.b16 %v5851, %v5850
    %v5920 = vpack.c.b16 %v5853, %v5852
    %v5921 = vpack.c.b16 %v5855, %v5854
    %v5922 = vpack.c.b16 %v5857, %v5856
    %v5923 = vpack.c.b16 %v5859, %v5858
    %5988 = vmatprep.subr.bf16.mxu0 0
    %5989 = vmatpush1.bf16.msra.mxu0 %v5867
    %5990 = vmatprep.subr.bf16.mxu0 0
    %5991 = vmatpush1.bf16.msra.mxu0 %v5866
    %5992 = vmatprep.subr.bf16.mxu0 0
    %5993 = vmatpush1.bf16.msra.mxu0 %v5865
    %5994 = vmatprep.subr.bf16.mxu0 0
    %5995 = vmatpush1.bf16.msra.mxu0 %v5864
    %5996 = vmatprep.subr.bf16.mxu0 0
    %5997 = vmatpush1.bf16.msra.mxu0 %v5863
    %5998 = vmatprep.subr.bf16.mxu0 0
    %5999 = vmatpush1.bf16.msra.mxu0 %v5862
    %6000 = vmatprep.subr.bf16.mxu0 0
    %6001 = vmatpush1.bf16.msra.mxu0 %v5861
    %6002 = vmatprep.subr.bf16.mxu0 0
    %6003 = vmatpush1.bf16.msra.mxu0 %v5860
    %6004 = vmatprep.subr.bf16.mxu0 0
    %6005 = vmatpush2.bf16.msra.mxu0 %v5875
    %6006 = vmatprep.subr.bf16.mxu0 0
    %6007 = vmatpush2.bf16.msra.mxu0 %v5874
    %6008 = vmatprep.subr.bf16.mxu0 0
    %6009 = vmatpush2.bf16.msra.mxu0 %v5873
    %6010 = vmatprep.subr.bf16.mxu0 0
    %6011 = vmatpush2.bf16.msra.mxu0 %v5872
    %6012 = vmatprep.subr.bf16.mxu0 0
    %6013 = vmatpush2.bf16.msra.mxu0 %v5871
    %6014 = vmatprep.subr.bf16.mxu0 0
    %6015 = vmatpush2.bf16.msra.mxu0 %v5870
    %6016 = vmatprep.subr.bf16.mxu0 0
    %6017 = vmatpush2.bf16.msra.mxu0 %v5869
    %6018 = vmatprep.subr.bf16.mxu0 0
    %6019 = vmatpush2.bf16.msra.mxu0 %v5868
    %6020 = vmatprep.mubr.bf16.mxu0 %v5462
    %6021 = vmatmul.mubr.bf16.gmra.mxu0 %v5461
    %v6022 = vpop.f32.mrf.mxu0
    %v6023 = vadd.f32 %v5602, %v6022
    %v6024 = vpop.f32.mrf.mxu0
    %v6025 = vpop.f32.mrf.mxu0
    %v6026 = vadd.f32 %v5602, %v6025
    %v6027 = vpop.f32.mrf.mxu0
    %6028 = vdwg.mxu0
    %6029 = vmatprep.subr.bf16.mxu0 0
    %6030 = vmatpush1.bf16.msra.mxu0 %v5883
    %6031 = vmatprep.subr.bf16.mxu0 0
    %6032 = vmatpush1.bf16.msra.mxu0 %v5882
    %6033 = vmatprep.subr.bf16.mxu0 0
    %6034 = vmatpush1.bf16.msra.mxu0 %v5881
    %6035 = vmatprep.subr.bf16.mxu0 0
    %6036 = vmatpush1.bf16.msra.mxu0 %v5880
    %6037 = vmatprep.subr.bf16.mxu0 0
    %6038 = vmatpush1.bf16.msra.mxu0 %v5879
    %6039 = vmatprep.subr.bf16.mxu0 0
    %6040 = vmatpush1.bf16.msra.mxu0 %v5878
    %6041 = vmatprep.subr.bf16.mxu0 0
    %6042 = vmatpush1.bf16.msra.mxu0 %v5877
    %6043 = vmatprep.subr.bf16.mxu0 0
    %6044 = vmatpush1.bf16.msra.mxu0 %v5876
    %6045 = vmatprep.subr.bf16.mxu0 0
    %6046 = vmatpush2.bf16.msra.mxu0 %v5891
    %6047 = vmatprep.subr.bf16.mxu0 0
    %6048 = vmatpush2.bf16.msra.mxu0 %v5890
    %6049 = vmatprep.subr.bf16.mxu0 0
    %6050 = vmatpush2.bf16.msra.mxu0 %v5889
    %6051 = vmatprep.subr.bf16.mxu0 0
    %6052 = vmatpush2.bf16.msra.mxu0 %v5888
    %6053 = vmatprep.subr.bf16.mxu0 0
    %6054 = vmatpush2.bf16.msra.mxu0 %v5887
    %6055 = vmatprep.subr.bf16.mxu0 0
    %6056 = vmatpush2.bf16.msra.mxu0 %v5886
    %6057 = vmatprep.subr.bf16.mxu0 0
    %6058 = vmatpush2.bf16.msra.mxu0 %v5885
    %6059 = vmatprep.subr.bf16.mxu0 0
    %6060 = vmatpush2.bf16.msra.mxu0 %v5884
    %6061 = vmatprep.mubr.bf16.mxu0 %v5464
    %6062 = vmatmul.mubr.bf16.gmra.mxu0 %v5463
    %v6063 = vpop.f32.mrf.mxu0
    %v6064 = vadd.f32 %v6023, %v6063
    %v6065 = vpop.f32.mrf.mxu0
    %v6066 = vpop.f32.mrf.mxu0
    %v6067 = vadd.f32 %v6026, %v6066
    %v6068 = vpop.f32.mrf.mxu0
    %6069 = vdwg.mxu0
    %6070 = vmatprep.subr.bf16.mxu0 0
    %6071 = vmatpush1.bf16.msra.mxu0 %v5899
    %6072 = vmatprep.subr.bf16.mxu0 0
    %6073 = vmatpush1.bf16.msra.mxu0 %v5898
    %6074 = vmatprep.subr.bf16.mxu0 0
    %6075 = vmatpush1.bf16.msra.mxu0 %v5897
    %6076 = vmatprep.subr.bf16.mxu0 0
    %6077 = vmatpush1.bf16.msra.mxu0 %v5896
    %6078 = vmatprep.subr.bf16.mxu0 0
    %6079 = vmatpush1.bf16.msra.mxu0 %v5895
    %6080 = vmatprep.subr.bf16.mxu0 0
    %6081 = vmatpush1.bf16.msra.mxu0 %v5894
    %6082 = vmatprep.subr.bf16.mxu0 0
    %6083 = vmatpush1.bf16.msra.mxu0 %v5893
    %6084 = vmatprep.subr.bf16.mxu0 0
    %6085 = vmatpush1.bf16.msra.mxu0 %v5892
    %6086 = vmatprep.subr.bf16.mxu0 0
    %6087 = vmatpush2.bf16.msra.mxu0 %v5907
    %6088 = vmatprep.subr.bf16.mxu0 0
    %6089 = vmatpush2.bf16.msra.mxu0 %v5906
    %6090 = vmatprep.subr.bf16.mxu0 0
    %6091 = vmatpush2.bf16.msra.mxu0 %v5905
    %6092 = vmatprep.subr.bf16.mxu0 0
    %6093 = vmatpush2.bf16.msra.mxu0 %v5904
    %6094 = vmatprep.subr.bf16.mxu0 0
    %6095 = vmatpush2.bf16.msra.mxu0 %v5903
    %6096 = vmatprep.subr.bf16.mxu0 0
    %6097 = vmatpush2.bf16.msra.mxu0 %v5902
    %6098 = vmatprep.subr.bf16.mxu0 0
    %6099 = vmatpush2.bf16.msra.mxu0 %v5901
    %6100 = vmatprep.subr.bf16.mxu0 0
    %6101 = vmatpush2.bf16.msra.mxu0 %v5900
    %6102 = vmatprep.mubr.bf16.mxu0 %v5466
    %6103 = vmatmul.mubr.bf16.gmra.mxu0 %v5465
    %v6104 = vpop.f32.mrf.mxu0
    %v6105 = vadd.f32 %v6064, %v6104
    %v6106 = vpop.f32.mrf.mxu0
    %v6107 = vpop.f32.mrf.mxu0
    %v6108 = vadd.f32 %v6067, %v6107
    %v6109 = vpop.f32.mrf.mxu0
    %6110 = vdwg.mxu0
    %6111 = vmatprep.subr.bf16.mxu0 0
    %6112 = vmatpush1.bf16.msra.mxu0 %v5915
    %6113 = vmatprep.subr.bf16.mxu0 0
    %6114 = vmatpush1.bf16.msra.mxu0 %v5914
    %6115 = vmatprep.subr.bf16.mxu0 0
    %6116 = vmatpush1.bf16.msra.mxu0 %v5913
    %6117 = vmatprep.subr.bf16.mxu0 0
    %6118 = vmatpush1.bf16.msra.mxu0 %v5912
    %6119 = vmatprep.subr.bf16.mxu0 0
    %6120 = vmatpush1.bf16.msra.mxu0 %v5911
    %6121 = vmatprep.subr.bf16.mxu0 0
    %6122 = vmatpush1.bf16.msra.mxu0 %v5910
    %6123 = vmatprep.subr.bf16.mxu0 0
    %6124 = vmatpush1.bf16.msra.mxu0 %v5909
    %6125 = vmatprep.subr.bf16.mxu0 0
    %6126 = vmatpush1.bf16.msra.mxu0 %v5908
    %6127 = vmatprep.subr.bf16.mxu0 0
    %6128 = vmatpush2.bf16.msra.mxu0 %v5923
    %6129 = vmatprep.subr.bf16.mxu0 0
    %6130 = vmatpush2.bf16.msra.mxu0 %v5922
    %6131 = vmatprep.subr.bf16.mxu0 0
    %6132 = vmatpush2.bf16.msra.mxu0 %v5921
    %6133 = vmatprep.subr.bf16.mxu0 0
    %6134 = vmatpush2.bf16.msra.mxu0 %v5920
    %6135 = vmatprep.subr.bf16.mxu0 0
    %6136 = vmatpush2.bf16.msra.mxu0 %v5919
    %6137 = vmatprep.subr.bf16.mxu0 0
    %6138 = vmatpush2.bf16.msra.mxu0 %v5918
    %6139 = vmatprep.subr.bf16.mxu0 0
    %6140 = vmatpush2.bf16.msra.mxu0 %v5917
    %6141 = vmatprep.subr.bf16.mxu0 0
    %6142 = vmatpush2.bf16.msra.mxu0 %v5916
    %6143 = vmatprep.mubr.bf16.mxu0 %v5468
    %6144 = vmatmul.mubr.bf16.gmra.mxu0 %v5467
    %v6145 = vpop.f32.mrf.mxu0
    %v6146 = vadd.f32 %v6105, %v6145
    %v6147 = vpop.f32.mrf.mxu0
    %v6148 = vpop.f32.mrf.mxu0
    %v6149 = vadd.f32 %v6108, %v6148
    %v6150 = vpop.f32.mrf.mxu0
    %6151 = vdwg.mxu0
    %v6152 = vld [vmem:[%s1] sm:$0xff]
    %v6153 = vld [vmem:[%s1 + $0x8] sm:$0xff]
    %v6154 = vadd.f32 %v6146, %v6152
    %v6155 = vadd.f32 %v6149, %v6153
    %v6156 = vld [vmem:[#allocation17] sm:$0x1]
    %v6157 = vld [vmem:[#allocation19] sm:$0x1]
    %6158 = vadd.xlane.f32.xlu0 %v6154
    %v6159 = vpop.xlane.xlu0 %6158
    %6160 = vadd.xlane.f32.xlu0 %v6155
    %v6161 = vpop.xlane.xlu0 %6160
    %v6162 = vrcp.pop 128.0
    %v6163 = vmul.f32 %v6159, %v6162
    %v6164 = vmul.f32 %v6161, %v6162
    %v6165 = vsub.f32 %v6154, %v6163
    %v6166 = vsub.f32 %v6155, %v6164
    %v6167 = vmul.f32 %v6165, %v6165
    %v6168 = vmul.f32 %v6166, %v6166
    %6169 = vadd.xlane.f32.xlu0 %v6167
    %v6170 = vpop.xlane.xlu0 %6169
    %6171 = vadd.xlane.f32.xlu0 %v6168
    %v6172 = vpop.xlane.xlu0 %6171
    %v6173 = vmul.f32 %v6170, %v6162
    %v6174 = vmul.f32 %v6172, %v6162
    %v6175 = vadd.f32 %v6173, 1e-05
    %v6176 = vadd.f32 %v6174, 1e-05
    %v6177 = vrsqrt.pop %v6175
    %v6178 = vrsqrt.pop %v6176
    %v6179 = vmul.f32 %v6165, %v6177
    %v6180 = vmul.f32 %v6166, %v6178
    %v6182 = vlaneseq
    %v6183 = vshrl.u32 %v6182, 7
    %v6184 = vsub.s32 0, %v6183
    %v6185 = vrot.slane %v6156, %v6184
    %v6187 = vmul.f32 %v6179, %v6185
    %v6188 = vmul.f32 %v6180, %v6185
    %v6190 = vlaneseq
    %v6191 = vshrl.u32 %v6190, 7
    %v6192 = vsub.s32 0, %v6191
    %v6193 = vrot.slane %v6157, %v6192
    %v6195 = vadd.f32 %v6187, %v6193
    %v6196 = vadd.f32 %v6188, %v6193
    %v6197 = vpack.c.bf16 %v6196, %v6195
    %v6198 = vld [vmem:[%s15] sm:$0xff]
    %v6199 = vld [vmem:[%s15 + $0x8] sm:$0xff]
    %v6200 = vld [vmem:[%s15 + $0x10] sm:$0xff]
    %v6201 = vld [vmem:[%s15 + $0x18] sm:$0xff]
    %v6202 = vld [vmem:[%s15 + $0x20] sm:$0xff]
    %v6203 = vld [vmem:[%s15 + $0x28] sm:$0xff]
    %v6204 = vld [vmem:[%s15 + $0x30] sm:$0xff]
    %v6205 = vld [vmem:[%s15 + $0x38] sm:$0xff]
    %v6206 = vld [vmem:[%s15 + $0x40] sm:$0xff]
    %v6207 = vld [vmem:[%s15 + $0x48] sm:$0xff]
    %v6208 = vld [vmem:[%s15 + $0x50] sm:$0xff]
    %v6209 = vld [vmem:[%s15 + $0x58] sm:$0xff]
    %v6210 = vld [vmem:[%s15 + $0x60] sm:$0xff]
    %v6211 = vld [vmem:[%s15 + $0x68] sm:$0xff]
    %v6212 = vld [vmem:[%s15 + $0x70] sm:$0xff]
    %v6213 = vld [vmem:[%s15 + $0x78] sm:$0xff]
    %v6230 = vunpack.c.l.b16 %v6198
    %v6231 = vunpack.c.h.b16 %v6198
    %v6232 = vunpack.c.l.b16 %v6199
    %v6233 = vunpack.c.h.b16 %v6199
    %v6234 = vunpack.c.l.b16 %v6200
    %v6235 = vunpack.c.h.b16 %v6200
    %v6236 = vunpack.c.l.b16 %v6201
    %v6237 = vunpack.c.h.b16 %v6201
    %v6238 = vunpack.c.l.b16 %v6202
    %v6239 = vunpack.c.h.b16 %v6202
    %v6240 = vunpack.c.l.b16 %v6203
    %v6241 = vunpack.c.h.b16 %v6203
    %v6242 = vunpack.c.l.b16 %v6204
    %v6243 = vunpack.c.h.b16 %v6204
    %v6244 = vunpack.c.l.b16 %v6205
    %v6245 = vunpack.c.h.b16 %v6205
    %v6246 = vunpack.c.l.b16 %v6206
    %v6247 = vunpack.c.h.b16 %v6206
    %v6248 = vunpack.c.l.b16 %v6207
    %v6249 = vunpack.c.h.b16 %v6207
    %v6250 = vunpack.c.l.b16 %v6208
    %v6251 = vunpack.c.h.b16 %v6208
    %v6252 = vunpack.c.l.b16 %v6209
    %v6253 = vunpack.c.h.b16 %v6209
    %v6254 = vunpack.c.l.b16 %v6210
    %v6255 = vunpack.c.h.b16 %v6210
    %v6256 = vunpack.c.l.b16 %v6211
    %v6257 = vunpack.c.h.b16 %v6211
    %v6258 = vunpack.c.l.b16 %v6212
    %v6259 = vunpack.c.h.b16 %v6212
    %v6260 = vunpack.c.l.b16 %v6213
    %v6261 = vunpack.c.h.b16 %v6213
    %v6262 = vpack.c.b16 %v6232, %v6230
    %v6263 = vpack.c.b16 %v6233, %v6231
    %v6264 = vpack.c.b16 %v6236, %v6234
    %v6265 = vpack.c.b16 %v6237, %v6235
    %v6266 = vpack.c.b16 %v6240, %v6238
    %v6267 = vpack.c.b16 %v6241, %v6239
    %v6268 = vpack.c.b16 %v6244, %v6242
    %v6269 = vpack.c.b16 %v6245, %v6243
    %v6270 = vpack.c.b16 %v6248, %v6246
    %v6271 = vpack.c.b16 %v6249, %v6247
    %v6272 = vpack.c.b16 %v6252, %v6250
    %v6273 = vpack.c.b16 %v6253, %v6251
    %v6274 = vpack.c.b16 %v6256, %v6254
    %v6275 = vpack.c.b16 %v6257, %v6255
    %v6276 = vpack.c.b16 %v6260, %v6258
    %v6277 = vpack.c.b16 %v6261, %v6259
    %6294 = vmatprep.subr.bf16.mxu0 %v6277
    %6295 = vmatpush1.bf16.msra.mxu0 %v6276
    %6296 = vmatprep.subr.bf16.mxu0 %v6275
    %6297 = vmatpush1.bf16.msra.mxu0 %v6274
    %6298 = vmatprep.subr.bf16.mxu0 %v6273
    %6299 = vmatpush1.bf16.msra.mxu0 %v6272
    %6300 = vmatprep.subr.bf16.mxu0 %v6271
    %6301 = vmatpush1.bf16.msra.mxu0 %v6270
    %6302 = vmatprep.subr.bf16.mxu0 %v6269
    %6303 = vmatpush1.bf16.msra.mxu0 %v6268
    %6304 = vmatprep.subr.bf16.mxu0 %v6267
    %6305 = vmatpush1.bf16.msra.mxu0 %v6266
    %6306 = vmatprep.subr.bf16.mxu0 %v6265
    %6307 = vmatpush1.bf16.msra.mxu0 %v6264
    %6308 = vmatprep.subr.bf16.mxu0 %v6263
    %6309 = vmatpush1.bf16.msra.mxu0 %v6262
    %6310 = vmatprep.subr.bf16.mxu0 0
    %6311 = vmatpush2.bf16.msra.mxu0 0
    %6312 = vmatprep.subr.bf16.mxu0 0
    %6313 = vmatpush2.bf16.msra.mxu0 0
    %6314 = vmatprep.subr.bf16.mxu0 0
    %6315 = vmatpush2.bf16.msra.mxu0 0
    %6316 = vmatprep.subr.bf16.mxu0 0
    %6317 = vmatpush2.bf16.msra.mxu0 0
    %6318 = vmatprep.subr.bf16.mxu0 0
    %6319 = vmatpush2.bf16.msra.mxu0 0
    %6320 = vmatprep.subr.bf16.mxu0 0
    %6321 = vmatpush2.bf16.msra.mxu0 0
    %6322 = vmatprep.subr.bf16.mxu0 0
    %6323 = vmatpush2.bf16.msra.mxu0 0
    %6324 = vmatprep.subr.bf16.mxu0 0
    %6325 = vmatpush2.bf16.msra.mxu0 0
    %6326 = vmatprep.mubr.bf16.mxu0 0
    %6327 = vmatmul.mubr.bf16.gmra.mxu0 %v6197
    %v6328 = vpop.f32.mrf.mxu0
    %v6329 = vadd.f32 0.0, %v6328
    %v6330 = vpop.f32.mrf.mxu0
    %v6331 = vadd.f32 0.0, %v6330
    %v6332 = vpop.f32.mrf.mxu0
    %v6333 = vadd.f32 0.0, %v6332
    %v6334 = vpop.f32.mrf.mxu0
    %v6335 = vadd.f32 0.0, %v6334
    %6336 = vdwg.mxu0
    %v6337 = vpack.c.bf16 %v6333, %v6329
    %v6338 = vpack.c.bf16 %v6335, %v6331
    %6340 = vrot.lane.b32.xlu0 %v6337, 64
    %v6341 = vpop.permute.xlu0 %6340
    %vm6342 = vcmask 261120
    %v6344 = vsel %vm6342, %v6337, 0
    %v6347 = vsel %vm6342, %v6341, 0
    %6349 = vmatprep.subr.bf16.mxu0 0
    %6350 = vmatpush1.bf16.xpose.msra.mxu0 0
    %6351 = vmatprep.subr.bf16.mxu0 0
    %6352 = vmatpush1.bf16.xpose.msra.mxu0 0
    %6353 = vmatprep.subr.bf16.mxu0 0
    %6354 = vmatpush1.bf16.xpose.msra.mxu0 0
    %6355 = vmatprep.subr.bf16.mxu0 0
    %6356 = vmatpush1.bf16.xpose.msra.mxu0 0
    %6357 = vmatprep.subr.bf16.mxu0 0
    %6358 = vmatpush1.bf16.xpose.msra.mxu0 0
    %6359 = vmatprep.subr.bf16.mxu0 0
    %6360 = vmatpush1.bf16.xpose.msra.mxu0 0
    %6361 = vmatprep.subr.bf16.mxu0 0
    %6362 = vmatpush1.bf16.xpose.msra.mxu0 0
    %6363 = vmatprep.subr.bf16.mxu0 0
    %6364 = vmatpush1.bf16.xpose.msra.mxu0 %v6347
    %6365 = vmatprep.subr.bf16.mxu0 0
    %6366 = vmatpush2.bf16.xpose.msra.mxu0 0
    %6367 = vmatprep.subr.bf16.mxu0 0
    %6368 = vmatpush2.bf16.xpose.msra.mxu0 0
    %6369 = vmatprep.subr.bf16.mxu0 0
    %6370 = vmatpush2.bf16.xpose.msra.mxu0 0
    %6371 = vmatprep.subr.bf16.mxu0 0
    %6372 = vmatpush2.bf16.xpose.msra.mxu0 0
    %6373 = vmatprep.subr.bf16.mxu0 0
    %6374 = vmatpush2.bf16.xpose.msra.mxu0 0
    %6375 = vmatprep.subr.bf16.mxu0 0
    %6376 = vmatpush2.bf16.xpose.msra.mxu0 0
    %6377 = vmatprep.subr.bf16.mxu0 0
    %6378 = vmatpush2.bf16.xpose.msra.mxu0 0
    %6379 = vmatprep.subr.bf16.mxu0 0
    %6380 = vmatpush2.bf16.xpose.msra.mxu0 0
    %6381 = vmatprep.mubr.bf16.mxu0 0
    %6382 = vmatmul.mubr.bf16.gmra.mxu0 %v6344
    %v6383 = vpop.f32.mrf.mxu0
    %v6384 = vadd.f32 0.0, %v6383
    %v6385 = vpop.f32.mrf.mxu0
    %v6386 = vpop.f32.mrf.mxu0
    %v6387 = vadd.f32 0.0, %v6386
    %v6388 = vpop.f32.mrf.mxu0
    %6389 = vdwg.mxu0
    %v6390 = vmul.f32 %v6384, 0.17677669
    %v6391 = vmul.f32 %v6387, 0.17677669
    %vm6392 = vcmask 130048
    %v6393 = vsel %vm6392, %v6390, -inf
    %6394 = vmax.xlane.f32.xlu0 %v6393
    %v6395 = vpop.xlane.xlu0 %6394
    %v6396 = vsel %vm6392, %v6391, -inf
    %6397 = vmax.xlane.f32.xlu0 %v6396
    %v6398 = vpop.xlane.xlu0 %6397
    %v6399 = vsub.f32 %v6390, %v6395
    %v6400 = vsub.f32 %v6391, %v6398
    %v6401 = vmul.f32 %v6399, 1.442695
    %v6402 = vpow.pop %v6401
    %v6403 = vmul.f32 %v6400, 1.442695
    %v6404 = vpow.pop %v6403
    %v6405 = vsel %vm6392, %v6402, 0.0
    %6406 = vadd.xlane.f32.xlu0 %v6405
    %v6407 = vpop.xlane.xlu0 %6406
    %v6408 = vsel %vm6392, %v6404, 0.0
    %6409 = vadd.xlane.f32.xlu0 %v6408
    %v6410 = vpop.xlane.xlu0 %6409
    %v6411 = vrcp.pop %v6407
    %v6412 = vmul.f32 %v6402, %v6411
    %v6413 = vrcp.pop %v6410
    %v6414 = vmul.f32 %v6404, %v6413
    %v6415 = vpack.c.bf16 %v6414, %v6412
    %v6417 = vsel %vm6392, %v6415, 0
    %6419 = vmatprep.subr.bf16.mxu0 0
    %6420 = vmatpush1.bf16.msra.mxu0 0
    %6421 = vmatprep.subr.bf16.mxu0 0
    %6422 = vmatpush1.bf16.msra.mxu0 0
    %6423 = vmatprep.subr.bf16.mxu0 0
    %6424 = vmatpush1.bf16.msra.mxu0 0
    %6425 = vmatprep.subr.bf16.mxu0 0
    %6426 = vmatpush1.bf16.msra.mxu0 0
    %6427 = vmatprep.subr.bf16.mxu0 0
    %6428 = vmatpush1.bf16.msra.mxu0 0
    %6429 = vmatprep.subr.bf16.mxu0 0
    %6430 = vmatpush1.bf16.msra.mxu0 0
    %6431 = vmatprep.subr.bf16.mxu0 0
    %6432 = vmatpush1.bf16.msra.mxu0 0
    %6433 = vmatprep.subr.bf16.mxu0 0
    %6434 = vmatpush1.bf16.msra.mxu0 %v6338
    %6435 = vmatprep.subr.bf16.mxu0 0
    %6436 = vmatpush2.bf16.msra.mxu0 0
    %6437 = vmatprep.subr.bf16.mxu0 0
    %6438 = vmatpush2.bf16.msra.mxu0 0
    %6439 = vmatprep.subr.bf16.mxu0 0
    %6440 = vmatpush2.bf16.msra.mxu0 0
    %6441 = vmatprep.subr.bf16.mxu0 0
    %6442 = vmatpush2.bf16.msra.mxu0 0
    %6443 = vmatprep.subr.bf16.mxu0 0
    %6444 = vmatpush2.bf16.msra.mxu0 0
    %6445 = vmatprep.subr.bf16.mxu0 0
    %6446 = vmatpush2.bf16.msra.mxu0 0
    %6447 = vmatprep.subr.bf16.mxu0 0
    %6448 = vmatpush2.bf16.msra.mxu0 0
    %6449 = vmatprep.subr.bf16.mxu0 0
    %6450 = vmatpush2.bf16.msra.mxu0 0
    %6451 = vmatprep.mubr.bf16.mxu0 0
    %6452 = vmatmul.mubr.bf16.gmra.mxu0 %v6417
    %v6453 = vpop.f32.mrf.mxu0
    %v6454 = vadd.f32 0.0, %v6453
    %v6455 = vpop.f32.mrf.mxu0
    %v6456 = vpop.f32.mrf.mxu0
    %v6457 = vadd.f32 0.0, %v6456
    %v6458 = vpop.f32.mrf.mxu0
    %6459 = vdwg.mxu0
    %6460 = vst.msk [vmem:[#allocation4] sm:$0xff] %vm6342, %v6454
    %6461 = vst.msk [vmem:[#allocation4 + $0x8] sm:$0xff] %vm6342, %v6457
    %6462 = vrot.lane.b32.xlu0 %v6337, 96
    %v6463 = vpop.permute.xlu0 %6462
    %6464 = vrot.lane.b32.xlu0 %v6337, 32
    %v6465 = vpop.permute.xlu0 %6464
    %v6467 = vsel %vm6342, %v6463, 0
    %v6470 = vsel %vm6342, %v6465, 0
    %6472 = vmatprep.subr.bf16.mxu0 0
    %6473 = vmatpush1.bf16.xpose.msra.mxu0 0
    %6474 = vmatprep.subr.bf16.mxu0 0
    %6475 = vmatpush1.bf16.xpose.msra.mxu0 0
    %6476 = vmatprep.subr.bf16.mxu0 0
    %6477 = vmatpush1.bf16.xpose.msra.mxu0 0
    %6478 = vmatprep.subr.bf16.mxu0 0
    %6479 = vmatpush1.bf16.xpose.msra.mxu0 0
    %6480 = vmatprep.subr.bf16.mxu0 0
    %6481 = vmatpush1.bf16.xpose.msra.mxu0 0
    %6482 = vmatprep.subr.bf16.mxu0 0
    %6483 = vmatpush1.bf16.xpose.msra.mxu0 0
    %6484 = vmatprep.subr.bf16.mxu0 0
    %6485 = vmatpush1.bf16.xpose.msra.mxu0 0
    %6486 = vmatprep.subr.bf16.mxu0 0
    %6487 = vmatpush1.bf16.xpose.msra.mxu0 %v6470
    %6488 = vmatprep.subr.bf16.mxu0 0
    %6489 = vmatpush2.bf16.xpose.msra.mxu0 0
    %6490 = vmatprep.subr.bf16.mxu0 0
    %6491 = vmatpush2.bf16.xpose.msra.mxu0 0
    %6492 = vmatprep.subr.bf16.mxu0 0
    %6493 = vmatpush2.bf16.xpose.msra.mxu0 0
    %6494 = vmatprep.subr.bf16.mxu0 0
    %6495 = vmatpush2.bf16.xpose.msra.mxu0 0
    %6496 = vmatprep.subr.bf16.mxu0 0
    %6497 = vmatpush2.bf16.xpose.msra.mxu0 0
    %6498 = vmatprep.subr.bf16.mxu0 0
    %6499 = vmatpush2.bf16.xpose.msra.mxu0 0
    %6500 = vmatprep.subr.bf16.mxu0 0
    %6501 = vmatpush2.bf16.xpose.msra.mxu0 0
    %6502 = vmatprep.subr.bf16.mxu0 0
    %6503 = vmatpush2.bf16.xpose.msra.mxu0 0
    %6504 = vmatprep.mubr.bf16.mxu0 0
    %6505 = vmatmul.mubr.bf16.gmra.mxu0 %v6467
    %v6506 = vpop.f32.mrf.mxu0
    %v6507 = vadd.f32 0.0, %v6506
    %v6508 = vpop.f32.mrf.mxu0
    %v6509 = vpop.f32.mrf.mxu0
    %v6510 = vadd.f32 0.0, %v6509
    %v6511 = vpop.f32.mrf.mxu0
    %6512 = vdwg.mxu0
    %v6513 = vmul.f32 %v6507, 0.17677669
    %v6514 = vmul.f32 %v6510, 0.17677669
    %v6515 = vsel %vm6392, %v6513, -inf
    %6516 = vmax.xlane.f32.xlu0 %v6515
    %v6517 = vpop.xlane.xlu0 %6516
    %v6518 = vsel %vm6392, %v6514, -inf
    %6519 = vmax.xlane.f32.xlu0 %v6518
    %v6520 = vpop.xlane.xlu0 %6519
    %v6521 = vsub.f32 %v6513, %v6517
    %v6522 = vsub.f32 %v6514, %v6520
    %v6523 = vmul.f32 %v6521, 1.442695
    %v6524 = vpow.pop %v6523
    %v6525 = vmul.f32 %v6522, 1.442695
    %v6526 = vpow.pop %v6525
    %v6527 = vsel %vm6392, %v6524, 0.0
    %6528 = vadd.xlane.f32.xlu0 %v6527
    %v6529 = vpop.xlane.xlu0 %6528
    %v6530 = vsel %vm6392, %v6526, 0.0
    %6531 = vadd.xlane.f32.xlu0 %v6530
    %v6532 = vpop.xlane.xlu0 %6531
    %v6533 = vrcp.pop %v6529
    %v6534 = vmul.f32 %v6524, %v6533
    %v6535 = vrcp.pop %v6532
    %v6536 = vmul.f32 %v6526, %v6535
    %v6537 = vpack.c.bf16 %v6536, %v6534
    %6539 = vrot.lane.b32.xlu0 %v6338, 96
    %v6540 = vpop.permute.xlu0 %6539
    %v6543 = vsel %vm6392, %v6537, 0
    %6545 = vmatprep.subr.bf16.mxu0 0
    %6546 = vmatpush1.bf16.msra.mxu0 0
    %6547 = vmatprep.subr.bf16.mxu0 0
    %6548 = vmatpush1.bf16.msra.mxu0 0
    %6549 = vmatprep.subr.bf16.mxu0 0
    %6550 = vmatpush1.bf16.msra.mxu0 0
    %6551 = vmatprep.subr.bf16.mxu0 0
    %6552 = vmatpush1.bf16.msra.mxu0 0
    %6553 = vmatprep.subr.bf16.mxu0 0
    %6554 = vmatpush1.bf16.msra.mxu0 0
    %6555 = vmatprep.subr.bf16.mxu0 0
    %6556 = vmatpush1.bf16.msra.mxu0 0
    %6557 = vmatprep.subr.bf16.mxu0 0
    %6558 = vmatpush1.bf16.msra.mxu0 0
    %6559 = vmatprep.subr.bf16.mxu0 0
    %6560 = vmatpush1.bf16.msra.mxu0 %v6540
    %6561 = vmatprep.subr.bf16.mxu0 0
    %6562 = vmatpush2.bf16.msra.mxu0 0
    %6563 = vmatprep.subr.bf16.mxu0 0
    %6564 = vmatpush2.bf16.msra.mxu0 0
    %6565 = vmatprep.subr.bf16.mxu0 0
    %6566 = vmatpush2.bf16.msra.mxu0 0
    %6567 = vmatprep.subr.bf16.mxu0 0
    %6568 = vmatpush2.bf16.msra.mxu0 0
    %6569 = vmatprep.subr.bf16.mxu0 0
    %6570 = vmatpush2.bf16.msra.mxu0 0
    %6571 = vmatprep.subr.bf16.mxu0 0
    %6572 = vmatpush2.bf16.msra.mxu0 0
    %6573 = vmatprep.subr.bf16.mxu0 0
    %6574 = vmatpush2.bf16.msra.mxu0 0
    %6575 = vmatprep.subr.bf16.mxu0 0
    %6576 = vmatpush2.bf16.msra.mxu0 0
    %6577 = vmatprep.mubr.bf16.mxu0 0
    %6578 = vmatmul.mubr.bf16.gmra.mxu0 %v6543
    %v6579 = vpop.f32.mrf.mxu0
    %v6580 = vadd.f32 0.0, %v6579
    %v6581 = vpop.f32.mrf.mxu0
    %v6582 = vpop.f32.mrf.mxu0
    %v6583 = vadd.f32 0.0, %v6582
    %v6584 = vpop.f32.mrf.mxu0
    %6585 = vdwg.mxu0
    %6588 = vrot.lane.b32.xlu0 %v6580, 32
    %v6589 = vpop.permute.xlu0 %6588
    %6590 = vrot.lane.b32.xlu0 %v6583, 32
    %v6591 = vpop.permute.xlu0 %6590
    %vm6594 = vcmask 523520
    %6595 = vst.msk [vmem:[#allocation4] sm:$0xff] %vm6594, %v6589
    %6596 = vst.msk [vmem:[#allocation4 + $0x8] sm:$0xff] %vm6594, %v6591
    %v6597 = vld [vmem:[#allocation4] sm:$0xff]
    %v6598 = vld [vmem:[#allocation4 + $0x8] sm:$0xff]
    %v6599 = vpack.c.bf16 %v6598, %v6597
    %v6600 = vld [vmem:[%s16] sm:$0xf]
    %v6601 = vld [vmem:[%s16 + $0x4] sm:$0xf]
    %v6602 = vld [vmem:[%s16 + $0x8] sm:$0xf]
    %v6603 = vld [vmem:[%s16 + $0xc] sm:$0xf]
    %v6604 = vld [vmem:[%s16 + $0x10] sm:$0xf]
    %v6605 = vld [vmem:[%s16 + $0x14] sm:$0xf]
    %v6606 = vld [vmem:[%s16 + $0x18] sm:$0xf]
    %v6607 = vld [vmem:[%s16 + $0x1c] sm:$0xf]
    %v6608 = vld [vmem:[#allocation20] sm:$0x1]
    %v6610 = vlaneseq
    %v6611 = vshrl.u32 %v6610, 7
    %v6612 = vsub.s32 0, %v6611
    %v6613 = vrot.slane %v6608, %v6612
    %v6623 = vunpack.c.l.b16 %v6600
    %v6624 = vunpack.c.l.b16 %v6601
    %v6625 = vunpack.c.l.b16 %v6602
    %v6626 = vunpack.c.l.b16 %v6603
    %v6627 = vunpack.c.l.b16 %v6604
    %v6628 = vunpack.c.l.b16 %v6605
    %v6629 = vunpack.c.l.b16 %v6606
    %v6630 = vunpack.c.l.b16 %v6607
    %v6631 = vpack.c.b16 %v6624, %v6623
    %v6632 = vpack.c.b16 %v6626, %v6625
    %v6633 = vpack.c.b16 %v6628, %v6627
    %v6634 = vpack.c.b16 %v6630, %v6629
    %vm6639 = vcmask 523264
    %v6641 = vsel %vm6639, %v6599, 0
    %6643 = vmatprep.subr.bf16.mxu0 0
    %6644 = vmatpush1.bf16.msra.mxu0 0
    %6645 = vmatprep.subr.bf16.mxu0 0
    %6646 = vmatpush1.bf16.msra.mxu0 0
    %6647 = vmatprep.subr.bf16.mxu0 0
    %6648 = vmatpush1.bf16.msra.mxu0 0
    %6649 = vmatprep.subr.bf16.mxu0 0
    %6650 = vmatpush1.bf16.msra.mxu0 0
    %6651 = vmatprep.subr.bf16.mxu0 0
    %6652 = vmatpush1.bf16.msra.mxu0 %v6634
    %6653 = vmatprep.subr.bf16.mxu0 0
    %6654 = vmatpush1.bf16.msra.mxu0 %v6633
    %6655 = vmatprep.subr.bf16.mxu0 0
    %6656 = vmatpush1.bf16.msra.mxu0 %v6632
    %6657 = vmatprep.subr.bf16.mxu0 0
    %6658 = vmatpush1.bf16.msra.mxu0 %v6631
    %6659 = vmatprep.subr.bf16.mxu0 0
    %6660 = vmatpush2.bf16.msra.mxu0 0
    %6661 = vmatprep.subr.bf16.mxu0 0
    %6662 = vmatpush2.bf16.msra.mxu0 0
    %6663 = vmatprep.subr.bf16.mxu0 0
    %6664 = vmatpush2.bf16.msra.mxu0 0
    %6665 = vmatprep.subr.bf16.mxu0 0
    %6666 = vmatpush2.bf16.msra.mxu0 0
    %6667 = vmatprep.subr.bf16.mxu0 0
    %6668 = vmatpush2.bf16.msra.mxu0 0
    %6669 = vmatprep.subr.bf16.mxu0 0
    %6670 = vmatpush2.bf16.msra.mxu0 0
    %6671 = vmatprep.subr.bf16.mxu0 0
    %6672 = vmatpush2.bf16.msra.mxu0 0
    %6673 = vmatprep.subr.bf16.mxu0 0
    %6674 = vmatpush2.bf16.msra.mxu0 0
    %6675 = vmatprep.mubr.bf16.mxu0 0
    %6676 = vmatmul.mubr.bf16.gmra.mxu0 %v6641
    %v6677 = vpop.f32.mrf.mxu0
    %v6678 = vadd.f32 %v6613, %v6677
    %v6679 = vpop.f32.mrf.mxu0
    %v6680 = vpop.f32.mrf.mxu0
    %v6681 = vadd.f32 %v6613, %v6680
    %v6682 = vpop.f32.mrf.mxu0
    %6683 = vdwg.mxu0
    %v6684 = vadd.f32 %v6678, %v6154
    %v6685 = vadd.f32 %v6681, %v6155
    %v6686 = vld [vmem:[#allocation22] sm:$0x1]
    %v6687 = vld [vmem:[#allocation23] sm:$0x1]
    %6688 = vadd.xlane.f32.xlu0 %v6684
    %v6689 = vpop.xlane.xlu0 %6688
    %6690 = vadd.xlane.f32.xlu0 %v6685
    %v6691 = vpop.xlane.xlu0 %6690
    %v6692 = vmul.f32 %v6689, %v6162
    %v6693 = vmul.f32 %v6691, %v6162
    %v6694 = vsub.f32 %v6684, %v6692
    %v6695 = vsub.f32 %v6685, %v6693
    %v6696 = vmul.f32 %v6694, %v6694
    %v6697 = vmul.f32 %v6695, %v6695
    %6698 = vadd.xlane.f32.xlu0 %v6696
    %v6699 = vpop.xlane.xlu0 %6698
    %6700 = vadd.xlane.f32.xlu0 %v6697
    %v6701 = vpop.xlane.xlu0 %6700
    %v6702 = vmul.f32 %v6699, %v6162
    %v6703 = vmul.f32 %v6701, %v6162
    %v6704 = vadd.f32 %v6702, 1e-05
    %v6705 = vadd.f32 %v6703, 1e-05
    %v6706 = vrsqrt.pop %v6704
    %v6707 = vrsqrt.pop %v6705
    %v6708 = vmul.f32 %v6694, %v6706
    %v6709 = vmul.f32 %v6695, %v6707
    %v6711 = vlaneseq
    %v6712 = vshrl.u32 %v6711, 7
    %v6713 = vsub.s32 0, %v6712
    %v6714 = vrot.slane %v6686, %v6713
    %v6716 = vmul.f32 %v6708, %v6714
    %v6717 = vmul.f32 %v6709, %v6714
    %v6719 = vlaneseq
    %v6720 = vshrl.u32 %v6719, 7
    %v6721 = vsub.s32 0, %v6720
    %v6722 = vrot.slane %v6687, %v6721
    %v6724 = vadd.f32 %v6716, %v6722
    %v6725 = vadd.f32 %v6717, %v6722
    %v6726 = vpack.c.bf16 %v6725, %v6724
    %v6727 = vld [vmem:[#allocation25] sm:$0xf]
    %v6728 = vld [vmem:[#allocation25 + $0x4] sm:$0xf]
    %v6729 = vld [vmem:[#allocation25 + $0x8] sm:$0xf]
    %v6730 = vld [vmem:[#allocation25 + $0xc] sm:$0xf]
    %v6731 = vld [vmem:[#allocation25 + $0x10] sm:$0xf]
    %v6732 = vld [vmem:[#allocation25 + $0x14] sm:$0xf]
    %v6733 = vld [vmem:[#allocation25 + $0x18] sm:$0xf]
    %v6734 = vld [vmem:[#allocation25 + $0x1c] sm:$0xf]
    %v6735 = vld [vmem:[#allocation25 + $0x20] sm:$0xf]
    %v6736 = vld [vmem:[#allocation25 + $0x24] sm:$0xf]
    %v6737 = vld [vmem:[#allocation25 + $0x28] sm:$0xf]
    %v6738 = vld [vmem:[#allocation25 + $0x2c] sm:$0xf]
    %v6739 = vld [vmem:[#allocation25 + $0x30] sm:$0xf]
    %v6740 = vld [vmem:[#allocation25 + $0x34] sm:$0xf]
    %v6741 = vld [vmem:[#allocation25 + $0x38] sm:$0xf]
    %v6742 = vld [vmem:[#allocation25 + $0x3c] sm:$0xf]
    %v6743 = vld [vmem:[#allocation26] sm:$0x1]
    %v6745 = vlaneseq
    %v6746 = vshrl.u32 %v6745, 7
    %v6747 = vsub.s32 0, %v6746
    %v6748 = vrot.slane %v6743, %v6747
    %v6766 = vunpack.c.l.b16 %v6727
    %v6767 = vunpack.c.l.b16 %v6728
    %v6768 = vunpack.c.l.b16 %v6729
    %v6769 = vunpack.c.l.b16 %v6730
    %v6770 = vunpack.c.l.b16 %v6731
    %v6771 = vunpack.c.l.b16 %v6732
    %v6772 = vunpack.c.l.b16 %v6733
    %v6773 = vunpack.c.l.b16 %v6734
    %v6774 = vunpack.c.l.b16 %v6735
    %v6775 = vunpack.c.l.b16 %v6736
    %v6776 = vunpack.c.l.b16 %v6737
    %v6777 = vunpack.c.l.b16 %v6738
    %v6778 = vunpack.c.l.b16 %v6739
    %v6779 = vunpack.c.l.b16 %v6740
    %v6780 = vunpack.c.l.b16 %v6741
    %v6781 = vunpack.c.l.b16 %v6742
    %v6782 = vpack.c.b16 %v6767, %v6766
    %v6783 = vpack.c.b16 %v6769, %v6768
    %v6784 = vpack.c.b16 %v6771, %v6770
    %v6785 = vpack.c.b16 %v6773, %v6772
    %v6786 = vpack.c.b16 %v6775, %v6774
    %v6787 = vpack.c.b16 %v6777, %v6776
    %v6788 = vpack.c.b16 %v6779, %v6778
    %v6789 = vpack.c.b16 %v6781, %v6780
    %6798 = vmatprep.subr.bf16.mxu0 0
    %6799 = vmatpush1.bf16.msra.mxu0 %v6789
    %6800 = vmatprep.subr.bf16.mxu0 0
    %6801 = vmatpush1.bf16.msra.mxu0 %v6788
    %6802 = vmatprep.subr.bf16.mxu0 0
    %6803 = vmatpush1.bf16.msra.mxu0 %v6787
    %6804 = vmatprep.subr.bf16.mxu0 0
    %6805 = vmatpush1.bf16.msra.mxu0 %v6786
    %6806 = vmatprep.subr.bf16.mxu0 0
    %6807 = vmatpush1.bf16.msra.mxu0 %v6785
    %6808 = vmatprep.subr.bf16.mxu0 0
    %6809 = vmatpush1.bf16.msra.mxu0 %v6784
    %6810 = vmatprep.subr.bf16.mxu0 0
    %6811 = vmatpush1.bf16.msra.mxu0 %v6783
    %6812 = vmatprep.subr.bf16.mxu0 0
    %6813 = vmatpush1.bf16.msra.mxu0 %v6782
    %6814 = vmatprep.subr.bf16.mxu0 0
    %6815 = vmatpush2.bf16.msra.mxu0 0
    %6816 = vmatprep.subr.bf16.mxu0 0
    %6817 = vmatpush2.bf16.msra.mxu0 0
    %6818 = vmatprep.subr.bf16.mxu0 0
    %6819 = vmatpush2.bf16.msra.mxu0 0
    %6820 = vmatprep.subr.bf16.mxu0 0
    %6821 = vmatpush2.bf16.msra.mxu0 0
    %6822 = vmatprep.subr.bf16.mxu0 0
    %6823 = vmatpush2.bf16.msra.mxu0 0
    %6824 = vmatprep.subr.bf16.mxu0 0
    %6825 = vmatpush2.bf16.msra.mxu0 0
    %6826 = vmatprep.subr.bf16.mxu0 0
    %6827 = vmatpush2.bf16.msra.mxu0 0
    %6828 = vmatprep.subr.bf16.mxu0 0
    %6829 = vmatpush2.bf16.msra.mxu0 0
    %6830 = vmatprep.mubr.bf16.mxu0 0
    %6831 = vmatmul.mubr.bf16.gmra.mxu0 %v6726
    %v6832 = vpop.f32.mrf.mxu0
    %v6833 = vadd.f32 %v6748, %v6832
    %v6834 = vpop.f32.mrf.mxu0
    %v6835 = vpop.f32.mrf.mxu0
    %v6836 = vadd.f32 %v6748, %v6835
    %v6837 = vpop.f32.mrf.mxu0
    %6838 = vdwg.mxu0
    %v6839 = vmul.f32 %v6833, 0.5
    %v6840 = vmul.f32 %v6836, 0.5
    %v6841 = vmul.f32 %v6833, 0.044715
    %v6842 = vmul.f32 %v6836, 0.044715
    %v6843 = vmul.f32 %v6841, %v6833
    %v6844 = vmul.f32 %v6842, %v6836
    %v6845 = vmul.f32 %v6843, %v6833
    %v6846 = vmul.f32 %v6844, %v6836
    %v6847 = vadd.f32 %v6833, %v6845
    %v6848 = vadd.f32 %v6836, %v6846
    %v6849 = vmul.f32 %v6847, 0.7978846
    %v6850 = vmul.f32 %v6848, 0.7978846
    %v6851 = vtanh.pop %v6849
    %v6852 = vtanh.pop %v6850
    %v6853 = vadd.f32 %v6851, 1.0
    %v6854 = vadd.f32 %v6852, 1.0
    %v6855 = vmul.f32 %v6839, %v6853
    %v6856 = vmul.f32 %v6840, %v6854
    %v6857 = vpack.c.bf16 %v6856, %v6855
    %v6858 = vld [vmem:[#allocation28] sm:$0xf]
    %v6859 = vld [vmem:[#allocation28 + $0x4] sm:$0xf]
    %v6860 = vld [vmem:[#allocation28 + $0x8] sm:$0xf]
    %v6861 = vld [vmem:[#allocation28 + $0xc] sm:$0xf]
    %v6862 = vld [vmem:[#allocation28 + $0x10] sm:$0xf]
    %v6863 = vld [vmem:[#allocation28 + $0x14] sm:$0xf]
    %v6864 = vld [vmem:[#allocation28 + $0x18] sm:$0xf]
    %v6865 = vld [vmem:[#allocation28 + $0x1c] sm:$0xf]
    %v6866 = vld [vmem:[#allocation28 + $0x20] sm:$0xf]
    %v6867 = vld [vmem:[#allocation28 + $0x24] sm:$0xf]
    %v6868 = vld [vmem:[#allocation28 + $0x28] sm:$0xf]
    %v6869 = vld [vmem:[#allocation28 + $0x2c] sm:$0xf]
    %v6870 = vld [vmem:[#allocation28 + $0x30] sm:$0xf]
    %v6871 = vld [vmem:[#allocation28 + $0x34] sm:$0xf]
    %v6872 = vld [vmem:[#allocation28 + $0x38] sm:$0xf]
    %v6873 = vld [vmem:[#allocation28 + $0x3c] sm:$0xf]
    %v6874 = vld [vmem:[#allocation29] sm:$0x1]
    %v6876 = vlaneseq
    %v6877 = vshrl.u32 %v6876, 7
    %v6878 = vsub.s32 0, %v6877
    %v6879 = vrot.slane %v6874, %v6878
    %v6897 = vunpack.c.l.b16 %v6858
    %v6898 = vunpack.c.l.b16 %v6859
    %v6899 = vunpack.c.l.b16 %v6860
    %v6900 = vunpack.c.l.b16 %v6861
    %v6901 = vunpack.c.l.b16 %v6862
    %v6902 = vunpack.c.l.b16 %v6863
    %v6903 = vunpack.c.l.b16 %v6864
    %v6904 = vunpack.c.l.b16 %v6865
    %v6905 = vunpack.c.l.b16 %v6866
    %v6906 = vunpack.c.l.b16 %v6867
    %v6907 = vunpack.c.l.b16 %v6868
    %v6908 = vunpack.c.l.b16 %v6869
    %v6909 = vunpack.c.l.b16 %v6870
    %v6910 = vunpack.c.l.b16 %v6871
    %v6911 = vunpack.c.l.b16 %v6872
    %v6912 = vunpack.c.l.b16 %v6873
    %v6913 = vpack.c.b16 %v6898, %v6897
    %v6914 = vpack.c.b16 %v6900, %v6899
    %v6915 = vpack.c.b16 %v6902, %v6901
    %v6916 = vpack.c.b16 %v6904, %v6903
    %v6917 = vpack.c.b16 %v6906, %v6905
    %v6918 = vpack.c.b16 %v6908, %v6907
    %v6919 = vpack.c.b16 %v6910, %v6909
    %v6920 = vpack.c.b16 %v6912, %v6911
    %6929 = vmatprep.subr.bf16.mxu0 0
    %6930 = vmatpush1.bf16.msra.mxu0 %v6920
    %6931 = vmatprep.subr.bf16.mxu0 0
    %6932 = vmatpush1.bf16.msra.mxu0 %v6919
    %6933 = vmatprep.subr.bf16.mxu0 0
    %6934 = vmatpush1.bf16.msra.mxu0 %v6918
    %6935 = vmatprep.subr.bf16.mxu0 0
    %6936 = vmatpush1.bf16.msra.mxu0 %v6917
    %6937 = vmatprep.subr.bf16.mxu0 0
    %6938 = vmatpush1.bf16.msra.mxu0 %v6916
    %6939 = vmatprep.subr.bf16.mxu0 0
    %6940 = vmatpush1.bf16.msra.mxu0 %v6915
    %6941 = vmatprep.subr.bf16.mxu0 0
    %6942 = vmatpush1.bf16.msra.mxu0 %v6914
    %6943 = vmatprep.subr.bf16.mxu0 0
    %6944 = vmatpush1.bf16.msra.mxu0 %v6913
    %6945 = vmatprep.subr.bf16.mxu0 0
    %6946 = vmatpush2.bf16.msra.mxu0 0
    %6947 = vmatprep.subr.bf16.mxu0 0
    %6948 = vmatpush2.bf16.msra.mxu0 0
    %6949 = vmatprep.subr.bf16.mxu0 0
    %6950 = vmatpush2.bf16.msra.mxu0 0
    %6951 = vmatprep.subr.bf16.mxu0 0
    %6952 = vmatpush2.bf16.msra.mxu0 0
    %6953 = vmatprep.subr.bf16.mxu0 0
    %6954 = vmatpush2.bf16.msra.mxu0 0
    %6955 = vmatprep.subr.bf16.mxu0 0
    %6956 = vmatpush2.bf16.msra.mxu0 0
    %6957 = vmatprep.subr.bf16.mxu0 0
    %6958 = vmatpush2.bf16.msra.mxu0 0
    %6959 = vmatprep.subr.bf16.mxu0 0
    %6960 = vmatpush2.bf16.msra.mxu0 0
    %6961 = vmatprep.mubr.bf16.mxu0 0
    %6962 = vmatmul.mubr.bf16.gmra.mxu0 %v6857
    %v6963 = vpop.f32.mrf.mxu0
    %v6964 = vadd.f32 %v6879, %v6963
    %v6965 = vpop.f32.mrf.mxu0
    %v6966 = vpop.f32.mrf.mxu0
    %v6967 = vadd.f32 %v6879, %v6966
    %v6968 = vpop.f32.mrf.mxu0
    %6969 = vdwg.mxu0
    %v6970 = vadd.f32 %v6964, %v6684
    %v6971 = vadd.f32 %v6967, %v6685
    %s6972 = scalar_lea.vmem [#allocation17], 1
    %v6973 = vld [vmem:[%s6972] sm:$0x1]
    %s6974 = scalar_lea.vmem [#allocation19], 1
    %v6975 = vld [vmem:[%s6974] sm:$0x1]
    %6976 = vadd.xlane.f32.xlu0 %v6970
    %v6977 = vpop.xlane.xlu0 %6976
    %6978 = vadd.xlane.f32.xlu0 %v6971
    %v6979 = vpop.xlane.xlu0 %6978
    %v6980 = vmul.f32 %v6977, %v6162
    %v6981 = vmul.f32 %v6979, %v6162
    %v6982 = vsub.f32 %v6970, %v6980
    %v6983 = vsub.f32 %v6971, %v6981
    %v6984 = vmul.f32 %v6982, %v6982
    %v6985 = vmul.f32 %v6983, %v6983
    %6986 = vadd.xlane.f32.xlu0 %v6984
    %v6987 = vpop.xlane.xlu0 %6986
    %6988 = vadd.xlane.f32.xlu0 %v6985
    %v6989 = vpop.xlane.xlu0 %6988
    %v6990 = vmul.f32 %v6987, %v6162
    %v6991 = vmul.f32 %v6989, %v6162
    %v6992 = vadd.f32 %v6990, 1e-05
    %v6993 = vadd.f32 %v6991, 1e-05
    %v6994 = vrsqrt.pop %v6992
    %v6995 = vrsqrt.pop %v6993
    %v6996 = vmul.f32 %v6982, %v6994
    %v6997 = vmul.f32 %v6983, %v6995
    %v6999 = vlaneseq
    %v7000 = vshrl.u32 %v6999, 7
    %v7001 = vsub.s32 0, %v7000
    %v7002 = vrot.slane %v6973, %v7001
    %v7004 = vmul.f32 %v6996, %v7002
    %v7005 = vmul.f32 %v6997, %v7002
    %v7007 = vlaneseq
    %v7008 = vshrl.u32 %v7007, 7
    %v7009 = vsub.s32 0, %v7008
    %v7010 = vrot.slane %v6975, %v7009
    %v7012 = vadd.f32 %v7004, %v7010
    %v7013 = vadd.f32 %v7005, %v7010
    %v7014 = vpack.c.bf16 %v7013, %v7012
    %s7015 = scalar_lea.vmem %s15, 128
    %v7016 = vld [vmem:[%s7015] sm:$0xff]
    %v7017 = vld [vmem:[%s7015 + $0x8] sm:$0xff]
    %v7018 = vld [vmem:[%s7015 + $0x10] sm:$0xff]
    %v7019 = vld [vmem:[%s7015 + $0x18] sm:$0xff]
    %v7020 = vld [vmem:[%s7015 + $0x20] sm:$0xff]
    %v7021 = vld [vmem:[%s7015 + $0x28] sm:$0xff]
    %v7022 = vld [vmem:[%s7015 + $0x30] sm:$0xff]
    %v7023 = vld [vmem:[%s7015 + $0x38] sm:$0xff]
    %v7024 = vld [vmem:[%s7015 + $0x40] sm:$0xff]
    %v7025 = vld [vmem:[%s7015 + $0x48] sm:$0xff]
    %v7026 = vld [vmem:[%s7015 + $0x50] sm:$0xff]
    %v7027 = vld [vmem:[%s7015 + $0x58] sm:$0xff]
    %v7028 = vld [vmem:[%s7015 + $0x60] sm:$0xff]
    %v7029 = vld [vmem:[%s7015 + $0x68] sm:$0xff]
    %v7030 = vld [vmem:[%s7015 + $0x70] sm:$0xff]
    %v7031 = vld [vmem:[%s7015 + $0x78] sm:$0xff]
    %v7048 = vunpack.c.l.b16 %v7016
    %v7049 = vunpack.c.h.b16 %v7016
    %v7050 = vunpack.c.l.b16 %v7017
    %v7051 = vunpack.c.h.b16 %v7017
    %v7052 = vunpack.c.l.b16 %v7018
    %v7053 = vunpack.c.h.b16 %v7018
    %v7054 = vunpack.c.l.b16 %v7019
    %v7055 = vunpack.c.h.b16 %v7019
    %v7056 = vunpack.c.l.b16 %v7020
    %v7057 = vunpack.c.h.b16 %v7020
    %v7058 = vunpack.c.l.b16 %v7021
    %v7059 = vunpack.c.h.b16 %v7021
    %v7060 = vunpack.c.l.b16 %v7022
    %v7061 = vunpack.c.h.b16 %v7022
    %v7062 = vunpack.c.l.b16 %v7023
    %v7063 = vunpack.c.h.b16 %v7023
    %v7064 = vunpack.c.l.b16 %v7024
    %v7065 = vunpack.c.h.b16 %v7024
    %v7066 = vunpack.c.l.b16 %v7025
    %v7067 = vunpack.c.h.b16 %v7025
    %v7068 = vunpack.c.l.b16 %v7026
    %v7069 = vunpack.c.h.b16 %v7026
    %v7070 = vunpack.c.l.b16 %v7027
    %v7071 = vunpack.c.h.b16 %v7027
    %v7072 = vunpack.c.l.b16 %v7028
    %v7073 = vunpack.c.h.b16 %v7028
    %v7074 = vunpack.c.l.b16 %v7029
    %v7075 = vunpack.c.h.b16 %v7029
    %v7076 = vunpack.c.l.b16 %v7030
    %v7077 = vunpack.c.h.b16 %v7030
    %v7078 = vunpack.c.l.b16 %v7031
    %v7079 = vunpack.c.h.b16 %v7031
    %v7080 = vpack.c.b16 %v7050, %v7048
    %v7081 = vpack.c.b16 %v7051, %v7049
    %v7082 = vpack.c.b16 %v7054, %v7052
    %v7083 = vpack.c.b16 %v7055, %v7053
    %v7084 = vpack.c.b16 %v7058, %v7056
    %v7085 = vpack.c.b16 %v7059, %v7057
    %v7086 = vpack.c.b16 %v7062, %v7060
    %v7087 = vpack.c.b16 %v7063, %v7061
    %v7088 = vpack.c.b16 %v7066, %v7064
    %v7089 = vpack.c.b16 %v7067, %v7065
    %v7090 = vpack.c.b16 %v7070, %v7068
    %v7091 = vpack.c.b16 %v7071, %v7069
    %v7092 = vpack.c.b16 %v7074, %v7072
    %v7093 = vpack.c.b16 %v7075, %v7073
    %v7094 = vpack.c.b16 %v7078, %v7076
    %v7095 = vpack.c.b16 %v7079, %v7077
    %7112 = vmatprep.subr.bf16.mxu0 %v7095
    %7113 = vmatpush1.bf16.msra.mxu0 %v7094
    %7114 = vmatprep.subr.bf16.mxu0 %v7093
    %7115 = vmatpush1.bf16.msra.mxu0 %v7092
    %7116 = vmatprep.subr.bf16.mxu0 %v7091
    %7117 = vmatpush1.bf16.msra.mxu0 %v7090
    %7118 = vmatprep.subr.bf16.mxu0 %v7089
    %7119 = vmatpush1.bf16.msra.mxu0 %v7088
    %7120 = vmatprep.subr.bf16.mxu0 %v7087
    %7121 = vmatpush1.bf16.msra.mxu0 %v7086
    %7122 = vmatprep.subr.bf16.mxu0 %v7085
    %7123 = vmatpush1.bf16.msra.mxu0 %v7084
    %7124 = vmatprep.subr.bf16.mxu0 %v7083
    %7125 = vmatpush1.bf16.msra.mxu0 %v7082
    %7126 = vmatprep.subr.bf16.mxu0 %v7081
    %7127 = vmatpush1.bf16.msra.mxu0 %v7080
    %7128 = vmatprep.subr.bf16.mxu0 0
    %7129 = vmatpush2.bf16.msra.mxu0 0
    %7130 = vmatprep.subr.bf16.mxu0 0
    %7131 = vmatpush2.bf16.msra.mxu0 0
    %7132 = vmatprep.subr.bf16.mxu0 0
    %7133 = vmatpush2.bf16.msra.mxu0 0
    %7134 = vmatprep.subr.bf16.mxu0 0
    %7135 = vmatpush2.bf16.msra.mxu0 0
    %7136 = vmatprep.subr.bf16.mxu0 0
    %7137 = vmatpush2.bf16.msra.mxu0 0
    %7138 = vmatprep.subr.bf16.mxu0 0
    %7139 = vmatpush2.bf16.msra.mxu0 0
    %7140 = vmatprep.subr.bf16.mxu0 0
    %7141 = vmatpush2.bf16.msra.mxu0 0
    %7142 = vmatprep.subr.bf16.mxu0 0
    %7143 = vmatpush2.bf16.msra.mxu0 0
    %7144 = vmatprep.mubr.bf16.mxu0 0
    %7145 = vmatmul.mubr.bf16.gmra.mxu0 %v7014
    %v7146 = vpop.f32.mrf.mxu0
    %v7147 = vadd.f32 0.0, %v7146
    %v7148 = vpop.f32.mrf.mxu0
    %v7149 = vadd.f32 0.0, %v7148
    %v7150 = vpop.f32.mrf.mxu0
    %v7151 = vadd.f32 0.0, %v7150
    %v7152 = vpop.f32.mrf.mxu0
    %v7153 = vadd.f32 0.0, %v7152
    %7154 = vdwg.mxu0
    %v7155 = vpack.c.bf16 %v7151, %v7147
    %v7156 = vpack.c.bf16 %v7153, %v7149
    %7158 = vrot.lane.b32.xlu0 %v7155, 64
    %v7159 = vpop.permute.xlu0 %7158
    %v7161 = vsel %vm6342, %v7155, 0
    %v7164 = vsel %vm6342, %v7159, 0
    %7166 = vmatprep.subr.bf16.mxu0 0
    %7167 = vmatpush1.bf16.xpose.msra.mxu0 0
    %7168 = vmatprep.subr.bf16.mxu0 0
    %7169 = vmatpush1.bf16.xpose.msra.mxu0 0
    %7170 = vmatprep.subr.bf16.mxu0 0
    %7171 = vmatpush1.bf16.xpose.msra.mxu0 0
    %7172 = vmatprep.subr.bf16.mxu0 0
    %7173 = vmatpush1.bf16.xpose.msra.mxu0 0
    %7174 = vmatprep.subr.bf16.mxu0 0
    %7175 = vmatpush1.bf16.xpose.msra.mxu0 0
    %7176 = vmatprep.subr.bf16.mxu0 0
    %7177 = vmatpush1.bf16.xpose.msra.mxu0 0
    %7178 = vmatprep.subr.bf16.mxu0 0
    %7179 = vmatpush1.bf16.xpose.msra.mxu0 0
    %7180 = vmatprep.subr.bf16.mxu0 0
    %7181 = vmatpush1.bf16.xpose.msra.mxu0 %v7164
    %7182 = vmatprep.subr.bf16.mxu0 0
    %7183 = vmatpush2.bf16.xpose.msra.mxu0 0
    %7184 = vmatprep.subr.bf16.mxu0 0
    %7185 = vmatpush2.bf16.xpose.msra.mxu0 0
    %7186 = vmatprep.subr.bf16.mxu0 0
    %7187 = vmatpush2.bf16.xpose.msra.mxu0 0
    %7188 = vmatprep.subr.bf16.mxu0 0
    %7189 = vmatpush2.bf16.xpose.msra.mxu0 0
    %7190 = vmatprep.subr.bf16.mxu0 0
    %7191 = vmatpush2.bf16.xpose.msra.mxu0 0
    %7192 = vmatprep.subr.bf16.mxu0 0
    %7193 = vmatpush2.bf16.xpose.msra.mxu0 0
    %7194 = vmatprep.subr.bf16.mxu0 0
    %7195 = vmatpush2.bf16.xpose.msra.mxu0 0
    %7196 = vmatprep.subr.bf16.mxu0 0
    %7197 = vmatpush2.bf16.xpose.msra.mxu0 0
    %7198 = vmatprep.mubr.bf16.mxu0 0
    %7199 = vmatmul.mubr.bf16.gmra.mxu0 %v7161
    %v7200 = vpop.f32.mrf.mxu0
    %v7201 = vadd.f32 0.0, %v7200
    %v7202 = vpop.f32.mrf.mxu0
    %v7203 = vpop.f32.mrf.mxu0
    %v7204 = vadd.f32 0.0, %v7203
    %v7205 = vpop.f32.mrf.mxu0
    %7206 = vdwg.mxu0
    %v7207 = vmul.f32 %v7201, 0.17677669
    %v7208 = vmul.f32 %v7204, 0.17677669
    %v7209 = vsel %vm6392, %v7207, -inf
    %7210 = vmax.xlane.f32.xlu0 %v7209
    %v7211 = vpop.xlane.xlu0 %7210
    %v7212 = vsel %vm6392, %v7208, -inf
    %7213 = vmax.xlane.f32.xlu0 %v7212
    %v7214 = vpop.xlane.xlu0 %7213
    %v7215 = vsub.f32 %v7207, %v7211
    %v7216 = vsub.f32 %v7208, %v7214
    %v7217 = vmul.f32 %v7215, 1.442695
    %v7218 = vpow.pop %v7217
    %v7219 = vmul.f32 %v7216, 1.442695
    %v7220 = vpow.pop %v7219
    %v7221 = vsel %vm6392, %v7218, 0.0
    %7222 = vadd.xlane.f32.xlu0 %v7221
    %v7223 = vpop.xlane.xlu0 %7222
    %v7224 = vsel %vm6392, %v7220, 0.0
    %7225 = vadd.xlane.f32.xlu0 %v7224
    %v7226 = vpop.xlane.xlu0 %7225
    %v7227 = vrcp.pop %v7223
    %v7228 = vmul.f32 %v7218, %v7227
    %v7229 = vrcp.pop %v7226
    %v7230 = vmul.f32 %v7220, %v7229
    %v7231 = vpack.c.bf16 %v7230, %v7228
    %v7233 = vsel %vm6392, %v7231, 0
    %7235 = vmatprep.subr.bf16.mxu0 0
    %7236 = vmatpush1.bf16.msra.mxu0 0
    %7237 = vmatprep.subr.bf16.mxu0 0
    %7238 = vmatpush1.bf16.msra.mxu0 0
    %7239 = vmatprep.subr.bf16.mxu0 0
    %7240 = vmatpush1.bf16.msra.mxu0 0
    %7241 = vmatprep.subr.bf16.mxu0 0
    %7242 = vmatpush1.bf16.msra.mxu0 0
    %7243 = vmatprep.subr.bf16.mxu0 0
    %7244 = vmatpush1.bf16.msra.mxu0 0
    %7245 = vmatprep.subr.bf16.mxu0 0
    %7246 = vmatpush1.bf16.msra.mxu0 0
    %7247 = vmatprep.subr.bf16.mxu0 0
    %7248 = vmatpush1.bf16.msra.mxu0 0
    %7249 = vmatprep.subr.bf16.mxu0 0
    %7250 = vmatpush1.bf16.msra.mxu0 %v7156
    %7251 = vmatprep.subr.bf16.mxu0 0
    %7252 = vmatpush2.bf16.msra.mxu0 0
    %7253 = vmatprep.subr.bf16.mxu0 0
    %7254 = vmatpush2.bf16.msra.mxu0 0
    %7255 = vmatprep.subr.bf16.mxu0 0
    %7256 = vmatpush2.bf16.msra.mxu0 0
    %7257 = vmatprep.subr.bf16.mxu0 0
    %7258 = vmatpush2.bf16.msra.mxu0 0
    %7259 = vmatprep.subr.bf16.mxu0 0
    %7260 = vmatpush2.bf16.msra.mxu0 0
    %7261 = vmatprep.subr.bf16.mxu0 0
    %7262 = vmatpush2.bf16.msra.mxu0 0
    %7263 = vmatprep.subr.bf16.mxu0 0
    %7264 = vmatpush2.bf16.msra.mxu0 0
    %7265 = vmatprep.subr.bf16.mxu0 0
    %7266 = vmatpush2.bf16.msra.mxu0 0
    %7267 = vmatprep.mubr.bf16.mxu0 0
    %7268 = vmatmul.mubr.bf16.gmra.mxu0 %v7233
    %v7269 = vpop.f32.mrf.mxu0
    %v7270 = vadd.f32 0.0, %v7269
    %v7271 = vpop.f32.mrf.mxu0
    %v7272 = vpop.f32.mrf.mxu0
    %v7273 = vadd.f32 0.0, %v7272
    %v7274 = vpop.f32.mrf.mxu0
    %7275 = vdwg.mxu0
    %7276 = vst.msk [vmem:[#allocation4] sm:$0xff] %vm6342, %v7270
    %7277 = vst.msk [vmem:[#allocation4 + $0x8] sm:$0xff] %vm6342, %v7273
    %7278 = vrot.lane.b32.xlu0 %v7155, 96
    %v7279 = vpop.permute.xlu0 %7278
    %7280 = vrot.lane.b32.xlu0 %v7155, 32
    %v7281 = vpop.permute.xlu0 %7280
    %v7283 = vsel %vm6342, %v7279, 0
    %v7286 = vsel %vm6342, %v7281, 0
    %7288 = vmatprep.subr.bf16.mxu0 0
    %7289 = vmatpush1.bf16.xpose.msra.mxu0 0
    %7290 = vmatprep.subr.bf16.mxu0 0
    %7291 = vmatpush1.bf16.xpose.msra.mxu0 0
    %7292 = vmatprep.subr.bf16.mxu0 0
    %7293 = vmatpush1.bf16.xpose.msra.mxu0 0
    %7294 = vmatprep.subr.bf16.mxu0 0
    %7295 = vmatpush1.bf16.xpose.msra.mxu0 0
    %7296 = vmatprep.subr.bf16.mxu0 0
    %7297 = vmatpush1.bf16.xpose.msra.mxu0 0
    %7298 = vmatprep.subr.bf16.mxu0 0
    %7299 = vmatpush1.bf16.xpose.msra.mxu0 0
    %7300 = vmatprep.subr.bf16.mxu0 0
    %7301 = vmatpush1.bf16.xpose.msra.mxu0 0
    %7302 = vmatprep.subr.bf16.mxu0 0
    %7303 = vmatpush1.bf16.xpose.msra.mxu0 %v7286
    %7304 = vmatprep.subr.bf16.mxu0 0
    %7305 = vmatpush2.bf16.xpose.msra.mxu0 0
    %7306 = vmatprep.subr.bf16.mxu0 0
    %7307 = vmatpush2.bf16.xpose.msra.mxu0 0
    %7308 = vmatprep.subr.bf16.mxu0 0
    %7309 = vmatpush2.bf16.xpose.msra.mxu0 0
    %7310 = vmatprep.subr.bf16.mxu0 0
    %7311 = vmatpush2.bf16.xpose.msra.mxu0 0
    %7312 = vmatprep.subr.bf16.mxu0 0
    %7313 = vmatpush2.bf16.xpose.msra.mxu0 0
    %7314 = vmatprep.subr.bf16.mxu0 0
    %7315 = vmatpush2.bf16.xpose.msra.mxu0 0
    %7316 = vmatprep.subr.bf16.mxu0 0
    %7317 = vmatpush2.bf16.xpose.msra.mxu0 0
    %7318 = vmatprep.subr.bf16.mxu0 0
    %7319 = vmatpush2.bf16.xpose.msra.mxu0 0
    %7320 = vmatprep.mubr.bf16.mxu0 0
    %7321 = vmatmul.mubr.bf16.gmra.mxu0 %v7283
    %v7322 = vpop.f32.mrf.mxu0
    %v7323 = vadd.f32 0.0, %v7322
    %v7324 = vpop.f32.mrf.mxu0
    %v7325 = vpop.f32.mrf.mxu0
    %v7326 = vadd.f32 0.0, %v7325
    %v7327 = vpop.f32.mrf.mxu0
    %7328 = vdwg.mxu0
    %v7329 = vmul.f32 %v7323, 0.17677669
    %v7330 = vmul.f32 %v7326, 0.17677669
    %v7331 = vsel %vm6392, %v7329, -inf
    %7332 = vmax.xlane.f32.xlu0 %v7331
    %v7333 = vpop.xlane.xlu0 %7332
    %v7334 = vsel %vm6392, %v7330, -inf
    %7335 = vmax.xlane.f32.xlu0 %v7334
    %v7336 = vpop.xlane.xlu0 %7335
    %v7337 = vsub.f32 %v7329, %v7333
    %v7338 = vsub.f32 %v7330, %v7336
    %v7339 = vmul.f32 %v7337, 1.442695
    %v7340 = vpow.pop %v7339
    %v7341 = vmul.f32 %v7338, 1.442695
    %v7342 = vpow.pop %v7341
    %v7343 = vsel %vm6392, %v7340, 0.0
    %7344 = vadd.xlane.f32.xlu0 %v7343
    %v7345 = vpop.xlane.xlu0 %7344
    %v7346 = vsel %vm6392, %v7342, 0.0
    %7347 = vadd.xlane.f32.xlu0 %v7346
    %v7348 = vpop.xlane.xlu0 %7347
    %v7349 = vrcp.pop %v7345
    %v7350 = vmul.f32 %v7340, %v7349
    %v7351 = vrcp.pop %v7348
    %v7352 = vmul.f32 %v7342, %v7351
    %v7353 = vpack.c.bf16 %v7352, %v7350
    %7355 = vrot.lane.b32.xlu0 %v7156, 96
    %v7356 = vpop.permute.xlu0 %7355
    %v7359 = vsel %vm6392, %v7353, 0
    %7361 = vmatprep.subr.bf16.mxu0 0
    %7362 = vmatpush1.bf16.msra.mxu0 0
    %7363 = vmatprep.subr.bf16.mxu0 0
    %7364 = vmatpush1.bf16.msra.mxu0 0
    %7365 = vmatprep.subr.bf16.mxu0 0
    %7366 = vmatpush1.bf16.msra.mxu0 0
    %7367 = vmatprep.subr.bf16.mxu0 0
    %7368 = vmatpush1.bf16.msra.mxu0 0
    %7369 = vmatprep.subr.bf16.mxu0 0
    %7370 = vmatpush1.bf16.msra.mxu0 0
    %7371 = vmatprep.subr.bf16.mxu0 0
    %7372 = vmatpush1.bf16.msra.mxu0 0
    %7373 = vmatprep.subr.bf16.mxu0 0
    %7374 = vmatpush1.bf16.msra.mxu0 0
    %7375 = vmatprep.subr.bf16.mxu0 0
    %7376 = vmatpush1.bf16.msra.mxu0 %v7356
    %7377 = vmatprep.subr.bf16.mxu0 0
    %7378 = vmatpush2.bf16.msra.mxu0 0
    %7379 = vmatprep.subr.bf16.mxu0 0
    %7380 = vmatpush2.bf16.msra.mxu0 0
    %7381 = vmatprep.subr.bf16.mxu0 0
    %7382 = vmatpush2.bf16.msra.mxu0 0
    %7383 = vmatprep.subr.bf16.mxu0 0
    %7384 = vmatpush2.bf16.msra.mxu0 0
    %7385 = vmatprep.subr.bf16.mxu0 0
    %7386 = vmatpush2.bf16.msra.mxu0 0
    %7387 = vmatprep.subr.bf16.mxu0 0
    %7388 = vmatpush2.bf16.msra.mxu0 0
    %7389 = vmatprep.subr.bf16.mxu0 0
    %7390 = vmatpush2.bf16.msra.mxu0 0
    %7391 = vmatprep.subr.bf16.mxu0 0
    %7392 = vmatpush2.bf16.msra.mxu0 0
    %7393 = vmatprep.mubr.bf16.mxu0 0
    %7394 = vmatmul.mubr.bf16.gmra.mxu0 %v7359
    %v7395 = vpop.f32.mrf.mxu0
    %v7396 = vadd.f32 0.0, %v7395
    %v7397 = vpop.f32.mrf.mxu0
    %v7398 = vpop.f32.mrf.mxu0
    %v7399 = vadd.f32 0.0, %v7398
    %v7400 = vpop.f32.mrf.mxu0
    %7401 = vdwg.mxu0
    %7404 = vrot.lane.b32.xlu0 %v7396, 32
    %v7405 = vpop.permute.xlu0 %7404
    %7406 = vrot.lane.b32.xlu0 %v7399, 32
    %v7407 = vpop.permute.xlu0 %7406
    %7410 = vst.msk [vmem:[#allocation4] sm:$0xff] %vm6594, %v7405
    %7411 = vst.msk [vmem:[#allocation4 + $0x8] sm:$0xff] %vm6594, %v7407
    %v7412 = vld [vmem:[#allocation4] sm:$0xff]
    %v7413 = vld [vmem:[#allocation4 + $0x8] sm:$0xff]
    %v7414 = vpack.c.bf16 %v7413, %v7412
    %s7415 = scalar_lea.vmem %s16, 32
    %v7416 = vld [vmem:[%s7415] sm:$0xf]
    %v7417 = vld [vmem:[%s7415 + $0x4] sm:$0xf]
    %v7418 = vld [vmem:[%s7415 + $0x8] sm:$0xf]
    %v7419 = vld [vmem:[%s7415 + $0xc] sm:$0xf]
    %v7420 = vld [vmem:[%s7415 + $0x10] sm:$0xf]
    %v7421 = vld [vmem:[%s7415 + $0x14] sm:$0xf]
    %v7422 = vld [vmem:[%s7415 + $0x18] sm:$0xf]
    %v7423 = vld [vmem:[%s7415 + $0x1c] sm:$0xf]
    %s7424 = scalar_lea.vmem [#allocation20], 1
    %v7425 = vld [vmem:[%s7424] sm:$0x1]
    %v7427 = vlaneseq
    %v7428 = vshrl.u32 %v7427, 7
    %v7429 = vsub.s32 0, %v7428
    %v7430 = vrot.slane %v7425, %v7429
    %v7440 = vunpack.c.l.b16 %v7416
    %v7441 = vunpack.c.l.b16 %v7417
    %v7442 = vunpack.c.l.b16 %v7418
    %v7443 = vunpack.c.l.b16 %v7419
    %v7444 = vunpack.c.l.b16 %v7420
    %v7445 = vunpack.c.l.b16 %v7421
    %v7446 = vunpack.c.l.b16 %v7422
    %v7447 = vunpack.c.l.b16 %v7423
    %v7448 = vpack.c.b16 %v7441, %v7440
    %v7449 = vpack.c.b16 %v7443, %v7442
    %v7450 = vpack.c.b16 %v7445, %v7444
    %v7451 = vpack.c.b16 %v7447, %v7446
    %v7457 = vsel %vm6639, %v7414, 0
    %7459 = vmatprep.subr.bf16.mxu0 0
    %7460 = vmatpush1.bf16.msra.mxu0 0
    %7461 = vmatprep.subr.bf16.mxu0 0
    %7462 = vmatpush1.bf16.msra.mxu0 0
    %7463 = vmatprep.subr.bf16.mxu0 0
    %7464 = vmatpush1.bf16.msra.mxu0 0
    %7465 = vmatprep.subr.bf16.mxu0 0
    %7466 = vmatpush1.bf16.msra.mxu0 0
    %7467 = vmatprep.subr.bf16.mxu0 0
    %7468 = vmatpush1.bf16.msra.mxu0 %v7451
    %7469 = vmatprep.subr.bf16.mxu0 0
    %7470 = vmatpush1.bf16.msra.mxu0 %v7450
    %7471 = vmatprep.subr.bf16.mxu0 0
    %7472 = vmatpush1.bf16.msra.mxu0 %v7449
    %7473 = vmatprep.subr.bf16.mxu0 0
    %7474 = vmatpush1.bf16.msra.mxu0 %v7448
    %7475 = vmatprep.subr.bf16.mxu0 0
    %7476 = vmatpush2.bf16.msra.mxu0 0
    %7477 = vmatprep.subr.bf16.mxu0 0
    %7478 = vmatpush2.bf16.msra.mxu0 0
    %7479 = vmatprep.subr.bf16.mxu0 0
    %7480 = vmatpush2.bf16.msra.mxu0 0
    %7481 = vmatprep.subr.bf16.mxu0 0
    %7482 = vmatpush2.bf16.msra.mxu0 0
    %7483 = vmatprep.subr.bf16.mxu0 0
    %7484 = vmatpush2.bf16.msra.mxu0 0
    %7485 = vmatprep.subr.bf16.mxu0 0
    %7486 = vmatpush2.bf16.msra.mxu0 0
    %7487 = vmatprep.subr.bf16.mxu0 0
    %7488 = vmatpush2.bf16.msra.mxu0 0
    %7489 = vmatprep.subr.bf16.mxu0 0
    %7490 = vmatpush2.bf16.msra.mxu0 0
    %7491 = vmatprep.mubr.bf16.mxu0 0
    %7492 = vmatmul.mubr.bf16.gmra.mxu0 %v7457
    %v7493 = vpop.f32.mrf.mxu0
    %v7494 = vadd.f32 %v7430, %v7493
    %v7495 = vpop.f32.mrf.mxu0
    %v7496 = vpop.f32.mrf.mxu0
    %v7497 = vadd.f32 %v7430, %v7496
    %v7498 = vpop.f32.mrf.mxu0
    %7499 = vdwg.mxu0
    %v7500 = vadd.f32 %v7494, %v6970
    %v7501 = vadd.f32 %v7497, %v6971
    %s7502 = scalar_lea.vmem [#allocation22], 1
    %v7503 = vld [vmem:[%s7502] sm:$0x1]
    %s7504 = scalar_lea.vmem [#allocation23], 1
    %v7505 = vld [vmem:[%s7504] sm:$0x1]
    %7506 = vadd.xlane.f32.xlu0 %v7500
    %v7507 = vpop.xlane.xlu0 %7506
    %7508 = vadd.xlane.f32.xlu0 %v7501
    %v7509 = vpop.xlane.xlu0 %7508
    %v7510 = vmul.f32 %v7507, %v6162
    %v7511 = vmul.f32 %v7509, %v6162
    %v7512 = vsub.f32 %v7500, %v7510
    %v7513 = vsub.f32 %v7501, %v7511
    %v7514 = vmul.f32 %v7512, %v7512
    %v7515 = vmul.f32 %v7513, %v7513
    %7516 = vadd.xlane.f32.xlu0 %v7514
    %v7517 = vpop.xlane.xlu0 %7516
    %7518 = vadd.xlane.f32.xlu0 %v7515
    %v7519 = vpop.xlane.xlu0 %7518
    %v7520 = vmul.f32 %v7517, %v6162
    %v7521 = vmul.f32 %v7519, %v6162
    %v7522 = vadd.f32 %v7520, 1e-05
    %v7523 = vadd.f32 %v7521, 1e-05
    %v7524 = vrsqrt.pop %v7522
    %v7525 = vrsqrt.pop %v7523
    %v7526 = vmul.f32 %v7512, %v7524
    %v7527 = vmul.f32 %v7513, %v7525
    %v7529 = vlaneseq
    %v7530 = vshrl.u32 %v7529, 7
    %v7531 = vsub.s32 0, %v7530
    %v7532 = vrot.slane %v7503, %v7531
    %v7534 = vmul.f32 %v7526, %v7532
    %v7535 = vmul.f32 %v7527, %v7532
    %v7537 = vlaneseq
    %v7538 = vshrl.u32 %v7537, 7
    %v7539 = vsub.s32 0, %v7538
    %v7540 = vrot.slane %v7505, %v7539
    %v7542 = vadd.f32 %v7534, %v7540
    %v7543 = vadd.f32 %v7535, %v7540
    %v7544 = vpack.c.bf16 %v7543, %v7542
    %s7545 = scalar_lea.vmem [#allocation25], 64
    %v7546 = vld [vmem:[%s7545] sm:$0xf]
    %v7547 = vld [vmem:[%s7545 + $0x4] sm:$0xf]
    %v7548 = vld [vmem:[%s7545 + $0x8] sm:$0xf]
    %v7549 = vld [vmem:[%s7545 + $0xc] sm:$0xf]
    %v7550 = vld [vmem:[%s7545 + $0x10] sm:$0xf]
    %v7551 = vld [vmem:[%s7545 + $0x14] sm:$0xf]
    %v7552 = vld [vmem:[%s7545 + $0x18] sm:$0xf]
    %v7553 = vld [vmem:[%s7545 + $0x1c] sm:$0xf]
    %v7554 = vld [vmem:[%s7545 + $0x20] sm:$0xf]
    %v7555 = vld [vmem:[%s7545 + $0x24] sm:$0xf]
    %v7556 = vld [vmem:[%s7545 + $0x28] sm:$0xf]
    %v7557 = vld [vmem:[%s7545 + $0x2c] sm:$0xf]
    %v7558 = vld [vmem:[%s7545 + $0x30] sm:$0xf]
    %v7559 = vld [vmem:[%s7545 + $0x34] sm:$0xf]
    %v7560 = vld [vmem:[%s7545 + $0x38] sm:$0xf]
    %v7561 = vld [vmem:[%s7545 + $0x3c] sm:$0xf]
    %s7562 = scalar_lea.vmem [#allocation26], 1
    %v7563 = vld [vmem:[%s7562] sm:$0x1]
    %v7565 = vlaneseq
    %v7566 = vshrl.u32 %v7565, 7
    %v7567 = vsub.s32 0, %v7566
    %v7568 = vrot.slane %v7563, %v7567
    %v7586 = vunpack.c.l.b16 %v7546
    %v7587 = vunpack.c.l.b16 %v7547
    %v7588 = vunpack.c.l.b16 %v7548
    %v7589 = vunpack.c.l.b16 %v7549
    %v7590 = vunpack.c.l.b16 %v7550
    %v7591 = vunpack.c.l.b16 %v7551
    %v7592 = vunpack.c.l.b16 %v7552
    %v7593 = vunpack.c.l.b16 %v7553
    %v7594 = vunpack.c.l.b16 %v7554
    %v7595 = vunpack.c.l.b16 %v7555
    %v7596 = vunpack.c.l.b16 %v7556
    %v7597 = vunpack.c.l.b16 %v7557
    %v7598 = vunpack.c.l.b16 %v7558
    %v7599 = vunpack.c.l.b16 %v7559
    %v7600 = vunpack.c.l.b16 %v7560
    %v7601 = vunpack.c.l.b16 %v7561
    %v7602 = vpack.c.b16 %v7587, %v7586
    %v7603 = vpack.c.b16 %v7589, %v7588
    %v7604 = vpack.c.b16 %v7591, %v7590
    %v7605 = vpack.c.b16 %v7593, %v7592
    %v7606 = vpack.c.b16 %v7595, %v7594
    %v7607 = vpack.c.b16 %v7597, %v7596
    %v7608 = vpack.c.b16 %v7599, %v7598
    %v7609 = vpack.c.b16 %v7601, %v7600
    %7618 = vmatprep.subr.bf16.mxu0 0
    %7619 = vmatpush1.bf16.msra.mxu0 %v7609
    %7620 = vmatprep.subr.bf16.mxu0 0
    %7621 = vmatpush1.bf16.msra.mxu0 %v7608
    %7622 = vmatprep.subr.bf16.mxu0 0
    %7623 = vmatpush1.bf16.msra.mxu0 %v7607
    %7624 = vmatprep.subr.bf16.mxu0 0
    %7625 = vmatpush1.bf16.msra.mxu0 %v7606
    %7626 = vmatprep.subr.bf16.mxu0 0
    %7627 = vmatpush1.bf16.msra.mxu0 %v7605
    %7628 = vmatprep.subr.bf16.mxu0 0
    %7629 = vmatpush1.bf16.msra.mxu0 %v7604
    %7630 = vmatprep.subr.bf16.mxu0 0
    %7631 = vmatpush1.bf16.msra.mxu0 %v7603
    %7632 = vmatprep.subr.bf16.mxu0 0
    %7633 = vmatpush1.bf16.msra.mxu0 %v7602
    %7634 = vmatprep.subr.bf16.mxu0 0
    %7635 = vmatpush2.bf16.msra.mxu0 0
    %7636 = vmatprep.subr.bf16.mxu0 0
    %7637 = vmatpush2.bf16.msra.mxu0 0
    %7638 = vmatprep.subr.bf16.mxu0 0
    %7639 = vmatpush2.bf16.msra.mxu0 0
    %7640 = vmatprep.subr.bf16.mxu0 0
    %7641 = vmatpush2.bf16.msra.mxu0 0
    %7642 = vmatprep.subr.bf16.mxu0 0
    %7643 = vmatpush2.bf16.msra.mxu0 0
    %7644 = vmatprep.subr.bf16.mxu0 0
    %7645 = vmatpush2.bf16.msra.mxu0 0
    %7646 = vmatprep.subr.bf16.mxu0 0
    %7647 = vmatpush2.bf16.msra.mxu0 0
    %7648 = vmatprep.subr.bf16.mxu0 0
    %7649 = vmatpush2.bf16.msra.mxu0 0
    %7650 = vmatprep.mubr.bf16.mxu0 0
    %7651 = vmatmul.mubr.bf16.gmra.mxu0 %v7544
    %v7652 = vpop.f32.mrf.mxu0
    %v7653 = vadd.f32 %v7568, %v7652
    %v7654 = vpop.f32.mrf.mxu0
    %v7655 = vpop.f32.mrf.mxu0
    %v7656 = vadd.f32 %v7568, %v7655
    %v7657 = vpop.f32.mrf.mxu0
    %7658 = vdwg.mxu0
    %v7659 = vmul.f32 %v7653, 0.5
    %v7660 = vmul.f32 %v7656, 0.5
    %v7661 = vmul.f32 %v7653, 0.044715
    %v7662 = vmul.f32 %v7656, 0.044715
    %v7663 = vmul.f32 %v7661, %v7653
    %v7664 = vmul.f32 %v7662, %v7656
    %v7665 = vmul.f32 %v7663, %v7653
    %v7666 = vmul.f32 %v7664, %v7656
    %v7667 = vadd.f32 %v7653, %v7665
    %v7668 = vadd.f32 %v7656, %v7666
    %v7669 = vmul.f32 %v7667, 0.7978846
    %v7670 = vmul.f32 %v7668, 0.7978846
    %v7671 = vtanh.pop %v7669
    %v7672 = vtanh.pop %v7670
    %v7673 = vadd.f32 %v7671, 1.0
    %v7674 = vadd.f32 %v7672, 1.0
    %v7675 = vmul.f32 %v7659, %v7673
    %v7676 = vmul.f32 %v7660, %v7674
    %v7677 = vpack.c.bf16 %v7676, %v7675
    %s7678 = scalar_lea.vmem [#allocation28], 64
    %v7679 = vld [vmem:[%s7678] sm:$0xf]
    %v7680 = vld [vmem:[%s7678 + $0x4] sm:$0xf]
    %v7681 = vld [vmem:[%s7678 + $0x8] sm:$0xf]
    %v7682 = vld [vmem:[%s7678 + $0xc] sm:$0xf]
    %v7683 = vld [vmem:[%s7678 + $0x10] sm:$0xf]
    %v7684 = vld [vmem:[%s7678 + $0x14] sm:$0xf]
    %v7685 = vld [vmem:[%s7678 + $0x18] sm:$0xf]
    %v7686 = vld [vmem:[%s7678 + $0x1c] sm:$0xf]
    %v7687 = vld [vmem:[%s7678 + $0x20] sm:$0xf]
    %v7688 = vld [vmem:[%s7678 + $0x24] sm:$0xf]
    %v7689 = vld [vmem:[%s7678 + $0x28] sm:$0xf]
    %v7690 = vld [vmem:[%s7678 + $0x2c] sm:$0xf]
    %v7691 = vld [vmem:[%s7678 + $0x30] sm:$0xf]
    %v7692 = vld [vmem:[%s7678 + $0x34] sm:$0xf]
    %v7693 = vld [vmem:[%s7678 + $0x38] sm:$0xf]
    %v7694 = vld [vmem:[%s7678 + $0x3c] sm:$0xf]
    %s7695 = scalar_lea.vmem [#allocation29], 1
    %v7696 = vld [vmem:[%s7695] sm:$0x1]
    %v7698 = vlaneseq
    %v7699 = vshrl.u32 %v7698, 7
    %v7700 = vsub.s32 0, %v7699
    %v7701 = vrot.slane %v7696, %v7700
    %v7719 = vunpack.c.l.b16 %v7679
    %v7720 = vunpack.c.l.b16 %v7680
    %v7721 = vunpack.c.l.b16 %v7681
    %v7722 = vunpack.c.l.b16 %v7682
    %v7723 = vunpack.c.l.b16 %v7683
    %v7724 = vunpack.c.l.b16 %v7684
    %v7725 = vunpack.c.l.b16 %v7685
    %v7726 = vunpack.c.l.b16 %v7686
    %v7727 = vunpack.c.l.b16 %v7687
    %v7728 = vunpack.c.l.b16 %v7688
    %v7729 = vunpack.c.l.b16 %v7689
    %v7730 = vunpack.c.l.b16 %v7690
    %v7731 = vunpack.c.l.b16 %v7691
    %v7732 = vunpack.c.l.b16 %v7692
    %v7733 = vunpack.c.l.b16 %v7693
    %v7734 = vunpack.c.l.b16 %v7694
    %v7735 = vpack.c.b16 %v7720, %v7719
    %v7736 = vpack.c.b16 %v7722, %v7721
    %v7737 = vpack.c.b16 %v7724, %v7723
    %v7738 = vpack.c.b16 %v7726, %v7725
    %v7739 = vpack.c.b16 %v7728, %v7727
    %v7740 = vpack.c.b16 %v7730, %v7729
    %v7741 = vpack.c.b16 %v7732, %v7731
    %v7742 = vpack.c.b16 %v7734, %v7733
    %7751 = vmatprep.subr.bf16.mxu0 0
    %7752 = vmatpush1.bf16.msra.mxu0 %v7742
    %7753 = vmatprep.subr.bf16.mxu0 0
    %7754 = vmatpush1.bf16.msra.mxu0 %v7741
    %7755 = vmatprep.subr.bf16.mxu0 0
    %7756 = vmatpush1.bf16.msra.mxu0 %v7740
    %7757 = vmatprep.subr.bf16.mxu0 0
    %7758 = vmatpush1.bf16.msra.mxu0 %v7739
    %7759 = vmatprep.subr.bf16.mxu0 0
    %7760 = vmatpush1.bf16.msra.mxu0 %v7738
    %7761 = vmatprep.subr.bf16.mxu0 0
    %7762 = vmatpush1.bf16.msra.mxu0 %v7737
    %7763 = vmatprep.subr.bf16.mxu0 0
    %7764 = vmatpush1.bf16.msra.mxu0 %v7736
    %7765 = vmatprep.subr.bf16.mxu0 0
    %7766 = vmatpush1.bf16.msra.mxu0 %v7735
    %7767 = vmatprep.subr.bf16.mxu0 0
    %7768 = vmatpush2.bf16.msra.mxu0 0
    %7769 = vmatprep.subr.bf16.mxu0 0
    %7770 = vmatpush2.bf16.msra.mxu0 0
    %7771 = vmatprep.subr.bf16.mxu0 0
    %7772 = vmatpush2.bf16.msra.mxu0 0
    %7773 = vmatprep.subr.bf16.mxu0 0
    %7774 = vmatpush2.bf16.msra.mxu0 0
    %7775 = vmatprep.subr.bf16.mxu0 0
    %7776 = vmatpush2.bf16.msra.mxu0 0
    %7777 = vmatprep.subr.bf16.mxu0 0
    %7778 = vmatpush2.bf16.msra.mxu0 0
    %7779 = vmatprep.subr.bf16.mxu0 0
    %7780 = vmatpush2.bf16.msra.mxu0 0
    %7781 = vmatprep.subr.bf16.mxu0 0
    %7782 = vmatpush2.bf16.msra.mxu0 0
    %7783 = vmatprep.mubr.bf16.mxu0 0
    %7784 = vmatmul.mubr.bf16.gmra.mxu0 %v7677
    %v7785 = vpop.f32.mrf.mxu0
    %v7786 = vadd.f32 %v7701, %v7785
    %v7787 = vpop.f32.mrf.mxu0
    %v7788 = vpop.f32.mrf.mxu0
    %v7789 = vadd.f32 %v7701, %v7788
    %v7790 = vpop.f32.mrf.mxu0
    %7791 = vdwg.mxu0
    %v7792 = vadd.f32 %v7786, %v7500
    %v7793 = vadd.f32 %v7789, %v7501
    %v7794 = vld [vmem:[%s2] sm:$0xff]
    %v7795 = vld [vmem:[%s2 + $0x8] sm:$0xff]
    %v7796 = vsel %vm6392, %v7794, 0.0
    %7797 = vadd.xlane.f32.xlu0 %v7796
    %v7798 = vpop.xlane.xlu0 %7797
    %v7799 = vsel %vm6392, %v7795, 0.0
    %7800 = vadd.xlane.f32.xlu0 %v7799
    %v7801 = vpop.xlane.xlu0 %7800
    %v7802 = vrcp.pop %v7798
    %v7803 = vrcp.pop %v7801
    %v7804 = vmul.f32 %v7794, %v7802
    %v7805 = vmul.f32 %v7795, %v7803
    %v7806 = vpack.c.bf16 %v7805, %v7804
    %v7807 = vpack.c.bf16 %v7793, %v7792
    %v7809 = vsel %vm6392, %v7806, 0
    %7811 = vmatprep.subr.bf16.mxu0 0
    %7812 = vmatpush1.bf16.msra.mxu0 0
    %7813 = vmatprep.subr.bf16.mxu0 0
    %7814 = vmatpush1.bf16.msra.mxu0 0
    %7815 = vmatprep.subr.bf16.mxu0 0
    %7816 = vmatpush1.bf16.msra.mxu0 0
    %7817 = vmatprep.subr.bf16.mxu0 0
    %7818 = vmatpush1.bf16.msra.mxu0 0
    %7819 = vmatprep.subr.bf16.mxu0 0
    %7820 = vmatpush1.bf16.msra.mxu0 0
    %7821 = vmatprep.subr.bf16.mxu0 0
    %7822 = vmatpush1.bf16.msra.mxu0 0
    %7823 = vmatprep.subr.bf16.mxu0 0
    %7824 = vmatpush1.bf16.msra.mxu0 0
    %7825 = vmatprep.subr.bf16.mxu0 0
    %7826 = vmatpush1.bf16.msra.mxu0 %v7807
    %7827 = vmatprep.subr.bf16.mxu0 0
    %7828 = vmatpush2.bf16.msra.mxu0 0
    %7829 = vmatprep.subr.bf16.mxu0 0
    %7830 = vmatpush2.bf16.msra.mxu0 0
    %7831 = vmatprep.subr.bf16.mxu0 0
    %7832 = vmatpush2.bf16.msra.mxu0 0
    %7833 = vmatprep.subr.bf16.mxu0 0
    %7834 = vmatpush2.bf16.msra.mxu0 0
    %7835 = vmatprep.subr.bf16.mxu0 0
    %7836 = vmatpush2.bf16.msra.mxu0 0
    %7837 = vmatprep.subr.bf16.mxu0 0
    %7838 = vmatpush2.bf16.msra.mxu0 0
    %7839 = vmatprep.subr.bf16.mxu0 0
    %7840 = vmatpush2.bf16.msra.mxu0 0
    %7841 = vmatprep.subr.bf16.mxu0 0
    %7842 = vmatpush2.bf16.msra.mxu0 0
    %7843 = vmatprep.mubr.bf16.mxu0 0
    %7844 = vmatmul.mubr.bf16.gmra.mxu0 %v7809
    %v7845 = vpop.f32.mrf.mxu0
    %v7846 = vadd.f32 0.0, %v7845
    %v7847 = vpop.f32.mrf.mxu0
    %v7848 = vpop.f32.mrf.mxu0
    %v7849 = vadd.f32 0.0, %v7848
    %v7850 = vpop.f32.mrf.mxu0
    %7851 = vdwg.mxu0
    %v7852 = vpack.c.bf16 %v7849, %v7846
    %v7853 = vld [vmem:[#allocation31] sm:$0xf]
    %v7854 = vld [vmem:[#allocation31 + $0x4] sm:$0xf]
    %v7855 = vld [vmem:[#allocation31 + $0x8] sm:$0xf]
    %v7856 = vld [vmem:[#allocation31 + $0xc] sm:$0xf]
    %v7857 = vld [vmem:[#allocation31 + $0x10] sm:$0xf]
    %v7858 = vld [vmem:[#allocation31 + $0x14] sm:$0xf]
    %v7859 = vld [vmem:[#allocation31 + $0x18] sm:$0xf]
    %v7860 = vld [vmem:[#allocation31 + $0x1c] sm:$0xf]
    %v7861 = vld [vmem:[#allocation31 + $0x20] sm:$0xf]
    %v7862 = vld [vmem:[#allocation31 + $0x24] sm:$0xf]
    %v7863 = vld [vmem:[#allocation31 + $0x28] sm:$0xf]
    %v7864 = vld [vmem:[#allocation31 + $0x2c] sm:$0xf]
    %v7865 = vld [vmem:[#allocation31 + $0x30] sm:$0xf]
    %v7866 = vld [vmem:[#allocation31 + $0x34] sm:$0xf]
    %v7867 = vld [vmem:[#allocation31 + $0x38] sm:$0xf]
    %v7868 = vld [vmem:[#allocation31 + $0x3c] sm:$0xf]
    %v7885 = vunpack.c.l.b16 %v7853
    %v7886 = vunpack.c.l.b16 %v7854
    %v7887 = vunpack.c.l.b16 %v7855
    %v7888 = vunpack.c.l.b16 %v7856
    %v7889 = vunpack.c.l.b16 %v7857
    %v7890 = vunpack.c.l.b16 %v7858
    %v7891 = vunpack.c.l.b16 %v7859
    %v7892 = vunpack.c.l.b16 %v7860
    %v7893 = vunpack.c.l.b16 %v7861
    %v7894 = vunpack.c.l.b16 %v7862
    %v7895 = vunpack.c.l.b16 %v7863
    %v7896 = vunpack.c.l.b16 %v7864
    %v7897 = vunpack.c.l.b16 %v7865
    %v7898 = vunpack.c.l.b16 %v7866
    %v7899 = vunpack.c.l.b16 %v7867
    %v7900 = vunpack.c.l.b16 %v7868
    %v7901 = vpack.c.b16 %v7886, %v7885
    %v7902 = vpack.c.b16 %v7888, %v7887
    %v7903 = vpack.c.b16 %v7890, %v7889
    %v7904 = vpack.c.b16 %v7892, %v7891
    %v7905 = vpack.c.b16 %v7894, %v7893
    %v7906 = vpack.c.b16 %v7896, %v7895
    %v7907 = vpack.c.b16 %v7898, %v7897
    %v7908 = vpack.c.b16 %v7900, %v7899
    %7917 = vmatprep.subr.bf16.mxu0 0
    %7918 = vmatpush1.bf16.msra.mxu0 %v7908
    %7919 = vmatprep.subr.bf16.mxu0 0
    %7920 = vmatpush1.bf16.msra.mxu0 %v7907
    %7921 = vmatprep.subr.bf16.mxu0 0
    %7922 = vmatpush1.bf16.msra.mxu0 %v7906
    %7923 = vmatprep.subr.bf16.mxu0 0
    %7924 = vmatpush1.bf16.msra.mxu0 %v7905
    %7925 = vmatprep.subr.bf16.mxu0 0
    %7926 = vmatpush1.bf16.msra.mxu0 %v7904
    %7927 = vmatprep.subr.bf16.mxu0 0
    %7928 = vmatpush1.bf16.msra.mxu0 %v7903
    %7929 = vmatprep.subr.bf16.mxu0 0
    %7930 = vmatpush1.bf16.msra.mxu0 %v7902
    %7931 = vmatprep.subr.bf16.mxu0 0
    %7932 = vmatpush1.bf16.msra.mxu0 %v7901
    %7933 = vmatprep.subr.bf16.mxu0 0
    %7934 = vmatpush2.bf16.msra.mxu0 0
    %7935 = vmatprep.subr.bf16.mxu0 0
    %7936 = vmatpush2.bf16.msra.mxu0 0
    %7937 = vmatprep.subr.bf16.mxu0 0
    %7938 = vmatpush2.bf16.msra.mxu0 0
    %7939 = vmatprep.subr.bf16.mxu0 0
    %7940 = vmatpush2.bf16.msra.mxu0 0
    %7941 = vmatprep.subr.bf16.mxu0 0
    %7942 = vmatpush2.bf16.msra.mxu0 0
    %7943 = vmatprep.subr.bf16.mxu0 0
    %7944 = vmatpush2.bf16.msra.mxu0 0
    %7945 = vmatprep.subr.bf16.mxu0 0
    %7946 = vmatpush2.bf16.msra.mxu0 0
    %7947 = vmatprep.subr.bf16.mxu0 0
    %7948 = vmatpush2.bf16.msra.mxu0 0
    %7949 = vmatprep.mubr.bf16.mxu0 0
    %7950 = vmatmul.mubr.bf16.gmra.mxu0 %v7852
    %v7951 = vpop.f32.mrf.mxu0
    %v7952 = vadd.f32 0.0, %v7951
    %v7953 = vpop.f32.mrf.mxu0
    %v7954 = vpop.f32.mrf.mxu0
    %v7955 = vadd.f32 0.0, %v7954
    %v7956 = vpop.f32.mrf.mxu0
    %7957 = vdwg.mxu0
    %v7958 = vmax.f32 %v7952, 0.0
    %v7959 = vmax.f32 %v7955, 0.0
    %v7960 = vmul.f32 %v7958, %v7958
    %v7961 = vmul.f32 %v7959, %v7959
    %7962 = vadd.xlane.f32.xlu0 %v7960
    %v7963 = vpop.xlane.xlu0 %7962
    %7964 = vadd.xlane.f32.xlu0 %v7961
    %v7965 = vpop.xlane.xlu0 %7964
    %v7966 = vmax.f32 %v7963, 1e-24
    %v7967 = vmax.f32 %v7965, 1e-24
    %v7968 = vrsqrt.pop %v7966
    %v7969 = vrsqrt.pop %v7967
    %v7970 = vmul.f32 %v7958, %v7968
    %v7971 = vmul.f32 %v7959, %v7969
    %v7972 = vpack.c.bf16 %v7971, %v7970
    %7973 = vmatprep.subr.bf16.mxu0 0
    %7974 = vmatpush1.bf16.msra.mxu0 0
    %7975 = vmatprep.subr.bf16.mxu0 0
    %7976 = vmatpush1.bf16.msra.mxu0 0
    %7977 = vmatprep.subr.bf16.mxu0 0
    %7978 = vmatpush1.bf16.msra.mxu0 0
    %7979 = vmatprep.subr.bf16.mxu0 0
    %7980 = vmatpush1.bf16.msra.mxu0 0
    %7981 = vmatprep.subr.bf16.mxu0 0
    %7982 = vmatpush1.bf16.msra.mxu0 0
    %7983 = vmatprep.subr.bf16.mxu0 0
    %7984 = vmatpush1.bf16.msra.mxu0 0
    %7985 = vmatprep.subr.bf16.mxu0 0
    %7986 = vmatpush1.bf16.msra.mxu0 0
    %7987 = vmatprep.subr.bf16.mxu0 0
    %7988 = vmatpush1.bf16.msra.mxu0 %v7972
    %7989 = vmatprep.subr.bf16.mxu0 0
    %7990 = vmatpush2.bf16.msra.mxu0 0
    %7991 = vmatprep.subr.bf16.mxu0 0
    %7992 = vmatpush2.bf16.msra.mxu0 0
    %7993 = vmatprep.subr.bf16.mxu0 0
    %7994 = vmatpush2.bf16.msra.mxu0 0
    %7995 = vmatprep.subr.bf16.mxu0 0
    %7996 = vmatpush2.bf16.msra.mxu0 0
    %7997 = vmatprep.subr.bf16.mxu0 0
    %7998 = vmatpush2.bf16.msra.mxu0 0
    %7999 = vmatprep.subr.bf16.mxu0 0
    %8000 = vmatpush2.bf16.msra.mxu0 0
    %8001 = vmatprep.subr.bf16.mxu0 0
    %8002 = vmatpush2.bf16.msra.mxu0 0
    %8003 = vmatprep.subr.bf16.mxu0 0
    %8004 = vmatpush2.bf16.msra.mxu0 0
    %8005 = vmatprep.mubr.bf16.mxu0 0
    %8006 = vmatmul.mubr.bf16.gmra.mxu0 %v7809
    %v8007 = vpop.f32.mrf.mxu0
    %v8008 = vadd.f32 0.0, %v8007
    %v8009 = vpop.f32.mrf.mxu0
    %v8010 = vpop.f32.mrf.mxu0
    %v8011 = vadd.f32 0.0, %v8010
    %v8012 = vpop.f32.mrf.mxu0
    %8013 = vdwg.mxu0
    %v8014 = vpack.c.bf16 %v8011, %v8008
    %s8015 = scalar_lea.vmem [#allocation31], 64
    %v8016 = vld [vmem:[%s8015] sm:$0xf]
    %v8017 = vld [vmem:[%s8015 + $0x4] sm:$0xf]
    %v8018 = vld [vmem:[%s8015 + $0x8] sm:$0xf]
    %v8019 = vld [vmem:[%s8015 + $0xc] sm:$0xf]
    %v8020 = vld [vmem:[%s8015 + $0x10] sm:$0xf]
    %v8021 = vld [vmem:[%s8015 + $0x14] sm:$0xf]
    %v8022 = vld [vmem:[%s8015 + $0x18] sm:$0xf]
    %v8023 = vld [vmem:[%s8015 + $0x1c] sm:$0xf]
    %v8024 = vld [vmem:[%s8015 + $0x20] sm:$0xf]
    %v8025 = vld [vmem:[%s8015 + $0x24] sm:$0xf]
    %v8026 = vld [vmem:[%s8015 + $0x28] sm:$0xf]
    %v8027 = vld [vmem:[%s8015 + $0x2c] sm:$0xf]
    %v8028 = vld [vmem:[%s8015 + $0x30] sm:$0xf]
    %v8029 = vld [vmem:[%s8015 + $0x34] sm:$0xf]
    %v8030 = vld [vmem:[%s8015 + $0x38] sm:$0xf]
    %v8031 = vld [vmem:[%s8015 + $0x3c] sm:$0xf]
    %v8048 = vunpack.c.l.b16 %v8016
    %v8049 = vunpack.c.l.b16 %v8017
    %v8050 = vunpack.c.l.b16 %v8018
    %v8051 = vunpack.c.l.b16 %v8019
    %v8052 = vunpack.c.l.b16 %v8020
    %v8053 = vunpack.c.l.b16 %v8021
    %v8054 = vunpack.c.l.b16 %v8022
    %v8055 = vunpack.c.l.b16 %v8023
    %v8056 = vunpack.c.l.b16 %v8024
    %v8057 = vunpack.c.l.b16 %v8025
    %v8058 = vunpack.c.l.b16 %v8026
    %v8059 = vunpack.c.l.b16 %v8027
    %v8060 = vunpack.c.l.b16 %v8028
    %v8061 = vunpack.c.l.b16 %v8029
    %v8062 = vunpack.c.l.b16 %v8030
    %v8063 = vunpack.c.l.b16 %v8031
    %v8064 = vpack.c.b16 %v8049, %v8048
    %v8065 = vpack.c.b16 %v8051, %v8050
    %v8066 = vpack.c.b16 %v8053, %v8052
    %v8067 = vpack.c.b16 %v8055, %v8054
    %v8068 = vpack.c.b16 %v8057, %v8056
    %v8069 = vpack.c.b16 %v8059, %v8058
    %v8070 = vpack.c.b16 %v8061, %v8060
    %v8071 = vpack.c.b16 %v8063, %v8062
    %8080 = vmatprep.subr.bf16.mxu0 0
    %8081 = vmatpush1.bf16.msra.mxu0 %v8071
    %8082 = vmatprep.subr.bf16.mxu0 0
    %8083 = vmatpush1.bf16.msra.mxu0 %v8070
    %8084 = vmatprep.subr.bf16.mxu0 0
    %8085 = vmatpush1.bf16.msra.mxu0 %v8069
    %8086 = vmatprep.subr.bf16.mxu0 0
    %8087 = vmatpush1.bf16.msra.mxu0 %v8068
    %8088 = vmatprep.subr.bf16.mxu0 0
    %8089 = vmatpush1.bf16.msra.mxu0 %v8067
    %8090 = vmatprep.subr.bf16.mxu0 0
    %8091 = vmatpush1.bf16.msra.mxu0 %v8066
    %8092 = vmatprep.subr.bf16.mxu0 0
    %8093 = vmatpush1.bf16.msra.mxu0 %v8065
    %8094 = vmatprep.subr.bf16.mxu0 0
    %8095 = vmatpush1.bf16.msra.mxu0 %v8064
    %8096 = vmatprep.subr.bf16.mxu0 0
    %8097 = vmatpush2.bf16.msra.mxu0 0
    %8098 = vmatprep.subr.bf16.mxu0 0
    %8099 = vmatpush2.bf16.msra.mxu0 0
    %8100 = vmatprep.subr.bf16.mxu0 0
    %8101 = vmatpush2.bf16.msra.mxu0 0
    %8102 = vmatprep.subr.bf16.mxu0 0
    %8103 = vmatpush2.bf16.msra.mxu0 0
    %8104 = vmatprep.subr.bf16.mxu0 0
    %8105 = vmatpush2.bf16.msra.mxu0 0
    %8106 = vmatprep.subr.bf16.mxu0 0
    %8107 = vmatpush2.bf16.msra.mxu0 0
    %8108 = vmatprep.subr.bf16.mxu0 0
    %8109 = vmatpush2.bf16.msra.mxu0 0
    %8110 = vmatprep.subr.bf16.mxu0 0
    %8111 = vmatpush2.bf16.msra.mxu0 0
    %8112 = vmatprep.mubr.bf16.mxu0 0
    %8113 = vmatmul.mubr.bf16.gmra.mxu0 %v8014
    %v8114 = vpop.f32.mrf.mxu0
    %v8115 = vadd.f32 0.0, %v8114
    %v8116 = vpop.f32.mrf.mxu0
    %v8117 = vpop.f32.mrf.mxu0
    %v8118 = vadd.f32 0.0, %v8117
    %v8119 = vpop.f32.mrf.mxu0
    %8120 = vdwg.mxu0
    %v8121 = vmax.f32 %v8115, 0.0
    %v8122 = vmax.f32 %v8118, 0.0
    %v8123 = vmul.f32 %v8121, %v8121
    %v8124 = vmul.f32 %v8122, %v8122
    %8125 = vadd.xlane.f32.xlu0 %v8123
    %v8126 = vpop.xlane.xlu0 %8125
    %8127 = vadd.xlane.f32.xlu0 %v8124
    %v8128 = vpop.xlane.xlu0 %8127
    %v8129 = vmax.f32 %v8126, 1e-24
    %v8130 = vmax.f32 %v8128, 1e-24
    %v8131 = vrsqrt.pop %v8129
    %v8132 = vrsqrt.pop %v8130
    %v8133 = vmul.f32 %v8121, %v8131
    %v8134 = vmul.f32 %v8122, %v8132
    %v8135 = vld [vmem:[%s25] sm:$0xff]
    %v8136 = vld [vmem:[%s25 + $0x8] sm:$0xff]
    %v8137 = vld [vmem:[%s25 + $0x10] sm:$0xff]
    %v8138 = vld [vmem:[%s25 + $0x18] sm:$0xff]
    %v8139 = vld [vmem:[%s25 + $0x20] sm:$0xff]
    %v8140 = vld [vmem:[%s25 + $0x28] sm:$0xff]
    %v8141 = vld [vmem:[%s25 + $0x30] sm:$0xff]
    %v8142 = vld [vmem:[%s25 + $0x38] sm:$0xff]
    %v8143 = vld [vmem:[%s25 + $0x40] sm:$0xff]
    %v8144 = vld [vmem:[%s25 + $0x48] sm:$0xff]
    %v8145 = vld [vmem:[%s25 + $0x50] sm:$0xff]
    %v8146 = vld [vmem:[%s25 + $0x58] sm:$0xff]
    %v8147 = vld [vmem:[%s25 + $0x60] sm:$0xff]
    %v8148 = vld [vmem:[%s25 + $0x68] sm:$0xff]
    %v8149 = vld [vmem:[%s25 + $0x70] sm:$0xff]
    %v8150 = vld [vmem:[%s25 + $0x78] sm:$0xff]
    %v8151 = vld [vmem:[%s25 + $0x80] sm:$0xff]
    %v8152 = vld [vmem:[%s25 + $0x88] sm:$0xff]
    %v8153 = vld [vmem:[%s25 + $0x90] sm:$0xff]
    %v8154 = vld [vmem:[%s25 + $0x98] sm:$0xff]
    %v8155 = vld [vmem:[%s25 + $0xa0] sm:$0xff]
    %v8156 = vld [vmem:[%s25 + $0xa8] sm:$0xff]
    %v8157 = vld [vmem:[%s25 + $0xb0] sm:$0xff]
    %v8158 = vld [vmem:[%s25 + $0xb8] sm:$0xff]
    %v8159 = vld [vmem:[%s25 + $0xc0] sm:$0xff]
    %v8160 = vld [vmem:[%s25 + $0xc8] sm:$0xff]
    %v8161 = vld [vmem:[%s25 + $0xd0] sm:$0xff]
    %v8162 = vld [vmem:[%s25 + $0xd8] sm:$0xff]
    %v8163 = vld [vmem:[%s25 + $0xe0] sm:$0xff]
    %v8164 = vld [vmem:[%s25 + $0xe8] sm:$0xff]
    %v8165 = vld [vmem:[%s25 + $0xf0] sm:$0xff]
    %v8166 = vld [vmem:[%s25 + $0xf8] sm:$0xff]
    %v8167 = vld [vmem:[%s26] sm:$0xff]
    %v8168 = vld [vmem:[%s26 + $0x8] sm:$0xff]
    %v8169 = vld [vmem:[%s26 + $0x10] sm:$0xff]
    %v8170 = vld [vmem:[%s26 + $0x18] sm:$0xff]
    %v8171 = vld [vmem:[%s26 + $0x20] sm:$0xff]
    %v8172 = vld [vmem:[%s26 + $0x28] sm:$0xff]
    %v8173 = vld [vmem:[%s26 + $0x30] sm:$0xff]
    %v8174 = vld [vmem:[%s26 + $0x38] sm:$0xff]
    %v8175 = vld [vmem:[%s26 + $0x40] sm:$0xff]
    %v8176 = vld [vmem:[%s26 + $0x48] sm:$0xff]
    %v8177 = vld [vmem:[%s26 + $0x50] sm:$0xff]
    %v8178 = vld [vmem:[%s26 + $0x58] sm:$0xff]
    %v8179 = vld [vmem:[%s26 + $0x60] sm:$0xff]
    %v8180 = vld [vmem:[%s26 + $0x68] sm:$0xff]
    %v8181 = vld [vmem:[%s26 + $0x70] sm:$0xff]
    %v8182 = vld [vmem:[%s26 + $0x78] sm:$0xff]
    %v8183 = vld [vmem:[%s26 + $0x80] sm:$0xff]
    %v8184 = vld [vmem:[%s26 + $0x88] sm:$0xff]
    %v8185 = vld [vmem:[%s26 + $0x90] sm:$0xff]
    %v8186 = vld [vmem:[%s26 + $0x98] sm:$0xff]
    %v8187 = vld [vmem:[%s26 + $0xa0] sm:$0xff]
    %v8188 = vld [vmem:[%s26 + $0xa8] sm:$0xff]
    %v8189 = vld [vmem:[%s26 + $0xb0] sm:$0xff]
    %v8190 = vld [vmem:[%s26 + $0xb8] sm:$0xff]
    %v8191 = vld [vmem:[%s26 + $0xc0] sm:$0xff]
    %v8192 = vld [vmem:[%s26 + $0xc8] sm:$0xff]
    %v8193 = vld [vmem:[%s26 + $0xd0] sm:$0xff]
    %v8194 = vld [vmem:[%s26 + $0xd8] sm:$0xff]
    %v8195 = vld [vmem:[%s26 + $0xe0] sm:$0xff]
    %v8196 = vld [vmem:[%s26 + $0xe8] sm:$0xff]
    %v8197 = vld [vmem:[%s26 + $0xf0] sm:$0xff]
    %v8198 = vld [vmem:[%s26 + $0xf8] sm:$0xff]
    %v8199 = vld [vmem:[#allocation32] sm:$0xf]
    %v8232 = vunpack.c.l.b16 %v8167
    %v8233 = vunpack.c.h.b16 %v8167
    %v8234 = vunpack.c.l.b16 %v8168
    %v8235 = vunpack.c.h.b16 %v8168
    %v8236 = vunpack.c.l.b16 %v8169
    %v8237 = vunpack.c.h.b16 %v8169
    %v8238 = vunpack.c.l.b16 %v8170
    %v8239 = vunpack.c.h.b16 %v8170
    %v8240 = vunpack.c.l.b16 %v8171
    %v8241 = vunpack.c.h.b16 %v8171
    %v8242 = vunpack.c.l.b16 %v8172
    %v8243 = vunpack.c.h.b16 %v8172
    %v8244 = vunpack.c.l.b16 %v8173
    %v8245 = vunpack.c.h.b16 %v8173
    %v8246 = vunpack.c.l.b16 %v8174
    %v8247 = vunpack.c.h.b16 %v8174
    %v8248 = vunpack.c.l.b16 %v8175
    %v8249 = vunpack.c.h.b16 %v8175
    %v8250 = vunpack.c.l.b16 %v8176
    %v8251 = vunpack.c.h.b16 %v8176
    %v8252 = vunpack.c.l.b16 %v8177
    %v8253 = vunpack.c.h.b16 %v8177
    %v8254 = vunpack.c.l.b16 %v8178
    %v8255 = vunpack.c.h.b16 %v8178
    %v8256 = vunpack.c.l.b16 %v8179
    %v8257 = vunpack.c.h.b16 %v8179
    %v8258 = vunpack.c.l.b16 %v8180
    %v8259 = vunpack.c.h.b16 %v8180
    %v8260 = vunpack.c.l.b16 %v8181
    %v8261 = vunpack.c.h.b16 %v8181
    %v8262 = vunpack.c.l.b16 %v8182
    %v8263 = vunpack.c.h.b16 %v8182
    %v8264 = vunpack.c.l.b16 %v8183
    %v8265 = vunpack.c.h.b16 %v8183
    %v8266 = vunpack.c.l.b16 %v8184
    %v8267 = vunpack.c.h.b16 %v8184
    %v8268 = vunpack.c.l.b16 %v8185
    %v8269 = vunpack.c.h.b16 %v8185
    %v8270 = vunpack.c.l.b16 %v8186
    %v8271 = vunpack.c.h.b16 %v8186
    %v8272 = vunpack.c.l.b16 %v8187
    %v8273 = vunpack.c.h.b16 %v8187
    %v8274 = vunpack.c.l.b16 %v8188
    %v8275 = vunpack.c.h.b16 %v8188
    %v8276 = vunpack.c.l.b16 %v8189
    %v8277 = vunpack.c.h.b16 %v8189
    %v8278 = vunpack.c.l.b16 %v8190
    %v8279 = vunpack.c.h.b16 %v8190
    %v8280 = vunpack.c.l.b16 %v8191
    %v8281 = vunpack.c.h.b16 %v8191
    %v8282 = vunpack.c.l.b16 %v8192
    %v8283 = vunpack.c.h.b16 %v8192
    %v8284 = vunpack.c.l.b16 %v8193
    %v8285 = vunpack.c.h.b16 %v8193
    %v8286 = vunpack.c.l.b16 %v8194
    %v8287 = vunpack.c.h.b16 %v8194
    %v8288 = vunpack.c.l.b16 %v8195
    %v8289 = vunpack.c.h.b16 %v8195
    %v8290 = vunpack.c.l.b16 %v8196
    %v8291 = vunpack.c.h.b16 %v8196
    %v8292 = vunpack.c.l.b16 %v8197
    %v8293 = vunpack.c.h.b16 %v8197
    %v8294 = vunpack.c.l.b16 %v8198
    %v8295 = vunpack.c.h.b16 %v8198
    %v8296 = vpack.c.b16 %v8236, %v8232
    %v8297 = vpack.c.b16 %v8237, %v8233
    %v8298 = vpack.c.b16 %v8238, %v8234
    %v8299 = vpack.c.b16 %v8239, %v8235
    %v8300 = vpack.c.b16 %v8244, %v8240
    %v8301 = vpack.c.b16 %v8245, %v8241
    %v8302 = vpack.c.b16 %v8246, %v8242
    %v8303 = vpack.c.b16 %v8247, %v8243
    %v8304 = vpack.c.b16 %v8252, %v8248
    %v8305 = vpack.c.b16 %v8253, %v8249
    %v8306 = vpack.c.b16 %v8254, %v8250
    %v8307 = vpack.c.b16 %v8255, %v8251
    %v8308 = vpack.c.b16 %v8260, %v8256
    %v8309 = vpack.c.b16 %v8261, %v8257
    %v8310 = vpack.c.b16 %v8262, %v8258
    %v8311 = vpack.c.b16 %v8263, %v8259
    %v8312 = vpack.c.b16 %v8268, %v8264
    %v8313 = vpack.c.b16 %v8269, %v8265
    %v8314 = vpack.c.b16 %v8270, %v8266
    %v8315 = vpack.c.b16 %v8271, %v8267
    %v8316 = vpack.c.b16 %v8276, %v8272
    %v8317 = vpack.c.b16 %v8277, %v8273
    %v8318 = vpack.c.b16 %v8278, %v8274
    %v8319 = vpack.c.b16 %v8279, %v8275
    %v8320 = vpack.c.b16 %v8284, %v8280
    %v8321 = vpack.c.b16 %v8285, %v8281
    %v8322 = vpack.c.b16 %v8286, %v8282
    %v8323 = vpack.c.b16 %v8287, %v8283
    %v8324 = vpack.c.b16 %v8292, %v8288
    %v8325 = vpack.c.b16 %v8293, %v8289
    %v8326 = vpack.c.b16 %v8294, %v8290
    %v8327 = vpack.c.b16 %v8295, %v8291
    %8360 = vmatprep.subr.bf16.mxu0 %v8325
    %8361 = vmatpush1.bf16.msra.mxu0 %v8324
    %8362 = vmatprep.subr.bf16.mxu0 %v8321
    %8363 = vmatpush1.bf16.msra.mxu0 %v8320
    %8364 = vmatprep.subr.bf16.mxu0 %v8317
    %8365 = vmatpush1.bf16.msra.mxu0 %v8316
    %8366 = vmatprep.subr.bf16.mxu0 %v8313
    %8367 = vmatpush1.bf16.msra.mxu0 %v8312
    %8368 = vmatprep.subr.bf16.mxu0 %v8309
    %8369 = vmatpush1.bf16.msra.mxu0 %v8308
    %8370 = vmatprep.subr.bf16.mxu0 %v8305
    %8371 = vmatpush1.bf16.msra.mxu0 %v8304
    %8372 = vmatprep.subr.bf16.mxu0 %v8301
    %8373 = vmatpush1.bf16.msra.mxu0 %v8300
    %8374 = vmatprep.subr.bf16.mxu0 %v8297
    %8375 = vmatpush1.bf16.msra.mxu0 %v8296
    %8376 = vmatprep.subr.bf16.mxu0 0
    %8377 = vmatpush2.bf16.msra.mxu0 0
    %8378 = vmatprep.subr.bf16.mxu0 0
    %8379 = vmatpush2.bf16.msra.mxu0 0
    %8380 = vmatprep.subr.bf16.mxu0 0
    %8381 = vmatpush2.bf16.msra.mxu0 0
    %8382 = vmatprep.subr.bf16.mxu0 0
    %8383 = vmatpush2.bf16.msra.mxu0 0
    %8384 = vmatprep.subr.bf16.mxu0 0
    %8385 = vmatpush2.bf16.msra.mxu0 0
    %8386 = vmatprep.subr.bf16.mxu0 0
    %8387 = vmatpush2.bf16.msra.mxu0 0
    %8388 = vmatprep.subr.bf16.mxu0 0
    %8389 = vmatpush2.bf16.msra.mxu0 0
    %8390 = vmatprep.subr.bf16.mxu0 0
    %8391 = vmatpush2.bf16.msra.mxu0 0
    %8392 = vmatprep.mubr.bf16.mxu0 0
    %8393 = vmatmul.mubr.bf16.gmra.mxu0 0
    %v8394 = vpop.f32.mrf.mxu0
    %v8395 = vadd.f32 0.0, %v8394
    %v8396 = vpop.f32.mrf.mxu0
    %v8397 = vadd.f32 0.0, %v8396
    %v8398 = vpop.f32.mrf.mxu0
    %v8399 = vadd.f32 0.0, %v8398
    %v8400 = vpop.f32.mrf.mxu0
    %v8401 = vadd.f32 0.0, %v8400
    %8402 = vdwg.mxu0
    %8403 = vmatprep.subr.bf16.mxu0 %v8327
    %8404 = vmatpush1.bf16.msra.mxu0 %v8326
    %8405 = vmatprep.subr.bf16.mxu0 %v8323
    %8406 = vmatpush1.bf16.msra.mxu0 %v8322
    %8407 = vmatprep.subr.bf16.mxu0 %v8319
    %8408 = vmatpush1.bf16.msra.mxu0 %v8318
    %8409 = vmatprep.subr.bf16.mxu0 %v8315
    %8410 = vmatpush1.bf16.msra.mxu0 %v8314
    %8411 = vmatprep.subr.bf16.mxu0 %v8311
    %8412 = vmatpush1.bf16.msra.mxu0 %v8310
    %8413 = vmatprep.subr.bf16.mxu0 %v8307
    %8414 = vmatpush1.bf16.msra.mxu0 %v8306
    %8415 = vmatprep.subr.bf16.mxu0 %v8303
    %8416 = vmatpush1.bf16.msra.mxu0 %v8302
    %8417 = vmatprep.subr.bf16.mxu0 %v8299
    %8418 = vmatpush1.bf16.msra.mxu0 %v8298
    %8419 = vmatprep.subr.bf16.mxu0 0
    %8420 = vmatpush2.bf16.msra.mxu0 0
    %8421 = vmatprep.subr.bf16.mxu0 0
    %8422 = vmatpush2.bf16.msra.mxu0 0
    %8423 = vmatprep.subr.bf16.mxu0 0
    %8424 = vmatpush2.bf16.msra.mxu0 0
    %8425 = vmatprep.subr.bf16.mxu0 0
    %8426 = vmatpush2.bf16.msra.mxu0 0
    %8427 = vmatprep.subr.bf16.mxu0 0
    %8428 = vmatpush2.bf16.msra.mxu0 0
    %8429 = vmatprep.subr.bf16.mxu0 0
    %8430 = vmatpush2.bf16.msra.mxu0 0
    %8431 = vmatprep.subr.bf16.mxu0 0
    %8432 = vmatpush2.bf16.msra.mxu0 0
    %8433 = vmatprep.subr.bf16.mxu0 0
    %8434 = vmatpush2.bf16.msra.mxu0 0
    %8435 = vmatprep.mubr.bf16.mxu0 0
    %8436 = vmatmul.mubr.bf16.gmra.mxu0 0
    %v8437 = vpop.f32.mrf.mxu0
    %v8438 = vadd.f32 0.0, %v8437
    %v8439 = vpop.f32.mrf.mxu0
    %v8440 = vadd.f32 0.0, %v8439
    %v8441 = vpop.f32.mrf.mxu0
    %v8442 = vadd.f32 0.0, %v8441
    %v8443 = vpop.f32.mrf.mxu0
    %v8444 = vadd.f32 0.0, %v8443
    %8445 = vdwg.mxu0
    %v8478 = vunpack.c.l.b16 %v8135
    %v8479 = vunpack.c.h.b16 %v8135
    %v8480 = vunpack.c.l.b16 %v8136
    %v8481 = vunpack.c.h.b16 %v8136
    %v8482 = vunpack.c.l.b16 %v8137
    %v8483 = vunpack.c.h.b16 %v8137
    %v8484 = vunpack.c.l.b16 %v8138
    %v8485 = vunpack.c.h.b16 %v8138
    %v8486 = vunpack.c.l.b16 %v8139
    %v8487 = vunpack.c.h.b16 %v8139
    %v8488 = vunpack.c.l.b16 %v8140
    %v8489 = vunpack.c.h.b16 %v8140
    %v8490 = vunpack.c.l.b16 %v8141
    %v8491 = vunpack.c.h.b16 %v8141
    %v8492 = vunpack.c.l.b16 %v8142
    %v8493 = vunpack.c.h.b16 %v8142
    %v8494 = vunpack.c.l.b16 %v8143
    %v8495 = vunpack.c.h.b16 %v8143
    %v8496 = vunpack.c.l.b16 %v8144
    %v8497 = vunpack.c.h.b16 %v8144
    %v8498 = vunpack.c.l.b16 %v8145
    %v8499 = vunpack.c.h.b16 %v8145
    %v8500 = vunpack.c.l.b16 %v8146
    %v8501 = vunpack.c.h.b16 %v8146
    %v8502 = vunpack.c.l.b16 %v8147
    %v8503 = vunpack.c.h.b16 %v8147
    %v8504 = vunpack.c.l.b16 %v8148
    %v8505 = vunpack.c.h.b16 %v8148
    %v8506 = vunpack.c.l.b16 %v8149
    %v8507 = vunpack.c.h.b16 %v8149
    %v8508 = vunpack.c.l.b16 %v8150
    %v8509 = vunpack.c.h.b16 %v8150
    %v8510 = vunpack.c.l.b16 %v8151
    %v8511 = vunpack.c.h.b16 %v8151
    %v8512 = vunpack.c.l.b16 %v8152
    %v8513 = vunpack.c.h.b16 %v8152
    %v8514 = vunpack.c.l.b16 %v8153
    %v8515 = vunpack.c.h.b16 %v8153
    %v8516 = vunpack.c.l.b16 %v8154
    %v8517 = vunpack.c.h.b16 %v8154
    %v8518 = vunpack.c.l.b16 %v8155
    %v8519 = vunpack.c.h.b16 %v8155
    %v8520 = vunpack.c.l.b16 %v8156
    %v8521 = vunpack.c.h.b16 %v8156
    %v8522 = vunpack.c.l.b16 %v8157
    %v8523 = vunpack.c.h.b16 %v8157
    %v8524 = vunpack.c.l.b16 %v8158
    %v8525 = vunpack.c.h.b16 %v8158
    %v8526 = vunpack.c.l.b16 %v8159
    %v8527 = vunpack.c.h.b16 %v8159
    %v8528 = vunpack.c.l.b16 %v8160
    %v8529 = vunpack.c.h.b16 %v8160
    %v8530 = vunpack.c.l.b16 %v8161
    %v8531 = vunpack.c.h.b16 %v8161
    %v8532 = vunpack.c.l.b16 %v8162
    %v8533 = vunpack.c.h.b16 %v8162
    %v8534 = vunpack.c.l.b16 %v8163
    %v8535 = vunpack.c.h.b16 %v8163
    %v8536 = vunpack.c.l.b16 %v8164
    %v8537 = vunpack.c.h.b16 %v8164
    %v8538 = vunpack.c.l.b16 %v8165
    %v8539 = vunpack.c.h.b16 %v8165
    %v8540 = vunpack.c.l.b16 %v8166
    %v8541 = vunpack.c.h.b16 %v8166
    %v8542 = vpack.c.b16 %v8482, %v8478
    %v8543 = vpack.c.b16 %v8483, %v8479
    %v8544 = vpack.c.b16 %v8484, %v8480
    %v8545 = vpack.c.b16 %v8485, %v8481
    %v8546 = vpack.c.b16 %v8490, %v8486
    %v8547 = vpack.c.b16 %v8491, %v8487
    %v8548 = vpack.c.b16 %v8492, %v8488
    %v8549 = vpack.c.b16 %v8493, %v8489
    %v8550 = vpack.c.b16 %v8498, %v8494
    %v8551 = vpack.c.b16 %v8499, %v8495
    %v8552 = vpack.c.b16 %v8500, %v8496
    %v8553 = vpack.c.b16 %v8501, %v8497
    %v8554 = vpack.c.b16 %v8506, %v8502
    %v8555 = vpack.c.b16 %v8507, %v8503
    %v8556 = vpack.c.b16 %v8508, %v8504
    %v8557 = vpack.c.b16 %v8509, %v8505
    %v8558 = vpack.c.b16 %v8514, %v8510
    %v8559 = vpack.c.b16 %v8515, %v8511
    %v8560 = vpack.c.b16 %v8516, %v8512
    %v8561 = vpack.c.b16 %v8517, %v8513
    %v8562 = vpack.c.b16 %v8522, %v8518
    %v8563 = vpack.c.b16 %v8523, %v8519
    %v8564 = vpack.c.b16 %v8524, %v8520
    %v8565 = vpack.c.b16 %v8525, %v8521
    %v8566 = vpack.c.b16 %v8530, %v8526
    %v8567 = vpack.c.b16 %v8531, %v8527
    %v8568 = vpack.c.b16 %v8532, %v8528
    %v8569 = vpack.c.b16 %v8533, %v8529
    %v8570 = vpack.c.b16 %v8538, %v8534
    %v8571 = vpack.c.b16 %v8539, %v8535
    %v8572 = vpack.c.b16 %v8540, %v8536
    %v8573 = vpack.c.b16 %v8541, %v8537
    %8606 = vmatprep.subr.bf16.mxu0 %v8571
    %8607 = vmatpush1.bf16.msra.mxu0 %v8570
    %8608 = vmatprep.subr.bf16.mxu0 %v8567
    %8609 = vmatpush1.bf16.msra.mxu0 %v8566
    %8610 = vmatprep.subr.bf16.mxu0 %v8563
    %8611 = vmatpush1.bf16.msra.mxu0 %v8562
    %8612 = vmatprep.subr.bf16.mxu0 %v8559
    %8613 = vmatpush1.bf16.msra.mxu0 %v8558
    %8614 = vmatprep.subr.bf16.mxu0 %v8555
    %8615 = vmatpush1.bf16.msra.mxu0 %v8554
    %8616 = vmatprep.subr.bf16.mxu0 %v8551
    %8617 = vmatpush1.bf16.msra.mxu0 %v8550
    %8618 = vmatprep.subr.bf16.mxu0 %v8547
    %8619 = vmatpush1.bf16.msra.mxu0 %v8546
    %8620 = vmatprep.subr.bf16.mxu0 %v8543
    %8621 = vmatpush1.bf16.msra.mxu0 %v8542
    %8622 = vmatprep.subr.bf16.mxu0 0
    %8623 = vmatpush2.bf16.msra.mxu0 0
    %8624 = vmatprep.subr.bf16.mxu0 0
    %8625 = vmatpush2.bf16.msra.mxu0 0
    %8626 = vmatprep.subr.bf16.mxu0 0
    %8627 = vmatpush2.bf16.msra.mxu0 0
    %8628 = vmatprep.subr.bf16.mxu0 0
    %8629 = vmatpush2.bf16.msra.mxu0 0
    %8630 = vmatprep.subr.bf16.mxu0 0
    %8631 = vmatpush2.bf16.msra.mxu0 0
    %8632 = vmatprep.subr.bf16.mxu0 0
    %8633 = vmatpush2.bf16.msra.mxu0 0
    %8634 = vmatprep.subr.bf16.mxu0 0
    %8635 = vmatpush2.bf16.msra.mxu0 0
    %8636 = vmatprep.subr.bf16.mxu0 0
    %8637 = vmatpush2.bf16.msra.mxu0 0
    %8638 = vmatprep.mubr.bf16.mxu0 0
    %8639 = vmatmul.mubr.bf16.gmra.mxu0 %v7972
    %v8640 = vpop.f32.mrf.mxu0
    %v8641 = vadd.f32 %v8395, %v8640
    %v8642 = vpop.f32.mrf.mxu0
    %v8643 = vadd.f32 %v8397, %v8642
    %v8644 = vpop.f32.mrf.mxu0
    %v8645 = vadd.f32 %v8399, %v8644
    %v8646 = vpop.f32.mrf.mxu0
    %v8647 = vadd.f32 %v8401, %v8646
    %8648 = vdwg.mxu0
    %8649 = vmatprep.subr.bf16.mxu0 %v8573
    %8650 = vmatpush1.bf16.msra.mxu0 %v8572
    %8651 = vmatprep.subr.bf16.mxu0 %v8569
    %8652 = vmatpush1.bf16.msra.mxu0 %v8568
    %8653 = vmatprep.subr.bf16.mxu0 %v8565
    %8654 = vmatpush1.bf16.msra.mxu0 %v8564
    %8655 = vmatprep.subr.bf16.mxu0 %v8561
    %8656 = vmatpush1.bf16.msra.mxu0 %v8560
    %8657 = vmatprep.subr.bf16.mxu0 %v8557
    %8658 = vmatpush1.bf16.msra.mxu0 %v8556
    %8659 = vmatprep.subr.bf16.mxu0 %v8553
    %8660 = vmatpush1.bf16.msra.mxu0 %v8552
    %8661 = vmatprep.subr.bf16.mxu0 %v8549
    %8662 = vmatpush1.bf16.msra.mxu0 %v8548
    %8663 = vmatprep.subr.bf16.mxu0 %v8545
    %8664 = vmatpush1.bf16.msra.mxu0 %v8544
    %8665 = vmatprep.subr.bf16.mxu0 0
    %8666 = vmatpush2.bf16.msra.mxu0 0
    %8667 = vmatprep.subr.bf16.mxu0 0
    %8668 = vmatpush2.bf16.msra.mxu0 0
    %8669 = vmatprep.subr.bf16.mxu0 0
    %8670 = vmatpush2.bf16.msra.mxu0 0
    %8671 = vmatprep.subr.bf16.mxu0 0
    %8672 = vmatpush2.bf16.msra.mxu0 0
    %8673 = vmatprep.subr.bf16.mxu0 0
    %8674 = vmatpush2.bf16.msra.mxu0 0
    %8675 = vmatprep.subr.bf16.mxu0 0
    %8676 = vmatpush2.bf16.msra.mxu0 0
    %8677 = vmatprep.subr.bf16.mxu0 0
    %8678 = vmatpush2.bf16.msra.mxu0 0
    %8679 = vmatprep.subr.bf16.mxu0 0
    %8680 = vmatpush2.bf16.msra.mxu0 0
    %8681 = vmatprep.mubr.bf16.mxu0 0
    %8682 = vmatmul.mubr.bf16.gmra.mxu0 %v7972
    %v8683 = vpop.f32.mrf.mxu0
    %v8684 = vadd.f32 %v8438, %v8683
    %v8685 = vpop.f32.mrf.mxu0
    %v8686 = vadd.f32 %v8440, %v8685
    %v8687 = vpop.f32.mrf.mxu0
    %v8688 = vadd.f32 %v8442, %v8687
    %v8689 = vpop.f32.mrf.mxu0
    %v8690 = vadd.f32 %v8444, %v8689
    %8691 = vdwg.mxu0
    %v8693 = vlaneseq
    %v8694 = vshrl.u32 %v8693, 7
    %v8695 = vsub.s32 0, %v8694
    %v8696 = vrot.slane %v8199, %v8695
    %v8697 = vlaneseq
    %v8698 = vshrl.u32 %v8697, 7
    %v8699 = vsub.s32 1, %v8698
    %v8700 = vrot.slane %v8199, %v8699
    %v8701 = vlaneseq
    %v8702 = vshrl.u32 %v8701, 7
    %v8703 = vsub.s32 2, %v8702
    %v8704 = vrot.slane %v8199, %v8703
    %v8705 = vlaneseq
    %v8706 = vshrl.u32 %v8705, 7
    %v8707 = vsub.s32 3, %v8706
    %v8708 = vrot.slane %v8199, %v8707
    %v8713 = vadd.f32 %v8641, %v8696
    %v8714 = vadd.f32 %v8643, %v8700
    %v8715 = vadd.f32 %v8684, %v8704
    %v8716 = vadd.f32 %v8686, %v8708
    %v8717 = vadd.f32 %v8645, %v8696
    %v8718 = vadd.f32 %v8647, %v8700
    %v8719 = vadd.f32 %v8688, %v8704
    %v8720 = vadd.f32 %v8690, %v8708
    %v8721 = vxor.u32 %v8713, 2147483648
    %v8722 = vxor.u32 %v8717, 2147483648
    %v8723 = vmul.f32 %v8721, 1.442695
    %v8724 = vpow.pop %v8723
    %v8725 = vmul.f32 %v8722, 1.442695
    %v8726 = vpow.pop %v8725
    %v8727 = vadd.f32 %v8724, 1.0
    %v8728 = vadd.f32 %v8726, 1.0
    %v8729 = vrcp.pop %v8727
    %v8730 = vmul.f32 1.0, %v8729
    %v8731 = vrcp.pop %v8728
    %v8732 = vmul.f32 1.0, %v8731
    %v8733 = vxor.u32 %v8714, 2147483648
    %v8734 = vxor.u32 %v8718, 2147483648
    %v8735 = vmul.f32 %v8733, 1.442695
    %v8736 = vpow.pop %v8735
    %v8737 = vmul.f32 %v8734, 1.442695
    %v8738 = vpow.pop %v8737
    %v8739 = vadd.f32 %v8736, 1.0
    %v8740 = vadd.f32 %v8738, 1.0
    %v8741 = vrcp.pop %v8739
    %v8742 = vmul.f32 1.0, %v8741
    %v8743 = vrcp.pop %v8740
    %v8744 = vmul.f32 1.0, %v8743
    %v8745 = vtanh.pop %v8715
    %v8746 = vtanh.pop %v8719
    %v8747 = vxor.u32 %v8716, 2147483648
    %v8748 = vxor.u32 %v8720, 2147483648
    %v8749 = vmul.f32 %v8747, 1.442695
    %v8750 = vpow.pop %v8749
    %v8751 = vmul.f32 %v8748, 1.442695
    %v8752 = vpow.pop %v8751
    %v8753 = vadd.f32 %v8750, 1.0
    %v8754 = vadd.f32 %v8752, 1.0
    %v8755 = vrcp.pop %v8753
    %v8756 = vmul.f32 1.0, %v8755
    %v8757 = vrcp.pop %v8754
    %v8758 = vmul.f32 1.0, %v8757
    %v8759 = vmul.f32 %v8742, 0.0
    %v8760 = vmul.f32 %v8744, 0.0
    %v8761 = vmul.f32 %v8730, %v8745
    %v8762 = vmul.f32 %v8732, %v8746
    %v8763 = vadd.f32 %v8759, %v8761
    %v8764 = vadd.f32 %v8760, %v8762
    %v8765 = vtanh.pop %v8763
    %v8766 = vtanh.pop %v8764
    %v8767 = vmul.f32 %v8756, %v8765
    %v8768 = vmul.f32 %v8758, %v8766
    %s8769 = scalar_lea.vmem %s25, 256
    %v8770 = vld [vmem:[%s8769] sm:$0xff]
    %v8771 = vld [vmem:[%s8769 + $0x8] sm:$0xff]
    %v8772 = vld [vmem:[%s8769 + $0x10] sm:$0xff]
    %v8773 = vld [vmem:[%s8769 + $0x18] sm:$0xff]
    %v8774 = vld [vmem:[%s8769 + $0x20] sm:$0xff]
    %v8775 = vld [vmem:[%s8769 + $0x28] sm:$0xff]
    %v8776 = vld [vmem:[%s8769 + $0x30] sm:$0xff]
    %v8777 = vld [vmem:[%s8769 + $0x38] sm:$0xff]
    %v8778 = vld [vmem:[%s8769 + $0x40] sm:$0xff]
    %v8779 = vld [vmem:[%s8769 + $0x48] sm:$0xff]
    %v8780 = vld [vmem:[%s8769 + $0x50] sm:$0xff]
    %v8781 = vld [vmem:[%s8769 + $0x58] sm:$0xff]
    %v8782 = vld [vmem:[%s8769 + $0x60] sm:$0xff]
    %v8783 = vld [vmem:[%s8769 + $0x68] sm:$0xff]
    %v8784 = vld [vmem:[%s8769 + $0x70] sm:$0xff]
    %v8785 = vld [vmem:[%s8769 + $0x78] sm:$0xff]
    %v8786 = vld [vmem:[%s8769 + $0x80] sm:$0xff]
    %v8787 = vld [vmem:[%s8769 + $0x88] sm:$0xff]
    %v8788 = vld [vmem:[%s8769 + $0x90] sm:$0xff]
    %v8789 = vld [vmem:[%s8769 + $0x98] sm:$0xff]
    %v8790 = vld [vmem:[%s8769 + $0xa0] sm:$0xff]
    %v8791 = vld [vmem:[%s8769 + $0xa8] sm:$0xff]
    %v8792 = vld [vmem:[%s8769 + $0xb0] sm:$0xff]
    %v8793 = vld [vmem:[%s8769 + $0xb8] sm:$0xff]
    %v8794 = vld [vmem:[%s8769 + $0xc0] sm:$0xff]
    %v8795 = vld [vmem:[%s8769 + $0xc8] sm:$0xff]
    %v8796 = vld [vmem:[%s8769 + $0xd0] sm:$0xff]
    %v8797 = vld [vmem:[%s8769 + $0xd8] sm:$0xff]
    %v8798 = vld [vmem:[%s8769 + $0xe0] sm:$0xff]
    %v8799 = vld [vmem:[%s8769 + $0xe8] sm:$0xff]
    %v8800 = vld [vmem:[%s8769 + $0xf0] sm:$0xff]
    %v8801 = vld [vmem:[%s8769 + $0xf8] sm:$0xff]
    %s8802 = scalar_lea.vmem %s26, 256
    %v8803 = vld [vmem:[%s8802] sm:$0xff]
    %v8804 = vld [vmem:[%s8802 + $0x8] sm:$0xff]
    %v8805 = vld [vmem:[%s8802 + $0x10] sm:$0xff]
    %v8806 = vld [vmem:[%s8802 + $0x18] sm:$0xff]
    %v8807 = vld [vmem:[%s8802 + $0x20] sm:$0xff]
    %v8808 = vld [vmem:[%s8802 + $0x28] sm:$0xff]
    %v8809 = vld [vmem:[%s8802 + $0x30] sm:$0xff]
    %v8810 = vld [vmem:[%s8802 + $0x38] sm:$0xff]
    %v8811 = vld [vmem:[%s8802 + $0x40] sm:$0xff]
    %v8812 = vld [vmem:[%s8802 + $0x48] sm:$0xff]
    %v8813 = vld [vmem:[%s8802 + $0x50] sm:$0xff]
    %v8814 = vld [vmem:[%s8802 + $0x58] sm:$0xff]
    %v8815 = vld [vmem:[%s8802 + $0x60] sm:$0xff]
    %v8816 = vld [vmem:[%s8802 + $0x68] sm:$0xff]
    %v8817 = vld [vmem:[%s8802 + $0x70] sm:$0xff]
    %v8818 = vld [vmem:[%s8802 + $0x78] sm:$0xff]
    %v8819 = vld [vmem:[%s8802 + $0x80] sm:$0xff]
    %v8820 = vld [vmem:[%s8802 + $0x88] sm:$0xff]
    %v8821 = vld [vmem:[%s8802 + $0x90] sm:$0xff]
    %v8822 = vld [vmem:[%s8802 + $0x98] sm:$0xff]
    %v8823 = vld [vmem:[%s8802 + $0xa0] sm:$0xff]
    %v8824 = vld [vmem:[%s8802 + $0xa8] sm:$0xff]
    %v8825 = vld [vmem:[%s8802 + $0xb0] sm:$0xff]
    %v8826 = vld [vmem:[%s8802 + $0xb8] sm:$0xff]
    %v8827 = vld [vmem:[%s8802 + $0xc0] sm:$0xff]
    %v8828 = vld [vmem:[%s8802 + $0xc8] sm:$0xff]
    %v8829 = vld [vmem:[%s8802 + $0xd0] sm:$0xff]
    %v8830 = vld [vmem:[%s8802 + $0xd8] sm:$0xff]
    %v8831 = vld [vmem:[%s8802 + $0xe0] sm:$0xff]
    %v8832 = vld [vmem:[%s8802 + $0xe8] sm:$0xff]
    %v8833 = vld [vmem:[%s8802 + $0xf0] sm:$0xff]
    %v8834 = vld [vmem:[%s8802 + $0xf8] sm:$0xff]
    %s8835 = scalar_lea.vmem [#allocation32], 4
    %v8836 = vld [vmem:[%s8835] sm:$0xf]
    %v8837 = vpack.c.bf16 %v8768, %v8767
    %v8870 = vunpack.c.l.b16 %v8803
    %v8871 = vunpack.c.h.b16 %v8803
    %v8872 = vunpack.c.l.b16 %v8804
    %v8873 = vunpack.c.h.b16 %v8804
    %v8874 = vunpack.c.l.b16 %v8805
    %v8875 = vunpack.c.h.b16 %v8805
    %v8876 = vunpack.c.l.b16 %v8806
    %v8877 = vunpack.c.h.b16 %v8806
    %v8878 = vunpack.c.l.b16 %v8807
    %v8879 = vunpack.c.h.b16 %v8807
    %v8880 = vunpack.c.l.b16 %v8808
    %v8881 = vunpack.c.h.b16 %v8808
    %v8882 = vunpack.c.l.b16 %v8809
    %v8883 = vunpack.c.h.b16 %v8809
    %v8884 = vunpack.c.l.b16 %v8810
    %v8885 = vunpack.c.h.b16 %v8810
    %v8886 = vunpack.c.l.b16 %v8811
    %v8887 = vunpack.c.h.b16 %v8811
    %v8888 = vunpack.c.l.b16 %v8812
    %v8889 = vunpack.c.h.b16 %v8812
    %v8890 = vunpack.c.l.b16 %v8813
    %v8891 = vunpack.c.h.b16 %v8813
    %v8892 = vunpack.c.l.b16 %v8814
    %v8893 = vunpack.c.h.b16 %v8814
    %v8894 = vunpack.c.l.b16 %v8815
    %v8895 = vunpack.c.h.b16 %v8815
    %v8896 = vunpack.c.l.b16 %v8816
    %v8897 = vunpack.c.h.b16 %v8816
    %v8898 = vunpack.c.l.b16 %v8817
    %v8899 = vunpack.c.h.b16 %v8817
    %v8900 = vunpack.c.l.b16 %v8818
    %v8901 = vunpack.c.h.b16 %v8818
    %v8902 = vunpack.c.l.b16 %v8819
    %v8903 = vunpack.c.h.b16 %v8819
    %v8904 = vunpack.c.l.b16 %v8820
    %v8905 = vunpack.c.h.b16 %v8820
    %v8906 = vunpack.c.l.b16 %v8821
    %v8907 = vunpack.c.h.b16 %v8821
    %v8908 = vunpack.c.l.b16 %v8822
    %v8909 = vunpack.c.h.b16 %v8822
    %v8910 = vunpack.c.l.b16 %v8823
    %v8911 = vunpack.c.h.b16 %v8823
    %v8912 = vunpack.c.l.b16 %v8824
    %v8913 = vunpack.c.h.b16 %v8824
    %v8914 = vunpack.c.l.b16 %v8825
    %v8915 = vunpack.c.h.b16 %v8825
    %v8916 = vunpack.c.l.b16 %v8826
    %v8917 = vunpack.c.h.b16 %v8826
    %v8918 = vunpack.c.l.b16 %v8827
    %v8919 = vunpack.c.h.b16 %v8827
    %v8920 = vunpack.c.l.b16 %v8828
    %v8921 = vunpack.c.h.b16 %v8828
    %v8922 = vunpack.c.l.b16 %v8829
    %v8923 = vunpack.c.h.b16 %v8829
    %v8924 = vunpack.c.l.b16 %v8830
    %v8925 = vunpack.c.h.b16 %v8830
    %v8926 = vunpack.c.l.b16 %v8831
    %v8927 = vunpack.c.h.b16 %v8831
    %v8928 = vunpack.c.l.b16 %v8832
    %v8929 = vunpack.c.h.b16 %v8832
    %v8930 = vunpack.c.l.b16 %v8833
    %v8931 = vunpack.c.h.b16 %v8833
    %v8932 = vunpack.c.l.b16 %v8834
    %v8933 = vunpack.c.h.b16 %v8834
    %v8934 = vpack.c.b16 %v8874, %v8870
    %v8935 = vpack.c.b16 %v8875, %v8871
    %v8936 = vpack.c.b16 %v8876, %v8872
    %v8937 = vpack.c.b16 %v8877, %v8873
    %v8938 = vpack.c.b16 %v8882, %v8878
    %v8939 = vpack.c.b16 %v8883, %v8879
    %v8940 = vpack.c.b16 %v8884, %v8880
    %v8941 = vpack.c.b16 %v8885, %v8881
    %v8942 = vpack.c.b16 %v8890, %v8886
    %v8943 = vpack.c.b16 %v8891, %v8887
    %v8944 = vpack.c.b16 %v8892, %v8888
    %v8945 = vpack.c.b16 %v8893, %v8889
    %v8946 = vpack.c.b16 %v8898, %v8894
    %v8947 = vpack.c.b16 %v8899, %v8895
    %v8948 = vpack.c.b16 %v8900, %v8896
    %v8949 = vpack.c.b16 %v8901, %v8897
    %v8950 = vpack.c.b16 %v8906, %v8902
    %v8951 = vpack.c.b16 %v8907, %v8903
    %v8952 = vpack.c.b16 %v8908, %v8904
    %v8953 = vpack.c.b16 %v8909, %v8905
    %v8954 = vpack.c.b16 %v8914, %v8910
    %v8955 = vpack.c.b16 %v8915, %v8911
    %v8956 = vpack.c.b16 %v8916, %v8912
    %v8957 = vpack.c.b16 %v8917, %v8913
    %v8958 = vpack.c.b16 %v8922, %v8918
    %v8959 = vpack.c.b16 %v8923, %v8919
    %v8960 = vpack.c.b16 %v8924, %v8920
    %v8961 = vpack.c.b16 %v8925, %v8921
    %v8962 = vpack.c.b16 %v8930, %v8926
    %v8963 = vpack.c.b16 %v8931, %v8927
    %v8964 = vpack.c.b16 %v8932, %v8928
    %v8965 = vpack.c.b16 %v8933, %v8929
    %8998 = vmatprep.subr.bf16.mxu0 %v8963
    %8999 = vmatpush1.bf16.msra.mxu0 %v8962
    %9000 = vmatprep.subr.bf16.mxu0 %v8959
    %9001 = vmatpush1.bf16.msra.mxu0 %v8958
    %9002 = vmatprep.subr.bf16.mxu0 %v8955
    %9003 = vmatpush1.bf16.msra.mxu0 %v8954
    %9004 = vmatprep.subr.bf16.mxu0 %v8951
    %9005 = vmatpush1.bf16.msra.mxu0 %v8950
    %9006 = vmatprep.subr.bf16.mxu0 %v8947
    %9007 = vmatpush1.bf16.msra.mxu0 %v8946
    %9008 = vmatprep.subr.bf16.mxu0 %v8943
    %9009 = vmatpush1.bf16.msra.mxu0 %v8942
    %9010 = vmatprep.subr.bf16.mxu0 %v8939
    %9011 = vmatpush1.bf16.msra.mxu0 %v8938
    %9012 = vmatprep.subr.bf16.mxu0 %v8935
    %9013 = vmatpush1.bf16.msra.mxu0 %v8934
    %9014 = vmatprep.subr.bf16.mxu0 0
    %9015 = vmatpush2.bf16.msra.mxu0 0
    %9016 = vmatprep.subr.bf16.mxu0 0
    %9017 = vmatpush2.bf16.msra.mxu0 0
    %9018 = vmatprep.subr.bf16.mxu0 0
    %9019 = vmatpush2.bf16.msra.mxu0 0
    %9020 = vmatprep.subr.bf16.mxu0 0
    %9021 = vmatpush2.bf16.msra.mxu0 0
    %9022 = vmatprep.subr.bf16.mxu0 0
    %9023 = vmatpush2.bf16.msra.mxu0 0
    %9024 = vmatprep.subr.bf16.mxu0 0
    %9025 = vmatpush2.bf16.msra.mxu0 0
    %9026 = vmatprep.subr.bf16.mxu0 0
    %9027 = vmatpush2.bf16.msra.mxu0 0
    %9028 = vmatprep.subr.bf16.mxu0 0
    %9029 = vmatpush2.bf16.msra.mxu0 0
    %9030 = vmatprep.mubr.bf16.mxu0 0
    %9031 = vmatmul.mubr.bf16.gmra.mxu0 0
    %v9032 = vpop.f32.mrf.mxu0
    %v9033 = vadd.f32 0.0, %v9032
    %v9034 = vpop.f32.mrf.mxu0
    %v9035 = vadd.f32 0.0, %v9034
    %v9036 = vpop.f32.mrf.mxu0
    %v9037 = vadd.f32 0.0, %v9036
    %v9038 = vpop.f32.mrf.mxu0
    %v9039 = vadd.f32 0.0, %v9038
    %9040 = vdwg.mxu0
    %9041 = vmatprep.subr.bf16.mxu0 %v8965
    %9042 = vmatpush1.bf16.msra.mxu0 %v8964
    %9043 = vmatprep.subr.bf16.mxu0 %v8961
    %9044 = vmatpush1.bf16.msra.mxu0 %v8960
    %9045 = vmatprep.subr.bf16.mxu0 %v8957
    %9046 = vmatpush1.bf16.msra.mxu0 %v8956
    %9047 = vmatprep.subr.bf16.mxu0 %v8953
    %9048 = vmatpush1.bf16.msra.mxu0 %v8952
    %9049 = vmatprep.subr.bf16.mxu0 %v8949
    %9050 = vmatpush1.bf16.msra.mxu0 %v8948
    %9051 = vmatprep.subr.bf16.mxu0 %v8945
    %9052 = vmatpush1.bf16.msra.mxu0 %v8944
    %9053 = vmatprep.subr.bf16.mxu0 %v8941
    %9054 = vmatpush1.bf16.msra.mxu0 %v8940
    %9055 = vmatprep.subr.bf16.mxu0 %v8937
    %9056 = vmatpush1.bf16.msra.mxu0 %v8936
    %9057 = vmatprep.subr.bf16.mxu0 0
    %9058 = vmatpush2.bf16.msra.mxu0 0
    %9059 = vmatprep.subr.bf16.mxu0 0
    %9060 = vmatpush2.bf16.msra.mxu0 0
    %9061 = vmatprep.subr.bf16.mxu0 0
    %9062 = vmatpush2.bf16.msra.mxu0 0
    %9063 = vmatprep.subr.bf16.mxu0 0
    %9064 = vmatpush2.bf16.msra.mxu0 0
    %9065 = vmatprep.subr.bf16.mxu0 0
    %9066 = vmatpush2.bf16.msra.mxu0 0
    %9067 = vmatprep.subr.bf16.mxu0 0
    %9068 = vmatpush2.bf16.msra.mxu0 0
    %9069 = vmatprep.subr.bf16.mxu0 0
    %9070 = vmatpush2.bf16.msra.mxu0 0
    %9071 = vmatprep.subr.bf16.mxu0 0
    %9072 = vmatpush2.bf16.msra.mxu0 0
    %9073 = vmatprep.mubr.bf16.mxu0 0
    %9074 = vmatmul.mubr.bf16.gmra.mxu0 0
    %v9075 = vpop.f32.mrf.mxu0
    %v9076 = vadd.f32 0.0, %v9075
    %v9077 = vpop.f32.mrf.mxu0
    %v9078 = vadd.f32 0.0, %v9077
    %v9079 = vpop.f32.mrf.mxu0
    %v9080 = vadd.f32 0.0, %v9079
    %v9081 = vpop.f32.mrf.mxu0
    %v9082 = vadd.f32 0.0, %v9081
    %9083 = vdwg.mxu0
    %v9116 = vunpack.c.l.b16 %v8770
    %v9117 = vunpack.c.h.b16 %v8770
    %v9118 = vunpack.c.l.b16 %v8771
    %v9119 = vunpack.c.h.b16 %v8771
    %v9120 = vunpack.c.l.b16 %v8772
    %v9121 = vunpack.c.h.b16 %v8772
    %v9122 = vunpack.c.l.b16 %v8773
    %v9123 = vunpack.c.h.b16 %v8773
    %v9124 = vunpack.c.l.b16 %v8774
    %v9125 = vunpack.c.h.b16 %v8774
    %v9126 = vunpack.c.l.b16 %v8775
    %v9127 = vunpack.c.h.b16 %v8775
    %v9128 = vunpack.c.l.b16 %v8776
    %v9129 = vunpack.c.h.b16 %v8776
    %v9130 = vunpack.c.l.b16 %v8777
    %v9131 = vunpack.c.h.b16 %v8777
    %v9132 = vunpack.c.l.b16 %v8778
    %v9133 = vunpack.c.h.b16 %v8778
    %v9134 = vunpack.c.l.b16 %v8779
    %v9135 = vunpack.c.h.b16 %v8779
    %v9136 = vunpack.c.l.b16 %v8780
    %v9137 = vunpack.c.h.b16 %v8780
    %v9138 = vunpack.c.l.b16 %v8781
    %v9139 = vunpack.c.h.b16 %v8781
    %v9140 = vunpack.c.l.b16 %v8782
    %v9141 = vunpack.c.h.b16 %v8782
    %v9142 = vunpack.c.l.b16 %v8783
    %v9143 = vunpack.c.h.b16 %v8783
    %v9144 = vunpack.c.l.b16 %v8784
    %v9145 = vunpack.c.h.b16 %v8784
    %v9146 = vunpack.c.l.b16 %v8785
    %v9147 = vunpack.c.h.b16 %v8785
    %v9148 = vunpack.c.l.b16 %v8786
    %v9149 = vunpack.c.h.b16 %v8786
    %v9150 = vunpack.c.l.b16 %v8787
    %v9151 = vunpack.c.h.b16 %v8787
    %v9152 = vunpack.c.l.b16 %v8788
    %v9153 = vunpack.c.h.b16 %v8788
    %v9154 = vunpack.c.l.b16 %v8789
    %v9155 = vunpack.c.h.b16 %v8789
    %v9156 = vunpack.c.l.b16 %v8790
    %v9157 = vunpack.c.h.b16 %v8790
    %v9158 = vunpack.c.l.b16 %v8791
    %v9159 = vunpack.c.h.b16 %v8791
    %v9160 = vunpack.c.l.b16 %v8792
    %v9161 = vunpack.c.h.b16 %v8792
    %v9162 = vunpack.c.l.b16 %v8793
    %v9163 = vunpack.c.h.b16 %v8793
    %v9164 = vunpack.c.l.b16 %v8794
    %v9165 = vunpack.c.h.b16 %v8794
    %v9166 = vunpack.c.l.b16 %v8795
    %v9167 = vunpack.c.h.b16 %v8795
    %v9168 = vunpack.c.l.b16 %v8796
    %v9169 = vunpack.c.h.b16 %v8796
    %v9170 = vunpack.c.l.b16 %v8797
    %v9171 = vunpack.c.h.b16 %v8797
    %v9172 = vunpack.c.l.b16 %v8798
    %v9173 = vunpack.c.h.b16 %v8798
    %v9174 = vunpack.c.l.b16 %v8799
    %v9175 = vunpack.c.h.b16 %v8799
    %v9176 = vunpack.c.l.b16 %v8800
    %v9177 = vunpack.c.h.b16 %v8800
    %v9178 = vunpack.c.l.b16 %v8801
    %v9179 = vunpack.c.h.b16 %v8801
    %v9180 = vpack.c.b16 %v9120, %v9116
    %v9181 = vpack.c.b16 %v9121, %v9117
    %v9182 = vpack.c.b16 %v9122, %v9118
    %v9183 = vpack.c.b16 %v9123, %v9119
    %v9184 = vpack.c.b16 %v9128, %v9124
    %v9185 = vpack.c.b16 %v9129, %v9125
    %v9186 = vpack.c.b16 %v9130, %v9126
    %v9187 = vpack.c.b16 %v9131, %v9127
    %v9188 = vpack.c.b16 %v9136, %v9132
    %v9189 = vpack.c.b16 %v9137, %v9133
    %v9190 = vpack.c.b16 %v9138, %v9134
    %v9191 = vpack.c.b16 %v9139, %v9135
    %v9192 = vpack.c.b16 %v9144, %v9140
    %v9193 = vpack.c.b16 %v9145, %v9141
    %v9194 = vpack.c.b16 %v9146, %v9142
    %v9195 = vpack.c.b16 %v9147, %v9143
    %v9196 = vpack.c.b16 %v9152, %v9148
    %v9197 = vpack.c.b16 %v9153, %v9149
    %v9198 = vpack.c.b16 %v9154, %v9150
    %v9199 = vpack.c.b16 %v9155, %v9151
    %v9200 = vpack.c.b16 %v9160, %v9156
    %v9201 = vpack.c.b16 %v9161, %v9157
    %v9202 = vpack.c.b16 %v9162, %v9158
    %v9203 = vpack.c.b16 %v9163, %v9159
    %v9204 = vpack.c.b16 %v9168, %v9164
    %v9205 = vpack.c.b16 %v9169, %v9165
    %v9206 = vpack.c.b16 %v9170, %v9166
    %v9207 = vpack.c.b16 %v9171, %v9167
    %v9208 = vpack.c.b16 %v9176, %v9172
    %v9209 = vpack.c.b16 %v9177, %v9173
    %v9210 = vpack.c.b16 %v9178, %v9174
    %v9211 = vpack.c.b16 %v9179, %v9175
    %9244 = vmatprep.subr.bf16.mxu0 %v9209
    %9245 = vmatpush1.bf16.msra.mxu0 %v9208
    %9246 = vmatprep.subr.bf16.mxu0 %v9205
    %9247 = vmatpush1.bf16.msra.mxu0 %v9204
    %9248 = vmatprep.subr.bf16.mxu0 %v9201
    %9249 = vmatpush1.bf16.msra.mxu0 %v9200
    %9250 = vmatprep.subr.bf16.mxu0 %v9197
    %9251 = vmatpush1.bf16.msra.mxu0 %v9196
    %9252 = vmatprep.subr.bf16.mxu0 %v9193
    %9253 = vmatpush1.bf16.msra.mxu0 %v9192
    %9254 = vmatprep.subr.bf16.mxu0 %v9189
    %9255 = vmatpush1.bf16.msra.mxu0 %v9188
    %9256 = vmatprep.subr.bf16.mxu0 %v9185
    %9257 = vmatpush1.bf16.msra.mxu0 %v9184
    %9258 = vmatprep.subr.bf16.mxu0 %v9181
    %9259 = vmatpush1.bf16.msra.mxu0 %v9180
    %9260 = vmatprep.subr.bf16.mxu0 0
    %9261 = vmatpush2.bf16.msra.mxu0 0
    %9262 = vmatprep.subr.bf16.mxu0 0
    %9263 = vmatpush2.bf16.msra.mxu0 0
    %9264 = vmatprep.subr.bf16.mxu0 0
    %9265 = vmatpush2.bf16.msra.mxu0 0
    %9266 = vmatprep.subr.bf16.mxu0 0
    %9267 = vmatpush2.bf16.msra.mxu0 0
    %9268 = vmatprep.subr.bf16.mxu0 0
    %9269 = vmatpush2.bf16.msra.mxu0 0
    %9270 = vmatprep.subr.bf16.mxu0 0
    %9271 = vmatpush2.bf16.msra.mxu0 0
    %9272 = vmatprep.subr.bf16.mxu0 0
    %9273 = vmatpush2.bf16.msra.mxu0 0
    %9274 = vmatprep.subr.bf16.mxu0 0
    %9275 = vmatpush2.bf16.msra.mxu0 0
    %9276 = vmatprep.mubr.bf16.mxu0 0
    %9277 = vmatmul.mubr.bf16.gmra.mxu0 %v8837
    %v9278 = vpop.f32.mrf.mxu0
    %v9279 = vadd.f32 %v9033, %v9278
    %v9280 = vpop.f32.mrf.mxu0
    %v9281 = vadd.f32 %v9035, %v9280
    %v9282 = vpop.f32.mrf.mxu0
    %v9283 = vadd.f32 %v9037, %v9282
    %v9284 = vpop.f32.mrf.mxu0
    %v9285 = vadd.f32 %v9039, %v9284
    %9286 = vdwg.mxu0
    %9287 = vmatprep.subr.bf16.mxu0 %v9211
    %9288 = vmatpush1.bf16.msra.mxu0 %v9210
    %9289 = vmatprep.subr.bf16.mxu0 %v9207
    %9290 = vmatpush1.bf16.msra.mxu0 %v9206
    %9291 = vmatprep.subr.bf16.mxu0 %v9203
    %9292 = vmatpush1.bf16.msra.mxu0 %v9202
    %9293 = vmatprep.subr.bf16.mxu0 %v9199
    %9294 = vmatpush1.bf16.msra.mxu0 %v9198
    %9295 = vmatprep.subr.bf16.mxu0 %v9195
    %9296 = vmatpush1.bf16.msra.mxu0 %v9194
    %9297 = vmatprep.subr.bf16.mxu0 %v9191
    %9298 = vmatpush1.bf16.msra.mxu0 %v9190
    %9299 = vmatprep.subr.bf16.mxu0 %v9187
    %9300 = vmatpush1.bf16.msra.mxu0 %v9186
    %9301 = vmatprep.subr.bf16.mxu0 %v9183
    %9302 = vmatpush1.bf16.msra.mxu0 %v9182
    %9303 = vmatprep.subr.bf16.mxu0 0
    %9304 = vmatpush2.bf16.msra.mxu0 0
    %9305 = vmatprep.subr.bf16.mxu0 0
    %9306 = vmatpush2.bf16.msra.mxu0 0
    %9307 = vmatprep.subr.bf16.mxu0 0
    %9308 = vmatpush2.bf16.msra.mxu0 0
    %9309 = vmatprep.subr.bf16.mxu0 0
    %9310 = vmatpush2.bf16.msra.mxu0 0
    %9311 = vmatprep.subr.bf16.mxu0 0
    %9312 = vmatpush2.bf16.msra.mxu0 0
    %9313 = vmatprep.subr.bf16.mxu0 0
    %9314 = vmatpush2.bf16.msra.mxu0 0
    %9315 = vmatprep.subr.bf16.mxu0 0
    %9316 = vmatpush2.bf16.msra.mxu0 0
    %9317 = vmatprep.subr.bf16.mxu0 0
    %9318 = vmatpush2.bf16.msra.mxu0 0
    %9319 = vmatprep.mubr.bf16.mxu0 0
    %9320 = vmatmul.mubr.bf16.gmra.mxu0 %v8837
    %v9321 = vpop.f32.mrf.mxu0
    %v9322 = vadd.f32 %v9076, %v9321
    %v9323 = vpop.f32.mrf.mxu0
    %v9324 = vadd.f32 %v9078, %v9323
    %v9325 = vpop.f32.mrf.mxu0
    %v9326 = vadd.f32 %v9080, %v9325
    %v9327 = vpop.f32.mrf.mxu0
    %v9328 = vadd.f32 %v9082, %v9327
    %9329 = vdwg.mxu0
    %v9331 = vlaneseq
    %v9332 = vshrl.u32 %v9331, 7
    %v9333 = vsub.s32 0, %v9332
    %v9334 = vrot.slane %v8836, %v9333
    %v9335 = vlaneseq
    %v9336 = vshrl.u32 %v9335, 7
    %v9337 = vsub.s32 1, %v9336
    %v9338 = vrot.slane %v8836, %v9337
    %v9339 = vlaneseq
    %v9340 = vshrl.u32 %v9339, 7
    %v9341 = vsub.s32 2, %v9340
    %v9342 = vrot.slane %v8836, %v9341
    %v9343 = vlaneseq
    %v9344 = vshrl.u32 %v9343, 7
    %v9345 = vsub.s32 3, %v9344
    %v9346 = vrot.slane %v8836, %v9345
    %v9351 = vadd.f32 %v9279, %v9334
    %v9352 = vadd.f32 %v9281, %v9338
    %v9353 = vadd.f32 %v9322, %v9342
    %v9354 = vadd.f32 %v9324, %v9346
    %v9355 = vadd.f32 %v9283, %v9334
    %v9356 = vadd.f32 %v9285, %v9338
    %v9357 = vadd.f32 %v9326, %v9342
    %v9358 = vadd.f32 %v9328, %v9346
    %v9359 = vxor.u32 %v9351, 2147483648
    %v9360 = vxor.u32 %v9355, 2147483648
    %v9361 = vmul.f32 %v9359, 1.442695
    %v9362 = vpow.pop %v9361
    %v9363 = vmul.f32 %v9360, 1.442695
    %v9364 = vpow.pop %v9363
    %v9365 = vadd.f32 %v9362, 1.0
    %v9366 = vadd.f32 %v9364, 1.0
    %v9367 = vrcp.pop %v9365
    %v9368 = vmul.f32 1.0, %v9367
    %v9369 = vrcp.pop %v9366
    %v9370 = vmul.f32 1.0, %v9369
    %v9371 = vxor.u32 %v9352, 2147483648
    %v9372 = vxor.u32 %v9356, 2147483648
    %v9373 = vmul.f32 %v9371, 1.442695
    %v9374 = vpow.pop %v9373
    %v9375 = vmul.f32 %v9372, 1.442695
    %v9376 = vpow.pop %v9375
    %v9377 = vadd.f32 %v9374, 1.0
    %v9378 = vadd.f32 %v9376, 1.0
    %v9379 = vrcp.pop %v9377
    %v9380 = vmul.f32 1.0, %v9379
    %v9381 = vrcp.pop %v9378
    %v9382 = vmul.f32 1.0, %v9381
    %v9383 = vtanh.pop %v9353
    %v9384 = vtanh.pop %v9357
    %v9385 = vxor.u32 %v9354, 2147483648
    %v9386 = vxor.u32 %v9358, 2147483648
    %v9387 = vmul.f32 %v9385, 1.442695
    %v9388 = vpow.pop %v9387
    %v9389 = vmul.f32 %v9386, 1.442695
    %v9390 = vpow.pop %v9389
    %v9391 = vadd.f32 %v9388, 1.0
    %v9392 = vadd.f32 %v9390, 1.0
    %v9393 = vrcp.pop %v9391
    %v9394 = vmul.f32 1.0, %v9393
    %v9395 = vrcp.pop %v9392
    %v9396 = vmul.f32 1.0, %v9395
    %v9397 = vmul.f32 %v9380, 0.0
    %v9398 = vmul.f32 %v9382, 0.0
    %v9399 = vmul.f32 %v9368, %v9383
    %v9400 = vmul.f32 %v9370, %v9384
    %v9401 = vadd.f32 %v9397, %v9399
    %v9402 = vadd.f32 %v9398, %v9400
    %v9403 = vtanh.pop %v9401
    %v9404 = vtanh.pop %v9402
    %v9405 = vmul.f32 %v9394, %v9403
    %v9406 = vmul.f32 %v9396, %v9404
    %v9407 = vadd.f32 %v9405, 0.0
    %v9408 = vadd.f32 %v9406, 0.0
    %v9409 = vpack.c.bf16 %v8134, %v8133
    %9410 = vmatprep.subr.bf16.mxu0 %v8325
    %9411 = vmatpush1.bf16.msra.mxu0 %v8324
    %9412 = vmatprep.subr.bf16.mxu0 %v8321
    %9413 = vmatpush1.bf16.msra.mxu0 %v8320
    %9414 = vmatprep.subr.bf16.mxu0 %v8317
    %9415 = vmatpush1.bf16.msra.mxu0 %v8316
    %9416 = vmatprep.subr.bf16.mxu0 %v8313
    %9417 = vmatpush1.bf16.msra.mxu0 %v8312
    %9418 = vmatprep.subr.bf16.mxu0 %v8309
    %9419 = vmatpush1.bf16.msra.mxu0 %v8308
    %9420 = vmatprep.subr.bf16.mxu0 %v8305
    %9421 = vmatpush1.bf16.msra.mxu0 %v8304
    %9422 = vmatprep.subr.bf16.mxu0 %v8301
    %9423 = vmatpush1.bf16.msra.mxu0 %v8300
    %9424 = vmatprep.subr.bf16.mxu0 %v8297
    %9425 = vmatpush1.bf16.msra.mxu0 %v8296
    %9426 = vmatprep.subr.bf16.mxu0 0
    %9427 = vmatpush2.bf16.msra.mxu0 0
    %9428 = vmatprep.subr.bf16.mxu0 0
    %9429 = vmatpush2.bf16.msra.mxu0 0
    %9430 = vmatprep.subr.bf16.mxu0 0
    %9431 = vmatpush2.bf16.msra.mxu0 0
    %9432 = vmatprep.subr.bf16.mxu0 0
    %9433 = vmatpush2.bf16.msra.mxu0 0
    %9434 = vmatprep.subr.bf16.mxu0 0
    %9435 = vmatpush2.bf16.msra.mxu0 0
    %9436 = vmatprep.subr.bf16.mxu0 0
    %9437 = vmatpush2.bf16.msra.mxu0 0
    %9438 = vmatprep.subr.bf16.mxu0 0
    %9439 = vmatpush2.bf16.msra.mxu0 0
    %9440 = vmatprep.subr.bf16.mxu0 0
    %9441 = vmatpush2.bf16.msra.mxu0 0
    %9442 = vmatprep.mubr.bf16.mxu0 0
    %9443 = vmatmul.mubr.bf16.gmra.mxu0 %v8837
    %v9444 = vpop.f32.mrf.mxu0
    %v9445 = vadd.f32 0.0, %v9444
    %v9446 = vpop.f32.mrf.mxu0
    %v9447 = vadd.f32 0.0, %v9446
    %v9448 = vpop.f32.mrf.mxu0
    %v9449 = vadd.f32 0.0, %v9448
    %v9450 = vpop.f32.mrf.mxu0
    %v9451 = vadd.f32 0.0, %v9450
    %9452 = vdwg.mxu0
    %9453 = vmatprep.subr.bf16.mxu0 %v8327
    %9454 = vmatpush1.bf16.msra.mxu0 %v8326
    %9455 = vmatprep.subr.bf16.mxu0 %v8323
    %9456 = vmatpush1.bf16.msra.mxu0 %v8322
    %9457 = vmatprep.subr.bf16.mxu0 %v8319
    %9458 = vmatpush1.bf16.msra.mxu0 %v8318
    %9459 = vmatprep.subr.bf16.mxu0 %v8315
    %9460 = vmatpush1.bf16.msra.mxu0 %v8314
    %9461 = vmatprep.subr.bf16.mxu0 %v8311
    %9462 = vmatpush1.bf16.msra.mxu0 %v8310
    %9463 = vmatprep.subr.bf16.mxu0 %v8307
    %9464 = vmatpush1.bf16.msra.mxu0 %v8306
    %9465 = vmatprep.subr.bf16.mxu0 %v8303
    %9466 = vmatpush1.bf16.msra.mxu0 %v8302
    %9467 = vmatprep.subr.bf16.mxu0 %v8299
    %9468 = vmatpush1.bf16.msra.mxu0 %v8298
    %9469 = vmatprep.subr.bf16.mxu0 0
    %9470 = vmatpush2.bf16.msra.mxu0 0
    %9471 = vmatprep.subr.bf16.mxu0 0
    %9472 = vmatpush2.bf16.msra.mxu0 0
    %9473 = vmatprep.subr.bf16.mxu0 0
    %9474 = vmatpush2.bf16.msra.mxu0 0
    %9475 = vmatprep.subr.bf16.mxu0 0
    %9476 = vmatpush2.bf16.msra.mxu0 0
    %9477 = vmatprep.subr.bf16.mxu0 0
    %9478 = vmatpush2.bf16.msra.mxu0 0
    %9479 = vmatprep.subr.bf16.mxu0 0
    %9480 = vmatpush2.bf16.msra.mxu0 0
    %9481 = vmatprep.subr.bf16.mxu0 0
    %9482 = vmatpush2.bf16.msra.mxu0 0
    %9483 = vmatprep.subr.bf16.mxu0 0
    %9484 = vmatpush2.bf16.msra.mxu0 0
    %9485 = vmatprep.mubr.bf16.mxu0 0
    %9486 = vmatmul.mubr.bf16.gmra.mxu0 %v8837
    %v9487 = vpop.f32.mrf.mxu0
    %v9488 = vadd.f32 0.0, %v9487
    %v9489 = vpop.f32.mrf.mxu0
    %v9490 = vadd.f32 0.0, %v9489
    %v9491 = vpop.f32.mrf.mxu0
    %v9492 = vadd.f32 0.0, %v9491
    %v9493 = vpop.f32.mrf.mxu0
    %v9494 = vadd.f32 0.0, %v9493
    %9495 = vdwg.mxu0
    %9496 = vmatprep.subr.bf16.mxu0 %v8571
    %9497 = vmatpush1.bf16.msra.mxu0 %v8570
    %9498 = vmatprep.subr.bf16.mxu0 %v8567
    %9499 = vmatpush1.bf16.msra.mxu0 %v8566
    %9500 = vmatprep.subr.bf16.mxu0 %v8563
    %9501 = vmatpush1.bf16.msra.mxu0 %v8562
    %9502 = vmatprep.subr.bf16.mxu0 %v8559
    %9503 = vmatpush1.bf16.msra.mxu0 %v8558
    %9504 = vmatprep.subr.bf16.mxu0 %v8555
    %9505 = vmatpush1.bf16.msra.mxu0 %v8554
    %9506 = vmatprep.subr.bf16.mxu0 %v8551
    %9507 = vmatpush1.bf16.msra.mxu0 %v8550
    %9508 = vmatprep.subr.bf16.mxu0 %v8547
    %9509 = vmatpush1.bf16.msra.mxu0 %v8546
    %9510 = vmatprep.subr.bf16.mxu0 %v8543
    %9511 = vmatpush1.bf16.msra.mxu0 %v8542
    %9512 = vmatprep.subr.bf16.mxu0 0
    %9513 = vmatpush2.bf16.msra.mxu0 0
    %9514 = vmatprep.subr.bf16.mxu0 0
    %9515 = vmatpush2.bf16.msra.mxu0 0
    %9516 = vmatprep.subr.bf16.mxu0 0
    %9517 = vmatpush2.bf16.msra.mxu0 0
    %9518 = vmatprep.subr.bf16.mxu0 0
    %9519 = vmatpush2.bf16.msra.mxu0 0
    %9520 = vmatprep.subr.bf16.mxu0 0
    %9521 = vmatpush2.bf16.msra.mxu0 0
    %9522 = vmatprep.subr.bf16.mxu0 0
    %9523 = vmatpush2.bf16.msra.mxu0 0
    %9524 = vmatprep.subr.bf16.mxu0 0
    %9525 = vmatpush2.bf16.msra.mxu0 0
    %9526 = vmatprep.subr.bf16.mxu0 0
    %9527 = vmatpush2.bf16.msra.mxu0 0
    %9528 = vmatprep.mubr.bf16.mxu0 0
    %9529 = vmatmul.mubr.bf16.gmra.mxu0 %v9409
    %v9530 = vpop.f32.mrf.mxu0
    %v9531 = vadd.f32 %v9445, %v9530
    %v9532 = vpop.f32.mrf.mxu0
    %v9533 = vadd.f32 %v9447, %v9532
    %v9534 = vpop.f32.mrf.mxu0
    %v9535 = vadd.f32 %v9449, %v9534
    %v9536 = vpop.f32.mrf.mxu0
    %v9537 = vadd.f32 %v9451, %v9536
    %9538 = vdwg.mxu0
    %9539 = vmatprep.subr.bf16.mxu0 %v8573
    %9540 = vmatpush1.bf16.msra.mxu0 %v8572
    %9541 = vmatprep.subr.bf16.mxu0 %v8569
    %9542 = vmatpush1.bf16.msra.mxu0 %v8568
    %9543 = vmatprep.subr.bf16.mxu0 %v8565
    %9544 = vmatpush1.bf16.msra.mxu0 %v8564
    %9545 = vmatprep.subr.bf16.mxu0 %v8561
    %9546 = vmatpush1.bf16.msra.mxu0 %v8560
    %9547 = vmatprep.subr.bf16.mxu0 %v8557
    %9548 = vmatpush1.bf16.msra.mxu0 %v8556
    %9549 = vmatprep.subr.bf16.mxu0 %v8553
    %9550 = vmatpush1.bf16.msra.mxu0 %v8552
    %9551 = vmatprep.subr.bf16.mxu0 %v8549
    %9552 = vmatpush1.bf16.msra.mxu0 %v8548
    %9553 = vmatprep.subr.bf16.mxu0 %v8545
    %9554 = vmatpush1.bf16.msra.mxu0 %v8544
    %9555 = vmatprep.subr.bf16.mxu0 0
    %9556 = vmatpush2.bf16.msra.mxu0 0
    %9557 = vmatprep.subr.bf16.mxu0 0
    %9558 = vmatpush2.bf16.msra.mxu0 0
    %9559 = vmatprep.subr.bf16.mxu0 0
    %9560 = vmatpush2.bf16.msra.mxu0 0
    %9561 = vmatprep.subr.bf16.mxu0 0
    %9562 = vmatpush2.bf16.msra.mxu0 0
    %9563 = vmatprep.subr.bf16.mxu0 0
    %9564 = vmatpush2.bf16.msra.mxu0 0
    %9565 = vmatprep.subr.bf16.mxu0 0
    %9566 = vmatpush2.bf16.msra.mxu0 0
    %9567 = vmatprep.subr.bf16.mxu0 0
    %9568 = vmatpush2.bf16.msra.mxu0 0
    %9569 = vmatprep.subr.bf16.mxu0 0
    %9570 = vmatpush2.bf16.msra.mxu0 0
    %9571 = vmatprep.mubr.bf16.mxu0 0
    %9572 = vmatmul.mubr.bf16.gmra.mxu0 %v9409
    %v9573 = vpop.f32.mrf.mxu0
    %v9574 = vadd.f32 %v9488, %v9573
    %v9575 = vpop.f32.mrf.mxu0
    %v9576 = vadd.f32 %v9490, %v9575
    %v9577 = vpop.f32.mrf.mxu0
    %v9578 = vadd.f32 %v9492, %v9577
    %v9579 = vpop.f32.mrf.mxu0
    %v9580 = vadd.f32 %v9494, %v9579
    %9581 = vdwg.mxu0
    %v9582 = vadd.f32 %v9531, %v8696
    %v9583 = vadd.f32 %v9533, %v8700
    %v9584 = vadd.f32 %v9574, %v8704
    %v9585 = vadd.f32 %v9576, %v8708
    %v9586 = vadd.f32 %v9535, %v8696
    %v9587 = vadd.f32 %v9537, %v8700
    %v9588 = vadd.f32 %v9578, %v8704
    %v9589 = vadd.f32 %v9580, %v8708
    %v9590 = vxor.u32 %v9582, 2147483648
    %v9591 = vxor.u32 %v9586, 2147483648
    %v9592 = vmul.f32 %v9590, 1.442695
    %v9593 = vpow.pop %v9592
    %v9594 = vmul.f32 %v9591, 1.442695
    %v9595 = vpow.pop %v9594
    %v9596 = vadd.f32 %v9593, 1.0
    %v9597 = vadd.f32 %v9595, 1.0
    %v9598 = vrcp.pop %v9596
    %v9599 = vmul.f32 1.0, %v9598
    %v9600 = vrcp.pop %v9597
    %v9601 = vmul.f32 1.0, %v9600
    %v9602 = vxor.u32 %v9583, 2147483648
    %v9603 = vxor.u32 %v9587, 2147483648
    %v9604 = vmul.f32 %v9602, 1.442695
    %v9605 = vpow.pop %v9604
    %v9606 = vmul.f32 %v9603, 1.442695
    %v9607 = vpow.pop %v9606
    %v9608 = vadd.f32 %v9605, 1.0
    %v9609 = vadd.f32 %v9607, 1.0
    %v9610 = vrcp.pop %v9608
    %v9611 = vmul.f32 1.0, %v9610
    %v9612 = vrcp.pop %v9609
    %v9613 = vmul.f32 1.0, %v9612
    %v9614 = vtanh.pop %v9584
    %v9615 = vtanh.pop %v9588
    %v9616 = vxor.u32 %v9585, 2147483648
    %v9617 = vxor.u32 %v9589, 2147483648
    %v9618 = vmul.f32 %v9616, 1.442695
    %v9619 = vpow.pop %v9618
    %v9620 = vmul.f32 %v9617, 1.442695
    %v9621 = vpow.pop %v9620
    %v9622 = vadd.f32 %v9619, 1.0
    %v9623 = vadd.f32 %v9621, 1.0
    %v9624 = vrcp.pop %v9622
    %v9625 = vmul.f32 1.0, %v9624
    %v9626 = vrcp.pop %v9623
    %v9627 = vmul.f32 1.0, %v9626
    %v9628 = vmul.f32 %v9611, %v8763
    %v9629 = vmul.f32 %v9613, %v8764
    %v9630 = vmul.f32 %v9599, %v9614
    %v9631 = vmul.f32 %v9601, %v9615
    %v9632 = vadd.f32 %v9628, %v9630
    %v9633 = vadd.f32 %v9629, %v9631
    %v9634 = vtanh.pop %v9632
    %v9635 = vtanh.pop %v9633
    %v9636 = vmul.f32 %v9625, %v9634
    %v9637 = vmul.f32 %v9627, %v9635
    %v9638 = vpack.c.bf16 %v9637, %v9636
    %v9639 = vpack.c.bf16 %v9406, %v9405
    %9640 = vmatprep.subr.bf16.mxu0 %v8963
    %9641 = vmatpush1.bf16.msra.mxu0 %v8962
    %9642 = vmatprep.subr.bf16.mxu0 %v8959
    %9643 = vmatpush1.bf16.msra.mxu0 %v8958
    %9644 = vmatprep.subr.bf16.mxu0 %v8955
    %9645 = vmatpush1.bf16.msra.mxu0 %v8954
    %9646 = vmatprep.subr.bf16.mxu0 %v8951
    %9647 = vmatpush1.bf16.msra.mxu0 %v8950
    %9648 = vmatprep.subr.bf16.mxu0 %v8947
    %9649 = vmatpush1.bf16.msra.mxu0 %v8946
    %9650 = vmatprep.subr.bf16.mxu0 %v8943
    %9651 = vmatpush1.bf16.msra.mxu0 %v8942
    %9652 = vmatprep.subr.bf16.mxu0 %v8939
    %9653 = vmatpush1.bf16.msra.mxu0 %v8938
    %9654 = vmatprep.subr.bf16.mxu0 %v8935
    %9655 = vmatpush1.bf16.msra.mxu0 %v8934
    %9656 = vmatprep.subr.bf16.mxu0 0
    %9657 = vmatpush2.bf16.msra.mxu0 0
    %9658 = vmatprep.subr.bf16.mxu0 0
    %9659 = vmatpush2.bf16.msra.mxu0 0
    %9660 = vmatprep.subr.bf16.mxu0 0
    %9661 = vmatpush2.bf16.msra.mxu0 0
    %9662 = vmatprep.subr.bf16.mxu0 0
    %9663 = vmatpush2.bf16.msra.mxu0 0
    %9664 = vmatprep.subr.bf16.mxu0 0
    %9665 = vmatpush2.bf16.msra.mxu0 0
    %9666 = vmatprep.subr.bf16.mxu0 0
    %9667 = vmatpush2.bf16.msra.mxu0 0
    %9668 = vmatprep.subr.bf16.mxu0 0
    %9669 = vmatpush2.bf16.msra.mxu0 0
    %9670 = vmatprep.subr.bf16.mxu0 0
    %9671 = vmatpush2.bf16.msra.mxu0 0
    %9672 = vmatprep.mubr.bf16.mxu0 0
    %9673 = vmatmul.mubr.bf16.gmra.mxu0 %v9639
    %v9674 = vpop.f32.mrf.mxu0
    %v9675 = vadd.f32 0.0, %v9674
    %v9676 = vpop.f32.mrf.mxu0
    %v9677 = vadd.f32 0.0, %v9676
    %v9678 = vpop.f32.mrf.mxu0
    %v9679 = vadd.f32 0.0, %v9678
    %v9680 = vpop.f32.mrf.mxu0
    %v9681 = vadd.f32 0.0, %v9680
    %9682 = vdwg.mxu0
    %9683 = vmatprep.subr.bf16.mxu0 %v8965
    %9684 = vmatpush1.bf16.msra.mxu0 %v8964
    %9685 = vmatprep.subr.bf16.mxu0 %v8961
    %9686 = vmatpush1.bf16.msra.mxu0 %v8960
    %9687 = vmatprep.subr.bf16.mxu0 %v8957
    %9688 = vmatpush1.bf16.msra.mxu0 %v8956
    %9689 = vmatprep.subr.bf16.mxu0 %v8953
    %9690 = vmatpush1.bf16.msra.mxu0 %v8952
    %9691 = vmatprep.subr.bf16.mxu0 %v8949
    %9692 = vmatpush1.bf16.msra.mxu0 %v8948
    %9693 = vmatprep.subr.bf16.mxu0 %v8945
    %9694 = vmatpush1.bf16.msra.mxu0 %v8944
    %9695 = vmatprep.subr.bf16.mxu0 %v8941
    %9696 = vmatpush1.bf16.msra.mxu0 %v8940
    %9697 = vmatprep.subr.bf16.mxu0 %v8937
    %9698 = vmatpush1.bf16.msra.mxu0 %v8936
    %9699 = vmatprep.subr.bf16.mxu0 0
    %9700 = vmatpush2.bf16.msra.mxu0 0
    %9701 = vmatprep.subr.bf16.mxu0 0
    %9702 = vmatpush2.bf16.msra.mxu0 0
    %9703 = vmatprep.subr.bf16.mxu0 0
    %9704 = vmatpush2.bf16.msra.mxu0 0
    %9705 = vmatprep.subr.bf16.mxu0 0
    %9706 = vmatpush2.bf16.msra.mxu0 0
    %9707 = vmatprep.subr.bf16.mxu0 0
    %9708 = vmatpush2.bf16.msra.mxu0 0
    %9709 = vmatprep.subr.bf16.mxu0 0
    %9710 = vmatpush2.bf16.msra.mxu0 0
    %9711 = vmatprep.subr.bf16.mxu0 0
    %9712 = vmatpush2.bf16.msra.mxu0 0
    %9713 = vmatprep.subr.bf16.mxu0 0
    %9714 = vmatpush2.bf16.msra.mxu0 0
    %9715 = vmatprep.mubr.bf16.mxu0 0
    %9716 = vmatmul.mubr.bf16.gmra.mxu0 %v9639
    %v9717 = vpop.f32.mrf.mxu0
    %v9718 = vadd.f32 0.0, %v9717
    %v9719 = vpop.f32.mrf.mxu0
    %v9720 = vadd.f32 0.0, %v9719
    %v9721 = vpop.f32.mrf.mxu0
    %v9722 = vadd.f32 0.0, %v9721
    %v9723 = vpop.f32.mrf.mxu0
    %v9724 = vadd.f32 0.0, %v9723
    %9725 = vdwg.mxu0
    %9726 = vmatprep.subr.bf16.mxu0 %v9209
    %9727 = vmatpush1.bf16.msra.mxu0 %v9208
    %9728 = vmatprep.subr.bf16.mxu0 %v9205
    %9729 = vmatpush1.bf16.msra.mxu0 %v9204
    %9730 = vmatprep.subr.bf16.mxu0 %v9201
    %9731 = vmatpush1.bf16.msra.mxu0 %v9200
    %9732 = vmatprep.subr.bf16.mxu0 %v9197
    %9733 = vmatpush1.bf16.msra.mxu0 %v9196
    %9734 = vmatprep.subr.bf16.mxu0 %v9193
    %9735 = vmatpush1.bf16.msra.mxu0 %v9192
    %9736 = vmatprep.subr.bf16.mxu0 %v9189
    %9737 = vmatpush1.bf16.msra.mxu0 %v9188
    %9738 = vmatprep.subr.bf16.mxu0 %v9185
    %9739 = vmatpush1.bf16.msra.mxu0 %v9184
    %9740 = vmatprep.subr.bf16.mxu0 %v9181
    %9741 = vmatpush1.bf16.msra.mxu0 %v9180
    %9742 = vmatprep.subr.bf16.mxu0 0
    %9743 = vmatpush2.bf16.msra.mxu0 0
    %9744 = vmatprep.subr.bf16.mxu0 0
    %9745 = vmatpush2.bf16.msra.mxu0 0
    %9746 = vmatprep.subr.bf16.mxu0 0
    %9747 = vmatpush2.bf16.msra.mxu0 0
    %9748 = vmatprep.subr.bf16.mxu0 0
    %9749 = vmatpush2.bf16.msra.mxu0 0
    %9750 = vmatprep.subr.bf16.mxu0 0
    %9751 = vmatpush2.bf16.msra.mxu0 0
    %9752 = vmatprep.subr.bf16.mxu0 0
    %9753 = vmatpush2.bf16.msra.mxu0 0
    %9754 = vmatprep.subr.bf16.mxu0 0
    %9755 = vmatpush2.bf16.msra.mxu0 0
    %9756 = vmatprep.subr.bf16.mxu0 0
    %9757 = vmatpush2.bf16.msra.mxu0 0
    %9758 = vmatprep.mubr.bf16.mxu0 0
    %9759 = vmatmul.mubr.bf16.gmra.mxu0 %v9638
    %v9760 = vpop.f32.mrf.mxu0
    %v9761 = vadd.f32 %v9675, %v9760
    %v9762 = vpop.f32.mrf.mxu0
    %v9763 = vadd.f32 %v9677, %v9762
    %v9764 = vpop.f32.mrf.mxu0
    %v9765 = vadd.f32 %v9679, %v9764
    %v9766 = vpop.f32.mrf.mxu0
    %v9767 = vadd.f32 %v9681, %v9766
    %9768 = vdwg.mxu0
    %9769 = vmatprep.subr.bf16.mxu0 %v9211
    %9770 = vmatpush1.bf16.msra.mxu0 %v9210
    %9771 = vmatprep.subr.bf16.mxu0 %v9207
    %9772 = vmatpush1.bf16.msra.mxu0 %v9206
    %9773 = vmatprep.subr.bf16.mxu0 %v9203
    %9774 = vmatpush1.bf16.msra.mxu0 %v9202
    %9775 = vmatprep.subr.bf16.mxu0 %v9199
    %9776 = vmatpush1.bf16.msra.mxu0 %v9198
    %9777 = vmatprep.subr.bf16.mxu0 %v9195
    %9778 = vmatpush1.bf16.msra.mxu0 %v9194
    %9779 = vmatprep.subr.bf16.mxu0 %v9191
    %9780 = vmatpush1.bf16.msra.mxu0 %v9190
    %9781 = vmatprep.subr.bf16.mxu0 %v9187
    %9782 = vmatpush1.bf16.msra.mxu0 %v9186
    %9783 = vmatprep.subr.bf16.mxu0 %v9183
    %9784 = vmatpush1.bf16.msra.mxu0 %v9182
    %9785 = vmatprep.subr.bf16.mxu0 0
    %9786 = vmatpush2.bf16.msra.mxu0 0
    %9787 = vmatprep.subr.bf16.mxu0 0
    %9788 = vmatpush2.bf16.msra.mxu0 0
    %9789 = vmatprep.subr.bf16.mxu0 0
    %9790 = vmatpush2.bf16.msra.mxu0 0
    %9791 = vmatprep.subr.bf16.mxu0 0
    %9792 = vmatpush2.bf16.msra.mxu0 0
    %9793 = vmatprep.subr.bf16.mxu0 0
    %9794 = vmatpush2.bf16.msra.mxu0 0
    %9795 = vmatprep.subr.bf16.mxu0 0
    %9796 = vmatpush2.bf16.msra.mxu0 0
    %9797 = vmatprep.subr.bf16.mxu0 0
    %9798 = vmatpush2.bf16.msra.mxu0 0
    %9799 = vmatprep.subr.bf16.mxu0 0
    %9800 = vmatpush2.bf16.msra.mxu0 0
    %9801 = vmatprep.mubr.bf16.mxu0 0
    %9802 = vmatmul.mubr.bf16.gmra.mxu0 %v9638
    %v9803 = vpop.f32.mrf.mxu0
    %v9804 = vadd.f32 %v9718, %v9803
    %v9805 = vpop.f32.mrf.mxu0
    %v9806 = vadd.f32 %v9720, %v9805
    %v9807 = vpop.f32.mrf.mxu0
    %v9808 = vadd.f32 %v9722, %v9807
    %v9809 = vpop.f32.mrf.mxu0
    %v9810 = vadd.f32 %v9724, %v9809
    %9811 = vdwg.mxu0
    %v9812 = vadd.f32 %v9761, %v9334
    %v9813 = vadd.f32 %v9763, %v9338
    %v9814 = vadd.f32 %v9804, %v9342
    %v9815 = vadd.f32 %v9806, %v9346
    %v9816 = vadd.f32 %v9765, %v9334
    %v9817 = vadd.f32 %v9767, %v9338
    %v9818 = vadd.f32 %v9808, %v9342
    %v9819 = vadd.f32 %v9810, %v9346
    %v9820 = vxor.u32 %v9812, 2147483648
    %v9821 = vxor.u32 %v9816, 2147483648
    %v9822 = vmul.f32 %v9820, 1.442695
    %v9823 = vpow.pop %v9822
    %v9824 = vmul.f32 %v9821, 1.442695
    %v9825 = vpow.pop %v9824
    %v9826 = vadd.f32 %v9823, 1.0
    %v9827 = vadd.f32 %v9825, 1.0
    %v9828 = vrcp.pop %v9826
    %v9829 = vmul.f32 1.0, %v9828
    %v9830 = vrcp.pop %v9827
    %v9831 = vmul.f32 1.0, %v9830
    %v9832 = vxor.u32 %v9813, 2147483648
    %v9833 = vxor.u32 %v9817, 2147483648
    %v9834 = vmul.f32 %v9832, 1.442695
    %v9835 = vpow.pop %v9834
    %v9836 = vmul.f32 %v9833, 1.442695
    %v9837 = vpow.pop %v9836
    %v9838 = vadd.f32 %v9835, 1.0
    %v9839 = vadd.f32 %v9837, 1.0
    %v9840 = vrcp.pop %v9838
    %v9841 = vmul.f32 1.0, %v9840
    %v9842 = vrcp.pop %v9839
    %v9843 = vmul.f32 1.0, %v9842
    %v9844 = vtanh.pop %v9814
    %v9845 = vtanh.pop %v9818
    %v9846 = vxor.u32 %v9815, 2147483648
    %v9847 = vxor.u32 %v9819, 2147483648
    %v9848 = vmul.f32 %v9846, 1.442695
    %v9849 = vpow.pop %v9848
    %v9850 = vmul.f32 %v9847, 1.442695
    %v9851 = vpow.pop %v9850
    %v9852 = vadd.f32 %v9849, 1.0
    %v9853 = vadd.f32 %v9851, 1.0
    %v9854 = vrcp.pop %v9852
    %v9855 = vmul.f32 1.0, %v9854
    %v9856 = vrcp.pop %v9853
    %v9857 = vmul.f32 1.0, %v9856
    %v9858 = vmul.f32 %v9841, %v9401
    %v9859 = vmul.f32 %v9843, %v9402
    %v9860 = vmul.f32 %v9829, %v9844
    %v9861 = vmul.f32 %v9831, %v9845
    %v9862 = vadd.f32 %v9858, %v9860
    %v9863 = vadd.f32 %v9859, %v9861
    %v9864 = vtanh.pop %v9862
    %v9865 = vtanh.pop %v9863
    %v9866 = vmul.f32 %v9855, %v9864
    %v9867 = vmul.f32 %v9857, %v9865
    %v9868 = vadd.f32 %v9407, %v9866
    %v9869 = vadd.f32 %v9408, %v9867
    %v9870 = vmul.f32 %v9868, 0.5
    %v9871 = vmul.f32 %v9869, 0.5
    %9872 = vst [vmem:[#allocation34] sm:$0xff] %v9870
    %9873 = vst [vmem:[#allocation34 + $0x8] sm:$0xff] %v9871
    // Predicated region
    $region186: #{mixer_transformer_forward.1} parent=1 // pred_check
      _
    $region187: #{mixer_transformer_forward.1} parent=1 // pred_check_branch
      %9875 = sbr.rel (0) target = $region189
    $region188: #{mixer_transformer_forward.1} parent=1 // pred_region
      %s9877 = ssub.s32 256, 256
      %9878 = vsyncadd [#allocation7], %s9877
      %s9879 = sshll.u32 [#allocation34], 4
      %s9880 = int_to_ptr.vmem [resolvable:$true] %s9879
      %9885 = dma.vmem_to_hbm [thread:$0]  %s9880, 256, %s28, [#allocation7], 128, 128, 8
    $region189: #{mixer_transformer_forward.1} parent=1 // pred_fallthru
      _
    // Predicated region
    $region190: #{mixer_transformer_forward.1} parent=1 // pred_check
      _
    $region191: #{mixer_transformer_forward.1} parent=1 // pred_check_branch
      %9887 = sbr.rel (0) target = $region193
    $region192: #{mixer_transformer_forward.1} parent=1 // pred_region
      %9888 = dma.done [#allocation7], 256
    $region193: #{mixer_transformer_forward.1} parent=1 // pred_fallthru
      _
    %9889 = vsyncpa [#allocation6], 1
    %9890 = vsyncpa [#allocation9], 1
    %9891 = vsyncpa [#allocation12], 1
    %9892 = vsyncpa [#allocation15], 1
    %9893 = vsyncpa [#allocation18], 1
    %9894 = vsyncpa [#allocation21], 1
    %9895 = vsyncpa [#allocation24], 1
    %9896 = vsyncpa [#allocation27], 1
    %9897 = vsyncpa [#allocation30], 1
    %9898 = vsyncpa [#allocation33], 1
    %9899 = vsyncpa [#allocation7], 1

</llo_original>
